<compile_context>
chip_gen: v5e
topology: v5e:2x2
jax: 0.10.0
libtpu: 0.0.40
codegen_flags: <defaults>
</compile_context>

<pallas_src>
import functools

import numpy as np
import jax
import jax.numpy as jnp
from jax.experimental import pallas as pl
from jax.experimental.pallas import tpu as pltpu

DIM = 64
LATENT = 128
OUT_FEATURES = 207
OUT_PAD = 256          # fc output padded 207 -> 256 so the only HBM store is lane-dense


# ---------------------------------------------------------------------------
# Host-side helpers (run once, outside the jitted forward)
# ---------------------------------------------------------------------------
def _spatial_scatter_mats(h_in, w_in, k, stride, padding):
    """0/1 matrices S[t, q, p] for the direct-conv equivalent of ConvTranspose2d
    (zero-dilate by `stride`, pad by k-1-padding, flipped kernel).
    q indexes output positions (row-major), p input positions, t = ky*k+kx."""
    pad = k - 1 - padding
    hd = (h_in - 1) * stride + 1
    wd = (w_in - 1) * stride + 1
    h_out = hd + 2 * pad - k + 1
    w_out = wd + 2 * pad - k + 1
    S = np.zeros((k * k, h_out * w_out, h_in * w_in), np.float32)
    for ky in range(k):
        for kx in range(k):
            t = ky * k + kx
            for oy in range(h_out):
                for ox in range(w_out):
                    dy, dx = oy + ky - pad, ox + kx - pad
                    if (0 <= dy < hd and 0 <= dx < wd
                            and dy % stride == 0 and dx % stride == 0):
                        S[t, oy * w_out + ox,
                          (dy // stride) * w_in + (dx // stride)] = 1.0
    return S


def _conv_tap_weights(w):
    """PyTorch ConvTranspose2d weight [IC, OC, K, K] -> per-tap direct-conv weights
    [K*K, IC, OC] (spatially flipped, in/out swapped)."""
    k = w.shape[2]
    wf = jnp.flip(w, axis=(2, 3))                       # [IC, OC, K, K] flipped
    return wf.transpose(2, 3, 0, 1).reshape(k * k, w.shape[0], w.shape[1])


def prepare_params(params, batch):
    """One-time re-layout of the PyTorch-style parameters for the fused kernel.
    Spatial rows inside the kernel are batch-interleaved: row = position * batch + b."""
    B = batch
    bf16 = jnp.bfloat16

    # preprocess Linear(128 -> 4*5*5*DIM): output feature index f = c*25 + p
    wpre = params["pre_w"].reshape(4 * DIM, 25, LATENT)        # [c, p, l]
    wpre_k = wpre.transpose(1, 2, 0)                           # [25, 128, 256] = [p, l, c]
    bpre_k = params["pre_b"].reshape(4 * DIM, 25).T.reshape(25, 1, 4 * DIM)

    w1r = _conv_tap_weights(params["w1"])                      # [9, 256, 128]
    w2r = _conv_tap_weights(params["w2"])                      # [9, 128, 64]
    w3r = _conv_tap_weights(params["w3"])                      # [16, 64, 1]
    w3stack = w3r[:, :, 0].T                                   # [64, 16]

    S1 = _spatial_scatter_mats(5, 5, 3, 1, 1)                  # [9, 25, 25]   5x5 -> 5x5
    S2 = _spatial_scatter_mats(5, 5, 3, 1, 0)                  # [9, 49, 25]   5x5 -> 7x7
    S3 = _spatial_scatter_mats(7, 7, 4, 2, 0)                  # [16, 256, 49] 7x7 -> 16x16

    eye = np.eye(B, dtype=np.float32)
    # Batch-interleaved scatter matrices (0/1 -> exact in bf16, halves their HBM bytes).
    s1int = jnp.asarray(np.stack([np.kron(S1[t], eye) for t in range(9)]))   # [9, 25B, 25B]
    s2int = jnp.asarray(np.stack([np.kron(S2[t], eye) for t in range(9)]))   # [9, 49B, 25B]

    # Fold deconv_out (OC=1) spatial scatter with fc(256 -> 207), per INPUT position:
    #   gfold[p, t, j] = sum_q S3[t, q, p] * fc_w[j, q]      (no batch repeat needed)
    wfc = params["fc_w"].T                                                   # [256, 207]
    gfold = jnp.einsum("tqp,qj->ptj", jnp.asarray(S3), wfc)                  # [49, 16, 207]
    gfold = jnp.pad(gfold, ((0, 0), (0, 0), (0, OUT_PAD - OUT_FEATURES)))    # lane-pad to 256

    blast = jnp.zeros((1, OUT_PAD), jnp.float32).at[0, :OUT_FEATURES].set(
        params["fc_b"] + params["b3"][0] * wfc.sum(axis=0))

    return {
        "wpre": wpre_k.astype(bf16), "bpre": bpre_k.astype(jnp.float32),
        "w1": w1r.astype(bf16), "b1": params["b1"].reshape(1, -1).astype(jnp.float32),
        "s1": s1int.astype(bf16),
        "w2": w2r.astype(bf16), "b2": params["b2"].reshape(1, -1).astype(jnp.float32),
        "s2": s2int.astype(bf16),
        "w3": w3stack.astype(bf16), "g": gfold.astype(bf16),
        "blast": blast.astype(jnp.float32),
    }


# ---------------------------------------------------------------------------
# The single fused Pallas kernel
# ---------------------------------------------------------------------------
def _convgen_kernel(z_ref, wpre_ref, bpre_ref, w1_ref, b1_ref, s1_ref,
                    w2_ref, b2_ref, s2_ref, w3_ref, g_ref, blast_ref,
                    out_ref, x1_ref, *, batch):
    f32 = jnp.float32
    B = batch
    zb = z_ref[...].astype(jnp.bfloat16)                                     # [B, 128]

    # preprocess: Linear(128, 6400) + ReLU, written per spatial position so the
    # activation lands directly in (position-major, channel-lane) layout.
    for p in range(25):
        r = jnp.dot(zb, wpre_ref[p], preferred_element_type=f32) + bpre_ref[p]
        x1_ref[p * B:(p + 1) * B, :] = jnp.maximum(r, 0.0).astype(x1_ref.dtype)

    x1 = x1_ref[...]                                                         # [25B, 256] bf16

    # block1: ConvTranspose2d(256, 128, 3, padding=1) + ReLU   (5x5 -> 5x5)
    acc1 = jnp.zeros((25 * B, 2 * DIM), f32)
    for t in range(9):
        ch = jnp.dot(x1, w1_ref[t], preferred_element_type=f32)              # [25B, 128]
        acc1 = acc1 + jnp.dot(s1_ref[t].astype(f32), ch, preferred_element_type=f32)
    y1 = jnp.maximum(acc1 + b1_ref[...], 0.0).astype(jnp.bfloat16)           # [25B, 128]

    # net[:, :, :9, :9] is a no-op at 5x5 spatial size (kept for fidelity).

    # block2: ConvTranspose2d(128, 64, 3) + ReLU   (5x5 -> 7x7)
    acc2 = jnp.zeros((49 * B, DIM), f32)
    for t in range(9):
        ch = jnp.dot(y1, w2_ref[t], preferred_element_type=f32)              # [25B, 64]
        acc2 = acc2 + jnp.dot(s2_ref[t].astype(f32), ch, preferred_element_type=f32)
    y2 = jnp.maximum(acc2 + b2_ref[...], 0.0).astype(jnp.bfloat16)           # [49B, 64]

    # deconv_out ConvTranspose2d(64, 1, 4, stride=2) folded with fc(256 -> 207):
    # u[row, t] is the per-tap channel contraction; g_ref[p] already contains the
    # fc weights gathered per input position, so each position contributes via a
    # tiny [B,16]x[16,256] matmul accumulated straight into the [B,256] output.
    u = jnp.dot(y2, w3_ref[...], preferred_element_type=f32)                 # [49B, 16]
    out = jnp.zeros((B, OUT_PAD), f32)
    for p in range(49):
        out = out + jnp.dot(u[p * B:(p + 1) * B, :], g_ref[p],
                            preferred_element_type=f32)                      # [B, 256]
    out_ref[...] = (out + blast_ref[...]).astype(out_ref.dtype)


def conv_generator_forward(prep, z):
    B = z.shape[0]

    def full(shape):
        return pl.BlockSpec(shape, lambda i, _s=shape: (0,) * len(_s))

    out = pl.pallas_call(
        functools.partial(_convgen_kernel, batch=B),
        out_shape=jax.ShapeDtypeStruct((B, OUT_PAD), jnp.float32),
        grid=(1,),
        in_specs=[
            pl.BlockSpec((B, LATENT), lambda i: (i, 0)),
            full(prep["wpre"].shape), full(prep["bpre"].shape),
            full(prep["w1"].shape), full(prep["b1"].shape), full(prep["s1"].shape),
            full(prep["w2"].shape), full(prep["b2"].shape), full(prep["s2"].shape),
            full(prep["w3"].shape), full(prep["g"].shape), full(prep["blast"].shape),
        ],
        out_specs=pl.BlockSpec((B, OUT_PAD), lambda i: (i, 0)),
        scratch_shapes=[pltpu.VMEM((25 * B, 4 * DIM), jnp.bfloat16)],
        compiler_params=pltpu.CompilerParams(dimension_semantics=("parallel",)),
    )(z, prep["wpre"], prep["bpre"], prep["w1"], prep["b1"], prep["s1"],
      prep["w2"], prep["b2"], prep["s2"], prep["w3"], prep["g"], prep["blast"])

    # TODO(synk): `self.transform` is never defined in the module's __init__ (set
    # externally in MisGAN); treated as identity here.
    return out[:, :OUT_FEATURES].reshape(B, 1, OUT_FEATURES)


# ---------------------------------------------------------------------------
# Deterministic parameter init (PyTorch-style uniform(-1/sqrt(fan_in), ...))
# ---------------------------------------------------------------------------
def init_params(key):
    ks = jax.random.split(key, 10)

    def unif(k, shape, fan_in):
        bound = 1.0 / float(fan_in) ** 0.5
        return jax.random.uniform(k, shape, jnp.float32, -bound, bound)

    p = {}
    p["pre_w"] = unif(ks[0], (4 * 5 * 5 * DIM, LATENT), LATENT)      # Linear: [out, in]
    p["pre_b"] = unif(ks[1], (4 * 5 * 5 * DIM,), LATENT)
    p["w1"] = unif(ks[2], (4 * DIM, 2 * DIM, 3, 3), 2 * DIM * 9)     # ConvT: [in, out, kH, kW]
    p["b1"] = unif(ks[3], (2 * DIM,), 2 * DIM * 9)
    p["w2"] = unif(ks[4], (2 * DIM, DIM, 3, 3), DIM * 9)
    p["b2"] = unif(ks[5], (DIM,), DIM * 9)
    p["w3"] = unif(ks[6], (DIM, 1, 4, 4), 1 * 16)
    p["b3"] = unif(ks[7], (1,), 16)
    p["fc_w"] = unif(ks[8], (OUT_FEATURES, 256), 256)                # Linear: [out, in]
    p["fc_b"] = unif(ks[9], (OUT_FEATURES,), 256)
    return p


if __name__ == "__main__":
    key = jax.random.PRNGKey(0)
    pkey, zkey = jax.random.split(key)
    params = init_params(pkey)
    z = jax.random.normal(zkey, (2, LATENT), jnp.float32)            # batch=2, latent=128

    prep = prepare_params(params, batch=z.shape[0])                  # one-time weight re-layout
    fwd = jax.jit(conv_generator_forward)
    out = jax.block_until_ready(fwd(prep, z))
    assert out.shape == (2, 1, OUT_FEATURES) and out.dtype == jnp.float32
    print("KERNEL_OK")
</pallas_src>

<mosaic_0001>
module attributes {stable_mosaic.version = 11 : i64} {
  func.func @_convgen_kernel(%arg0: i32, %arg1: memref<2x128xf32, #tpu.memory_space<vmem>>, %arg2: memref<25x128x256xbf16, #tpu.memory_space<vmem>>, %arg3: memref<25x1x256xf32, #tpu.memory_space<vmem>>, %arg4: memref<9x256x128xbf16, #tpu.memory_space<vmem>>, %arg5: memref<1x128xf32, #tpu.memory_space<vmem>>, %arg6: memref<9x50x50xbf16, #tpu.memory_space<vmem>>, %arg7: memref<9x128x64xbf16, #tpu.memory_space<vmem>>, %arg8: memref<1x64xf32, #tpu.memory_space<vmem>>, %arg9: memref<9x98x50xbf16, #tpu.memory_space<vmem>>, %arg10: memref<64x16xbf16, #tpu.memory_space<vmem>>, %arg11: memref<49x16x256xbf16, #tpu.memory_space<vmem>>, %arg12: memref<1x256xf32, #tpu.memory_space<vmem>>, %arg13: memref<2x256xf32, #tpu.memory_space<vmem>>, %arg14: memref<50x256xbf16, #tpu.memory_space<vmem>>) attributes {dimension_semantics = [#tpu.dimension_semantics<parallel>], iteration_bounds = array<i64: 1>, scalar_prefetch = 0 : i64, scratch_operands = 1 : i64, tpu.core_type = #tpu.core_type<tc>, window_params = [{transform_indices = @transform_0, window_bounds = array<i64: 2, 128>}, {pipeline_mode = #tpu.pipeline_mode<synchronous>, transform_indices = @transform_1, window_bounds = array<i64: 25, 128, 256>}, {pipeline_mode = #tpu.pipeline_mode<synchronous>, transform_indices = @transform_2, window_bounds = array<i64: 25, 1, 256>}, {pipeline_mode = #tpu.pipeline_mode<synchronous>, transform_indices = @transform_3, window_bounds = array<i64: 9, 256, 128>}, {pipeline_mode = #tpu.pipeline_mode<synchronous>, transform_indices = @transform_4, window_bounds = array<i64: 1, 128>}, {pipeline_mode = #tpu.pipeline_mode<synchronous>, transform_indices = @transform_5, window_bounds = array<i64: 9, 50, 50>}, {pipeline_mode = #tpu.pipeline_mode<synchronous>, transform_indices = @transform_6, window_bounds = array<i64: 9, 128, 64>}, {pipeline_mode = #tpu.pipeline_mode<synchronous>, transform_indices = @transform_7, window_bounds = array<i64: 1, 64>}, {pipeline_mode = #tpu.pipeline_mode<synchronous>, transform_indices = @transform_8, window_bounds = array<i64: 9, 98, 50>}, {pipeline_mode = #tpu.pipeline_mode<synchronous>, transform_indices = @transform_9, window_bounds = array<i64: 64, 16>}, {pipeline_mode = #tpu.pipeline_mode<synchronous>, transform_indices = @transform_10, window_bounds = array<i64: 49, 16, 256>}, {pipeline_mode = #tpu.pipeline_mode<synchronous>, transform_indices = @transform_11, window_bounds = array<i64: 1, 256>}, {transform_indices = @transform_12, window_bounds = array<i64: 2, 256>}]} {
    %c0 = arith.constant 0 : index
    %c0_0 = arith.constant 0 : index
    %0 = vector.load %arg1[%c0, %c0_0] : memref<2x128xf32, #tpu.memory_space<vmem>>, vector<2x128xf32>
    %1 = arith.truncf %0 : vector<2x128xf32> to vector<2x128xbf16>
    %c0_1 = arith.constant 0 : index
    %c0_2 = arith.constant 0 : index
    %c0_3 = arith.constant 0 : index
    %2 = vector.load %arg2[%c0_1, %c0_2, %c0_3] : memref<25x128x256xbf16, #tpu.memory_space<vmem>>, vector<1x128x256xbf16>
    %3 = vector.shape_cast %2 : vector<1x128x256xbf16> to vector<128x256xbf16>
    %cst = arith.constant dense<0.000000e+00> : vector<2x256xf32>
    %4 = tpu.matmul %1, %3, %cst {dimension_numbers = #tpu.dot_dimension_numbers<[1], [0], [0], [1], [0, 0, 1, 1], [], []>} : vector<2x128xbf16>, vector<128x256xbf16>, vector<2x256xf32> -> vector<2x256xf32>
    %c0_4 = arith.constant 0 : index
    %c0_5 = arith.constant 0 : index
    %c0_6 = arith.constant 0 : index
    %5 = vector.load %arg3[%c0_4, %c0_5, %c0_6] : memref<25x1x256xf32, #tpu.memory_space<vmem>>, vector<1x1x256xf32>
    %6 = vector.shape_cast %5 : vector<1x1x256xf32> to vector<1x256xf32>
    %7 = vector.broadcast %6 : vector<1x256xf32> to vector<2x256xf32>
    %8 = arith.addf %4, %7 : vector<2x256xf32>
    %cst_7 = arith.constant 0.000000e+00 : f32
    %9 = vector.broadcast %cst_7 : f32 to vector<2x256xf32>
    %10 = arith.maximumf %8, %9 : vector<2x256xf32>
    %11 = arith.truncf %10 : vector<2x256xf32> to vector<2x256xbf16>
    %c0_8 = arith.constant 0 : index
    %c0_9 = arith.constant 0 : index
    %12 = vector.load %arg14[%c0_8, %c0_9] : memref<50x256xbf16, #tpu.memory_space<vmem>>, vector<2x256xbf16>
    tpu.vector_store %arg14[%c0_8, %c0_9], %11 {strides = array<i32>} : memref<50x256xbf16, #tpu.memory_space<vmem>>, vector<2x256xbf16>,
    %c1 = arith.constant 1 : index
    %c0_10 = arith.constant 0 : index
    %c0_11 = arith.constant 0 : index
    %13 = vector.load %arg2[%c1, %c0_10, %c0_11] : memref<25x128x256xbf16, #tpu.memory_space<vmem>>, vector<1x128x256xbf16>
    %14 = vector.shape_cast %13 : vector<1x128x256xbf16> to vector<128x256xbf16>
    %cst_12 = arith.constant dense<0.000000e+00> : vector<2x256xf32>
    %15 = tpu.matmul %1, %14, %cst_12 {dimension_numbers = #tpu.dot_dimension_numbers<[1], [0], [0], [1], [0, 0, 1, 1], [], []>} : vector<2x128xbf16>, vector<128x256xbf16>, vector<2x256xf32> -> vector<2x256xf32>
    %c1_13 = arith.constant 1 : index
    %c0_14 = arith.constant 0 : index
    %c0_15 = arith.constant 0 : index
    %16 = vector.load %arg3[%c1_13, %c0_14, %c0_15] : memref<25x1x256xf32, #tpu.memory_space<vmem>>, vector<1x1x256xf32>
    %17 = vector.shape_cast %16 : vector<1x1x256xf32> to vector<1x256xf32>
    %18 = vector.broadcast %17 : vector<1x256xf32> to vector<2x256xf32>
    %19 = arith.addf %15, %18 : vector<2x256xf32>
    %cst_16 = arith.constant 0.000000e+00 : f32
    %20 = vector.broadcast %cst_16 : f32 to vector<2x256xf32>
    %21 = arith.maximumf %19, %20 : vector<2x256xf32>
    %22 = arith.truncf %21 : vector<2x256xf32> to vector<2x256xbf16>
    %c2 = arith.constant 2 : index
    %c0_17 = arith.constant 0 : index
    %23 = vector.load %arg14[%c2, %c0_17] : memref<50x256xbf16, #tpu.memory_space<vmem>>, vector<2x256xbf16>
    tpu.vector_store %arg14[%c2, %c0_17], %22 {strides = array<i32>} : memref<50x256xbf16, #tpu.memory_space<vmem>>, vector<2x256xbf16>,
    %c2_18 = arith.constant 2 : index
    %c0_19 = arith.constant 0 : index
    %c0_20 = arith.constant 0 : index
    %24 = vector.load %arg2[%c2_18, %c0_19, %c0_20] : memref<25x128x256xbf16, #tpu.memory_space<vmem>>, vector<1x128x256xbf16>
    %25 = vector.shape_cast %24 : vector<1x128x256xbf16> to vector<128x256xbf16>
    %cst_21 = arith.constant dense<0.000000e+00> : vector<2x256xf32>
    %26 = tpu.matmul %1, %25, %cst_21 {dimension_numbers = #tpu.dot_dimension_numbers<[1], [0], [0], [1], [0, 0, 1, 1], [], []>} : vector<2x128xbf16>, vector<128x256xbf16>, vector<2x256xf32> -> vector<2x256xf32>
    %c2_22 = arith.constant 2 : index
    %c0_23 = arith.constant 0 : index
    %c0_24 = arith.constant 0 : index
    %27 = vector.load %arg3[%c2_22, %c0_23, %c0_24] : memref<25x1x256xf32, #tpu.memory_space<vmem>>, vector<1x1x256xf32>
    %28 = vector.shape_cast %27 : vector<1x1x256xf32> to vector<1x256xf32>
    %29 = vector.broadcast %28 : vector<1x256xf32> to vector<2x256xf32>
    %30 = arith.addf %26, %29 : vector<2x256xf32>
    %cst_25 = arith.constant 0.000000e+00 : f32
    %31 = vector.broadcast %cst_25 : f32 to vector<2x256xf32>
    %32 = arith.maximumf %30, %31 : vector<2x256xf32>
    %33 = arith.truncf %32 : vector<2x256xf32> to vector<2x256xbf16>
    %c4 = arith.constant 4 : index
    %c0_26 = arith.constant 0 : index
    %34 = vector.load %arg14[%c4, %c0_26] : memref<50x256xbf16, #tpu.memory_space<vmem>>, vector<2x256xbf16>
    tpu.vector_store %arg14[%c4, %c0_26], %33 {strides = array<i32>} : memref<50x256xbf16, #tpu.memory_space<vmem>>, vector<2x256xbf16>,
    %c3 = arith.constant 3 : index
    %c0_27 = arith.constant 0 : index
    %c0_28 = arith.constant 0 : index
    %35 = vector.load %arg2[%c3, %c0_27, %c0_28] : memref<25x128x256xbf16, #tpu.memory_space<vmem>>, vector<1x128x256xbf16>
    %36 = vector.shape_cast %35 : vector<1x128x256xbf16> to vector<128x256xbf16>
    %cst_29 = arith.constant dense<0.000000e+00> : vector<2x256xf32>
    %37 = tpu.matmul %1, %36, %cst_29 {dimension_numbers = #tpu.dot_dimension_numbers<[1], [0], [0], [1], [0, 0, 1, 1], [], []>} : vector<2x128xbf16>, vector<128x256xbf16>, vector<2x256xf32> -> vector<2x256xf32>
    %c3_30 = arith.constant 3 : index
    %c0_31 = arith.constant 0 : index
    %c0_32 = arith.constant 0 : index
    %38 = vector.load %arg3[%c3_30, %c0_31, %c0_32] : memref<25x1x256xf32, #tpu.memory_space<vmem>>, vector<1x1x256xf32>
    %39 = vector.shape_cast %38 : vector<1x1x256xf32> to vector<1x256xf32>
    %40 = vector.broadcast %39 : vector<1x256xf32> to vector<2x256xf32>
    %41 = arith.addf %37, %40 : vector<2x256xf32>
    %cst_33 = arith.constant 0.000000e+00 : f32
    %42 = vector.broadcast %cst_33 : f32 to vector<2x256xf32>
    %43 = arith.maximumf %41, %42 : vector<2x256xf32>
    %44 = arith.truncf %43 : vector<2x256xf32> to vector<2x256xbf16>
    %c6 = arith.constant 6 : index
    %c0_34 = arith.constant 0 : index
    %45 = vector.load %arg14[%c6, %c0_34] : memref<50x256xbf16, #tpu.memory_space<vmem>>, vector<2x256xbf16>
    tpu.vector_store %arg14[%c6, %c0_34], %44 {strides = array<i32>} : memref<50x256xbf16, #tpu.memory_space<vmem>>, vector<2x256xbf16>,
    %c4_35 = arith.constant 4 : index
    %c0_36 = arith.constant 0 : index
    %c0_37 = arith.constant 0 : index
    %46 = vector.load %arg2[%c4_35, %c0_36, %c0_37] : memref<25x128x256xbf16, #tpu.memory_space<vmem>>, vector<1x128x256xbf16>
    %47 = vector.shape_cast %46 : vector<1x128x256xbf16> to vector<128x256xbf16>
    %cst_38 = arith.constant dense<0.000000e+00> : vector<2x256xf32>
    %48 = tpu.matmul %1, %47, %cst_38 {dimension_numbers = #tpu.dot_dimension_numbers<[1], [0], [0], [1], [0, 0, 1, 1], [], []>} : vector<2x128xbf16>, vector<128x256xbf16>, vector<2x256xf32> -> vector<2x256xf32>
    %c4_39 = arith.constant 4 : index
    %c0_40 = arith.constant 0 : index
    %c0_41 = arith.constant 0 : index
    %49 = vector.load %arg3[%c4_39, %c0_40, %c0_41] : memref<25x1x256xf32, #tpu.memory_space<vmem>>, vector<1x1x256xf32>
    %50 = vector.shape_cast %49 : vector<1x1x256xf32> to vector<1x256xf32>
    %51 = vector.broadcast %50 : vector<1x256xf32> to vector<2x256xf32>
    %52 = arith.addf %48, %51 : vector<2x256xf32>
    %cst_42 = arith.constant 0.000000e+00 : f32
    %53 = vector.broadcast %cst_42 : f32 to vector<2x256xf32>
    %54 = arith.maximumf %52, %53 : vector<2x256xf32>
    %55 = arith.truncf %54 : vector<2x256xf32> to vector<2x256xbf16>
    %c8 = arith.constant 8 : index
    %c0_43 = arith.constant 0 : index
    %56 = vector.load %arg14[%c8, %c0_43] : memref<50x256xbf16, #tpu.memory_space<vmem>>, vector<2x256xbf16>
    tpu.vector_store %arg14[%c8, %c0_43], %55 {strides = array<i32>} : memref<50x256xbf16, #tpu.memory_space<vmem>>, vector<2x256xbf16>,
    %c5 = arith.constant 5 : index
    %c0_44 = arith.constant 0 : index
    %c0_45 = arith.constant 0 : index
    %57 = vector.load %arg2[%c5, %c0_44, %c0_45] : memref<25x128x256xbf16, #tpu.memory_space<vmem>>, vector<1x128x256xbf16>
    %58 = vector.shape_cast %57 : vector<1x128x256xbf16> to vector<128x256xbf16>
    %cst_46 = arith.constant dense<0.000000e+00> : vector<2x256xf32>
    %59 = tpu.matmul %1, %58, %cst_46 {dimension_numbers = #tpu.dot_dimension_numbers<[1], [0], [0], [1], [0, 0, 1, 1], [], []>} : vector<2x128xbf16>, vector<128x256xbf16>, vector<2x256xf32> -> vector<2x256xf32>
    %c5_47 = arith.constant 5 : index
    %c0_48 = arith.constant 0 : index
    %c0_49 = arith.constant 0 : index
    %60 = vector.load %arg3[%c5_47, %c0_48, %c0_49] : memref<25x1x256xf32, #tpu.memory_space<vmem>>, vector<1x1x256xf32>
    %61 = vector.shape_cast %60 : vector<1x1x256xf32> to vector<1x256xf32>
    %62 = vector.broadcast %61 : vector<1x256xf32> to vector<2x256xf32>
    %63 = arith.addf %59, %62 : vector<2x256xf32>
    %cst_50 = arith.constant 0.000000e+00 : f32
    %64 = vector.broadcast %cst_50 : f32 to vector<2x256xf32>
    %65 = arith.maximumf %63, %64 : vector<2x256xf32>
    %66 = arith.truncf %65 : vector<2x256xf32> to vector<2x256xbf16>
    %c10 = arith.constant 10 : index
    %c0_51 = arith.constant 0 : index
    %67 = vector.load %arg14[%c10, %c0_51] : memref<50x256xbf16, #tpu.memory_space<vmem>>, vector<2x256xbf16>
    tpu.vector_store %arg14[%c10, %c0_51], %66 {strides = array<i32>} : memref<50x256xbf16, #tpu.memory_space<vmem>>, vector<2x256xbf16>,
    %c6_52 = arith.constant 6 : index
    %c0_53 = arith.constant 0 : index
    %c0_54 = arith.constant 0 : index
    %68 = vector.load %arg2[%c6_52, %c0_53, %c0_54] : memref<25x128x256xbf16, #tpu.memory_space<vmem>>, vector<1x128x256xbf16>
    %69 = vector.shape_cast %68 : vector<1x128x256xbf16> to vector<128x256xbf16>
    %cst_55 = arith.constant dense<0.000000e+00> : vector<2x256xf32>
    %70 = tpu.matmul %1, %69, %cst_55 {dimension_numbers = #tpu.dot_dimension_numbers<[1], [0], [0], [1], [0, 0, 1, 1], [], []>} : vector<2x128xbf16>, vector<128x256xbf16>, vector<2x256xf32> -> vector<2x256xf32>
    %c6_56 = arith.constant 6 : index
    %c0_57 = arith.constant 0 : index
    %c0_58 = arith.constant 0 : index
    %71 = vector.load %arg3[%c6_56, %c0_57, %c0_58] : memref<25x1x256xf32, #tpu.memory_space<vmem>>, vector<1x1x256xf32>
    %72 = vector.shape_cast %71 : vector<1x1x256xf32> to vector<1x256xf32>
    %73 = vector.broadcast %72 : vector<1x256xf32> to vector<2x256xf32>
    %74 = arith.addf %70, %73 : vector<2x256xf32>
    %cst_59 = arith.constant 0.000000e+00 : f32
    %75 = vector.broadcast %cst_59 : f32 to vector<2x256xf32>
    %76 = arith.maximumf %74, %75 : vector<2x256xf32>
    %77 = arith.truncf %76 : vector<2x256xf32> to vector<2x256xbf16>
    %c12 = arith.constant 12 : index
    %c0_60 = arith.constant 0 : index
    %78 = vector.load %arg14[%c12, %c0_60] : memref<50x256xbf16, #tpu.memory_space<vmem>>, vector<2x256xbf16>
    tpu.vector_store %arg14[%c12, %c0_60], %77 {strides = array<i32>} : memref<50x256xbf16, #tpu.memory_space<vmem>>, vector<2x256xbf16>,
    %c7 = arith.constant 7 : index
    %c0_61 = arith.constant 0 : index
    %c0_62 = arith.constant 0 : index
    %79 = vector.load %arg2[%c7, %c0_61, %c0_62] : memref<25x128x256xbf16, #tpu.memory_space<vmem>>, vector<1x128x256xbf16>
    %80 = vector.shape_cast %79 : vector<1x128x256xbf16> to vector<128x256xbf16>
    %cst_63 = arith.constant dense<0.000000e+00> : vector<2x256xf32>
    %81 = tpu.matmul %1, %80, %cst_63 {dimension_numbers = #tpu.dot_dimension_numbers<[1], [0], [0], [1], [0, 0, 1, 1], [], []>} : vector<2x128xbf16>, vector<128x256xbf16>, vector<2x256xf32> -> vector<2x256xf32>
    %c7_64 = arith.constant 7 : index
    %c0_65 = arith.constant 0 : index
    %c0_66 = arith.constant 0 : index
    %82 = vector.load %arg3[%c7_64, %c0_65, %c0_66] : memref<25x1x256xf32, #tpu.memory_space<vmem>>, vector<1x1x256xf32>
    %83 = vector.shape_cast %82 : vector<1x1x256xf32> to vector<1x256xf32>
    %84 = vector.broadcast %83 : vector<1x256xf32> to vector<2x256xf32>
    %85 = arith.addf %81, %84 : vector<2x256xf32>
    %cst_67 = arith.constant 0.000000e+00 : f32
    %86 = vector.broadcast %cst_67 : f32 to vector<2x256xf32>
    %87 = arith.maximumf %85, %86 : vector<2x256xf32>
    %88 = arith.truncf %87 : vector<2x256xf32> to vector<2x256xbf16>
    %c14 = arith.constant 14 : index
    %c0_68 = arith.constant 0 : index
    %89 = vector.load %arg14[%c14, %c0_68] : memref<50x256xbf16, #tpu.memory_space<vmem>>, vector<2x256xbf16>
    tpu.vector_store %arg14[%c14, %c0_68], %88 {strides = array<i32>} : memref<50x256xbf16, #tpu.memory_space<vmem>>, vector<2x256xbf16>,
    %c8_69 = arith.constant 8 : index
    %c0_70 = arith.constant 0 : index
    %c0_71 = arith.constant 0 : index
    %90 = vector.load %arg2[%c8_69, %c0_70, %c0_71] : memref<25x128x256xbf16, #tpu.memory_space<vmem>>, vector<1x128x256xbf16>
    %91 = vector.shape_cast %90 : vector<1x128x256xbf16> to vector<128x256xbf16>
    %cst_72 = arith.constant dense<0.000000e+00> : vector<2x256xf32>
    %92 = tpu.matmul %1, %91, %cst_72 {dimension_numbers = #tpu.dot_dimension_numbers<[1], [0], [0], [1], [0, 0, 1, 1], [], []>} : vector<2x128xbf16>, vector<128x256xbf16>, vector<2x256xf32> -> vector<2x256xf32>
    %c8_73 = arith.constant 8 : index
    %c0_74 = arith.constant 0 : index
    %c0_75 = arith.constant 0 : index
    %93 = vector.load %arg3[%c8_73, %c0_74, %c0_75] : memref<25x1x256xf32, #tpu.memory_space<vmem>>, vector<1x1x256xf32>
    %94 = vector.shape_cast %93 : vector<1x1x256xf32> to vector<1x256xf32>
    %95 = vector.broadcast %94 : vector<1x256xf32> to vector<2x256xf32>
    %96 = arith.addf %92, %95 : vector<2x256xf32>
    %cst_76 = arith.constant 0.000000e+00 : f32
    %97 = vector.broadcast %cst_76 : f32 to vector<2x256xf32>
    %98 = arith.maximumf %96, %97 : vector<2x256xf32>
    %99 = arith.truncf %98 : vector<2x256xf32> to vector<2x256xbf16>
    %c16 = arith.constant 16 : index
    %c0_77 = arith.constant 0 : index
    %100 = vector.load %arg14[%c16, %c0_77] : memref<50x256xbf16, #tpu.memory_space<vmem>>, vector<2x256xbf16>
    tpu.vector_store %arg14[%c16, %c0_77], %99 {strides = array<i32>} : memref<50x256xbf16, #tpu.memory_space<vmem>>, vector<2x256xbf16>,
    %c9 = arith.constant 9 : index
    %c0_78 = arith.constant 0 : index
    %c0_79 = arith.constant 0 : index
    %101 = vector.load %arg2[%c9, %c0_78, %c0_79] : memref<25x128x256xbf16, #tpu.memory_space<vmem>>, vector<1x128x256xbf16>
    %102 = vector.shape_cast %101 : vector<1x128x256xbf16> to vector<128x256xbf16>
    %cst_80 = arith.constant dense<0.000000e+00> : vector<2x256xf32>
    %103 = tpu.matmul %1, %102, %cst_80 {dimension_numbers = #tpu.dot_dimension_numbers<[1], [0], [0], [1], [0, 0, 1, 1], [], []>} : vector<2x128xbf16>, vector<128x256xbf16>, vector<2x256xf32> -> vector<2x256xf32>
    %c9_81 = arith.constant 9 : index
    %c0_82 = arith.constant 0 : index
    %c0_83 = arith.constant 0 : index
    %104 = vector.load %arg3[%c9_81, %c0_82, %c0_83] : memref<25x1x256xf32, #tpu.memory_space<vmem>>, vector<1x1x256xf32>
    %105 = vector.shape_cast %104 : vector<1x1x256xf32> to vector<1x256xf32>
    %106 = vector.broadcast %105 : vector<1x256xf32> to vector<2x256xf32>
    %107 = arith.addf %103, %106 : vector<2x256xf32>
    %cst_84 = arith.constant 0.000000e+00 : f32
    %108 = vector.broadcast %cst_84 : f32 to vector<2x256xf32>
    %109 = arith.maximumf %107, %108 : vector<2x256xf32>
    %110 = arith.truncf %109 : vector<2x256xf32> to vector<2x256xbf16>
    %c18 = arith.constant 18 : index
    %c0_85 = arith.constant 0 : index
    %111 = vector.load %arg14[%c18, %c0_85] : memref<50x256xbf16, #tpu.memory_space<vmem>>, vector<2x256xbf16>
    tpu.vector_store %arg14[%c18, %c0_85], %110 {strides = array<i32>} : memref<50x256xbf16, #tpu.memory_space<vmem>>, vector<2x256xbf16>,
    %c10_86 = arith.constant 10 : index
    %c0_87 = arith.constant 0 : index
    %c0_88 = arith.constant 0 : index
    %112 = vector.load %arg2[%c10_86, %c0_87, %c0_88] : memref<25x128x256xbf16, #tpu.memory_space<vmem>>, vector<1x128x256xbf16>
    %113 = vector.shape_cast %112 : vector<1x128x256xbf16> to vector<128x256xbf16>
    %cst_89 = arith.constant dense<0.000000e+00> : vector<2x256xf32>
    %114 = tpu.matmul %1, %113, %cst_89 {dimension_numbers = #tpu.dot_dimension_numbers<[1], [0], [0], [1], [0, 0, 1, 1], [], []>} : vector<2x128xbf16>, vector<128x256xbf16>, vector<2x256xf32> -> vector<2x256xf32>
    %c10_90 = arith.constant 10 : index
    %c0_91 = arith.constant 0 : index
    %c0_92 = arith.constant 0 : index
    %115 = vector.load %arg3[%c10_90, %c0_91, %c0_92] : memref<25x1x256xf32, #tpu.memory_space<vmem>>, vector<1x1x256xf32>
    %116 = vector.shape_cast %115 : vector<1x1x256xf32> to vector<1x256xf32>
    %117 = vector.broadcast %116 : vector<1x256xf32> to vector<2x256xf32>
    %118 = arith.addf %114, %117 : vector<2x256xf32>
    %cst_93 = arith.constant 0.000000e+00 : f32
    %119 = vector.broadcast %cst_93 : f32 to vector<2x256xf32>
    %120 = arith.maximumf %118, %119 : vector<2x256xf32>
    %121 = arith.truncf %120 : vector<2x256xf32> to vector<2x256xbf16>
    %c20 = arith.constant 20 : index
    %c0_94 = arith.constant 0 : index
    %122 = vector.load %arg14[%c20, %c0_94] : memref<50x256xbf16, #tpu.memory_space<vmem>>, vector<2x256xbf16>
    tpu.vector_store %arg14[%c20, %c0_94], %121 {strides = array<i32>} : memref<50x256xbf16, #tpu.memory_space<vmem>>, vector<2x256xbf16>,
    %c11 = arith.constant 11 : index
    %c0_95 = arith.constant 0 : index
    %c0_96 = arith.constant 0 : index
    %123 = vector.load %arg2[%c11, %c0_95, %c0_96] : memref<25x128x256xbf16, #tpu.memory_space<vmem>>, vector<1x128x256xbf16>
    %124 = vector.shape_cast %123 : vector<1x128x256xbf16> to vector<128x256xbf16>
    %cst_97 = arith.constant dense<0.000000e+00> : vector<2x256xf32>
    %125 = tpu.matmul %1, %124, %cst_97 {dimension_numbers = #tpu.dot_dimension_numbers<[1], [0], [0], [1], [0, 0, 1, 1], [], []>} : vector<2x128xbf16>, vector<128x256xbf16>, vector<2x256xf32> -> vector<2x256xf32>
    %c11_98 = arith.constant 11 : index
    %c0_99 = arith.constant 0 : index
    %c0_100 = arith.constant 0 : index
    %126 = vector.load %arg3[%c11_98, %c0_99, %c0_100] : memref<25x1x256xf32, #tpu.memory_space<vmem>>, vector<1x1x256xf32>
    %127 = vector.shape_cast %126 : vector<1x1x256xf32> to vector<1x256xf32>
    %128 = vector.broadcast %127 : vector<1x256xf32> to vector<2x256xf32>
    %129 = arith.addf %125, %128 : vector<2x256xf32>
    %cst_101 = arith.constant 0.000000e+00 : f32
    %130 = vector.broadcast %cst_101 : f32 to vector<2x256xf32>
    %131 = arith.maximumf %129, %130 : vector<2x256xf32>
    %132 = arith.truncf %131 : vector<2x256xf32> to vector<2x256xbf16>
    %c22 = arith.constant 22 : index
    %c0_102 = arith.constant 0 : index
    %133 = vector.load %arg14[%c22, %c0_102] : memref<50x256xbf16, #tpu.memory_space<vmem>>, vector<2x256xbf16>
    tpu.vector_store %arg14[%c22, %c0_102], %132 {strides = array<i32>} : memref<50x256xbf16, #tpu.memory_space<vmem>>, vector<2x256xbf16>,
    %c12_103 = arith.constant 12 : index
    %c0_104 = arith.constant 0 : index
    %c0_105 = arith.constant 0 : index
    %134 = vector.load %arg2[%c12_103, %c0_104, %c0_105] : memref<25x128x256xbf16, #tpu.memory_space<vmem>>, vector<1x128x256xbf16>
    %135 = vector.shape_cast %134 : vector<1x128x256xbf16> to vector<128x256xbf16>
    %cst_106 = arith.constant dense<0.000000e+00> : vector<2x256xf32>
    %136 = tpu.matmul %1, %135, %cst_106 {dimension_numbers = #tpu.dot_dimension_numbers<[1], [0], [0], [1], [0, 0, 1, 1], [], []>} : vector<2x128xbf16>, vector<128x256xbf16>, vector<2x256xf32> -> vector<2x256xf32>
    %c12_107 = arith.constant 12 : index
    %c0_108 = arith.constant 0 : index
    %c0_109 = arith.constant 0 : index
    %137 = vector.load %arg3[%c12_107, %c0_108, %c0_109] : memref<25x1x256xf32, #tpu.memory_space<vmem>>, vector<1x1x256xf32>
    %138 = vector.shape_cast %137 : vector<1x1x256xf32> to vector<1x256xf32>
    %139 = vector.broadcast %138 : vector<1x256xf32> to vector<2x256xf32>
    %140 = arith.addf %136, %139 : vector<2x256xf32>
    %cst_110 = arith.constant 0.000000e+00 : f32
    %141 = vector.broadcast %cst_110 : f32 to vector<2x256xf32>
    %142 = arith.maximumf %140, %141 : vector<2x256xf32>
    %143 = arith.truncf %142 : vector<2x256xf32> to vector<2x256xbf16>
    %c24 = arith.constant 24 : index
    %c0_111 = arith.constant 0 : index
    %144 = vector.load %arg14[%c24, %c0_111] : memref<50x256xbf16, #tpu.memory_space<vmem>>, vector<2x256xbf16>
    tpu.vector_store %arg14[%c24, %c0_111], %143 {strides = array<i32>} : memref<50x256xbf16, #tpu.memory_space<vmem>>, vector<2x256xbf16>,
    %c13 = arith.constant 13 : index
    %c0_112 = arith.constant 0 : index
    %c0_113 = arith.constant 0 : index
    %145 = vector.load %arg2[%c13, %c0_112, %c0_113] : memref<25x128x256xbf16, #tpu.memory_space<vmem>>, vector<1x128x256xbf16>
    %146 = vector.shape_cast %145 : vector<1x128x256xbf16> to vector<128x256xbf16>
    %cst_114 = arith.constant dense<0.000000e+00> : vector<2x256xf32>
    %147 = tpu.matmul %1, %146, %cst_114 {dimension_numbers = #tpu.dot_dimension_numbers<[1], [0], [0], [1], [0, 0, 1, 1], [], []>} : vector<2x128xbf16>, vector<128x256xbf16>, vector<2x256xf32> -> vector<2x256xf32>
    %c13_115 = arith.constant 13 : index
    %c0_116 = arith.constant 0 : index
    %c0_117 = arith.constant 0 : index
    %148 = vector.load %arg3[%c13_115, %c0_116, %c0_117] : memref<25x1x256xf32, #tpu.memory_space<vmem>>, vector<1x1x256xf32>
    %149 = vector.shape_cast %148 : vector<1x1x256xf32> to vector<1x256xf32>
    %150 = vector.broadcast %149 : vector<1x256xf32> to vector<2x256xf32>
    %151 = arith.addf %147, %150 : vector<2x256xf32>
    %cst_118 = arith.constant 0.000000e+00 : f32
    %152 = vector.broadcast %cst_118 : f32 to vector<2x256xf32>
    %153 = arith.maximumf %151, %152 : vector<2x256xf32>
    %154 = arith.truncf %153 : vector<2x256xf32> to vector<2x256xbf16>
    %c26 = arith.constant 26 : index
    %c0_119 = arith.constant 0 : index
    %155 = vector.load %arg14[%c26, %c0_119] : memref<50x256xbf16, #tpu.memory_space<vmem>>, vector<2x256xbf16>
    tpu.vector_store %arg14[%c26, %c0_119], %154 {strides = array<i32>} : memref<50x256xbf16, #tpu.memory_space<vmem>>, vector<2x256xbf16>,
    %c14_120 = arith.constant 14 : index
    %c0_121 = arith.constant 0 : index
    %c0_122 = arith.constant 0 : index
    %156 = vector.load %arg2[%c14_120, %c0_121, %c0_122] : memref<25x128x256xbf16, #tpu.memory_space<vmem>>, vector<1x128x256xbf16>
    %157 = vector.shape_cast %156 : vector<1x128x256xbf16> to vector<128x256xbf16>
    %cst_123 = arith.constant dense<0.000000e+00> : vector<2x256xf32>
    %158 = tpu.matmul %1, %157, %cst_123 {dimension_numbers = #tpu.dot_dimension_numbers<[1], [0], [0], [1], [0, 0, 1, 1], [], []>} : vector<2x128xbf16>, vector<128x256xbf16>, vector<2x256xf32> -> vector<2x256xf32>
    %c14_124 = arith.constant 14 : index
    %c0_125 = arith.constant 0 : index
    %c0_126 = arith.constant 0 : index
    %159 = vector.load %arg3[%c14_124, %c0_125, %c0_126] : memref<25x1x256xf32, #tpu.memory_space<vmem>>, vector<1x1x256xf32>
    %160 = vector.shape_cast %159 : vector<1x1x256xf32> to vector<1x256xf32>
    %161 = vector.broadcast %160 : vector<1x256xf32> to vector<2x256xf32>
    %162 = arith.addf %158, %161 : vector<2x256xf32>
    %cst_127 = arith.constant 0.000000e+00 : f32
    %163 = vector.broadcast %cst_127 : f32 to vector<2x256xf32>
    %164 = arith.maximumf %162, %163 : vector<2x256xf32>
    %165 = arith.truncf %164 : vector<2x256xf32> to vector<2x256xbf16>
    %c28 = arith.constant 28 : index
    %c0_128 = arith.constant 0 : index
    %166 = vector.load %arg14[%c28, %c0_128] : memref<50x256xbf16, #tpu.memory_space<vmem>>, vector<2x256xbf16>
    tpu.vector_store %arg14[%c28, %c0_128], %165 {strides = array<i32>} : memref<50x256xbf16, #tpu.memory_space<vmem>>, vector<2x256xbf16>,
    %c15 = arith.constant 15 : index
    %c0_129 = arith.constant 0 : index
    %c0_130 = arith.constant 0 : index
    %167 = vector.load %arg2[%c15, %c0_129, %c0_130] : memref<25x128x256xbf16, #tpu.memory_space<vmem>>, vector<1x128x256xbf16>
    %168 = vector.shape_cast %167 : vector<1x128x256xbf16> to vector<128x256xbf16>
    %cst_131 = arith.constant dense<0.000000e+00> : vector<2x256xf32>
    %169 = tpu.matmul %1, %168, %cst_131 {dimension_numbers = #tpu.dot_dimension_numbers<[1], [0], [0], [1], [0, 0, 1, 1], [], []>} : vector<2x128xbf16>, vector<128x256xbf16>, vector<2x256xf32> -> vector<2x256xf32>
    %c15_132 = arith.constant 15 : index
    %c0_133 = arith.constant 0 : index
    %c0_134 = arith.constant 0 : index
    %170 = vector.load %arg3[%c15_132, %c0_133, %c0_134] : memref<25x1x256xf32, #tpu.memory_space<vmem>>, vector<1x1x256xf32>
    %171 = vector.shape_cast %170 : vector<1x1x256xf32> to vector<1x256xf32>
    %172 = vector.broadcast %171 : vector<1x256xf32> to vector<2x256xf32>
    %173 = arith.addf %169, %172 : vector<2x256xf32>
    %cst_135 = arith.constant 0.000000e+00 : f32
    %174 = vector.broadcast %cst_135 : f32 to vector<2x256xf32>
    %175 = arith.maximumf %173, %174 : vector<2x256xf32>
    %176 = arith.truncf %175 : vector<2x256xf32> to vector<2x256xbf16>
    %c30 = arith.constant 30 : index
    %c0_136 = arith.constant 0 : index
    %177 = vector.load %arg14[%c30, %c0_136] : memref<50x256xbf16, #tpu.memory_space<vmem>>, vector<2x256xbf16>
    tpu.vector_store %arg14[%c30, %c0_136], %176 {strides = array<i32>} : memref<50x256xbf16, #tpu.memory_space<vmem>>, vector<2x256xbf16>,
    %c16_137 = arith.constant 16 : index
    %c0_138 = arith.constant 0 : index
    %c0_139 = arith.constant 0 : index
    %178 = vector.load %arg2[%c16_137, %c0_138, %c0_139] : memref<25x128x256xbf16, #tpu.memory_space<vmem>>, vector<1x128x256xbf16>
    %179 = vector.shape_cast %178 : vector<1x128x256xbf16> to vector<128x256xbf16>
    %cst_140 = arith.constant dense<0.000000e+00> : vector<2x256xf32>
    %180 = tpu.matmul %1, %179, %cst_140 {dimension_numbers = #tpu.dot_dimension_numbers<[1], [0], [0], [1], [0, 0, 1, 1], [], []>} : vector<2x128xbf16>, vector<128x256xbf16>, vector<2x256xf32> -> vector<2x256xf32>
    %c16_141 = arith.constant 16 : index
    %c0_142 = arith.constant 0 : index
    %c0_143 = arith.constant 0 : index
    %181 = vector.load %arg3[%c16_141, %c0_142, %c0_143] : memref<25x1x256xf32, #tpu.memory_space<vmem>>, vector<1x1x256xf32>
    %182 = vector.shape_cast %181 : vector<1x1x256xf32> to vector<1x256xf32>
    %183 = vector.broadcast %182 : vector<1x256xf32> to vector<2x256xf32>
    %184 = arith.addf %180, %183 : vector<2x256xf32>
    %cst_144 = arith.constant 0.000000e+00 : f32
    %185 = vector.broadcast %cst_144 : f32 to vector<2x256xf32>
    %186 = arith.maximumf %184, %185 : vector<2x256xf32>
    %187 = arith.truncf %186 : vector<2x256xf32> to vector<2x256xbf16>
    %c32 = arith.constant 32 : index
    %c0_145 = arith.constant 0 : index
    %188 = vector.load %arg14[%c32, %c0_145] : memref<50x256xbf16, #tpu.memory_space<vmem>>, vector<2x256xbf16>
    tpu.vector_store %arg14[%c32, %c0_145], %187 {strides = array<i32>} : memref<50x256xbf16, #tpu.memory_space<vmem>>, vector<2x256xbf16>,
    %c17 = arith.constant 17 : index
    %c0_146 = arith.constant 0 : index
    %c0_147 = arith.constant 0 : index
    %189 = vector.load %arg2[%c17, %c0_146, %c0_147] : memref<25x128x256xbf16, #tpu.memory_space<vmem>>, vector<1x128x256xbf16>
    %190 = vector.shape_cast %189 : vector<1x128x256xbf16> to vector<128x256xbf16>
    %cst_148 = arith.constant dense<0.000000e+00> : vector<2x256xf32>
    %191 = tpu.matmul %1, %190, %cst_148 {dimension_numbers = #tpu.dot_dimension_numbers<[1], [0], [0], [1], [0, 0, 1, 1], [], []>} : vector<2x128xbf16>, vector<128x256xbf16>, vector<2x256xf32> -> vector<2x256xf32>
    %c17_149 = arith.constant 17 : index
    %c0_150 = arith.constant 0 : index
    %c0_151 = arith.constant 0 : index
    %192 = vector.load %arg3[%c17_149, %c0_150, %c0_151] : memref<25x1x256xf32, #tpu.memory_space<vmem>>, vector<1x1x256xf32>
    %193 = vector.shape_cast %192 : vector<1x1x256xf32> to vector<1x256xf32>
    %194 = vector.broadcast %193 : vector<1x256xf32> to vector<2x256xf32>
    %195 = arith.addf %191, %194 : vector<2x256xf32>
    %cst_152 = arith.constant 0.000000e+00 : f32
    %196 = vector.broadcast %cst_152 : f32 to vector<2x256xf32>
    %197 = arith.maximumf %195, %196 : vector<2x256xf32>
    %198 = arith.truncf %197 : vector<2x256xf32> to vector<2x256xbf16>
    %c34 = arith.constant 34 : index
    %c0_153 = arith.constant 0 : index
    %199 = vector.load %arg14[%c34, %c0_153] : memref<50x256xbf16, #tpu.memory_space<vmem>>, vector<2x256xbf16>
    tpu.vector_store %arg14[%c34, %c0_153], %198 {strides = array<i32>} : memref<50x256xbf16, #tpu.memory_space<vmem>>, vector<2x256xbf16>,
    %c18_154 = arith.constant 18 : index
    %c0_155 = arith.constant 0 : index
    %c0_156 = arith.constant 0 : index
    %200 = vector.load %arg2[%c18_154, %c0_155, %c0_156] : memref<25x128x256xbf16, #tpu.memory_space<vmem>>, vector<1x128x256xbf16>
    %201 = vector.shape_cast %200 : vector<1x128x256xbf16> to vector<128x256xbf16>
    %cst_157 = arith.constant dense<0.000000e+00> : vector<2x256xf32>
    %202 = tpu.matmul %1, %201, %cst_157 {dimension_numbers = #tpu.dot_dimension_numbers<[1], [0], [0], [1], [0, 0, 1, 1], [], []>} : vector<2x128xbf16>, vector<128x256xbf16>, vector<2x256xf32> -> vector<2x256xf32>
    %c18_158 = arith.constant 18 : index
    %c0_159 = arith.constant 0 : index
    %c0_160 = arith.constant 0 : index
    %203 = vector.load %arg3[%c18_158, %c0_159, %c0_160] : memref<25x1x256xf32, #tpu.memory_space<vmem>>, vector<1x1x256xf32>
    %204 = vector.shape_cast %203 : vector<1x1x256xf32> to vector<1x256xf32>
    %205 = vector.broadcast %204 : vector<1x256xf32> to vector<2x256xf32>
    %206 = arith.addf %202, %205 : vector<2x256xf32>
    %cst_161 = arith.constant 0.000000e+00 : f32
    %207 = vector.broadcast %cst_161 : f32 to vector<2x256xf32>
    %208 = arith.maximumf %206, %207 : vector<2x256xf32>
    %209 = arith.truncf %208 : vector<2x256xf32> to vector<2x256xbf16>
    %c36 = arith.constant 36 : index
    %c0_162 = arith.constant 0 : index
    %210 = vector.load %arg14[%c36, %c0_162] : memref<50x256xbf16, #tpu.memory_space<vmem>>, vector<2x256xbf16>
    tpu.vector_store %arg14[%c36, %c0_162], %209 {strides = array<i32>} : memref<50x256xbf16, #tpu.memory_space<vmem>>, vector<2x256xbf16>,
    %c19 = arith.constant 19 : index
    %c0_163 = arith.constant 0 : index
    %c0_164 = arith.constant 0 : index
    %211 = vector.load %arg2[%c19, %c0_163, %c0_164] : memref<25x128x256xbf16, #tpu.memory_space<vmem>>, vector<1x128x256xbf16>
    %212 = vector.shape_cast %211 : vector<1x128x256xbf16> to vector<128x256xbf16>
    %cst_165 = arith.constant dense<0.000000e+00> : vector<2x256xf32>
    %213 = tpu.matmul %1, %212, %cst_165 {dimension_numbers = #tpu.dot_dimension_numbers<[1], [0], [0], [1], [0, 0, 1, 1], [], []>} : vector<2x128xbf16>, vector<128x256xbf16>, vector<2x256xf32> -> vector<2x256xf32>
    %c19_166 = arith.constant 19 : index
    %c0_167 = arith.constant 0 : index
    %c0_168 = arith.constant 0 : index
    %214 = vector.load %arg3[%c19_166, %c0_167, %c0_168] : memref<25x1x256xf32, #tpu.memory_space<vmem>>, vector<1x1x256xf32>
    %215 = vector.shape_cast %214 : vector<1x1x256xf32> to vector<1x256xf32>
    %216 = vector.broadcast %215 : vector<1x256xf32> to vector<2x256xf32>
    %217 = arith.addf %213, %216 : vector<2x256xf32>
    %cst_169 = arith.constant 0.000000e+00 : f32
    %218 = vector.broadcast %cst_169 : f32 to vector<2x256xf32>
    %219 = arith.maximumf %217, %218 : vector<2x256xf32>
    %220 = arith.truncf %219 : vector<2x256xf32> to vector<2x256xbf16>
    %c38 = arith.constant 38 : index
    %c0_170 = arith.constant 0 : index
    %221 = vector.load %arg14[%c38, %c0_170] : memref<50x256xbf16, #tpu.memory_space<vmem>>, vector<2x256xbf16>
    tpu.vector_store %arg14[%c38, %c0_170], %220 {strides = array<i32>} : memref<50x256xbf16, #tpu.memory_space<vmem>>, vector<2x256xbf16>,
    %c20_171 = arith.constant 20 : index
    %c0_172 = arith.constant 0 : index
    %c0_173 = arith.constant 0 : index
    %222 = vector.load %arg2[%c20_171, %c0_172, %c0_173] : memref<25x128x256xbf16, #tpu.memory_space<vmem>>, vector<1x128x256xbf16>
    %223 = vector.shape_cast %222 : vector<1x128x256xbf16> to vector<128x256xbf16>
    %cst_174 = arith.constant dense<0.000000e+00> : vector<2x256xf32>
    %224 = tpu.matmul %1, %223, %cst_174 {dimension_numbers = #tpu.dot_dimension_numbers<[1], [0], [0], [1], [0, 0, 1, 1], [], []>} : vector<2x128xbf16>, vector<128x256xbf16>, vector<2x256xf32> -> vector<2x256xf32>
    %c20_175 = arith.constant 20 : index
    %c0_176 = arith.constant 0 : index
    %c0_177 = arith.constant 0 : index
    %225 = vector.load %arg3[%c20_175, %c0_176, %c0_177] : memref<25x1x256xf32, #tpu.memory_space<vmem>>, vector<1x1x256xf32>
    %226 = vector.shape_cast %225 : vector<1x1x256xf32> to vector<1x256xf32>
    %227 = vector.broadcast %226 : vector<1x256xf32> to vector<2x256xf32>
    %228 = arith.addf %224, %227 : vector<2x256xf32>
    %cst_178 = arith.constant 0.000000e+00 : f32
    %229 = vector.broadcast %cst_178 : f32 to vector<2x256xf32>
    %230 = arith.maximumf %228, %229 : vector<2x256xf32>
    %231 = arith.truncf %230 : vector<2x256xf32> to vector<2x256xbf16>
    %c40 = arith.constant 40 : index
    %c0_179 = arith.constant 0 : index
    %232 = vector.load %arg14[%c40, %c0_179] : memref<50x256xbf16, #tpu.memory_space<vmem>>, vector<2x256xbf16>
    tpu.vector_store %arg14[%c40, %c0_179], %231 {strides = array<i32>} : memref<50x256xbf16, #tpu.memory_space<vmem>>, vector<2x256xbf16>,
    %c21 = arith.constant 21 : index
    %c0_180 = arith.constant 0 : index
    %c0_181 = arith.constant 0 : index
    %233 = vector.load %arg2[%c21, %c0_180, %c0_181] : memref<25x128x256xbf16, #tpu.memory_space<vmem>>, vector<1x128x256xbf16>
    %234 = vector.shape_cast %233 : vector<1x128x256xbf16> to vector<128x256xbf16>
    %cst_182 = arith.constant dense<0.000000e+00> : vector<2x256xf32>
    %235 = tpu.matmul %1, %234, %cst_182 {dimension_numbers = #tpu.dot_dimension_numbers<[1], [0], [0], [1], [0, 0, 1, 1], [], []>} : vector<2x128xbf16>, vector<128x256xbf16>, vector<2x256xf32> -> vector<2x256xf32>
    %c21_183 = arith.constant 21 : index
    %c0_184 = arith.constant 0 : index
    %c0_185 = arith.constant 0 : index
    %236 = vector.load %arg3[%c21_183, %c0_184, %c0_185] : memref<25x1x256xf32, #tpu.memory_space<vmem>>, vector<1x1x256xf32>
    %237 = vector.shape_cast %236 : vector<1x1x256xf32> to vector<1x256xf32>
    %238 = vector.broadcast %237 : vector<1x256xf32> to vector<2x256xf32>
    %239 = arith.addf %235, %238 : vector<2x256xf32>
    %cst_186 = arith.constant 0.000000e+00 : f32
    %240 = vector.broadcast %cst_186 : f32 to vector<2x256xf32>
    %241 = arith.maximumf %239, %240 : vector<2x256xf32>
    %242 = arith.truncf %241 : vector<2x256xf32> to vector<2x256xbf16>
    %c42 = arith.constant 42 : index
    %c0_187 = arith.constant 0 : index
    %243 = vector.load %arg14[%c42, %c0_187] : memref<50x256xbf16, #tpu.memory_space<vmem>>, vector<2x256xbf16>
    tpu.vector_store %arg14[%c42, %c0_187], %242 {strides = array<i32>} : memref<50x256xbf16, #tpu.memory_space<vmem>>, vector<2x256xbf16>,
    %c22_188 = arith.constant 22 : index
    %c0_189 = arith.constant 0 : index
    %c0_190 = arith.constant 0 : index
    %244 = vector.load %arg2[%c22_188, %c0_189, %c0_190] : memref<25x128x256xbf16, #tpu.memory_space<vmem>>, vector<1x128x256xbf16>
    %245 = vector.shape_cast %244 : vector<1x128x256xbf16> to vector<128x256xbf16>
    %cst_191 = arith.constant dense<0.000000e+00> : vector<2x256xf32>
    %246 = tpu.matmul %1, %245, %cst_191 {dimension_numbers = #tpu.dot_dimension_numbers<[1], [0], [0], [1], [0, 0, 1, 1], [], []>} : vector<2x128xbf16>, vector<128x256xbf16>, vector<2x256xf32> -> vector<2x256xf32>
    %c22_192 = arith.constant 22 : index
    %c0_193 = arith.constant 0 : index
    %c0_194 = arith.constant 0 : index
    %247 = vector.load %arg3[%c22_192, %c0_193, %c0_194] : memref<25x1x256xf32, #tpu.memory_space<vmem>>, vector<1x1x256xf32>
    %248 = vector.shape_cast %247 : vector<1x1x256xf32> to vector<1x256xf32>
    %249 = vector.broadcast %248 : vector<1x256xf32> to vector<2x256xf32>
    %250 = arith.addf %246, %249 : vector<2x256xf32>
    %cst_195 = arith.constant 0.000000e+00 : f32
    %251 = vector.broadcast %cst_195 : f32 to vector<2x256xf32>
    %252 = arith.maximumf %250, %251 : vector<2x256xf32>
    %253 = arith.truncf %252 : vector<2x256xf32> to vector<2x256xbf16>
    %c44 = arith.constant 44 : index
    %c0_196 = arith.constant 0 : index
    %254 = vector.load %arg14[%c44, %c0_196] : memref<50x256xbf16, #tpu.memory_space<vmem>>, vector<2x256xbf16>
    tpu.vector_store %arg14[%c44, %c0_196], %253 {strides = array<i32>} : memref<50x256xbf16, #tpu.memory_space<vmem>>, vector<2x256xbf16>,
    %c23 = arith.constant 23 : index
    %c0_197 = arith.constant 0 : index
    %c0_198 = arith.constant 0 : index
    %255 = vector.load %arg2[%c23, %c0_197, %c0_198] : memref<25x128x256xbf16, #tpu.memory_space<vmem>>, vector<1x128x256xbf16>
    %256 = vector.shape_cast %255 : vector<1x128x256xbf16> to vector<128x256xbf16>
    %cst_199 = arith.constant dense<0.000000e+00> : vector<2x256xf32>
    %257 = tpu.matmul %1, %256, %cst_199 {dimension_numbers = #tpu.dot_dimension_numbers<[1], [0], [0], [1], [0, 0, 1, 1], [], []>} : vector<2x128xbf16>, vector<128x256xbf16>, vector<2x256xf32> -> vector<2x256xf32>
    %c23_200 = arith.constant 23 : index
    %c0_201 = arith.constant 0 : index
    %c0_202 = arith.constant 0 : index
    %258 = vector.load %arg3[%c23_200, %c0_201, %c0_202] : memref<25x1x256xf32, #tpu.memory_space<vmem>>, vector<1x1x256xf32>
    %259 = vector.shape_cast %258 : vector<1x1x256xf32> to vector<1x256xf32>
    %260 = vector.broadcast %259 : vector<1x256xf32> to vector<2x256xf32>
    %261 = arith.addf %257, %260 : vector<2x256xf32>
    %cst_203 = arith.constant 0.000000e+00 : f32
    %262 = vector.broadcast %cst_203 : f32 to vector<2x256xf32>
    %263 = arith.maximumf %261, %262 : vector<2x256xf32>
    %264 = arith.truncf %263 : vector<2x256xf32> to vector<2x256xbf16>
    %c46 = arith.constant 46 : index
    %c0_204 = arith.constant 0 : index
    %265 = vector.load %arg14[%c46, %c0_204] : memref<50x256xbf16, #tpu.memory_space<vmem>>, vector<2x256xbf16>
    tpu.vector_store %arg14[%c46, %c0_204], %264 {strides = array<i32>} : memref<50x256xbf16, #tpu.memory_space<vmem>>, vector<2x256xbf16>,
    %c24_205 = arith.constant 24 : index
    %c0_206 = arith.constant 0 : index
    %c0_207 = arith.constant 0 : index
    %266 = vector.load %arg2[%c24_205, %c0_206, %c0_207] : memref<25x128x256xbf16, #tpu.memory_space<vmem>>, vector<1x128x256xbf16>
    %267 = vector.shape_cast %266 : vector<1x128x256xbf16> to vector<128x256xbf16>
    %cst_208 = arith.constant dense<0.000000e+00> : vector<2x256xf32>
    %268 = tpu.matmul %1, %267, %cst_208 {dimension_numbers = #tpu.dot_dimension_numbers<[1], [0], [0], [1], [0, 0, 1, 1], [], []>} : vector<2x128xbf16>, vector<128x256xbf16>, vector<2x256xf32> -> vector<2x256xf32>
    %c24_209 = arith.constant 24 : index
    %c0_210 = arith.constant 0 : index
    %c0_211 = arith.constant 0 : index
    %269 = vector.load %arg3[%c24_209, %c0_210, %c0_211] : memref<25x1x256xf32, #tpu.memory_space<vmem>>, vector<1x1x256xf32>
    %270 = vector.shape_cast %269 : vector<1x1x256xf32> to vector<1x256xf32>
    %271 = vector.broadcast %270 : vector<1x256xf32> to vector<2x256xf32>
    %272 = arith.addf %268, %271 : vector<2x256xf32>
    %cst_212 = arith.constant 0.000000e+00 : f32
    %273 = vector.broadcast %cst_212 : f32 to vector<2x256xf32>
    %274 = arith.maximumf %272, %273 : vector<2x256xf32>
    %275 = arith.truncf %274 : vector<2x256xf32> to vector<2x256xbf16>
    %c48 = arith.constant 48 : index
    %c0_213 = arith.constant 0 : index
    %276 = vector.load %arg14[%c48, %c0_213] : memref<50x256xbf16, #tpu.memory_space<vmem>>, vector<2x256xbf16>
    tpu.vector_store %arg14[%c48, %c0_213], %275 {strides = array<i32>} : memref<50x256xbf16, #tpu.memory_space<vmem>>, vector<2x256xbf16>,
    %c0_214 = arith.constant 0 : index
    %c0_215 = arith.constant 0 : index
    %277 = vector.load %arg14[%c0_214, %c0_215] : memref<50x256xbf16, #tpu.memory_space<vmem>>, vector<50x256xbf16>
    %cst_216 = arith.constant 0.000000e+00 : f32
    %278 = vector.broadcast %cst_216 : f32 to vector<50x128xf32>
    %c0_217 = arith.constant 0 : index
    %c0_218 = arith.constant 0 : index
    %c0_219 = arith.constant 0 : index
    %279 = vector.load %arg4[%c0_217, %c0_218, %c0_219] : memref<9x256x128xbf16, #tpu.memory_space<vmem>>, vector<1x256x128xbf16>
    %280 = vector.shape_cast %279 : vector<1x256x128xbf16> to vector<256x128xbf16>
    %cst_220 = arith.constant dense<0.000000e+00> : vector<50x128xf32>
    %281 = tpu.matmul %277, %280, %cst_220 {dimension_numbers = #tpu.dot_dimension_numbers<[1], [0], [0], [1], [0, 0, 1, 1], [], []>} : vector<50x256xbf16>, vector<256x128xbf16>, vector<50x128xf32> -> vector<50x128xf32>
    %c0_221 = arith.constant 0 : index
    %c0_222 = arith.constant 0 : index
    %c0_223 = arith.constant 0 : index
    %282 = vector.load %arg6[%c0_221, %c0_222, %c0_223] : memref<9x50x50xbf16, #tpu.memory_space<vmem>>, vector<1x50x50xbf16>
    %283 = vector.shape_cast %282 : vector<1x50x50xbf16> to vector<50x50xbf16>
    %284 = arith.extf %283 : vector<50x50xbf16> to vector<50x50xf32>
    %cst_224 = arith.constant dense<0.000000e+00> : vector<50x128xf32>
    %285 = tpu.matmul %284, %281, %cst_224 {dimension_numbers = #tpu.dot_dimension_numbers<[1], [0], [0], [1], [0, 0, 1, 1], [], []>} : vector<50x50xf32>, vector<50x128xf32>, vector<50x128xf32> -> vector<50x128xf32>
    %286 = arith.addf %278, %285 : vector<50x128xf32>
    %c1_225 = arith.constant 1 : index
    %c0_226 = arith.constant 0 : index
    %c0_227 = arith.constant 0 : index
    %287 = vector.load %arg4[%c1_225, %c0_226, %c0_227] : memref<9x256x128xbf16, #tpu.memory_space<vmem>>, vector<1x256x128xbf16>
    %288 = vector.shape_cast %287 : vector<1x256x128xbf16> to vector<256x128xbf16>
    %cst_228 = arith.constant dense<0.000000e+00> : vector<50x128xf32>
    %289 = tpu.matmul %277, %288, %cst_228 {dimension_numbers = #tpu.dot_dimension_numbers<[1], [0], [0], [1], [0, 0, 1, 1], [], []>} : vector<50x256xbf16>, vector<256x128xbf16>, vector<50x128xf32> -> vector<50x128xf32>
    %c1_229 = arith.constant 1 : index
    %c0_230 = arith.constant 0 : index
    %c0_231 = arith.constant 0 : index
    %290 = vector.load %arg6[%c1_229, %c0_230, %c0_231] : memref<9x50x50xbf16, #tpu.memory_space<vmem>>, vector<1x50x50xbf16>
    %291 = vector.shape_cast %290 : vector<1x50x50xbf16> to vector<50x50xbf16>
    %292 = arith.extf %291 : vector<50x50xbf16> to vector<50x50xf32>
    %cst_232 = arith.constant dense<0.000000e+00> : vector<50x128xf32>
    %293 = tpu.matmul %292, %289, %cst_232 {dimension_numbers = #tpu.dot_dimension_numbers<[1], [0], [0], [1], [0, 0, 1, 1], [], []>} : vector<50x50xf32>, vector<50x128xf32>, vector<50x128xf32> -> vector<50x128xf32>
    %294 = arith.addf %286, %293 : vector<50x128xf32>
    %c2_233 = arith.constant 2 : index
    %c0_234 = arith.constant 0 : index
    %c0_235 = arith.constant 0 : index
    %295 = vector.load %arg4[%c2_233, %c0_234, %c0_235] : memref<9x256x128xbf16, #tpu.memory_space<vmem>>, vector<1x256x128xbf16>
    %296 = vector.shape_cast %295 : vector<1x256x128xbf16> to vector<256x128xbf16>
    %cst_236 = arith.constant dense<0.000000e+00> : vector<50x128xf32>
    %297 = tpu.matmul %277, %296, %cst_236 {dimension_numbers = #tpu.dot_dimension_numbers<[1], [0], [0], [1], [0, 0, 1, 1], [], []>} : vector<50x256xbf16>, vector<256x128xbf16>, vector<50x128xf32> -> vector<50x128xf32>
    %c2_237 = arith.constant 2 : index
    %c0_238 = arith.constant 0 : index
    %c0_239 = arith.constant 0 : index
    %298 = vector.load %arg6[%c2_237, %c0_238, %c0_239] : memref<9x50x50xbf16, #tpu.memory_space<vmem>>, vector<1x50x50xbf16>
    %299 = vector.shape_cast %298 : vector<1x50x50xbf16> to vector<50x50xbf16>
    %300 = arith.extf %299 : vector<50x50xbf16> to vector<50x50xf32>
    %cst_240 = arith.constant dense<0.000000e+00> : vector<50x128xf32>
    %301 = tpu.matmul %300, %297, %cst_240 {dimension_numbers = #tpu.dot_dimension_numbers<[1], [0], [0], [1], [0, 0, 1, 1], [], []>} : vector<50x50xf32>, vector<50x128xf32>, vector<50x128xf32> -> vector<50x128xf32>
    %302 = arith.addf %294, %301 : vector<50x128xf32>
    %c3_241 = arith.constant 3 : index
    %c0_242 = arith.constant 0 : index
    %c0_243 = arith.constant 0 : index
    %303 = vector.load %arg4[%c3_241, %c0_242, %c0_243] : memref<9x256x128xbf16, #tpu.memory_space<vmem>>, vector<1x256x128xbf16>
    %304 = vector.shape_cast %303 : vector<1x256x128xbf16> to vector<256x128xbf16>
    %cst_244 = arith.constant dense<0.000000e+00> : vector<50x128xf32>
    %305 = tpu.matmul %277, %304, %cst_244 {dimension_numbers = #tpu.dot_dimension_numbers<[1], [0], [0], [1], [0, 0, 1, 1], [], []>} : vector<50x256xbf16>, vector<256x128xbf16>, vector<50x128xf32> -> vector<50x128xf32>
    %c3_245 = arith.constant 3 : index
    %c0_246 = arith.constant 0 : index
    %c0_247 = arith.constant 0 : index
    %306 = vector.load %arg6[%c3_245, %c0_246, %c0_247] : memref<9x50x50xbf16, #tpu.memory_space<vmem>>, vector<1x50x50xbf16>
    %307 = vector.shape_cast %306 : vector<1x50x50xbf16> to vector<50x50xbf16>
    %308 = arith.extf %307 : vector<50x50xbf16> to vector<50x50xf32>
    %cst_248 = arith.constant dense<0.000000e+00> : vector<50x128xf32>
    %309 = tpu.matmul %308, %305, %cst_248 {dimension_numbers = #tpu.dot_dimension_numbers<[1], [0], [0], [1], [0, 0, 1, 1], [], []>} : vector<50x50xf32>, vector<50x128xf32>, vector<50x128xf32> -> vector<50x128xf32>
    %310 = arith.addf %302, %309 : vector<50x128xf32>
    %c4_249 = arith.constant 4 : index
    %c0_250 = arith.constant 0 : index
    %c0_251 = arith.constant 0 : index
    %311 = vector.load %arg4[%c4_249, %c0_250, %c0_251] : memref<9x256x128xbf16, #tpu.memory_space<vmem>>, vector<1x256x128xbf16>
    %312 = vector.shape_cast %311 : vector<1x256x128xbf16> to vector<256x128xbf16>
    %cst_252 = arith.constant dense<0.000000e+00> : vector<50x128xf32>
    %313 = tpu.matmul %277, %312, %cst_252 {dimension_numbers = #tpu.dot_dimension_numbers<[1], [0], [0], [1], [0, 0, 1, 1], [], []>} : vector<50x256xbf16>, vector<256x128xbf16>, vector<50x128xf32> -> vector<50x128xf32>
    %c4_253 = arith.constant 4 : index
    %c0_254 = arith.constant 0 : index
    %c0_255 = arith.constant 0 : index
    %314 = vector.load %arg6[%c4_253, %c0_254, %c0_255] : memref<9x50x50xbf16, #tpu.memory_space<vmem>>, vector<1x50x50xbf16>
    %315 = vector.shape_cast %314 : vector<1x50x50xbf16> to vector<50x50xbf16>
    %316 = arith.extf %315 : vector<50x50xbf16> to vector<50x50xf32>
    %cst_256 = arith.constant dense<0.000000e+00> : vector<50x128xf32>
    %317 = tpu.matmul %316, %313, %cst_256 {dimension_numbers = #tpu.dot_dimension_numbers<[1], [0], [0], [1], [0, 0, 1, 1], [], []>} : vector<50x50xf32>, vector<50x128xf32>, vector<50x128xf32> -> vector<50x128xf32>
    %318 = arith.addf %310, %317 : vector<50x128xf32>
    %c5_257 = arith.constant 5 : index
    %c0_258 = arith.constant 0 : index
    %c0_259 = arith.constant 0 : index
    %319 = vector.load %arg4[%c5_257, %c0_258, %c0_259] : memref<9x256x128xbf16, #tpu.memory_space<vmem>>, vector<1x256x128xbf16>
    %320 = vector.shape_cast %319 : vector<1x256x128xbf16> to vector<256x128xbf16>
    %cst_260 = arith.constant dense<0.000000e+00> : vector<50x128xf32>
    %321 = tpu.matmul %277, %320, %cst_260 {dimension_numbers = #tpu.dot_dimension_numbers<[1], [0], [0], [1], [0, 0, 1, 1], [], []>} : vector<50x256xbf16>, vector<256x128xbf16>, vector<50x128xf32> -> vector<50x128xf32>
    %c5_261 = arith.constant 5 : index
    %c0_262 = arith.constant 0 : index
    %c0_263 = arith.constant 0 : index
    %322 = vector.load %arg6[%c5_261, %c0_262, %c0_263] : memref<9x50x50xbf16, #tpu.memory_space<vmem>>, vector<1x50x50xbf16>
    %323 = vector.shape_cast %322 : vector<1x50x50xbf16> to vector<50x50xbf16>
    %324 = arith.extf %323 : vector<50x50xbf16> to vector<50x50xf32>
    %cst_264 = arith.constant dense<0.000000e+00> : vector<50x128xf32>
    %325 = tpu.matmul %324, %321, %cst_264 {dimension_numbers = #tpu.dot_dimension_numbers<[1], [0], [0], [1], [0, 0, 1, 1], [], []>} : vector<50x50xf32>, vector<50x128xf32>, vector<50x128xf32> -> vector<50x128xf32>
    %326 = arith.addf %318, %325 : vector<50x128xf32>
    %c6_265 = arith.constant 6 : index
    %c0_266 = arith.constant 0 : index
    %c0_267 = arith.constant 0 : index
    %327 = vector.load %arg4[%c6_265, %c0_266, %c0_267] : memref<9x256x128xbf16, #tpu.memory_space<vmem>>, vector<1x256x128xbf16>
    %328 = vector.shape_cast %327 : vector<1x256x128xbf16> to vector<256x128xbf16>
    %cst_268 = arith.constant dense<0.000000e+00> : vector<50x128xf32>
    %329 = tpu.matmul %277, %328, %cst_268 {dimension_numbers = #tpu.dot_dimension_numbers<[1], [0], [0], [1], [0, 0, 1, 1], [], []>} : vector<50x256xbf16>, vector<256x128xbf16>, vector<50x128xf32> -> vector<50x128xf32>
    %c6_269 = arith.constant 6 : index
    %c0_270 = arith.constant 0 : index
    %c0_271 = arith.constant 0 : index
    %330 = vector.load %arg6[%c6_269, %c0_270, %c0_271] : memref<9x50x50xbf16, #tpu.memory_space<vmem>>, vector<1x50x50xbf16>
    %331 = vector.shape_cast %330 : vector<1x50x50xbf16> to vector<50x50xbf16>
    %332 = arith.extf %331 : vector<50x50xbf16> to vector<50x50xf32>
    %cst_272 = arith.constant dense<0.000000e+00> : vector<50x128xf32>
    %333 = tpu.matmul %332, %329, %cst_272 {dimension_numbers = #tpu.dot_dimension_numbers<[1], [0], [0], [1], [0, 0, 1, 1], [], []>} : vector<50x50xf32>, vector<50x128xf32>, vector<50x128xf32> -> vector<50x128xf32>
    %334 = arith.addf %326, %333 : vector<50x128xf32>
    %c7_273 = arith.constant 7 : index
    %c0_274 = arith.constant 0 : index
    %c0_275 = arith.constant 0 : index
    %335 = vector.load %arg4[%c7_273, %c0_274, %c0_275] : memref<9x256x128xbf16, #tpu.memory_space<vmem>>, vector<1x256x128xbf16>
    %336 = vector.shape_cast %335 : vector<1x256x128xbf16> to vector<256x128xbf16>
    %cst_276 = arith.constant dense<0.000000e+00> : vector<50x128xf32>
    %337 = tpu.matmul %277, %336, %cst_276 {dimension_numbers = #tpu.dot_dimension_numbers<[1], [0], [0], [1], [0, 0, 1, 1], [], []>} : vector<50x256xbf16>, vector<256x128xbf16>, vector<50x128xf32> -> vector<50x128xf32>
    %c7_277 = arith.constant 7 : index
    %c0_278 = arith.constant 0 : index
    %c0_279 = arith.constant 0 : index
    %338 = vector.load %arg6[%c7_277, %c0_278, %c0_279] : memref<9x50x50xbf16, #tpu.memory_space<vmem>>, vector<1x50x50xbf16>
    %339 = vector.shape_cast %338 : vector<1x50x50xbf16> to vector<50x50xbf16>
    %340 = arith.extf %339 : vector<50x50xbf16> to vector<50x50xf32>
    %cst_280 = arith.constant dense<0.000000e+00> : vector<50x128xf32>
    %341 = tpu.matmul %340, %337, %cst_280 {dimension_numbers = #tpu.dot_dimension_numbers<[1], [0], [0], [1], [0, 0, 1, 1], [], []>} : vector<50x50xf32>, vector<50x128xf32>, vector<50x128xf32> -> vector<50x128xf32>
    %342 = arith.addf %334, %341 : vector<50x128xf32>
    %c8_281 = arith.constant 8 : index
    %c0_282 = arith.constant 0 : index
    %c0_283 = arith.constant 0 : index
    %343 = vector.load %arg4[%c8_281, %c0_282, %c0_283] : memref<9x256x128xbf16, #tpu.memory_space<vmem>>, vector<1x256x128xbf16>
    %344 = vector.shape_cast %343 : vector<1x256x128xbf16> to vector<256x128xbf16>
    %cst_284 = arith.constant dense<0.000000e+00> : vector<50x128xf32>
    %345 = tpu.matmul %277, %344, %cst_284 {dimension_numbers = #tpu.dot_dimension_numbers<[1], [0], [0], [1], [0, 0, 1, 1], [], []>} : vector<50x256xbf16>, vector<256x128xbf16>, vector<50x128xf32> -> vector<50x128xf32>
    %c8_285 = arith.constant 8 : index
    %c0_286 = arith.constant 0 : index
    %c0_287 = arith.constant 0 : index
    %346 = vector.load %arg6[%c8_285, %c0_286, %c0_287] : memref<9x50x50xbf16, #tpu.memory_space<vmem>>, vector<1x50x50xbf16>
    %347 = vector.shape_cast %346 : vector<1x50x50xbf16> to vector<50x50xbf16>
    %348 = arith.extf %347 : vector<50x50xbf16> to vector<50x50xf32>
    %cst_288 = arith.constant dense<0.000000e+00> : vector<50x128xf32>
    %349 = tpu.matmul %348, %345, %cst_288 {dimension_numbers = #tpu.dot_dimension_numbers<[1], [0], [0], [1], [0, 0, 1, 1], [], []>} : vector<50x50xf32>, vector<50x128xf32>, vector<50x128xf32> -> vector<50x128xf32>
    %350 = arith.addf %342, %349 : vector<50x128xf32>
    %c0_289 = arith.constant 0 : index
    %c0_290 = arith.constant 0 : index
    %351 = vector.load %arg5[%c0_289, %c0_290] : memref<1x128xf32, #tpu.memory_space<vmem>>, vector<1x128xf32>
    %352 = vector.broadcast %351 : vector<1x128xf32> to vector<50x128xf32>
    %353 = arith.addf %350, %352 : vector<50x128xf32>
    %cst_291 = arith.constant 0.000000e+00 : f32
    %354 = vector.broadcast %cst_291 : f32 to vector<50x128xf32>
    %355 = arith.maximumf %353, %354 : vector<50x128xf32>
    %356 = arith.truncf %355 : vector<50x128xf32> to vector<50x128xbf16>
    %cst_292 = arith.constant 0.000000e+00 : f32
    %357 = vector.broadcast %cst_292 : f32 to vector<98x64xf32>
    %c0_293 = arith.constant 0 : index
    %c0_294 = arith.constant 0 : index
    %c0_295 = arith.constant 0 : index
    %358 = vector.load %arg7[%c0_293, %c0_294, %c0_295] : memref<9x128x64xbf16, #tpu.memory_space<vmem>>, vector<1x128x64xbf16>
    %359 = vector.shape_cast %358 : vector<1x128x64xbf16> to vector<128x64xbf16>
    %cst_296 = arith.constant dense<0.000000e+00> : vector<50x64xf32>
    %360 = tpu.matmul %356, %359, %cst_296 {dimension_numbers = #tpu.dot_dimension_numbers<[1], [0], [0], [1], [0, 0, 1, 1], [], []>} : vector<50x128xbf16>, vector<128x64xbf16>, vector<50x64xf32> -> vector<50x64xf32>
    %c0_297 = arith.constant 0 : index
    %c0_298 = arith.constant 0 : index
    %c0_299 = arith.constant 0 : index
    %361 = vector.load %arg9[%c0_297, %c0_298, %c0_299] : memref<9x98x50xbf16, #tpu.memory_space<vmem>>, vector<1x98x50xbf16>
    %362 = vector.shape_cast %361 : vector<1x98x50xbf16> to vector<98x50xbf16>
    %363 = arith.extf %362 : vector<98x50xbf16> to vector<98x50xf32>
    %cst_300 = arith.constant dense<0.000000e+00> : vector<98x64xf32>
    %364 = tpu.matmul %363, %360, %cst_300 {dimension_numbers = #tpu.dot_dimension_numbers<[1], [0], [0], [1], [0, 0, 1, 1], [], []>} : vector<98x50xf32>, vector<50x64xf32>, vector<98x64xf32> -> vector<98x64xf32>
    %365 = arith.addf %357, %364 : vector<98x64xf32>
    %c1_301 = arith.constant 1 : index
    %c0_302 = arith.constant 0 : index
    %c0_303 = arith.constant 0 : index
    %366 = vector.load %arg7[%c1_301, %c0_302, %c0_303] : memref<9x128x64xbf16, #tpu.memory_space<vmem>>, vector<1x128x64xbf16>
    %367 = vector.shape_cast %366 : vector<1x128x64xbf16> to vector<128x64xbf16>
    %cst_304 = arith.constant dense<0.000000e+00> : vector<50x64xf32>
    %368 = tpu.matmul %356, %367, %cst_304 {dimension_numbers = #tpu.dot_dimension_numbers<[1], [0], [0], [1], [0, 0, 1, 1], [], []>} : vector<50x128xbf16>, vector<128x64xbf16>, vector<50x64xf32> -> vector<50x64xf32>
    %c1_305 = arith.constant 1 : index
    %c0_306 = arith.constant 0 : index
    %c0_307 = arith.constant 0 : index
    %369 = vector.load %arg9[%c1_305, %c0_306, %c0_307] : memref<9x98x50xbf16, #tpu.memory_space<vmem>>, vector<1x98x50xbf16>
    %370 = vector.shape_cast %369 : vector<1x98x50xbf16> to vector<98x50xbf16>
    %371 = arith.extf %370 : vector<98x50xbf16> to vector<98x50xf32>
    %cst_308 = arith.constant dense<0.000000e+00> : vector<98x64xf32>
    %372 = tpu.matmul %371, %368, %cst_308 {dimension_numbers = #tpu.dot_dimension_numbers<[1], [0], [0], [1], [0, 0, 1, 1], [], []>} : vector<98x50xf32>, vector<50x64xf32>, vector<98x64xf32> -> vector<98x64xf32>
    %373 = arith.addf %365, %372 : vector<98x64xf32>
    %c2_309 = arith.constant 2 : index
    %c0_310 = arith.constant 0 : index
    %c0_311 = arith.constant 0 : index
    %374 = vector.load %arg7[%c2_309, %c0_310, %c0_311] : memref<9x128x64xbf16, #tpu.memory_space<vmem>>, vector<1x128x64xbf16>
    %375 = vector.shape_cast %374 : vector<1x128x64xbf16> to vector<128x64xbf16>
    %cst_312 = arith.constant dense<0.000000e+00> : vector<50x64xf32>
    %376 = tpu.matmul %356, %375, %cst_312 {dimension_numbers = #tpu.dot_dimension_numbers<[1], [0], [0], [1], [0, 0, 1, 1], [], []>} : vector<50x128xbf16>, vector<128x64xbf16>, vector<50x64xf32> -> vector<50x64xf32>
    %c2_313 = arith.constant 2 : index
    %c0_314 = arith.constant 0 : index
    %c0_315 = arith.constant 0 : index
    %377 = vector.load %arg9[%c2_313, %c0_314, %c0_315] : memref<9x98x50xbf16, #tpu.memory_space<vmem>>, vector<1x98x50xbf16>
    %378 = vector.shape_cast %377 : vector<1x98x50xbf16> to vector<98x50xbf16>
    %379 = arith.extf %378 : vector<98x50xbf16> to vector<98x50xf32>
    %cst_316 = arith.constant dense<0.000000e+00> : vector<98x64xf32>
    %380 = tpu.matmul %379, %376, %cst_316 {dimension_numbers = #tpu.dot_dimension_numbers<[1], [0], [0], [1], [0, 0, 1, 1], [], []>} : vector<98x50xf32>, vector<50x64xf32>, vector<98x64xf32> -> vector<98x64xf32>
    %381 = arith.addf %373, %380 : vector<98x64xf32>
    %c3_317 = arith.constant 3 : index
    %c0_318 = arith.constant 0 : index
    %c0_319 = arith.constant 0 : index
    %382 = vector.load %arg7[%c3_317, %c0_318, %c0_319] : memref<9x128x64xbf16, #tpu.memory_space<vmem>>, vector<1x128x64xbf16>
    %383 = vector.shape_cast %382 : vector<1x128x64xbf16> to vector<128x64xbf16>
    %cst_320 = arith.constant dense<0.000000e+00> : vector<50x64xf32>
    %384 = tpu.matmul %356, %383, %cst_320 {dimension_numbers = #tpu.dot_dimension_numbers<[1], [0], [0], [1], [0, 0, 1, 1], [], []>} : vector<50x128xbf16>, vector<128x64xbf16>, vector<50x64xf32> -> vector<50x64xf32>
    %c3_321 = arith.constant 3 : index
    %c0_322 = arith.constant 0 : index
    %c0_323 = arith.constant 0 : index
    %385 = vector.load %arg9[%c3_321, %c0_322, %c0_323] : memref<9x98x50xbf16, #tpu.memory_space<vmem>>, vector<1x98x50xbf16>
    %386 = vector.shape_cast %385 : vector<1x98x50xbf16> to vector<98x50xbf16>
    %387 = arith.extf %386 : vector<98x50xbf16> to vector<98x50xf32>
    %cst_324 = arith.constant dense<0.000000e+00> : vector<98x64xf32>
    %388 = tpu.matmul %387, %384, %cst_324 {dimension_numbers = #tpu.dot_dimension_numbers<[1], [0], [0], [1], [0, 0, 1, 1], [], []>} : vector<98x50xf32>, vector<50x64xf32>, vector<98x64xf32> -> vector<98x64xf32>
    %389 = arith.addf %381, %388 : vector<98x64xf32>
    %c4_325 = arith.constant 4 : index
    %c0_326 = arith.constant 0 : index
    %c0_327 = arith.constant 0 : index
    %390 = vector.load %arg7[%c4_325, %c0_326, %c0_327] : memref<9x128x64xbf16, #tpu.memory_space<vmem>>, vector<1x128x64xbf16>
    %391 = vector.shape_cast %390 : vector<1x128x64xbf16> to vector<128x64xbf16>
    %cst_328 = arith.constant dense<0.000000e+00> : vector<50x64xf32>
    %392 = tpu.matmul %356, %391, %cst_328 {dimension_numbers = #tpu.dot_dimension_numbers<[1], [0], [0], [1], [0, 0, 1, 1], [], []>} : vector<50x128xbf16>, vector<128x64xbf16>, vector<50x64xf32> -> vector<50x64xf32>
    %c4_329 = arith.constant 4 : index
    %c0_330 = arith.constant 0 : index
    %c0_331 = arith.constant 0 : index
    %393 = vector.load %arg9[%c4_329, %c0_330, %c0_331] : memref<9x98x50xbf16, #tpu.memory_space<vmem>>, vector<1x98x50xbf16>
    %394 = vector.shape_cast %393 : vector<1x98x50xbf16> to vector<98x50xbf16>
    %395 = arith.extf %394 : vector<98x50xbf16> to vector<98x50xf32>
    %cst_332 = arith.constant dense<0.000000e+00> : vector<98x64xf32>
    %396 = tpu.matmul %395, %392, %cst_332 {dimension_numbers = #tpu.dot_dimension_numbers<[1], [0], [0], [1], [0, 0, 1, 1], [], []>} : vector<98x50xf32>, vector<50x64xf32>, vector<98x64xf32> -> vector<98x64xf32>
    %397 = arith.addf %389, %396 : vector<98x64xf32>
    %c5_333 = arith.constant 5 : index
    %c0_334 = arith.constant 0 : index
    %c0_335 = arith.constant 0 : index
    %398 = vector.load %arg7[%c5_333, %c0_334, %c0_335] : memref<9x128x64xbf16, #tpu.memory_space<vmem>>, vector<1x128x64xbf16>
    %399 = vector.shape_cast %398 : vector<1x128x64xbf16> to vector<128x64xbf16>
    %cst_336 = arith.constant dense<0.000000e+00> : vector<50x64xf32>
    %400 = tpu.matmul %356, %399, %cst_336 {dimension_numbers = #tpu.dot_dimension_numbers<[1], [0], [0], [1], [0, 0, 1, 1], [], []>} : vector<50x128xbf16>, vector<128x64xbf16>, vector<50x64xf32> -> vector<50x64xf32>
    %c5_337 = arith.constant 5 : index
    %c0_338 = arith.constant 0 : index
    %c0_339 = arith.constant 0 : index
    %401 = vector.load %arg9[%c5_337, %c0_338, %c0_339] : memref<9x98x50xbf16, #tpu.memory_space<vmem>>, vector<1x98x50xbf16>
    %402 = vector.shape_cast %401 : vector<1x98x50xbf16> to vector<98x50xbf16>
    %403 = arith.extf %402 : vector<98x50xbf16> to vector<98x50xf32>
    %cst_340 = arith.constant dense<0.000000e+00> : vector<98x64xf32>
    %404 = tpu.matmul %403, %400, %cst_340 {dimension_numbers = #tpu.dot_dimension_numbers<[1], [0], [0], [1], [0, 0, 1, 1], [], []>} : vector<98x50xf32>, vector<50x64xf32>, vector<98x64xf32> -> vector<98x64xf32>
    %405 = arith.addf %397, %404 : vector<98x64xf32>
    %c6_341 = arith.constant 6 : index
    %c0_342 = arith.constant 0 : index
    %c0_343 = arith.constant 0 : index
    %406 = vector.load %arg7[%c6_341, %c0_342, %c0_343] : memref<9x128x64xbf16, #tpu.memory_space<vmem>>, vector<1x128x64xbf16>
    %407 = vector.shape_cast %406 : vector<1x128x64xbf16> to vector<128x64xbf16>
    %cst_344 = arith.constant dense<0.000000e+00> : vector<50x64xf32>
    %408 = tpu.matmul %356, %407, %cst_344 {dimension_numbers = #tpu.dot_dimension_numbers<[1], [0], [0], [1], [0, 0, 1, 1], [], []>} : vector<50x128xbf16>, vector<128x64xbf16>, vector<50x64xf32> -> vector<50x64xf32>
    %c6_345 = arith.constant 6 : index
    %c0_346 = arith.constant 0 : index
    %c0_347 = arith.constant 0 : index
    %409 = vector.load %arg9[%c6_345, %c0_346, %c0_347] : memref<9x98x50xbf16, #tpu.memory_space<vmem>>, vector<1x98x50xbf16>
    %410 = vector.shape_cast %409 : vector<1x98x50xbf16> to vector<98x50xbf16>
    %411 = arith.extf %410 : vector<98x50xbf16> to vector<98x50xf32>
    %cst_348 = arith.constant dense<0.000000e+00> : vector<98x64xf32>
    %412 = tpu.matmul %411, %408, %cst_348 {dimension_numbers = #tpu.dot_dimension_numbers<[1], [0], [0], [1], [0, 0, 1, 1], [], []>} : vector<98x50xf32>, vector<50x64xf32>, vector<98x64xf32> -> vector<98x64xf32>
    %413 = arith.addf %405, %412 : vector<98x64xf32>
    %c7_349 = arith.constant 7 : index
    %c0_350 = arith.constant 0 : index
    %c0_351 = arith.constant 0 : index
    %414 = vector.load %arg7[%c7_349, %c0_350, %c0_351] : memref<9x128x64xbf16, #tpu.memory_space<vmem>>, vector<1x128x64xbf16>
    %415 = vector.shape_cast %414 : vector<1x128x64xbf16> to vector<128x64xbf16>
    %cst_352 = arith.constant dense<0.000000e+00> : vector<50x64xf32>
    %416 = tpu.matmul %356, %415, %cst_352 {dimension_numbers = #tpu.dot_dimension_numbers<[1], [0], [0], [1], [0, 0, 1, 1], [], []>} : vector<50x128xbf16>, vector<128x64xbf16>, vector<50x64xf32> -> vector<50x64xf32>
    %c7_353 = arith.constant 7 : index
    %c0_354 = arith.constant 0 : index
    %c0_355 = arith.constant 0 : index
    %417 = vector.load %arg9[%c7_353, %c0_354, %c0_355] : memref<9x98x50xbf16, #tpu.memory_space<vmem>>, vector<1x98x50xbf16>
    %418 = vector.shape_cast %417 : vector<1x98x50xbf16> to vector<98x50xbf16>
    %419 = arith.extf %418 : vector<98x50xbf16> to vector<98x50xf32>
    %cst_356 = arith.constant dense<0.000000e+00> : vector<98x64xf32>
    %420 = tpu.matmul %419, %416, %cst_356 {dimension_numbers = #tpu.dot_dimension_numbers<[1], [0], [0], [1], [0, 0, 1, 1], [], []>} : vector<98x50xf32>, vector<50x64xf32>, vector<98x64xf32> -> vector<98x64xf32>
    %421 = arith.addf %413, %420 : vector<98x64xf32>
    %c8_357 = arith.constant 8 : index
    %c0_358 = arith.constant 0 : index
    %c0_359 = arith.constant 0 : index
    %422 = vector.load %arg7[%c8_357, %c0_358, %c0_359] : memref<9x128x64xbf16, #tpu.memory_space<vmem>>, vector<1x128x64xbf16>
    %423 = vector.shape_cast %422 : vector<1x128x64xbf16> to vector<128x64xbf16>
    %cst_360 = arith.constant dense<0.000000e+00> : vector<50x64xf32>
    %424 = tpu.matmul %356, %423, %cst_360 {dimension_numbers = #tpu.dot_dimension_numbers<[1], [0], [0], [1], [0, 0, 1, 1], [], []>} : vector<50x128xbf16>, vector<128x64xbf16>, vector<50x64xf32> -> vector<50x64xf32>
    %c8_361 = arith.constant 8 : index
    %c0_362 = arith.constant 0 : index
    %c0_363 = arith.constant 0 : index
    %425 = vector.load %arg9[%c8_361, %c0_362, %c0_363] : memref<9x98x50xbf16, #tpu.memory_space<vmem>>, vector<1x98x50xbf16>
    %426 = vector.shape_cast %425 : vector<1x98x50xbf16> to vector<98x50xbf16>
    %427 = arith.extf %426 : vector<98x50xbf16> to vector<98x50xf32>
    %cst_364 = arith.constant dense<0.000000e+00> : vector<98x64xf32>
    %428 = tpu.matmul %427, %424, %cst_364 {dimension_numbers = #tpu.dot_dimension_numbers<[1], [0], [0], [1], [0, 0, 1, 1], [], []>} : vector<98x50xf32>, vector<50x64xf32>, vector<98x64xf32> -> vector<98x64xf32>
    %429 = arith.addf %421, %428 : vector<98x64xf32>
    %c0_365 = arith.constant 0 : index
    %c0_366 = arith.constant 0 : index
    %430 = vector.load %arg8[%c0_365, %c0_366] : memref<1x64xf32, #tpu.memory_space<vmem>>, vector<1x64xf32>
    %431 = vector.broadcast %430 : vector<1x64xf32> to vector<98x64xf32>
    %432 = arith.addf %429, %431 : vector<98x64xf32>
    %cst_367 = arith.constant 0.000000e+00 : f32
    %433 = vector.broadcast %cst_367 : f32 to vector<98x64xf32>
    %434 = arith.maximumf %432, %433 : vector<98x64xf32>
    %435 = arith.truncf %434 : vector<98x64xf32> to vector<98x64xbf16>
    %c0_368 = arith.constant 0 : index
    %c0_369 = arith.constant 0 : index
    %436 = vector.load %arg10[%c0_368, %c0_369] : memref<64x16xbf16, #tpu.memory_space<vmem>>, vector<64x16xbf16>
    %cst_370 = arith.constant dense<0.000000e+00> : vector<98x16xf32>
    %437 = tpu.matmul %435, %436, %cst_370 {dimension_numbers = #tpu.dot_dimension_numbers<[1], [0], [0], [1], [0, 0, 1, 1], [], []>} : vector<98x64xbf16>, vector<64x16xbf16>, vector<98x16xf32> -> vector<98x16xf32>
    %cst_371 = arith.constant 0.000000e+00 : f32
    %438 = vector.broadcast %cst_371 : f32 to vector<2x256xf32>
    %439 = vector.extract_strided_slice %437 {offsets = [0, 0], sizes = [2, 16], strides = [1, 1]} : vector<98x16xf32> to vector<2x16xf32>
    %c0_372 = arith.constant 0 : index
    %c0_373 = arith.constant 0 : index
    %c0_374 = arith.constant 0 : index
    %440 = vector.load %arg11[%c0_372, %c0_373, %c0_374] : memref<49x16x256xbf16, #tpu.memory_space<vmem>>, vector<1x16x256xbf16>
    %441 = vector.shape_cast %440 : vector<1x16x256xbf16> to vector<16x256xbf16>
    %cst_375 = arith.constant dense<0.000000e+00> : vector<2x256xf32>
    %442 = tpu.matmul %439, %441, %cst_375 {dimension_numbers = #tpu.dot_dimension_numbers<[1], [0], [0], [1], [0, 0, 1, 1], [], []>} : vector<2x16xf32>, vector<16x256xbf16>, vector<2x256xf32> -> vector<2x256xf32>
    %443 = arith.addf %438, %442 : vector<2x256xf32>
    %444 = vector.extract_strided_slice %437 {offsets = [2, 0], sizes = [2, 16], strides = [1, 1]} : vector<98x16xf32> to vector<2x16xf32>
    %c1_376 = arith.constant 1 : index
    %c0_377 = arith.constant 0 : index
    %c0_378 = arith.constant 0 : index
    %445 = vector.load %arg11[%c1_376, %c0_377, %c0_378] : memref<49x16x256xbf16, #tpu.memory_space<vmem>>, vector<1x16x256xbf16>
    %446 = vector.shape_cast %445 : vector<1x16x256xbf16> to vector<16x256xbf16>
    %cst_379 = arith.constant dense<0.000000e+00> : vector<2x256xf32>
    %447 = tpu.matmul %444, %446, %cst_379 {dimension_numbers = #tpu.dot_dimension_numbers<[1], [0], [0], [1], [0, 0, 1, 1], [], []>} : vector<2x16xf32>, vector<16x256xbf16>, vector<2x256xf32> -> vector<2x256xf32>
    %448 = arith.addf %443, %447 : vector<2x256xf32>
    %449 = vector.extract_strided_slice %437 {offsets = [4, 0], sizes = [2, 16], strides = [1, 1]} : vector<98x16xf32> to vector<2x16xf32>
    %c2_380 = arith.constant 2 : index
    %c0_381 = arith.constant 0 : index
    %c0_382 = arith.constant 0 : index
    %450 = vector.load %arg11[%c2_380, %c0_381, %c0_382] : memref<49x16x256xbf16, #tpu.memory_space<vmem>>, vector<1x16x256xbf16>
    %451 = vector.shape_cast %450 : vector<1x16x256xbf16> to vector<16x256xbf16>
    %cst_383 = arith.constant dense<0.000000e+00> : vector<2x256xf32>
    %452 = tpu.matmul %449, %451, %cst_383 {dimension_numbers = #tpu.dot_dimension_numbers<[1], [0], [0], [1], [0, 0, 1, 1], [], []>} : vector<2x16xf32>, vector<16x256xbf16>, vector<2x256xf32> -> vector<2x256xf32>
    %453 = arith.addf %448, %452 : vector<2x256xf32>
    %454 = vector.extract_strided_slice %437 {offsets = [6, 0], sizes = [2, 16], strides = [1, 1]} : vector<98x16xf32> to vector<2x16xf32>
    %c3_384 = arith.constant 3 : index
    %c0_385 = arith.constant 0 : index
    %c0_386 = arith.constant 0 : index
    %455 = vector.load %arg11[%c3_384, %c0_385, %c0_386] : memref<49x16x256xbf16, #tpu.memory_space<vmem>>, vector<1x16x256xbf16>
    %456 = vector.shape_cast %455 : vector<1x16x256xbf16> to vector<16x256xbf16>
    %cst_387 = arith.constant dense<0.000000e+00> : vector<2x256xf32>
    %457 = tpu.matmul %454, %456, %cst_387 {dimension_numbers = #tpu.dot_dimension_numbers<[1], [0], [0], [1], [0, 0, 1, 1], [], []>} : vector<2x16xf32>, vector<16x256xbf16>, vector<2x256xf32> -> vector<2x256xf32>
    %458 = arith.addf %453, %457 : vector<2x256xf32>
    %459 = vector.extract_strided_slice %437 {offsets = [8, 0], sizes = [2, 16], strides = [1, 1]} : vector<98x16xf32> to vector<2x16xf32>
    %c4_388 = arith.constant 4 : index
    %c0_389 = arith.constant 0 : index
    %c0_390 = arith.constant 0 : index
    %460 = vector.load %arg11[%c4_388, %c0_389, %c0_390] : memref<49x16x256xbf16, #tpu.memory_space<vmem>>, vector<1x16x256xbf16>
    %461 = vector.shape_cast %460 : vector<1x16x256xbf16> to vector<16x256xbf16>
    %cst_391 = arith.constant dense<0.000000e+00> : vector<2x256xf32>
    %462 = tpu.matmul %459, %461, %cst_391 {dimension_numbers = #tpu.dot_dimension_numbers<[1], [0], [0], [1], [0, 0, 1, 1], [], []>} : vector<2x16xf32>, vector<16x256xbf16>, vector<2x256xf32> -> vector<2x256xf32>
    %463 = arith.addf %458, %462 : vector<2x256xf32>
    %464 = vector.extract_strided_slice %437 {offsets = [10, 0], sizes = [2, 16], strides = [1, 1]} : vector<98x16xf32> to vector<2x16xf32>
    %c5_392 = arith.constant 5 : index
    %c0_393 = arith.constant 0 : index
    %c0_394 = arith.constant 0 : index
    %465 = vector.load %arg11[%c5_392, %c0_393, %c0_394] : memref<49x16x256xbf16, #tpu.memory_space<vmem>>, vector<1x16x256xbf16>
    %466 = vector.shape_cast %465 : vector<1x16x256xbf16> to vector<16x256xbf16>
    %cst_395 = arith.constant dense<0.000000e+00> : vector<2x256xf32>
    %467 = tpu.matmul %464, %466, %cst_395 {dimension_numbers = #tpu.dot_dimension_numbers<[1], [0], [0], [1], [0, 0, 1, 1], [], []>} : vector<2x16xf32>, vector<16x256xbf16>, vector<2x256xf32> -> vector<2x256xf32>
    %468 = arith.addf %463, %467 : vector<2x256xf32>
    %469 = vector.extract_strided_slice %437 {offsets = [12, 0], sizes = [2, 16], strides = [1, 1]} : vector<98x16xf32> to vector<2x16xf32>
    %c6_396 = arith.constant 6 : index
    %c0_397 = arith.constant 0 : index
    %c0_398 = arith.constant 0 : index
    %470 = vector.load %arg11[%c6_396, %c0_397, %c0_398] : memref<49x16x256xbf16, #tpu.memory_space<vmem>>, vector<1x16x256xbf16>
    %471 = vector.shape_cast %470 : vector<1x16x256xbf16> to vector<16x256xbf16>
    %cst_399 = arith.constant dense<0.000000e+00> : vector<2x256xf32>
    %472 = tpu.matmul %469, %471, %cst_399 {dimension_numbers = #tpu.dot_dimension_numbers<[1], [0], [0], [1], [0, 0, 1, 1], [], []>} : vector<2x16xf32>, vector<16x256xbf16>, vector<2x256xf32> -> vector<2x256xf32>
    %473 = arith.addf %468, %472 : vector<2x256xf32>
    %474 = vector.extract_strided_slice %437 {offsets = [14, 0], sizes = [2, 16], strides = [1, 1]} : vector<98x16xf32> to vector<2x16xf32>
    %c7_400 = arith.constant 7 : index
    %c0_401 = arith.constant 0 : index
    %c0_402 = arith.constant 0 : index
    %475 = vector.load %arg11[%c7_400, %c0_401, %c0_402] : memref<49x16x256xbf16, #tpu.memory_space<vmem>>, vector<1x16x256xbf16>
    %476 = vector.shape_cast %475 : vector<1x16x256xbf16> to vector<16x256xbf16>
    %cst_403 = arith.constant dense<0.000000e+00> : vector<2x256xf32>
    %477 = tpu.matmul %474, %476, %cst_403 {dimension_numbers = #tpu.dot_dimension_numbers<[1], [0], [0], [1], [0, 0, 1, 1], [], []>} : vector<2x16xf32>, vector<16x256xbf16>, vector<2x256xf32> -> vector<2x256xf32>
    %478 = arith.addf %473, %477 : vector<2x256xf32>
    %479 = vector.extract_strided_slice %437 {offsets = [16, 0], sizes = [2, 16], strides = [1, 1]} : vector<98x16xf32> to vector<2x16xf32>
    %c8_404 = arith.constant 8 : index
    %c0_405 = arith.constant 0 : index
    %c0_406 = arith.constant 0 : index
    %480 = vector.load %arg11[%c8_404, %c0_405, %c0_406] : memref<49x16x256xbf16, #tpu.memory_space<vmem>>, vector<1x16x256xbf16>
    %481 = vector.shape_cast %480 : vector<1x16x256xbf16> to vector<16x256xbf16>
    %cst_407 = arith.constant dense<0.000000e+00> : vector<2x256xf32>
    %482 = tpu.matmul %479, %481, %cst_407 {dimension_numbers = #tpu.dot_dimension_numbers<[1], [0], [0], [1], [0, 0, 1, 1], [], []>} : vector<2x16xf32>, vector<16x256xbf16>, vector<2x256xf32> -> vector<2x256xf32>
    %483 = arith.addf %478, %482 : vector<2x256xf32>
    %484 = vector.extract_strided_slice %437 {offsets = [18, 0], sizes = [2, 16], strides = [1, 1]} : vector<98x16xf32> to vector<2x16xf32>
    %c9_408 = arith.constant 9 : index
    %c0_409 = arith.constant 0 : index
    %c0_410 = arith.constant 0 : index
    %485 = vector.load %arg11[%c9_408, %c0_409, %c0_410] : memref<49x16x256xbf16, #tpu.memory_space<vmem>>, vector<1x16x256xbf16>
    %486 = vector.shape_cast %485 : vector<1x16x256xbf16> to vector<16x256xbf16>
    %cst_411 = arith.constant dense<0.000000e+00> : vector<2x256xf32>
    %487 = tpu.matmul %484, %486, %cst_411 {dimension_numbers = #tpu.dot_dimension_numbers<[1], [0], [0], [1], [0, 0, 1, 1], [], []>} : vector<2x16xf32>, vector<16x256xbf16>, vector<2x256xf32> -> vector<2x256xf32>
    %488 = arith.addf %483, %487 : vector<2x256xf32>
    %489 = vector.extract_strided_slice %437 {offsets = [20, 0], sizes = [2, 16], strides = [1, 1]} : vector<98x16xf32> to vector<2x16xf32>
    %c10_412 = arith.constant 10 : index
    %c0_413 = arith.constant 0 : index
    %c0_414 = arith.constant 0 : index
    %490 = vector.load %arg11[%c10_412, %c0_413, %c0_414] : memref<49x16x256xbf16, #tpu.memory_space<vmem>>, vector<1x16x256xbf16>
    %491 = vector.shape_cast %490 : vector<1x16x256xbf16> to vector<16x256xbf16>
    %cst_415 = arith.constant dense<0.000000e+00> : vector<2x256xf32>
    %492 = tpu.matmul %489, %491, %cst_415 {dimension_numbers = #tpu.dot_dimension_numbers<[1], [0], [0], [1], [0, 0, 1, 1], [], []>} : vector<2x16xf32>, vector<16x256xbf16>, vector<2x256xf32> -> vector<2x256xf32>
    %493 = arith.addf %488, %492 : vector<2x256xf32>
    %494 = vector.extract_strided_slice %437 {offsets = [22, 0], sizes = [2, 16], strides = [1, 1]} : vector<98x16xf32> to vector<2x16xf32>
    %c11_416 = arith.constant 11 : index
    %c0_417 = arith.constant 0 : index
    %c0_418 = arith.constant 0 : index
    %495 = vector.load %arg11[%c11_416, %c0_417, %c0_418] : memref<49x16x256xbf16, #tpu.memory_space<vmem>>, vector<1x16x256xbf16>
    %496 = vector.shape_cast %495 : vector<1x16x256xbf16> to vector<16x256xbf16>
    %cst_419 = arith.constant dense<0.000000e+00> : vector<2x256xf32>
    %497 = tpu.matmul %494, %496, %cst_419 {dimension_numbers = #tpu.dot_dimension_numbers<[1], [0], [0], [1], [0, 0, 1, 1], [], []>} : vector<2x16xf32>, vector<16x256xbf16>, vector<2x256xf32> -> vector<2x256xf32>
    %498 = arith.addf %493, %497 : vector<2x256xf32>
    %499 = vector.extract_strided_slice %437 {offsets = [24, 0], sizes = [2, 16], strides = [1, 1]} : vector<98x16xf32> to vector<2x16xf32>
    %c12_420 = arith.constant 12 : index
    %c0_421 = arith.constant 0 : index
    %c0_422 = arith.constant 0 : index
    %500 = vector.load %arg11[%c12_420, %c0_421, %c0_422] : memref<49x16x256xbf16, #tpu.memory_space<vmem>>, vector<1x16x256xbf16>
    %501 = vector.shape_cast %500 : vector<1x16x256xbf16> to vector<16x256xbf16>
    %cst_423 = arith.constant dense<0.000000e+00> : vector<2x256xf32>
    %502 = tpu.matmul %499, %501, %cst_423 {dimension_numbers = #tpu.dot_dimension_numbers<[1], [0], [0], [1], [0, 0, 1, 1], [], []>} : vector<2x16xf32>, vector<16x256xbf16>, vector<2x256xf32> -> vector<2x256xf32>
    %503 = arith.addf %498, %502 : vector<2x256xf32>
    %504 = vector.extract_strided_slice %437 {offsets = [26, 0], sizes = [2, 16], strides = [1, 1]} : vector<98x16xf32> to vector<2x16xf32>
    %c13_424 = arith.constant 13 : index
    %c0_425 = arith.constant 0 : index
    %c0_426 = arith.constant 0 : index
    %505 = vector.load %arg11[%c13_424, %c0_425, %c0_426] : memref<49x16x256xbf16, #tpu.memory_space<vmem>>, vector<1x16x256xbf16>
    %506 = vector.shape_cast %505 : vector<1x16x256xbf16> to vector<16x256xbf16>
    %cst_427 = arith.constant dense<0.000000e+00> : vector<2x256xf32>
    %507 = tpu.matmul %504, %506, %cst_427 {dimension_numbers = #tpu.dot_dimension_numbers<[1], [0], [0], [1], [0, 0, 1, 1], [], []>} : vector<2x16xf32>, vector<16x256xbf16>, vector<2x256xf32> -> vector<2x256xf32>
    %508 = arith.addf %503, %507 : vector<2x256xf32>
    %509 = vector.extract_strided_slice %437 {offsets = [28, 0], sizes = [2, 16], strides = [1, 1]} : vector<98x16xf32> to vector<2x16xf32>
    %c14_428 = arith.constant 14 : index
    %c0_429 = arith.constant 0 : index
    %c0_430 = arith.constant 0 : index
    %510 = vector.load %arg11[%c14_428, %c0_429, %c0_430] : memref<49x16x256xbf16, #tpu.memory_space<vmem>>, vector<1x16x256xbf16>
    %511 = vector.shape_cast %510 : vector<1x16x256xbf16> to vector<16x256xbf16>
    %cst_431 = arith.constant dense<0.000000e+00> : vector<2x256xf32>
    %512 = tpu.matmul %509, %511, %cst_431 {dimension_numbers = #tpu.dot_dimension_numbers<[1], [0], [0], [1], [0, 0, 1, 1], [], []>} : vector<2x16xf32>, vector<16x256xbf16>, vector<2x256xf32> -> vector<2x256xf32>
    %513 = arith.addf %508, %512 : vector<2x256xf32>
    %514 = vector.extract_strided_slice %437 {offsets = [30, 0], sizes = [2, 16], strides = [1, 1]} : vector<98x16xf32> to vector<2x16xf32>
    %c15_432 = arith.constant 15 : index
    %c0_433 = arith.constant 0 : index
    %c0_434 = arith.constant 0 : index
    %515 = vector.load %arg11[%c15_432, %c0_433, %c0_434] : memref<49x16x256xbf16, #tpu.memory_space<vmem>>, vector<1x16x256xbf16>
    %516 = vector.shape_cast %515 : vector<1x16x256xbf16> to vector<16x256xbf16>
    %cst_435 = arith.constant dense<0.000000e+00> : vector<2x256xf32>
    %517 = tpu.matmul %514, %516, %cst_435 {dimension_numbers = #tpu.dot_dimension_numbers<[1], [0], [0], [1], [0, 0, 1, 1], [], []>} : vector<2x16xf32>, vector<16x256xbf16>, vector<2x256xf32> -> vector<2x256xf32>
    %518 = arith.addf %513, %517 : vector<2x256xf32>
    %519 = vector.extract_strided_slice %437 {offsets = [32, 0], sizes = [2, 16], strides = [1, 1]} : vector<98x16xf32> to vector<2x16xf32>
    %c16_436 = arith.constant 16 : index
    %c0_437 = arith.constant 0 : index
    %c0_438 = arith.constant 0 : index
    %520 = vector.load %arg11[%c16_436, %c0_437, %c0_438] : memref<49x16x256xbf16, #tpu.memory_space<vmem>>, vector<1x16x256xbf16>
    %521 = vector.shape_cast %520 : vector<1x16x256xbf16> to vector<16x256xbf16>
    %cst_439 = arith.constant dense<0.000000e+00> : vector<2x256xf32>
    %522 = tpu.matmul %519, %521, %cst_439 {dimension_numbers = #tpu.dot_dimension_numbers<[1], [0], [0], [1], [0, 0, 1, 1], [], []>} : vector<2x16xf32>, vector<16x256xbf16>, vector<2x256xf32> -> vector<2x256xf32>
    %523 = arith.addf %518, %522 : vector<2x256xf32>
    %524 = vector.extract_strided_slice %437 {offsets = [34, 0], sizes = [2, 16], strides = [1, 1]} : vector<98x16xf32> to vector<2x16xf32>
    %c17_440 = arith.constant 17 : index
    %c0_441 = arith.constant 0 : index
    %c0_442 = arith.constant 0 : index
    %525 = vector.load %arg11[%c17_440, %c0_441, %c0_442] : memref<49x16x256xbf16, #tpu.memory_space<vmem>>, vector<1x16x256xbf16>
    %526 = vector.shape_cast %525 : vector<1x16x256xbf16> to vector<16x256xbf16>
    %cst_443 = arith.constant dense<0.000000e+00> : vector<2x256xf32>
    %527 = tpu.matmul %524, %526, %cst_443 {dimension_numbers = #tpu.dot_dimension_numbers<[1], [0], [0], [1], [0, 0, 1, 1], [], []>} : vector<2x16xf32>, vector<16x256xbf16>, vector<2x256xf32> -> vector<2x256xf32>
    %528 = arith.addf %523, %527 : vector<2x256xf32>
    %529 = vector.extract_strided_slice %437 {offsets = [36, 0], sizes = [2, 16], strides = [1, 1]} : vector<98x16xf32> to vector<2x16xf32>
    %c18_444 = arith.constant 18 : index
    %c0_445 = arith.constant 0 : index
    %c0_446 = arith.constant 0 : index
    %530 = vector.load %arg11[%c18_444, %c0_445, %c0_446] : memref<49x16x256xbf16, #tpu.memory_space<vmem>>, vector<1x16x256xbf16>
    %531 = vector.shape_cast %530 : vector<1x16x256xbf16> to vector<16x256xbf16>
    %cst_447 = arith.constant dense<0.000000e+00> : vector<2x256xf32>
    %532 = tpu.matmul %529, %531, %cst_447 {dimension_numbers = #tpu.dot_dimension_numbers<[1], [0], [0], [1], [0, 0, 1, 1], [], []>} : vector<2x16xf32>, vector<16x256xbf16>, vector<2x256xf32> -> vector<2x256xf32>
    %533 = arith.addf %528, %532 : vector<2x256xf32>
    %534 = vector.extract_strided_slice %437 {offsets = [38, 0], sizes = [2, 16], strides = [1, 1]} : vector<98x16xf32> to vector<2x16xf32>
    %c19_448 = arith.constant 19 : index
    %c0_449 = arith.constant 0 : index
    %c0_450 = arith.constant 0 : index
    %535 = vector.load %arg11[%c19_448, %c0_449, %c0_450] : memref<49x16x256xbf16, #tpu.memory_space<vmem>>, vector<1x16x256xbf16>
    %536 = vector.shape_cast %535 : vector<1x16x256xbf16> to vector<16x256xbf16>
    %cst_451 = arith.constant dense<0.000000e+00> : vector<2x256xf32>
    %537 = tpu.matmul %534, %536, %cst_451 {dimension_numbers = #tpu.dot_dimension_numbers<[1], [0], [0], [1], [0, 0, 1, 1], [], []>} : vector<2x16xf32>, vector<16x256xbf16>, vector<2x256xf32> -> vector<2x256xf32>
    %538 = arith.addf %533, %537 : vector<2x256xf32>
    %539 = vector.extract_strided_slice %437 {offsets = [40, 0], sizes = [2, 16], strides = [1, 1]} : vector<98x16xf32> to vector<2x16xf32>
    %c20_452 = arith.constant 20 : index
    %c0_453 = arith.constant 0 : index
    %c0_454 = arith.constant 0 : index
    %540 = vector.load %arg11[%c20_452, %c0_453, %c0_454] : memref<49x16x256xbf16, #tpu.memory_space<vmem>>, vector<1x16x256xbf16>
    %541 = vector.shape_cast %540 : vector<1x16x256xbf16> to vector<16x256xbf16>
    %cst_455 = arith.constant dense<0.000000e+00> : vector<2x256xf32>
    %542 = tpu.matmul %539, %541, %cst_455 {dimension_numbers = #tpu.dot_dimension_numbers<[1], [0], [0], [1], [0, 0, 1, 1], [], []>} : vector<2x16xf32>, vector<16x256xbf16>, vector<2x256xf32> -> vector<2x256xf32>
    %543 = arith.addf %538, %542 : vector<2x256xf32>
    %544 = vector.extract_strided_slice %437 {offsets = [42, 0], sizes = [2, 16], strides = [1, 1]} : vector<98x16xf32> to vector<2x16xf32>
    %c21_456 = arith.constant 21 : index
    %c0_457 = arith.constant 0 : index
    %c0_458 = arith.constant 0 : index
    %545 = vector.load %arg11[%c21_456, %c0_457, %c0_458] : memref<49x16x256xbf16, #tpu.memory_space<vmem>>, vector<1x16x256xbf16>
    %546 = vector.shape_cast %545 : vector<1x16x256xbf16> to vector<16x256xbf16>
    %cst_459 = arith.constant dense<0.000000e+00> : vector<2x256xf32>
    %547 = tpu.matmul %544, %546, %cst_459 {dimension_numbers = #tpu.dot_dimension_numbers<[1], [0], [0], [1], [0, 0, 1, 1], [], []>} : vector<2x16xf32>, vector<16x256xbf16>, vector<2x256xf32> -> vector<2x256xf32>
    %548 = arith.addf %543, %547 : vector<2x256xf32>
    %549 = vector.extract_strided_slice %437 {offsets = [44, 0], sizes = [2, 16], strides = [1, 1]} : vector<98x16xf32> to vector<2x16xf32>
    %c22_460 = arith.constant 22 : index
    %c0_461 = arith.constant 0 : index
    %c0_462 = arith.constant 0 : index
    %550 = vector.load %arg11[%c22_460, %c0_461, %c0_462] : memref<49x16x256xbf16, #tpu.memory_space<vmem>>, vector<1x16x256xbf16>
    %551 = vector.shape_cast %550 : vector<1x16x256xbf16> to vector<16x256xbf16>
    %cst_463 = arith.constant dense<0.000000e+00> : vector<2x256xf32>
    %552 = tpu.matmul %549, %551, %cst_463 {dimension_numbers = #tpu.dot_dimension_numbers<[1], [0], [0], [1], [0, 0, 1, 1], [], []>} : vector<2x16xf32>, vector<16x256xbf16>, vector<2x256xf32> -> vector<2x256xf32>
    %553 = arith.addf %548, %552 : vector<2x256xf32>
    %554 = vector.extract_strided_slice %437 {offsets = [46, 0], sizes = [2, 16], strides = [1, 1]} : vector<98x16xf32> to vector<2x16xf32>
    %c23_464 = arith.constant 23 : index
    %c0_465 = arith.constant 0 : index
    %c0_466 = arith.constant 0 : index
    %555 = vector.load %arg11[%c23_464, %c0_465, %c0_466] : memref<49x16x256xbf16, #tpu.memory_space<vmem>>, vector<1x16x256xbf16>
    %556 = vector.shape_cast %555 : vector<1x16x256xbf16> to vector<16x256xbf16>
    %cst_467 = arith.constant dense<0.000000e+00> : vector<2x256xf32>
    %557 = tpu.matmul %554, %556, %cst_467 {dimension_numbers = #tpu.dot_dimension_numbers<[1], [0], [0], [1], [0, 0, 1, 1], [], []>} : vector<2x16xf32>, vector<16x256xbf16>, vector<2x256xf32> -> vector<2x256xf32>
    %558 = arith.addf %553, %557 : vector<2x256xf32>
    %559 = vector.extract_strided_slice %437 {offsets = [48, 0], sizes = [2, 16], strides = [1, 1]} : vector<98x16xf32> to vector<2x16xf32>
    %c24_468 = arith.constant 24 : index
    %c0_469 = arith.constant 0 : index
    %c0_470 = arith.constant 0 : index
    %560 = vector.load %arg11[%c24_468, %c0_469, %c0_470] : memref<49x16x256xbf16, #tpu.memory_space<vmem>>, vector<1x16x256xbf16>
    %561 = vector.shape_cast %560 : vector<1x16x256xbf16> to vector<16x256xbf16>
    %cst_471 = arith.constant dense<0.000000e+00> : vector<2x256xf32>
    %562 = tpu.matmul %559, %561, %cst_471 {dimension_numbers = #tpu.dot_dimension_numbers<[1], [0], [0], [1], [0, 0, 1, 1], [], []>} : vector<2x16xf32>, vector<16x256xbf16>, vector<2x256xf32> -> vector<2x256xf32>
    %563 = arith.addf %558, %562 : vector<2x256xf32>
    %564 = vector.extract_strided_slice %437 {offsets = [50, 0], sizes = [2, 16], strides = [1, 1]} : vector<98x16xf32> to vector<2x16xf32>
    %c25 = arith.constant 25 : index
    %c0_472 = arith.constant 0 : index
    %c0_473 = arith.constant 0 : index
    %565 = vector.load %arg11[%c25, %c0_472, %c0_473] : memref<49x16x256xbf16, #tpu.memory_space<vmem>>, vector<1x16x256xbf16>
    %566 = vector.shape_cast %565 : vector<1x16x256xbf16> to vector<16x256xbf16>
    %cst_474 = arith.constant dense<0.000000e+00> : vector<2x256xf32>
    %567 = tpu.matmul %564, %566, %cst_474 {dimension_numbers = #tpu.dot_dimension_numbers<[1], [0], [0], [1], [0, 0, 1, 1], [], []>} : vector<2x16xf32>, vector<16x256xbf16>, vector<2x256xf32> -> vector<2x256xf32>
    %568 = arith.addf %563, %567 : vector<2x256xf32>
    %569 = vector.extract_strided_slice %437 {offsets = [52, 0], sizes = [2, 16], strides = [1, 1]} : vector<98x16xf32> to vector<2x16xf32>
    %c26_475 = arith.constant 26 : index
    %c0_476 = arith.constant 0 : index
    %c0_477 = arith.constant 0 : index
    %570 = vector.load %arg11[%c26_475, %c0_476, %c0_477] : memref<49x16x256xbf16, #tpu.memory_space<vmem>>, vector<1x16x256xbf16>
    %571 = vector.shape_cast %570 : vector<1x16x256xbf16> to vector<16x256xbf16>
    %cst_478 = arith.constant dense<0.000000e+00> : vector<2x256xf32>
    %572 = tpu.matmul %569, %571, %cst_478 {dimension_numbers = #tpu.dot_dimension_numbers<[1], [0], [0], [1], [0, 0, 1, 1], [], []>} : vector<2x16xf32>, vector<16x256xbf16>, vector<2x256xf32> -> vector<2x256xf32>
    %573 = arith.addf %568, %572 : vector<2x256xf32>
    %574 = vector.extract_strided_slice %437 {offsets = [54, 0], sizes = [2, 16], strides = [1, 1]} : vector<98x16xf32> to vector<2x16xf32>
    %c27 = arith.constant 27 : index
    %c0_479 = arith.constant 0 : index
    %c0_480 = arith.constant 0 : index
    %575 = vector.load %arg11[%c27, %c0_479, %c0_480] : memref<49x16x256xbf16, #tpu.memory_space<vmem>>, vector<1x16x256xbf16>
    %576 = vector.shape_cast %575 : vector<1x16x256xbf16> to vector<16x256xbf16>
    %cst_481 = arith.constant dense<0.000000e+00> : vector<2x256xf32>
    %577 = tpu.matmul %574, %576, %cst_481 {dimension_numbers = #tpu.dot_dimension_numbers<[1], [0], [0], [1], [0, 0, 1, 1], [], []>} : vector<2x16xf32>, vector<16x256xbf16>, vector<2x256xf32> -> vector<2x256xf32>
    %578 = arith.addf %573, %577 : vector<2x256xf32>
    %579 = vector.extract_strided_slice %437 {offsets = [56, 0], sizes = [2, 16], strides = [1, 1]} : vector<98x16xf32> to vector<2x16xf32>
    %c28_482 = arith.constant 28 : index
    %c0_483 = arith.constant 0 : index
    %c0_484 = arith.constant 0 : index
    %580 = vector.load %arg11[%c28_482, %c0_483, %c0_484] : memref<49x16x256xbf16, #tpu.memory_space<vmem>>, vector<1x16x256xbf16>
    %581 = vector.shape_cast %580 : vector<1x16x256xbf16> to vector<16x256xbf16>
    %cst_485 = arith.constant dense<0.000000e+00> : vector<2x256xf32>
    %582 = tpu.matmul %579, %581, %cst_485 {dimension_numbers = #tpu.dot_dimension_numbers<[1], [0], [0], [1], [0, 0, 1, 1], [], []>} : vector<2x16xf32>, vector<16x256xbf16>, vector<2x256xf32> -> vector<2x256xf32>
    %583 = arith.addf %578, %582 : vector<2x256xf32>
    %584 = vector.extract_strided_slice %437 {offsets = [58, 0], sizes = [2, 16], strides = [1, 1]} : vector<98x16xf32> to vector<2x16xf32>
    %c29 = arith.constant 29 : index
    %c0_486 = arith.constant 0 : index
    %c0_487 = arith.constant 0 : index
    %585 = vector.load %arg11[%c29, %c0_486, %c0_487] : memref<49x16x256xbf16, #tpu.memory_space<vmem>>, vector<1x16x256xbf16>
    %586 = vector.shape_cast %585 : vector<1x16x256xbf16> to vector<16x256xbf16>
    %cst_488 = arith.constant dense<0.000000e+00> : vector<2x256xf32>
    %587 = tpu.matmul %584, %586, %cst_488 {dimension_numbers = #tpu.dot_dimension_numbers<[1], [0], [0], [1], [0, 0, 1, 1], [], []>} : vector<2x16xf32>, vector<16x256xbf16>, vector<2x256xf32> -> vector<2x256xf32>
    %588 = arith.addf %583, %587 : vector<2x256xf32>
    %589 = vector.extract_strided_slice %437 {offsets = [60, 0], sizes = [2, 16], strides = [1, 1]} : vector<98x16xf32> to vector<2x16xf32>
    %c30_489 = arith.constant 30 : index
    %c0_490 = arith.constant 0 : index
    %c0_491 = arith.constant 0 : index
    %590 = vector.load %arg11[%c30_489, %c0_490, %c0_491] : memref<49x16x256xbf16, #tpu.memory_space<vmem>>, vector<1x16x256xbf16>
    %591 = vector.shape_cast %590 : vector<1x16x256xbf16> to vector<16x256xbf16>
    %cst_492 = arith.constant dense<0.000000e+00> : vector<2x256xf32>
    %592 = tpu.matmul %589, %591, %cst_492 {dimension_numbers = #tpu.dot_dimension_numbers<[1], [0], [0], [1], [0, 0, 1, 1], [], []>} : vector<2x16xf32>, vector<16x256xbf16>, vector<2x256xf32> -> vector<2x256xf32>
    %593 = arith.addf %588, %592 : vector<2x256xf32>
    %594 = vector.extract_strided_slice %437 {offsets = [62, 0], sizes = [2, 16], strides = [1, 1]} : vector<98x16xf32> to vector<2x16xf32>
    %c31 = arith.constant 31 : index
    %c0_493 = arith.constant 0 : index
    %c0_494 = arith.constant 0 : index
    %595 = vector.load %arg11[%c31, %c0_493, %c0_494] : memref<49x16x256xbf16, #tpu.memory_space<vmem>>, vector<1x16x256xbf16>
    %596 = vector.shape_cast %595 : vector<1x16x256xbf16> to vector<16x256xbf16>
    %cst_495 = arith.constant dense<0.000000e+00> : vector<2x256xf32>
    %597 = tpu.matmul %594, %596, %cst_495 {dimension_numbers = #tpu.dot_dimension_numbers<[1], [0], [0], [1], [0, 0, 1, 1], [], []>} : vector<2x16xf32>, vector<16x256xbf16>, vector<2x256xf32> -> vector<2x256xf32>
    %598 = arith.addf %593, %597 : vector<2x256xf32>
    %599 = vector.extract_strided_slice %437 {offsets = [64, 0], sizes = [2, 16], strides = [1, 1]} : vector<98x16xf32> to vector<2x16xf32>
    %c32_496 = arith.constant 32 : index
    %c0_497 = arith.constant 0 : index
    %c0_498 = arith.constant 0 : index
    %600 = vector.load %arg11[%c32_496, %c0_497, %c0_498] : memref<49x16x256xbf16, #tpu.memory_space<vmem>>, vector<1x16x256xbf16>
    %601 = vector.shape_cast %600 : vector<1x16x256xbf16> to vector<16x256xbf16>
    %cst_499 = arith.constant dense<0.000000e+00> : vector<2x256xf32>
    %602 = tpu.matmul %599, %601, %cst_499 {dimension_numbers = #tpu.dot_dimension_numbers<[1], [0], [0], [1], [0, 0, 1, 1], [], []>} : vector<2x16xf32>, vector<16x256xbf16>, vector<2x256xf32> -> vector<2x256xf32>
    %603 = arith.addf %598, %602 : vector<2x256xf32>
    %604 = vector.extract_strided_slice %437 {offsets = [66, 0], sizes = [2, 16], strides = [1, 1]} : vector<98x16xf32> to vector<2x16xf32>
    %c33 = arith.constant 33 : index
    %c0_500 = arith.constant 0 : index
    %c0_501 = arith.constant 0 : index
    %605 = vector.load %arg11[%c33, %c0_500, %c0_501] : memref<49x16x256xbf16, #tpu.memory_space<vmem>>, vector<1x16x256xbf16>
    %606 = vector.shape_cast %605 : vector<1x16x256xbf16> to vector<16x256xbf16>
    %cst_502 = arith.constant dense<0.000000e+00> : vector<2x256xf32>
    %607 = tpu.matmul %604, %606, %cst_502 {dimension_numbers = #tpu.dot_dimension_numbers<[1], [0], [0], [1], [0, 0, 1, 1], [], []>} : vector<2x16xf32>, vector<16x256xbf16>, vector<2x256xf32> -> vector<2x256xf32>
    %608 = arith.addf %603, %607 : vector<2x256xf32>
    %609 = vector.extract_strided_slice %437 {offsets = [68, 0], sizes = [2, 16], strides = [1, 1]} : vector<98x16xf32> to vector<2x16xf32>
    %c34_503 = arith.constant 34 : index
    %c0_504 = arith.constant 0 : index
    %c0_505 = arith.constant 0 : index
    %610 = vector.load %arg11[%c34_503, %c0_504, %c0_505] : memref<49x16x256xbf16, #tpu.memory_space<vmem>>, vector<1x16x256xbf16>
    %611 = vector.shape_cast %610 : vector<1x16x256xbf16> to vector<16x256xbf16>
    %cst_506 = arith.constant dense<0.000000e+00> : vector<2x256xf32>
    %612 = tpu.matmul %609, %611, %cst_506 {dimension_numbers = #tpu.dot_dimension_numbers<[1], [0], [0], [1], [0, 0, 1, 1], [], []>} : vector<2x16xf32>, vector<16x256xbf16>, vector<2x256xf32> -> vector<2x256xf32>
    %613 = arith.addf %608, %612 : vector<2x256xf32>
    %614 = vector.extract_strided_slice %437 {offsets = [70, 0], sizes = [2, 16], strides = [1, 1]} : vector<98x16xf32> to vector<2x16xf32>
    %c35 = arith.constant 35 : index
    %c0_507 = arith.constant 0 : index
    %c0_508 = arith.constant 0 : index
    %615 = vector.load %arg11[%c35, %c0_507, %c0_508] : memref<49x16x256xbf16, #tpu.memory_space<vmem>>, vector<1x16x256xbf16>
    %616 = vector.shape_cast %615 : vector<1x16x256xbf16> to vector<16x256xbf16>
    %cst_509 = arith.constant dense<0.000000e+00> : vector<2x256xf32>
    %617 = tpu.matmul %614, %616, %cst_509 {dimension_numbers = #tpu.dot_dimension_numbers<[1], [0], [0], [1], [0, 0, 1, 1], [], []>} : vector<2x16xf32>, vector<16x256xbf16>, vector<2x256xf32> -> vector<2x256xf32>
    %618 = arith.addf %613, %617 : vector<2x256xf32>
    %619 = vector.extract_strided_slice %437 {offsets = [72, 0], sizes = [2, 16], strides = [1, 1]} : vector<98x16xf32> to vector<2x16xf32>
    %c36_510 = arith.constant 36 : index
    %c0_511 = arith.constant 0 : index
    %c0_512 = arith.constant 0 : index
    %620 = vector.load %arg11[%c36_510, %c0_511, %c0_512] : memref<49x16x256xbf16, #tpu.memory_space<vmem>>, vector<1x16x256xbf16>
    %621 = vector.shape_cast %620 : vector<1x16x256xbf16> to vector<16x256xbf16>
    %cst_513 = arith.constant dense<0.000000e+00> : vector<2x256xf32>
    %622 = tpu.matmul %619, %621, %cst_513 {dimension_numbers = #tpu.dot_dimension_numbers<[1], [0], [0], [1], [0, 0, 1, 1], [], []>} : vector<2x16xf32>, vector<16x256xbf16>, vector<2x256xf32> -> vector<2x256xf32>
    %623 = arith.addf %618, %622 : vector<2x256xf32>
    %624 = vector.extract_strided_slice %437 {offsets = [74, 0], sizes = [2, 16], strides = [1, 1]} : vector<98x16xf32> to vector<2x16xf32>
    %c37 = arith.constant 37 : index
    %c0_514 = arith.constant 0 : index
    %c0_515 = arith.constant 0 : index
    %625 = vector.load %arg11[%c37, %c0_514, %c0_515] : memref<49x16x256xbf16, #tpu.memory_space<vmem>>, vector<1x16x256xbf16>
    %626 = vector.shape_cast %625 : vector<1x16x256xbf16> to vector<16x256xbf16>
    %cst_516 = arith.constant dense<0.000000e+00> : vector<2x256xf32>
    %627 = tpu.matmul %624, %626, %cst_516 {dimension_numbers = #tpu.dot_dimension_numbers<[1], [0], [0], [1], [0, 0, 1, 1], [], []>} : vector<2x16xf32>, vector<16x256xbf16>, vector<2x256xf32> -> vector<2x256xf32>
    %628 = arith.addf %623, %627 : vector<2x256xf32>
    %629 = vector.extract_strided_slice %437 {offsets = [76, 0], sizes = [2, 16], strides = [1, 1]} : vector<98x16xf32> to vector<2x16xf32>
    %c38_517 = arith.constant 38 : index
    %c0_518 = arith.constant 0 : index
    %c0_519 = arith.constant 0 : index
    %630 = vector.load %arg11[%c38_517, %c0_518, %c0_519] : memref<49x16x256xbf16, #tpu.memory_space<vmem>>, vector<1x16x256xbf16>
    %631 = vector.shape_cast %630 : vector<1x16x256xbf16> to vector<16x256xbf16>
    %cst_520 = arith.constant dense<0.000000e+00> : vector<2x256xf32>
    %632 = tpu.matmul %629, %631, %cst_520 {dimension_numbers = #tpu.dot_dimension_numbers<[1], [0], [0], [1], [0, 0, 1, 1], [], []>} : vector<2x16xf32>, vector<16x256xbf16>, vector<2x256xf32> -> vector<2x256xf32>
    %633 = arith.addf %628, %632 : vector<2x256xf32>
    %634 = vector.extract_strided_slice %437 {offsets = [78, 0], sizes = [2, 16], strides = [1, 1]} : vector<98x16xf32> to vector<2x16xf32>
    %c39 = arith.constant 39 : index
    %c0_521 = arith.constant 0 : index
    %c0_522 = arith.constant 0 : index
    %635 = vector.load %arg11[%c39, %c0_521, %c0_522] : memref<49x16x256xbf16, #tpu.memory_space<vmem>>, vector<1x16x256xbf16>
    %636 = vector.shape_cast %635 : vector<1x16x256xbf16> to vector<16x256xbf16>
    %cst_523 = arith.constant dense<0.000000e+00> : vector<2x256xf32>
    %637 = tpu.matmul %634, %636, %cst_523 {dimension_numbers = #tpu.dot_dimension_numbers<[1], [0], [0], [1], [0, 0, 1, 1], [], []>} : vector<2x16xf32>, vector<16x256xbf16>, vector<2x256xf32> -> vector<2x256xf32>
    %638 = arith.addf %633, %637 : vector<2x256xf32>
    %639 = vector.extract_strided_slice %437 {offsets = [80, 0], sizes = [2, 16], strides = [1, 1]} : vector<98x16xf32> to vector<2x16xf32>
    %c40_524 = arith.constant 40 : index
    %c0_525 = arith.constant 0 : index
    %c0_526 = arith.constant 0 : index
    %640 = vector.load %arg11[%c40_524, %c0_525, %c0_526] : memref<49x16x256xbf16, #tpu.memory_space<vmem>>, vector<1x16x256xbf16>
    %641 = vector.shape_cast %640 : vector<1x16x256xbf16> to vector<16x256xbf16>
    %cst_527 = arith.constant dense<0.000000e+00> : vector<2x256xf32>
    %642 = tpu.matmul %639, %641, %cst_527 {dimension_numbers = #tpu.dot_dimension_numbers<[1], [0], [0], [1], [0, 0, 1, 1], [], []>} : vector<2x16xf32>, vector<16x256xbf16>, vector<2x256xf32> -> vector<2x256xf32>
    %643 = arith.addf %638, %642 : vector<2x256xf32>
    %644 = vector.extract_strided_slice %437 {offsets = [82, 0], sizes = [2, 16], strides = [1, 1]} : vector<98x16xf32> to vector<2x16xf32>
    %c41 = arith.constant 41 : index
    %c0_528 = arith.constant 0 : index
    %c0_529 = arith.constant 0 : index
    %645 = vector.load %arg11[%c41, %c0_528, %c0_529] : memref<49x16x256xbf16, #tpu.memory_space<vmem>>, vector<1x16x256xbf16>
    %646 = vector.shape_cast %645 : vector<1x16x256xbf16> to vector<16x256xbf16>
    %cst_530 = arith.constant dense<0.000000e+00> : vector<2x256xf32>
    %647 = tpu.matmul %644, %646, %cst_530 {dimension_numbers = #tpu.dot_dimension_numbers<[1], [0], [0], [1], [0, 0, 1, 1], [], []>} : vector<2x16xf32>, vector<16x256xbf16>, vector<2x256xf32> -> vector<2x256xf32>
    %648 = arith.addf %643, %647 : vector<2x256xf32>
    %649 = vector.extract_strided_slice %437 {offsets = [84, 0], sizes = [2, 16], strides = [1, 1]} : vector<98x16xf32> to vector<2x16xf32>
    %c42_531 = arith.constant 42 : index
    %c0_532 = arith.constant 0 : index
    %c0_533 = arith.constant 0 : index
    %650 = vector.load %arg11[%c42_531, %c0_532, %c0_533] : memref<49x16x256xbf16, #tpu.memory_space<vmem>>, vector<1x16x256xbf16>
    %651 = vector.shape_cast %650 : vector<1x16x256xbf16> to vector<16x256xbf16>
    %cst_534 = arith.constant dense<0.000000e+00> : vector<2x256xf32>
    %652 = tpu.matmul %649, %651, %cst_534 {dimension_numbers = #tpu.dot_dimension_numbers<[1], [0], [0], [1], [0, 0, 1, 1], [], []>} : vector<2x16xf32>, vector<16x256xbf16>, vector<2x256xf32> -> vector<2x256xf32>
    %653 = arith.addf %648, %652 : vector<2x256xf32>
    %654 = vector.extract_strided_slice %437 {offsets = [86, 0], sizes = [2, 16], strides = [1, 1]} : vector<98x16xf32> to vector<2x16xf32>
    %c43 = arith.constant 43 : index
    %c0_535 = arith.constant 0 : index
    %c0_536 = arith.constant 0 : index
    %655 = vector.load %arg11[%c43, %c0_535, %c0_536] : memref<49x16x256xbf16, #tpu.memory_space<vmem>>, vector<1x16x256xbf16>
    %656 = vector.shape_cast %655 : vector<1x16x256xbf16> to vector<16x256xbf16>
    %cst_537 = arith.constant dense<0.000000e+00> : vector<2x256xf32>
    %657 = tpu.matmul %654, %656, %cst_537 {dimension_numbers = #tpu.dot_dimension_numbers<[1], [0], [0], [1], [0, 0, 1, 1], [], []>} : vector<2x16xf32>, vector<16x256xbf16>, vector<2x256xf32> -> vector<2x256xf32>
    %658 = arith.addf %653, %657 : vector<2x256xf32>
    %659 = vector.extract_strided_slice %437 {offsets = [88, 0], sizes = [2, 16], strides = [1, 1]} : vector<98x16xf32> to vector<2x16xf32>
    %c44_538 = arith.constant 44 : index
    %c0_539 = arith.constant 0 : index
    %c0_540 = arith.constant 0 : index
    %660 = vector.load %arg11[%c44_538, %c0_539, %c0_540] : memref<49x16x256xbf16, #tpu.memory_space<vmem>>, vector<1x16x256xbf16>
    %661 = vector.shape_cast %660 : vector<1x16x256xbf16> to vector<16x256xbf16>
    %cst_541 = arith.constant dense<0.000000e+00> : vector<2x256xf32>
    %662 = tpu.matmul %659, %661, %cst_541 {dimension_numbers = #tpu.dot_dimension_numbers<[1], [0], [0], [1], [0, 0, 1, 1], [], []>} : vector<2x16xf32>, vector<16x256xbf16>, vector<2x256xf32> -> vector<2x256xf32>
    %663 = arith.addf %658, %662 : vector<2x256xf32>
    %664 = vector.extract_strided_slice %437 {offsets = [90, 0], sizes = [2, 16], strides = [1, 1]} : vector<98x16xf32> to vector<2x16xf32>
    %c45 = arith.constant 45 : index
    %c0_542 = arith.constant 0 : index
    %c0_543 = arith.constant 0 : index
    %665 = vector.load %arg11[%c45, %c0_542, %c0_543] : memref<49x16x256xbf16, #tpu.memory_space<vmem>>, vector<1x16x256xbf16>
    %666 = vector.shape_cast %665 : vector<1x16x256xbf16> to vector<16x256xbf16>
    %cst_544 = arith.constant dense<0.000000e+00> : vector<2x256xf32>
    %667 = tpu.matmul %664, %666, %cst_544 {dimension_numbers = #tpu.dot_dimension_numbers<[1], [0], [0], [1], [0, 0, 1, 1], [], []>} : vector<2x16xf32>, vector<16x256xbf16>, vector<2x256xf32> -> vector<2x256xf32>
    %668 = arith.addf %663, %667 : vector<2x256xf32>
    %669 = vector.extract_strided_slice %437 {offsets = [92, 0], sizes = [2, 16], strides = [1, 1]} : vector<98x16xf32> to vector<2x16xf32>
    %c46_545 = arith.constant 46 : index
    %c0_546 = arith.constant 0 : index
    %c0_547 = arith.constant 0 : index
    %670 = vector.load %arg11[%c46_545, %c0_546, %c0_547] : memref<49x16x256xbf16, #tpu.memory_space<vmem>>, vector<1x16x256xbf16>
    %671 = vector.shape_cast %670 : vector<1x16x256xbf16> to vector<16x256xbf16>
    %cst_548 = arith.constant dense<0.000000e+00> : vector<2x256xf32>
    %672 = tpu.matmul %669, %671, %cst_548 {dimension_numbers = #tpu.dot_dimension_numbers<[1], [0], [0], [1], [0, 0, 1, 1], [], []>} : vector<2x16xf32>, vector<16x256xbf16>, vector<2x256xf32> -> vector<2x256xf32>
    %673 = arith.addf %668, %672 : vector<2x256xf32>
    %674 = vector.extract_strided_slice %437 {offsets = [94, 0], sizes = [2, 16], strides = [1, 1]} : vector<98x16xf32> to vector<2x16xf32>
    %c47 = arith.constant 47 : index
    %c0_549 = arith.constant 0 : index
    %c0_550 = arith.constant 0 : index
    %675 = vector.load %arg11[%c47, %c0_549, %c0_550] : memref<49x16x256xbf16, #tpu.memory_space<vmem>>, vector<1x16x256xbf16>
    %676 = vector.shape_cast %675 : vector<1x16x256xbf16> to vector<16x256xbf16>
    %cst_551 = arith.constant dense<0.000000e+00> : vector<2x256xf32>
    %677 = tpu.matmul %674, %676, %cst_551 {dimension_numbers = #tpu.dot_dimension_numbers<[1], [0], [0], [1], [0, 0, 1, 1], [], []>} : vector<2x16xf32>, vector<16x256xbf16>, vector<2x256xf32> -> vector<2x256xf32>
    %678 = arith.addf %673, %677 : vector<2x256xf32>
    %679 = vector.extract_strided_slice %437 {offsets = [96, 0], sizes = [2, 16], strides = [1, 1]} : vector<98x16xf32> to vector<2x16xf32>
    %c48_552 = arith.constant 48 : index
    %c0_553 = arith.constant 0 : index
    %c0_554 = arith.constant 0 : index
    %680 = vector.load %arg11[%c48_552, %c0_553, %c0_554] : memref<49x16x256xbf16, #tpu.memory_space<vmem>>, vector<1x16x256xbf16>
    %681 = vector.shape_cast %680 : vector<1x16x256xbf16> to vector<16x256xbf16>
    %cst_555 = arith.constant dense<0.000000e+00> : vector<2x256xf32>
    %682 = tpu.matmul %679, %681, %cst_555 {dimension_numbers = #tpu.dot_dimension_numbers<[1], [0], [0], [1], [0, 0, 1, 1], [], []>} : vector<2x16xf32>, vector<16x256xbf16>, vector<2x256xf32> -> vector<2x256xf32>
    %683 = arith.addf %678, %682 : vector<2x256xf32>
    %c0_556 = arith.constant 0 : index
    %c0_557 = arith.constant 0 : index
    %684 = vector.load %arg12[%c0_556, %c0_557] : memref<1x256xf32, #tpu.memory_space<vmem>>, vector<1x256xf32>
    %685 = vector.broadcast %684 : vector<1x256xf32> to vector<2x256xf32>
    %686 = arith.addf %683, %685 : vector<2x256xf32>
    %c0_558 = arith.constant 0 : index
    %c0_559 = arith.constant 0 : index
    %687 = vector.load %arg13[%c0_558, %c0_559] : memref<2x256xf32, #tpu.memory_space<vmem>>, vector<2x256xf32>
    tpu.vector_store %arg13[%c0_558, %c0_559], %686 {strides = array<i32>} : memref<2x256xf32, #tpu.memory_space<vmem>>, vector<2x256xf32>,
    return
  }
  func.func @transform_0(%arg0: i32) -> (i32, i32) {
    %c0_i32 = arith.constant 0 : i32
    %c0_i32_0 = arith.constant 0 : i32
    return %arg0, %c0_i32 : i32, i32
  }
  func.func @transform_1(%arg0: i32) -> (i32, i32, i32) {
    %c0_i32 = arith.constant 0 : i32
    %c0_i32_0 = arith.constant 0 : i32
    %c0_i32_1 = arith.constant 0 : i32
    %c0_i32_2 = arith.constant 0 : i32
    return %c0_i32, %c0_i32_0, %c0_i32_1 : i32, i32, i32
  }
  func.func @transform_2(%arg0: i32) -> (i32, i32, i32) {
    %c0_i32 = arith.constant 0 : i32
    %c0_i32_0 = arith.constant 0 : i32
    %c0_i32_1 = arith.constant 0 : i32
    %c0_i32_2 = arith.constant 0 : i32
    return %c0_i32, %c0_i32_0, %c0_i32_1 : i32, i32, i32
  }
  func.func @transform_3(%arg0: i32) -> (i32, i32, i32) {
    %c0_i32 = arith.constant 0 : i32
    %c0_i32_0 = arith.constant 0 : i32
    %c0_i32_1 = arith.constant 0 : i32
    %c0_i32_2 = arith.constant 0 : i32
    return %c0_i32, %c0_i32_0, %c0_i32_1 : i32, i32, i32
  }
  func.func @transform_4(%arg0: i32) -> (i32, i32) {
    %c0_i32 = arith.constant 0 : i32
    %c0_i32_0 = arith.constant 0 : i32
    %c0_i32_1 = arith.constant 0 : i32
    return %c0_i32, %c0_i32_0 : i32, i32
  }
  func.func @transform_5(%arg0: i32) -> (i32, i32, i32) {
    %c0_i32 = arith.constant 0 : i32
    %c0_i32_0 = arith.constant 0 : i32
    %c0_i32_1 = arith.constant 0 : i32
    %c0_i32_2 = arith.constant 0 : i32
    return %c0_i32, %c0_i32_0, %c0_i32_1 : i32, i32, i32
  }
  func.func @transform_6(%arg0: i32) -> (i32, i32, i32) {
    %c0_i32 = arith.constant 0 : i32
    %c0_i32_0 = arith.constant 0 : i32
    %c0_i32_1 = arith.constant 0 : i32
    %c0_i32_2 = arith.constant 0 : i32
    return %c0_i32, %c0_i32_0, %c0_i32_1 : i32, i32, i32
  }
  func.func @transform_7(%arg0: i32) -> (i32, i32) {
    %c0_i32 = arith.constant 0 : i32
    %c0_i32_0 = arith.constant 0 : i32
    %c0_i32_1 = arith.constant 0 : i32
    return %c0_i32, %c0_i32_0 : i32, i32
  }
  func.func @transform_8(%arg0: i32) -> (i32, i32, i32) {
    %c0_i32 = arith.constant 0 : i32
    %c0_i32_0 = arith.constant 0 : i32
    %c0_i32_1 = arith.constant 0 : i32
    %c0_i32_2 = arith.constant 0 : i32
    return %c0_i32, %c0_i32_0, %c0_i32_1 : i32, i32, i32
  }
  func.func @transform_9(%arg0: i32) -> (i32, i32) {
    %c0_i32 = arith.constant 0 : i32
    %c0_i32_0 = arith.constant 0 : i32
    %c0_i32_1 = arith.constant 0 : i32
    return %c0_i32, %c0_i32_0 : i32, i32
  }
  func.func @transform_10(%arg0: i32) -> (i32, i32, i32) {
    %c0_i32 = arith.constant 0 : i32
    %c0_i32_0 = arith.constant 0 : i32
    %c0_i32_1 = arith.constant 0 : i32
    %c0_i32_2 = arith.constant 0 : i32
    return %c0_i32, %c0_i32_0, %c0_i32_1 : i32, i32, i32
  }
  func.func @transform_11(%arg0: i32) -> (i32, i32) {
    %c0_i32 = arith.constant 0 : i32
    %c0_i32_0 = arith.constant 0 : i32
    %c0_i32_1 = arith.constant 0 : i32
    return %c0_i32, %c0_i32_0 : i32, i32
  }
  func.func @transform_12(%arg0: i32) -> (i32, i32) {
    %c0_i32 = arith.constant 0 : i32
    %c0_i32_0 = arith.constant 0 : i32
    return %arg0, %c0_i32 : i32, i32
  }
}

</mosaic_0001>

<llo_original>
// kernel: conv_generator_forward.1
$region0: #{conv_generator_forward.1}
  #allocation0 [shape = 'u32[]', space=smem, size = 0x4, offset = 0x4, fixed_abs, tag = 'smem constant byte address 0x4 - core index']
  #allocation1 [shape = 'u32[72,128]{1,0:T(1,128)}', space=vmem, size = 0x9000, scoped, tag = 'internal scratch']
  #allocation2 [shape = 'bf16[50,256]{1,0:T(8,128)(2,1)}', space=vmem, size = 0x7000, scoped, tag = 'scratch operand']
  %s0 = inlined_call_operand.hbm [shape: f32[2,128], index: 0, kind: input, shape index: {}]
  %s1 = inlined_call_operand.hbm [shape: bf16[25,128,256], index: 1, kind: input, shape index: {}]
  %s2 = inlined_call_operand.hbm [shape: f32[25,1,256], index: 2, kind: input, shape index: {}]
  %s3 = inlined_call_operand.hbm [shape: bf16[9,256,128], index: 3, kind: input, shape index: {}]
  %s4 = inlined_call_operand.hbm [shape: f32[1,128], index: 4, kind: input, shape index: {}]
  %s5 = inlined_call_operand.hbm [shape: bf16[9,50,50], index: 5, kind: input, shape index: {}]
  %s6 = inlined_call_operand.vmem [shape: bf16[9,128,64], index: 6, kind: input, shape index: {}]
  %s7 = inlined_call_operand.hbm [shape: f32[1,64], index: 7, kind: input, shape index: {}]
  %s8 = inlined_call_operand.vmem [shape: bf16[9,98,50], index: 8, kind: input, shape index: {}]
  %s9 = inlined_call_operand.vmem [shape: bf16[64,16], index: 9, kind: input, shape index: {}]
  %s10 = inlined_call_operand.hbm [shape: bf16[49,16,256], index: 10, kind: input, shape index: {}]
  %s11 = inlined_call_operand.hbm [shape: f32[1,256], index: 11, kind: input, shape index: {}]
  %s12 = inlined_call_operand.vmem [shape: f32[2,256], index: 12, kind: output, shape index: {}]
  %s13 = sld [smem:[#allocation0]]
  $region94: #{conv_generator_forward.1} parent=0
    _
  %s15 = ssub.s32 1, %s13
  %s16 = scalar_select 0, %s15, %s13
  $region1: #{conv_generator_forward.1} parent=0
    #allocation3 [shape = 'u8[1024]{0}', space=vmem, size = 0x400, scoped, tag = 'input window, operand 0, single buffered']
    #allocation4 [shape = 's32[1]{0}', space=sflag, size = 0x4, scoped, tag = 'scoped memory for conv_generator_forward.1']
    #allocation5 [shape = 'u8[1638400]{0}', space=vmem, size = 0x190000, scoped, tag = 'input window, operand 1, single buffered']
    #allocation6 [shape = 's32[1]{0}', space=sflag, size = 0x4, scoped, tag = 'scoped memory for conv_generator_forward.1']
    #allocation7 [shape = 'u8[25600]{0}', space=vmem, size = 0x6400, scoped, tag = 'input window, operand 2, single buffered']
    #allocation8 [shape = 'u8[589824]{0}', space=vmem, size = 0x90000, scoped, tag = 'input window, operand 3, single buffered']
    #allocation9 [shape = 's32[1]{0}', space=sflag, size = 0x4, scoped, tag = 'scoped memory for conv_generator_forward.1']
    #allocation10 [shape = 'u8[512]{0}', space=vmem, size = 0x400, scoped, tag = 'input window, operand 4, single buffered']
    #allocation11 [shape = 'u8[129024]{0}', space=vmem, size = 0x1f800, scoped, tag = 'input window, operand 5, single buffered']
    #allocation12 [shape = 's32[1]{0}', space=sflag, size = 0x4, scoped, tag = 'scoped memory for conv_generator_forward.1']
    #allocation13 [shape = 'u8[512]{0}', space=vmem, size = 0x400, scoped, tag = 'input window, operand 7, single buffered']
    #allocation14 [shape = 'u8[401408]{0}', space=vmem, size = 0x62000, scoped, tag = 'input window, operand 10, single buffered']
    #allocation15 [shape = 's32[1]{0}', space=sflag, size = 0x4, scoped, tag = 'scoped memory for conv_generator_forward.1']
    #allocation16 [shape = 'u8[1024]{0}', space=vmem, size = 0x400, scoped, tag = 'input window, operand 11, single buffered']
    %17 = vsyncpa [#allocation4], 0
    %18 = vsyncpa [#allocation6], 0
    %19 = vsyncpa [#allocation9], 0
    %20 = vsyncpa [#allocation12], 0
    %21 = vsyncpa [#allocation15], 0
    // Predicated region
    $region2: #{conv_generator_forward.1} parent=1 // pred_check
      _
    $region3: #{conv_generator_forward.1} parent=1 // pred_check_branch
      %23 = sbr.rel (0) target = $region5
    $region4: #{conv_generator_forward.1} parent=1 // pred_region
      %25 = vsyncadd [#allocation4], 0
      %s27 = sshll.u32 %s0, 4
      %s28 = int_to_ptr.hbm [resolvable:$true] %s27
      %s29 = sshll.u32 [#allocation3], 4
      %s30 = int_to_ptr.vmem [resolvable:$true] %s29
      %32 = dma.hbm_to_vmem [thread:$0]  %s28, 32, %s30, [#allocation4]
    $region5: #{conv_generator_forward.1} parent=1 // pred_fallthru
      _
    // Predicated region
    $region6: #{conv_generator_forward.1} parent=1 // pred_check
      _
    $region7: #{conv_generator_forward.1} parent=1 // pred_check_branch
      %34 = sbr.rel (0) target = $region9
    $region8: #{conv_generator_forward.1} parent=1 // pred_region
      %36 = vsyncadd [#allocation6], 0
      %s37 = sshll.u32 %s1, 4
      %s38 = int_to_ptr.hbm [resolvable:$true] %s37
      %s39 = sshll.u32 [#allocation5], 4
      %s40 = int_to_ptr.vmem [resolvable:$true] %s39
      %45 = dma.hbm_to_vmem [thread:$0]  %s38, 51200, %s40, [#allocation6], 128, 128, 8
    $region9: #{conv_generator_forward.1} parent=1 // pred_fallthru
      _
    // Predicated region
    $region10: #{conv_generator_forward.1} parent=1 // pred_check
      _
    $region11: #{conv_generator_forward.1} parent=1 // pred_check_branch
      %47 = sbr.rel (0) target = $region13
    $region12: #{conv_generator_forward.1} parent=1 // pred_region
      %49 = vsyncadd [#allocation6], 0
      %s50 = sshll.u32 %s2, 4
      %s51 = int_to_ptr.hbm [resolvable:$true] %s50
      %s52 = sshll.u32 [#allocation7], 4
      %s53 = int_to_ptr.vmem [resolvable:$true] %s52
      %58 = dma.hbm_to_vmem [thread:$0]  %s51, 800, %s53, [#allocation6], 32, 32, 2
    $region13: #{conv_generator_forward.1} parent=1 // pred_fallthru
      _
    // Predicated region
    $region14: #{conv_generator_forward.1} parent=1 // pred_check
      _
    $region15: #{conv_generator_forward.1} parent=1 // pred_check_branch
      %60 = sbr.rel (0) target = $region17
    $region16: #{conv_generator_forward.1} parent=1 // pred_region
      %62 = vsyncadd [#allocation9], 0
      %s63 = sshll.u32 %s3, 4
      %s64 = int_to_ptr.hbm [resolvable:$true] %s63
      %s65 = sshll.u32 [#allocation8], 4
      %s66 = int_to_ptr.vmem [resolvable:$true] %s65
      %71 = dma.hbm_to_vmem [thread:$0]  %s64, 18432, %s66, [#allocation9], 64, 64, 4
    $region17: #{conv_generator_forward.1} parent=1 // pred_fallthru
      _
    // Predicated region
    $region18: #{conv_generator_forward.1} parent=1 // pred_check
      _
    $region19: #{conv_generator_forward.1} parent=1 // pred_check_branch
      %73 = sbr.rel (0) target = $region21
    $region20: #{conv_generator_forward.1} parent=1 // pred_region
      %75 = vsyncadd [#allocation9], 0
      %s77 = sshll.u32 %s4, 4
      %s78 = int_to_ptr.hbm [resolvable:$true] %s77
      %s79 = sshll.u32 [#allocation10], 4
      %s80 = int_to_ptr.vmem [resolvable:$true] %s79
      %82 = dma.hbm_to_vmem [thread:$0]  %s78, 16, %s80, [#allocation9]
    $region21: #{conv_generator_forward.1} parent=1 // pred_fallthru
      _
    // Predicated region
    $region22: #{conv_generator_forward.1} parent=1 // pred_check
      _
    $region23: #{conv_generator_forward.1} parent=1 // pred_check_branch
      %84 = sbr.rel (0) target = $region25
    $region24: #{conv_generator_forward.1} parent=1 // pred_region
      %86 = vsyncadd [#allocation12], 0
      %s87 = sshll.u32 %s5, 4
      %s88 = int_to_ptr.hbm [resolvable:$true] %s87
      %s89 = sshll.u32 [#allocation11], 4
      %s90 = int_to_ptr.vmem [resolvable:$true] %s89
      %95 = dma.hbm_to_vmem [thread:$0]  %s88, 4032, %s90, [#allocation12], 64, 64, 4
    $region25: #{conv_generator_forward.1} parent=1 // pred_fallthru
      _
    // Predicated region
    $region26: #{conv_generator_forward.1} parent=1 // pred_check
      _
    $region27: #{conv_generator_forward.1} parent=1 // pred_check_branch
      %97 = sbr.rel (0) target = $region29
    $region28: #{conv_generator_forward.1} parent=1 // pred_region
      _
    $region29: #{conv_generator_forward.1} parent=1 // pred_fallthru
      _
    // Predicated region
    $region30: #{conv_generator_forward.1} parent=1 // pred_check
      _
    $region31: #{conv_generator_forward.1} parent=1 // pred_check_branch
      %99 = sbr.rel (0) target = $region33
    $region32: #{conv_generator_forward.1} parent=1 // pred_region
      %101 = vsyncadd [#allocation12], 0
      %s103 = sshll.u32 %s7, 4
      %s104 = int_to_ptr.hbm [resolvable:$true] %s103
      %s105 = sshll.u32 [#allocation13], 4
      %s106 = int_to_ptr.vmem [resolvable:$true] %s105
      %108 = dma.hbm_to_vmem [thread:$0]  %s104, 16, %s106, [#allocation12]
    $region33: #{conv_generator_forward.1} parent=1 // pred_fallthru
      _
    // Predicated region
    $region34: #{conv_generator_forward.1} parent=1 // pred_check
      _
    $region35: #{conv_generator_forward.1} parent=1 // pred_check_branch
      %110 = sbr.rel (0) target = $region37
    $region36: #{conv_generator_forward.1} parent=1 // pred_region
      _
    $region37: #{conv_generator_forward.1} parent=1 // pred_fallthru
      _
    // Predicated region
    $region38: #{conv_generator_forward.1} parent=1 // pred_check
      _
    $region39: #{conv_generator_forward.1} parent=1 // pred_check_branch
      %112 = sbr.rel (0) target = $region41
    $region40: #{conv_generator_forward.1} parent=1 // pred_region
      _
    $region41: #{conv_generator_forward.1} parent=1 // pred_fallthru
      _
    // Predicated region
    $region42: #{conv_generator_forward.1} parent=1 // pred_check
      _
    $region43: #{conv_generator_forward.1} parent=1 // pred_check_branch
      %114 = sbr.rel (0) target = $region45
    $region44: #{conv_generator_forward.1} parent=1 // pred_region
      %116 = vsyncadd [#allocation15], 0
      %s117 = sshll.u32 %s10, 4
      %s118 = int_to_ptr.hbm [resolvable:$true] %s117
      %s119 = sshll.u32 [#allocation14], 4
      %s120 = int_to_ptr.vmem [resolvable:$true] %s119
      %125 = dma.hbm_to_vmem [thread:$0]  %s118, 12544, %s120, [#allocation15], 128, 128, 8
    $region45: #{conv_generator_forward.1} parent=1 // pred_fallthru
      _
    // Predicated region
    $region46: #{conv_generator_forward.1} parent=1 // pred_check
      _
    $region47: #{conv_generator_forward.1} parent=1 // pred_check_branch
      %127 = sbr.rel (0) target = $region49
    $region48: #{conv_generator_forward.1} parent=1 // pred_region
      %129 = vsyncadd [#allocation15], 0
      %s131 = sshll.u32 %s11, 4
      %s132 = int_to_ptr.hbm [resolvable:$true] %s131
      %s133 = sshll.u32 [#allocation16], 4
      %s134 = int_to_ptr.vmem [resolvable:$true] %s133
      %136 = dma.hbm_to_vmem [thread:$0]  %s132, 32, %s134, [#allocation15]
    $region49: #{conv_generator_forward.1} parent=1 // pred_fallthru
      _
    // Predicated region
    $region50: #{conv_generator_forward.1} parent=1 // pred_check
      _
    $region51: #{conv_generator_forward.1} parent=1 // pred_check_branch
      %138 = sbr.rel (0) target = $region53
    $region52: #{conv_generator_forward.1} parent=1 // pred_region
      %140 = dma.done [#allocation4], 32
    $region53: #{conv_generator_forward.1} parent=1 // pred_fallthru
      _
    // Predicated region
    $region54: #{conv_generator_forward.1} parent=1 // pred_check
      _
    $region55: #{conv_generator_forward.1} parent=1 // pred_check_branch
      %142 = sbr.rel (0) target = $region57
    $region56: #{conv_generator_forward.1} parent=1 // pred_region
      %144 = dma.done [#allocation6], 51200
    $region57: #{conv_generator_forward.1} parent=1 // pred_fallthru
      _
    // Predicated region
    $region58: #{conv_generator_forward.1} parent=1 // pred_check
      _
    $region59: #{conv_generator_forward.1} parent=1 // pred_check_branch
      %146 = sbr.rel (0) target = $region61
    $region60: #{conv_generator_forward.1} parent=1 // pred_region
      %148 = dma.done [#allocation6], 800
    $region61: #{conv_generator_forward.1} parent=1 // pred_fallthru
      _
    // Predicated region
    $region62: #{conv_generator_forward.1} parent=1 // pred_check
      _
    $region63: #{conv_generator_forward.1} parent=1 // pred_check_branch
      %150 = sbr.rel (0) target = $region65
    $region64: #{conv_generator_forward.1} parent=1 // pred_region
      %152 = dma.done [#allocation9], 18432
    $region65: #{conv_generator_forward.1} parent=1 // pred_fallthru
      _
    // Predicated region
    $region66: #{conv_generator_forward.1} parent=1 // pred_check
      _
    $region67: #{conv_generator_forward.1} parent=1 // pred_check_branch
      %154 = sbr.rel (0) target = $region69
    $region68: #{conv_generator_forward.1} parent=1 // pred_region
      %156 = dma.done [#allocation9], 16
    $region69: #{conv_generator_forward.1} parent=1 // pred_fallthru
      _
    // Predicated region
    $region70: #{conv_generator_forward.1} parent=1 // pred_check
      _
    $region71: #{conv_generator_forward.1} parent=1 // pred_check_branch
      %158 = sbr.rel (0) target = $region73
    $region72: #{conv_generator_forward.1} parent=1 // pred_region
      %160 = dma.done [#allocation12], 4032
    $region73: #{conv_generator_forward.1} parent=1 // pred_fallthru
      _
    // Predicated region
    $region74: #{conv_generator_forward.1} parent=1 // pred_check
      _
    $region75: #{conv_generator_forward.1} parent=1 // pred_check_branch
      %162 = sbr.rel (0) target = $region77
    $region76: #{conv_generator_forward.1} parent=1 // pred_region
      %164 = dma.done [#allocation12], 16
    $region77: #{conv_generator_forward.1} parent=1 // pred_fallthru
      _
    // Predicated region
    $region78: #{conv_generator_forward.1} parent=1 // pred_check
      _
    $region79: #{conv_generator_forward.1} parent=1 // pred_check_branch
      %166 = sbr.rel (0) target = $region81
    $region80: #{conv_generator_forward.1} parent=1 // pred_region
      %168 = dma.done [#allocation15], 12544
    $region81: #{conv_generator_forward.1} parent=1 // pred_fallthru
      _
    // Predicated region
    $region82: #{conv_generator_forward.1} parent=1 // pred_check
      _
    $region83: #{conv_generator_forward.1} parent=1 // pred_check_branch
      %170 = sbr.rel (0) target = $region85
    $region84: #{conv_generator_forward.1} parent=1 // pred_region
      %172 = dma.done [#allocation15], 32
    $region85: #{conv_generator_forward.1} parent=1 // pred_fallthru
      _
    %v174 = vld [vmem:[#allocation3] sm:$0x3]
    %v175 = vpack.c.bf16 %v174, %v174
    %v176 = vld [vmem:[#allocation5] sm:$0xff]
    %v177 = vld [vmem:[#allocation5 + $0x8] sm:$0xff]
    %v178 = vld [vmem:[#allocation5 + $0x10] sm:$0xff]
    %v179 = vld [vmem:[#allocation5 + $0x18] sm:$0xff]
    %v180 = vld [vmem:[#allocation5 + $0x20] sm:$0xff]
    %v181 = vld [vmem:[#allocation5 + $0x28] sm:$0xff]
    %v182 = vld [vmem:[#allocation5 + $0x30] sm:$0xff]
    %v183 = vld [vmem:[#allocation5 + $0x38] sm:$0xff]
    %v184 = vld [vmem:[#allocation5 + $0x40] sm:$0xff]
    %v185 = vld [vmem:[#allocation5 + $0x48] sm:$0xff]
    %v186 = vld [vmem:[#allocation5 + $0x50] sm:$0xff]
    %v187 = vld [vmem:[#allocation5 + $0x58] sm:$0xff]
    %v188 = vld [vmem:[#allocation5 + $0x60] sm:$0xff]
    %v189 = vld [vmem:[#allocation5 + $0x68] sm:$0xff]
    %v190 = vld [vmem:[#allocation5 + $0x70] sm:$0xff]
    %v191 = vld [vmem:[#allocation5 + $0x78] sm:$0xff]
    %v192 = vld [vmem:[#allocation7] sm:$0x3]
    %v194 = vperm.slane %v192, 0
    %v195 = vperm.slane %v192, 1
    %v214 = vunpack.c.l.b16 %v176
    %v215 = vunpack.c.h.b16 %v176
    %v216 = vunpack.c.l.b16 %v177
    %v217 = vunpack.c.h.b16 %v177
    %v218 = vunpack.c.l.b16 %v178
    %v219 = vunpack.c.h.b16 %v178
    %v220 = vunpack.c.l.b16 %v179
    %v221 = vunpack.c.h.b16 %v179
    %v222 = vunpack.c.l.b16 %v180
    %v223 = vunpack.c.h.b16 %v180
    %v224 = vunpack.c.l.b16 %v181
    %v225 = vunpack.c.h.b16 %v181
    %v226 = vunpack.c.l.b16 %v182
    %v227 = vunpack.c.h.b16 %v182
    %v228 = vunpack.c.l.b16 %v183
    %v229 = vunpack.c.h.b16 %v183
    %v230 = vunpack.c.l.b16 %v184
    %v231 = vunpack.c.h.b16 %v184
    %v232 = vunpack.c.l.b16 %v185
    %v233 = vunpack.c.h.b16 %v185
    %v234 = vunpack.c.l.b16 %v186
    %v235 = vunpack.c.h.b16 %v186
    %v236 = vunpack.c.l.b16 %v187
    %v237 = vunpack.c.h.b16 %v187
    %v238 = vunpack.c.l.b16 %v188
    %v239 = vunpack.c.h.b16 %v188
    %v240 = vunpack.c.l.b16 %v189
    %v241 = vunpack.c.h.b16 %v189
    %v242 = vunpack.c.l.b16 %v190
    %v243 = vunpack.c.h.b16 %v190
    %v244 = vunpack.c.l.b16 %v191
    %v245 = vunpack.c.h.b16 %v191
    %v246 = vpack.c.b16 %v216, %v214
    %v247 = vpack.c.b16 %v217, %v215
    %v248 = vpack.c.b16 %v220, %v218
    %v249 = vpack.c.b16 %v221, %v219
    %v250 = vpack.c.b16 %v224, %v222
    %v251 = vpack.c.b16 %v225, %v223
    %v252 = vpack.c.b16 %v228, %v226
    %v253 = vpack.c.b16 %v229, %v227
    %v254 = vpack.c.b16 %v232, %v230
    %v255 = vpack.c.b16 %v233, %v231
    %v256 = vpack.c.b16 %v236, %v234
    %v257 = vpack.c.b16 %v237, %v235
    %v258 = vpack.c.b16 %v240, %v238
    %v259 = vpack.c.b16 %v241, %v239
    %v260 = vpack.c.b16 %v244, %v242
    %v261 = vpack.c.b16 %v245, %v243
    %278 = vmatpush.bf16.msra.mxu0 %v260
    %279 = vmatpush.bf16.msra.mxu0 %v258
    %280 = vmatpush.bf16.msra.mxu0 %v256
    %281 = vmatpush.bf16.msra.mxu0 %v254
    %282 = vmatpush.bf16.msra.mxu0 %v252
    %283 = vmatpush.bf16.msra.mxu0 %v250
    %284 = vmatpush.bf16.msra.mxu0 %v248
    %285 = vmatpush.bf16.msra.mxu0 %v246
    %286 = vmatmul.bf16.gmra.mxu0 %v175
    %v287 = vpop.f32.mrf.mxu0
    %v288 = vadd.f32 %v194, %v287
    %v289 = vpop.f32.mrf.mxu0
    %290 = vdwg.mxu0
    %291 = vmatpush.bf16.msra.mxu0 %v261
    %292 = vmatpush.bf16.msra.mxu0 %v259
    %293 = vmatpush.bf16.msra.mxu0 %v257
    %294 = vmatpush.bf16.msra.mxu0 %v255
    %295 = vmatpush.bf16.msra.mxu0 %v253
    %296 = vmatpush.bf16.msra.mxu0 %v251
    %297 = vmatpush.bf16.msra.mxu0 %v249
    %298 = vmatpush.bf16.msra.mxu0 %v247
    %299 = vmatmul.bf16.gmra.mxu0 %v175
    %v300 = vpop.f32.mrf.mxu0
    %v301 = vadd.f32 %v195, %v300
    %v302 = vpop.f32.mrf.mxu0
    %303 = vdwg.mxu0
    %v304 = vmax.f32 %v288, 0.0
    %v305 = vmax.f32 %v301, 0.0
    %v306 = vpack.c.bf16 %v305, %v304
    %307 = vst [vmem:[#allocation2] sm:$0x11] %v306
    %s308 = scalar_lea.vmem [#allocation5], 128
    %v309 = vld [vmem:[%s308] sm:$0xff]
    %v310 = vld [vmem:[%s308 + $0x8] sm:$0xff]
    %v311 = vld [vmem:[%s308 + $0x10] sm:$0xff]
    %v312 = vld [vmem:[%s308 + $0x18] sm:$0xff]
    %v313 = vld [vmem:[%s308 + $0x20] sm:$0xff]
    %v314 = vld [vmem:[%s308 + $0x28] sm:$0xff]
    %v315 = vld [vmem:[%s308 + $0x30] sm:$0xff]
    %v316 = vld [vmem:[%s308 + $0x38] sm:$0xff]
    %v317 = vld [vmem:[%s308 + $0x40] sm:$0xff]
    %v318 = vld [vmem:[%s308 + $0x48] sm:$0xff]
    %v319 = vld [vmem:[%s308 + $0x50] sm:$0xff]
    %v320 = vld [vmem:[%s308 + $0x58] sm:$0xff]
    %v321 = vld [vmem:[%s308 + $0x60] sm:$0xff]
    %v322 = vld [vmem:[%s308 + $0x68] sm:$0xff]
    %v323 = vld [vmem:[%s308 + $0x70] sm:$0xff]
    %v324 = vld [vmem:[%s308 + $0x78] sm:$0xff]
    %s325 = scalar_lea.vmem [#allocation7], 2
    %v326 = vld [vmem:[%s325] sm:$0x3]
    %v328 = vperm.slane %v326, 0
    %v329 = vperm.slane %v326, 1
    %v348 = vunpack.c.l.b16 %v309
    %v349 = vunpack.c.h.b16 %v309
    %v350 = vunpack.c.l.b16 %v310
    %v351 = vunpack.c.h.b16 %v310
    %v352 = vunpack.c.l.b16 %v311
    %v353 = vunpack.c.h.b16 %v311
    %v354 = vunpack.c.l.b16 %v312
    %v355 = vunpack.c.h.b16 %v312
    %v356 = vunpack.c.l.b16 %v313
    %v357 = vunpack.c.h.b16 %v313
    %v358 = vunpack.c.l.b16 %v314
    %v359 = vunpack.c.h.b16 %v314
    %v360 = vunpack.c.l.b16 %v315
    %v361 = vunpack.c.h.b16 %v315
    %v362 = vunpack.c.l.b16 %v316
    %v363 = vunpack.c.h.b16 %v316
    %v364 = vunpack.c.l.b16 %v317
    %v365 = vunpack.c.h.b16 %v317
    %v366 = vunpack.c.l.b16 %v318
    %v367 = vunpack.c.h.b16 %v318
    %v368 = vunpack.c.l.b16 %v319
    %v369 = vunpack.c.h.b16 %v319
    %v370 = vunpack.c.l.b16 %v320
    %v371 = vunpack.c.h.b16 %v320
    %v372 = vunpack.c.l.b16 %v321
    %v373 = vunpack.c.h.b16 %v321
    %v374 = vunpack.c.l.b16 %v322
    %v375 = vunpack.c.h.b16 %v322
    %v376 = vunpack.c.l.b16 %v323
    %v377 = vunpack.c.h.b16 %v323
    %v378 = vunpack.c.l.b16 %v324
    %v379 = vunpack.c.h.b16 %v324
    %v380 = vpack.c.b16 %v350, %v348
    %v381 = vpack.c.b16 %v351, %v349
    %v382 = vpack.c.b16 %v354, %v352
    %v383 = vpack.c.b16 %v355, %v353
    %v384 = vpack.c.b16 %v358, %v356
    %v385 = vpack.c.b16 %v359, %v357
    %v386 = vpack.c.b16 %v362, %v360
    %v387 = vpack.c.b16 %v363, %v361
    %v388 = vpack.c.b16 %v366, %v364
    %v389 = vpack.c.b16 %v367, %v365
    %v390 = vpack.c.b16 %v370, %v368
    %v391 = vpack.c.b16 %v371, %v369
    %v392 = vpack.c.b16 %v374, %v372
    %v393 = vpack.c.b16 %v375, %v373
    %v394 = vpack.c.b16 %v378, %v376
    %v395 = vpack.c.b16 %v379, %v377
    %412 = vmatpush.bf16.msra.mxu0 %v394
    %413 = vmatpush.bf16.msra.mxu0 %v392
    %414 = vmatpush.bf16.msra.mxu0 %v390
    %415 = vmatpush.bf16.msra.mxu0 %v388
    %416 = vmatpush.bf16.msra.mxu0 %v386
    %417 = vmatpush.bf16.msra.mxu0 %v384
    %418 = vmatpush.bf16.msra.mxu0 %v382
    %419 = vmatpush.bf16.msra.mxu0 %v380
    %420 = vmatmul.bf16.gmra.mxu0 %v175
    %v421 = vpop.f32.mrf.mxu0
    %v422 = vadd.f32 %v328, %v421
    %v423 = vpop.f32.mrf.mxu0
    %424 = vdwg.mxu0
    %425 = vmatpush.bf16.msra.mxu0 %v395
    %426 = vmatpush.bf16.msra.mxu0 %v393
    %427 = vmatpush.bf16.msra.mxu0 %v391
    %428 = vmatpush.bf16.msra.mxu0 %v389
    %429 = vmatpush.bf16.msra.mxu0 %v387
    %430 = vmatpush.bf16.msra.mxu0 %v385
    %431 = vmatpush.bf16.msra.mxu0 %v383
    %432 = vmatpush.bf16.msra.mxu0 %v381
    %433 = vmatmul.bf16.gmra.mxu0 %v175
    %v434 = vpop.f32.mrf.mxu0
    %v435 = vadd.f32 %v329, %v434
    %v436 = vpop.f32.mrf.mxu0
    %437 = vdwg.mxu0
    %v438 = vmax.f32 %v422, 0.0
    %v439 = vmax.f32 %v435, 0.0
    %v440 = vpack.c.bf16 %v439, %v438
    %v442 = vrot.slane %v440, 7
    %444 = vst [vmem:[#allocation2] sm:$0x22] %v442
    %s445 = scalar_lea.vmem [#allocation5], 256
    %v446 = vld [vmem:[%s445] sm:$0xff]
    %v447 = vld [vmem:[%s445 + $0x8] sm:$0xff]
    %v448 = vld [vmem:[%s445 + $0x10] sm:$0xff]
    %v449 = vld [vmem:[%s445 + $0x18] sm:$0xff]
    %v450 = vld [vmem:[%s445 + $0x20] sm:$0xff]
    %v451 = vld [vmem:[%s445 + $0x28] sm:$0xff]
    %v452 = vld [vmem:[%s445 + $0x30] sm:$0xff]
    %v453 = vld [vmem:[%s445 + $0x38] sm:$0xff]
    %v454 = vld [vmem:[%s445 + $0x40] sm:$0xff]
    %v455 = vld [vmem:[%s445 + $0x48] sm:$0xff]
    %v456 = vld [vmem:[%s445 + $0x50] sm:$0xff]
    %v457 = vld [vmem:[%s445 + $0x58] sm:$0xff]
    %v458 = vld [vmem:[%s445 + $0x60] sm:$0xff]
    %v459 = vld [vmem:[%s445 + $0x68] sm:$0xff]
    %v460 = vld [vmem:[%s445 + $0x70] sm:$0xff]
    %v461 = vld [vmem:[%s445 + $0x78] sm:$0xff]
    %s462 = scalar_lea.vmem [#allocation7], 4
    %v463 = vld [vmem:[%s462] sm:$0x3]
    %v465 = vperm.slane %v463, 0
    %v466 = vperm.slane %v463, 1
    %v485 = vunpack.c.l.b16 %v446
    %v486 = vunpack.c.h.b16 %v446
    %v487 = vunpack.c.l.b16 %v447
    %v488 = vunpack.c.h.b16 %v447
    %v489 = vunpack.c.l.b16 %v448
    %v490 = vunpack.c.h.b16 %v448
    %v491 = vunpack.c.l.b16 %v449
    %v492 = vunpack.c.h.b16 %v449
    %v493 = vunpack.c.l.b16 %v450
    %v494 = vunpack.c.h.b16 %v450
    %v495 = vunpack.c.l.b16 %v451
    %v496 = vunpack.c.h.b16 %v451
    %v497 = vunpack.c.l.b16 %v452
    %v498 = vunpack.c.h.b16 %v452
    %v499 = vunpack.c.l.b16 %v453
    %v500 = vunpack.c.h.b16 %v453
    %v501 = vunpack.c.l.b16 %v454
    %v502 = vunpack.c.h.b16 %v454
    %v503 = vunpack.c.l.b16 %v455
    %v504 = vunpack.c.h.b16 %v455
    %v505 = vunpack.c.l.b16 %v456
    %v506 = vunpack.c.h.b16 %v456
    %v507 = vunpack.c.l.b16 %v457
    %v508 = vunpack.c.h.b16 %v457
    %v509 = vunpack.c.l.b16 %v458
    %v510 = vunpack.c.h.b16 %v458
    %v511 = vunpack.c.l.b16 %v459
    %v512 = vunpack.c.h.b16 %v459
    %v513 = vunpack.c.l.b16 %v460
    %v514 = vunpack.c.h.b16 %v460
    %v515 = vunpack.c.l.b16 %v461
    %v516 = vunpack.c.h.b16 %v461
    %v517 = vpack.c.b16 %v487, %v485
    %v518 = vpack.c.b16 %v488, %v486
    %v519 = vpack.c.b16 %v491, %v489
    %v520 = vpack.c.b16 %v492, %v490
    %v521 = vpack.c.b16 %v495, %v493
    %v522 = vpack.c.b16 %v496, %v494
    %v523 = vpack.c.b16 %v499, %v497
    %v524 = vpack.c.b16 %v500, %v498
    %v525 = vpack.c.b16 %v503, %v501
    %v526 = vpack.c.b16 %v504, %v502
    %v527 = vpack.c.b16 %v507, %v505
    %v528 = vpack.c.b16 %v508, %v506
    %v529 = vpack.c.b16 %v511, %v509
    %v530 = vpack.c.b16 %v512, %v510
    %v531 = vpack.c.b16 %v515, %v513
    %v532 = vpack.c.b16 %v516, %v514
    %549 = vmatpush.bf16.msra.mxu0 %v531
    %550 = vmatpush.bf16.msra.mxu0 %v529
    %551 = vmatpush.bf16.msra.mxu0 %v527
    %552 = vmatpush.bf16.msra.mxu0 %v525
    %553 = vmatpush.bf16.msra.mxu0 %v523
    %554 = vmatpush.bf16.msra.mxu0 %v521
    %555 = vmatpush.bf16.msra.mxu0 %v519
    %556 = vmatpush.bf16.msra.mxu0 %v517
    %557 = vmatmul.bf16.gmra.mxu0 %v175
    %v558 = vpop.f32.mrf.mxu0
    %v559 = vadd.f32 %v465, %v558
    %v560 = vpop.f32.mrf.mxu0
    %561 = vdwg.mxu0
    %562 = vmatpush.bf16.msra.mxu0 %v532
    %563 = vmatpush.bf16.msra.mxu0 %v530
    %564 = vmatpush.bf16.msra.mxu0 %v528
    %565 = vmatpush.bf16.msra.mxu0 %v526
    %566 = vmatpush.bf16.msra.mxu0 %v524
    %567 = vmatpush.bf16.msra.mxu0 %v522
    %568 = vmatpush.bf16.msra.mxu0 %v520
    %569 = vmatpush.bf16.msra.mxu0 %v518
    %570 = vmatmul.bf16.gmra.mxu0 %v175
    %v571 = vpop.f32.mrf.mxu0
    %v572 = vadd.f32 %v466, %v571
    %v573 = vpop.f32.mrf.mxu0
    %574 = vdwg.mxu0
    %v575 = vmax.f32 %v559, 0.0
    %v576 = vmax.f32 %v572, 0.0
    %v577 = vpack.c.bf16 %v576, %v575
    %v579 = vrot.slane %v577, 6
    %581 = vst [vmem:[#allocation2] sm:$0x44] %v579
    %s582 = scalar_lea.vmem [#allocation5], 384
    %v583 = vld [vmem:[%s582] sm:$0xff]
    %v584 = vld [vmem:[%s582 + $0x8] sm:$0xff]
    %v585 = vld [vmem:[%s582 + $0x10] sm:$0xff]
    %v586 = vld [vmem:[%s582 + $0x18] sm:$0xff]
    %v587 = vld [vmem:[%s582 + $0x20] sm:$0xff]
    %v588 = vld [vmem:[%s582 + $0x28] sm:$0xff]
    %v589 = vld [vmem:[%s582 + $0x30] sm:$0xff]
    %v590 = vld [vmem:[%s582 + $0x38] sm:$0xff]
    %v591 = vld [vmem:[%s582 + $0x40] sm:$0xff]
    %v592 = vld [vmem:[%s582 + $0x48] sm:$0xff]
    %v593 = vld [vmem:[%s582 + $0x50] sm:$0xff]
    %v594 = vld [vmem:[%s582 + $0x58] sm:$0xff]
    %v595 = vld [vmem:[%s582 + $0x60] sm:$0xff]
    %v596 = vld [vmem:[%s582 + $0x68] sm:$0xff]
    %v597 = vld [vmem:[%s582 + $0x70] sm:$0xff]
    %v598 = vld [vmem:[%s582 + $0x78] sm:$0xff]
    %s599 = scalar_lea.vmem [#allocation7], 6
    %v600 = vld [vmem:[%s599] sm:$0x3]
    %v602 = vperm.slane %v600, 0
    %v603 = vperm.slane %v600, 1
    %v622 = vunpack.c.l.b16 %v583
    %v623 = vunpack.c.h.b16 %v583
    %v624 = vunpack.c.l.b16 %v584
    %v625 = vunpack.c.h.b16 %v584
    %v626 = vunpack.c.l.b16 %v585
    %v627 = vunpack.c.h.b16 %v585
    %v628 = vunpack.c.l.b16 %v586
    %v629 = vunpack.c.h.b16 %v586
    %v630 = vunpack.c.l.b16 %v587
    %v631 = vunpack.c.h.b16 %v587
    %v632 = vunpack.c.l.b16 %v588
    %v633 = vunpack.c.h.b16 %v588
    %v634 = vunpack.c.l.b16 %v589
    %v635 = vunpack.c.h.b16 %v589
    %v636 = vunpack.c.l.b16 %v590
    %v637 = vunpack.c.h.b16 %v590
    %v638 = vunpack.c.l.b16 %v591
    %v639 = vunpack.c.h.b16 %v591
    %v640 = vunpack.c.l.b16 %v592
    %v641 = vunpack.c.h.b16 %v592
    %v642 = vunpack.c.l.b16 %v593
    %v643 = vunpack.c.h.b16 %v593
    %v644 = vunpack.c.l.b16 %v594
    %v645 = vunpack.c.h.b16 %v594
    %v646 = vunpack.c.l.b16 %v595
    %v647 = vunpack.c.h.b16 %v595
    %v648 = vunpack.c.l.b16 %v596
    %v649 = vunpack.c.h.b16 %v596
    %v650 = vunpack.c.l.b16 %v597
    %v651 = vunpack.c.h.b16 %v597
    %v652 = vunpack.c.l.b16 %v598
    %v653 = vunpack.c.h.b16 %v598
    %v654 = vpack.c.b16 %v624, %v622
    %v655 = vpack.c.b16 %v625, %v623
    %v656 = vpack.c.b16 %v628, %v626
    %v657 = vpack.c.b16 %v629, %v627
    %v658 = vpack.c.b16 %v632, %v630
    %v659 = vpack.c.b16 %v633, %v631
    %v660 = vpack.c.b16 %v636, %v634
    %v661 = vpack.c.b16 %v637, %v635
    %v662 = vpack.c.b16 %v640, %v638
    %v663 = vpack.c.b16 %v641, %v639
    %v664 = vpack.c.b16 %v644, %v642
    %v665 = vpack.c.b16 %v645, %v643
    %v666 = vpack.c.b16 %v648, %v646
    %v667 = vpack.c.b16 %v649, %v647
    %v668 = vpack.c.b16 %v652, %v650
    %v669 = vpack.c.b16 %v653, %v651
    %686 = vmatpush.bf16.msra.mxu0 %v668
    %687 = vmatpush.bf16.msra.mxu0 %v666
    %688 = vmatpush.bf16.msra.mxu0 %v664
    %689 = vmatpush.bf16.msra.mxu0 %v662
    %690 = vmatpush.bf16.msra.mxu0 %v660
    %691 = vmatpush.bf16.msra.mxu0 %v658
    %692 = vmatpush.bf16.msra.mxu0 %v656
    %693 = vmatpush.bf16.msra.mxu0 %v654
    %694 = vmatmul.bf16.gmra.mxu0 %v175
    %v695 = vpop.f32.mrf.mxu0
    %v696 = vadd.f32 %v602, %v695
    %v697 = vpop.f32.mrf.mxu0
    %698 = vdwg.mxu0
    %699 = vmatpush.bf16.msra.mxu0 %v669
    %700 = vmatpush.bf16.msra.mxu0 %v667
    %701 = vmatpush.bf16.msra.mxu0 %v665
    %702 = vmatpush.bf16.msra.mxu0 %v663
    %703 = vmatpush.bf16.msra.mxu0 %v661
    %704 = vmatpush.bf16.msra.mxu0 %v659
    %705 = vmatpush.bf16.msra.mxu0 %v657
    %706 = vmatpush.bf16.msra.mxu0 %v655
    %707 = vmatmul.bf16.gmra.mxu0 %v175
    %v708 = vpop.f32.mrf.mxu0
    %v709 = vadd.f32 %v603, %v708
    %v710 = vpop.f32.mrf.mxu0
    %711 = vdwg.mxu0
    %v712 = vmax.f32 %v696, 0.0
    %v713 = vmax.f32 %v709, 0.0
    %v714 = vpack.c.bf16 %v713, %v712
    %v716 = vrot.slane %v714, 5
    %718 = vst [vmem:[#allocation2] sm:$0x88] %v716
    %s719 = scalar_lea.vmem [#allocation5], 512
    %v720 = vld [vmem:[%s719] sm:$0xff]
    %v721 = vld [vmem:[%s719 + $0x8] sm:$0xff]
    %v722 = vld [vmem:[%s719 + $0x10] sm:$0xff]
    %v723 = vld [vmem:[%s719 + $0x18] sm:$0xff]
    %v724 = vld [vmem:[%s719 + $0x20] sm:$0xff]
    %v725 = vld [vmem:[%s719 + $0x28] sm:$0xff]
    %v726 = vld [vmem:[%s719 + $0x30] sm:$0xff]
    %v727 = vld [vmem:[%s719 + $0x38] sm:$0xff]
    %v728 = vld [vmem:[%s719 + $0x40] sm:$0xff]
    %v729 = vld [vmem:[%s719 + $0x48] sm:$0xff]
    %v730 = vld [vmem:[%s719 + $0x50] sm:$0xff]
    %v731 = vld [vmem:[%s719 + $0x58] sm:$0xff]
    %v732 = vld [vmem:[%s719 + $0x60] sm:$0xff]
    %v733 = vld [vmem:[%s719 + $0x68] sm:$0xff]
    %v734 = vld [vmem:[%s719 + $0x70] sm:$0xff]
    %v735 = vld [vmem:[%s719 + $0x78] sm:$0xff]
    %s736 = scalar_lea.vmem [#allocation7], 8
    %v737 = vld [vmem:[%s736] sm:$0x3]
    %v739 = vperm.slane %v737, 0
    %v740 = vperm.slane %v737, 1
    %v759 = vunpack.c.l.b16 %v720
    %v760 = vunpack.c.h.b16 %v720
    %v761 = vunpack.c.l.b16 %v721
    %v762 = vunpack.c.h.b16 %v721
    %v763 = vunpack.c.l.b16 %v722
    %v764 = vunpack.c.h.b16 %v722
    %v765 = vunpack.c.l.b16 %v723
    %v766 = vunpack.c.h.b16 %v723
    %v767 = vunpack.c.l.b16 %v724
    %v768 = vunpack.c.h.b16 %v724
    %v769 = vunpack.c.l.b16 %v725
    %v770 = vunpack.c.h.b16 %v725
    %v771 = vunpack.c.l.b16 %v726
    %v772 = vunpack.c.h.b16 %v726
    %v773 = vunpack.c.l.b16 %v727
    %v774 = vunpack.c.h.b16 %v727
    %v775 = vunpack.c.l.b16 %v728
    %v776 = vunpack.c.h.b16 %v728
    %v777 = vunpack.c.l.b16 %v729
    %v778 = vunpack.c.h.b16 %v729
    %v779 = vunpack.c.l.b16 %v730
    %v780 = vunpack.c.h.b16 %v730
    %v781 = vunpack.c.l.b16 %v731
    %v782 = vunpack.c.h.b16 %v731
    %v783 = vunpack.c.l.b16 %v732
    %v784 = vunpack.c.h.b16 %v732
    %v785 = vunpack.c.l.b16 %v733
    %v786 = vunpack.c.h.b16 %v733
    %v787 = vunpack.c.l.b16 %v734
    %v788 = vunpack.c.h.b16 %v734
    %v789 = vunpack.c.l.b16 %v735
    %v790 = vunpack.c.h.b16 %v735
    %v791 = vpack.c.b16 %v761, %v759
    %v792 = vpack.c.b16 %v762, %v760
    %v793 = vpack.c.b16 %v765, %v763
    %v794 = vpack.c.b16 %v766, %v764
    %v795 = vpack.c.b16 %v769, %v767
    %v796 = vpack.c.b16 %v770, %v768
    %v797 = vpack.c.b16 %v773, %v771
    %v798 = vpack.c.b16 %v774, %v772
    %v799 = vpack.c.b16 %v777, %v775
    %v800 = vpack.c.b16 %v778, %v776
    %v801 = vpack.c.b16 %v781, %v779
    %v802 = vpack.c.b16 %v782, %v780
    %v803 = vpack.c.b16 %v785, %v783
    %v804 = vpack.c.b16 %v786, %v784
    %v805 = vpack.c.b16 %v789, %v787
    %v806 = vpack.c.b16 %v790, %v788
    %823 = vmatpush.bf16.msra.mxu0 %v805
    %824 = vmatpush.bf16.msra.mxu0 %v803
    %825 = vmatpush.bf16.msra.mxu0 %v801
    %826 = vmatpush.bf16.msra.mxu0 %v799
    %827 = vmatpush.bf16.msra.mxu0 %v797
    %828 = vmatpush.bf16.msra.mxu0 %v795
    %829 = vmatpush.bf16.msra.mxu0 %v793
    %830 = vmatpush.bf16.msra.mxu0 %v791
    %831 = vmatmul.bf16.gmra.mxu0 %v175
    %v832 = vpop.f32.mrf.mxu0
    %v833 = vadd.f32 %v739, %v832
    %v834 = vpop.f32.mrf.mxu0
    %835 = vdwg.mxu0
    %836 = vmatpush.bf16.msra.mxu0 %v806
    %837 = vmatpush.bf16.msra.mxu0 %v804
    %838 = vmatpush.bf16.msra.mxu0 %v802
    %839 = vmatpush.bf16.msra.mxu0 %v800
    %840 = vmatpush.bf16.msra.mxu0 %v798
    %841 = vmatpush.bf16.msra.mxu0 %v796
    %842 = vmatpush.bf16.msra.mxu0 %v794
    %843 = vmatpush.bf16.msra.mxu0 %v792
    %844 = vmatmul.bf16.gmra.mxu0 %v175
    %v845 = vpop.f32.mrf.mxu0
    %v846 = vadd.f32 %v740, %v845
    %v847 = vpop.f32.mrf.mxu0
    %848 = vdwg.mxu0
    %v849 = vmax.f32 %v833, 0.0
    %v850 = vmax.f32 %v846, 0.0
    %v851 = vpack.c.bf16 %v850, %v849
    %852 = vst [vmem:[#allocation2 + $0x8] sm:$0x11] %v851
    %s853 = scalar_lea.vmem [#allocation5], 640
    %v854 = vld [vmem:[%s853] sm:$0xff]
    %v855 = vld [vmem:[%s853 + $0x8] sm:$0xff]
    %v856 = vld [vmem:[%s853 + $0x10] sm:$0xff]
    %v857 = vld [vmem:[%s853 + $0x18] sm:$0xff]
    %v858 = vld [vmem:[%s853 + $0x20] sm:$0xff]
    %v859 = vld [vmem:[%s853 + $0x28] sm:$0xff]
    %v860 = vld [vmem:[%s853 + $0x30] sm:$0xff]
    %v861 = vld [vmem:[%s853 + $0x38] sm:$0xff]
    %v862 = vld [vmem:[%s853 + $0x40] sm:$0xff]
    %v863 = vld [vmem:[%s853 + $0x48] sm:$0xff]
    %v864 = vld [vmem:[%s853 + $0x50] sm:$0xff]
    %v865 = vld [vmem:[%s853 + $0x58] sm:$0xff]
    %v866 = vld [vmem:[%s853 + $0x60] sm:$0xff]
    %v867 = vld [vmem:[%s853 + $0x68] sm:$0xff]
    %v868 = vld [vmem:[%s853 + $0x70] sm:$0xff]
    %v869 = vld [vmem:[%s853 + $0x78] sm:$0xff]
    %s870 = scalar_lea.vmem [#allocation7], 10
    %v871 = vld [vmem:[%s870] sm:$0x3]
    %v873 = vperm.slane %v871, 0
    %v874 = vperm.slane %v871, 1
    %v893 = vunpack.c.l.b16 %v854
    %v894 = vunpack.c.h.b16 %v854
    %v895 = vunpack.c.l.b16 %v855
    %v896 = vunpack.c.h.b16 %v855
    %v897 = vunpack.c.l.b16 %v856
    %v898 = vunpack.c.h.b16 %v856
    %v899 = vunpack.c.l.b16 %v857
    %v900 = vunpack.c.h.b16 %v857
    %v901 = vunpack.c.l.b16 %v858
    %v902 = vunpack.c.h.b16 %v858
    %v903 = vunpack.c.l.b16 %v859
    %v904 = vunpack.c.h.b16 %v859
    %v905 = vunpack.c.l.b16 %v860
    %v906 = vunpack.c.h.b16 %v860
    %v907 = vunpack.c.l.b16 %v861
    %v908 = vunpack.c.h.b16 %v861
    %v909 = vunpack.c.l.b16 %v862
    %v910 = vunpack.c.h.b16 %v862
    %v911 = vunpack.c.l.b16 %v863
    %v912 = vunpack.c.h.b16 %v863
    %v913 = vunpack.c.l.b16 %v864
    %v914 = vunpack.c.h.b16 %v864
    %v915 = vunpack.c.l.b16 %v865
    %v916 = vunpack.c.h.b16 %v865
    %v917 = vunpack.c.l.b16 %v866
    %v918 = vunpack.c.h.b16 %v866
    %v919 = vunpack.c.l.b16 %v867
    %v920 = vunpack.c.h.b16 %v867
    %v921 = vunpack.c.l.b16 %v868
    %v922 = vunpack.c.h.b16 %v868
    %v923 = vunpack.c.l.b16 %v869
    %v924 = vunpack.c.h.b16 %v869
    %v925 = vpack.c.b16 %v895, %v893
    %v926 = vpack.c.b16 %v896, %v894
    %v927 = vpack.c.b16 %v899, %v897
    %v928 = vpack.c.b16 %v900, %v898
    %v929 = vpack.c.b16 %v903, %v901
    %v930 = vpack.c.b16 %v904, %v902
    %v931 = vpack.c.b16 %v907, %v905
    %v932 = vpack.c.b16 %v908, %v906
    %v933 = vpack.c.b16 %v911, %v909
    %v934 = vpack.c.b16 %v912, %v910
    %v935 = vpack.c.b16 %v915, %v913
    %v936 = vpack.c.b16 %v916, %v914
    %v937 = vpack.c.b16 %v919, %v917
    %v938 = vpack.c.b16 %v920, %v918
    %v939 = vpack.c.b16 %v923, %v921
    %v940 = vpack.c.b16 %v924, %v922
    %957 = vmatpush.bf16.msra.mxu0 %v939
    %958 = vmatpush.bf16.msra.mxu0 %v937
    %959 = vmatpush.bf16.msra.mxu0 %v935
    %960 = vmatpush.bf16.msra.mxu0 %v933
    %961 = vmatpush.bf16.msra.mxu0 %v931
    %962 = vmatpush.bf16.msra.mxu0 %v929
    %963 = vmatpush.bf16.msra.mxu0 %v927
    %964 = vmatpush.bf16.msra.mxu0 %v925
    %965 = vmatmul.bf16.gmra.mxu0 %v175
    %v966 = vpop.f32.mrf.mxu0
    %v967 = vadd.f32 %v873, %v966
    %v968 = vpop.f32.mrf.mxu0
    %969 = vdwg.mxu0
    %970 = vmatpush.bf16.msra.mxu0 %v940
    %971 = vmatpush.bf16.msra.mxu0 %v938
    %972 = vmatpush.bf16.msra.mxu0 %v936
    %973 = vmatpush.bf16.msra.mxu0 %v934
    %974 = vmatpush.bf16.msra.mxu0 %v932
    %975 = vmatpush.bf16.msra.mxu0 %v930
    %976 = vmatpush.bf16.msra.mxu0 %v928
    %977 = vmatpush.bf16.msra.mxu0 %v926
    %978 = vmatmul.bf16.gmra.mxu0 %v175
    %v979 = vpop.f32.mrf.mxu0
    %v980 = vadd.f32 %v874, %v979
    %v981 = vpop.f32.mrf.mxu0
    %982 = vdwg.mxu0
    %v983 = vmax.f32 %v967, 0.0
    %v984 = vmax.f32 %v980, 0.0
    %v985 = vpack.c.bf16 %v984, %v983
    %v987 = vrot.slane %v985, 7
    %989 = vst [vmem:[#allocation2 + $0x8] sm:$0x22] %v987
    %s990 = scalar_lea.vmem [#allocation5], 768
    %v991 = vld [vmem:[%s990] sm:$0xff]
    %v992 = vld [vmem:[%s990 + $0x8] sm:$0xff]
    %v993 = vld [vmem:[%s990 + $0x10] sm:$0xff]
    %v994 = vld [vmem:[%s990 + $0x18] sm:$0xff]
    %v995 = vld [vmem:[%s990 + $0x20] sm:$0xff]
    %v996 = vld [vmem:[%s990 + $0x28] sm:$0xff]
    %v997 = vld [vmem:[%s990 + $0x30] sm:$0xff]
    %v998 = vld [vmem:[%s990 + $0x38] sm:$0xff]
    %v999 = vld [vmem:[%s990 + $0x40] sm:$0xff]
    %v1000 = vld [vmem:[%s990 + $0x48] sm:$0xff]
    %v1001 = vld [vmem:[%s990 + $0x50] sm:$0xff]
    %v1002 = vld [vmem:[%s990 + $0x58] sm:$0xff]
    %v1003 = vld [vmem:[%s990 + $0x60] sm:$0xff]
    %v1004 = vld [vmem:[%s990 + $0x68] sm:$0xff]
    %v1005 = vld [vmem:[%s990 + $0x70] sm:$0xff]
    %v1006 = vld [vmem:[%s990 + $0x78] sm:$0xff]
    %s1007 = scalar_lea.vmem [#allocation7], 12
    %v1008 = vld [vmem:[%s1007] sm:$0x3]
    %v1010 = vperm.slane %v1008, 0
    %v1011 = vperm.slane %v1008, 1
    %v1030 = vunpack.c.l.b16 %v991
    %v1031 = vunpack.c.h.b16 %v991
    %v1032 = vunpack.c.l.b16 %v992
    %v1033 = vunpack.c.h.b16 %v992
    %v1034 = vunpack.c.l.b16 %v993
    %v1035 = vunpack.c.h.b16 %v993
    %v1036 = vunpack.c.l.b16 %v994
    %v1037 = vunpack.c.h.b16 %v994
    %v1038 = vunpack.c.l.b16 %v995
    %v1039 = vunpack.c.h.b16 %v995
    %v1040 = vunpack.c.l.b16 %v996
    %v1041 = vunpack.c.h.b16 %v996
    %v1042 = vunpack.c.l.b16 %v997
    %v1043 = vunpack.c.h.b16 %v997
    %v1044 = vunpack.c.l.b16 %v998
    %v1045 = vunpack.c.h.b16 %v998
    %v1046 = vunpack.c.l.b16 %v999
    %v1047 = vunpack.c.h.b16 %v999
    %v1048 = vunpack.c.l.b16 %v1000
    %v1049 = vunpack.c.h.b16 %v1000
    %v1050 = vunpack.c.l.b16 %v1001
    %v1051 = vunpack.c.h.b16 %v1001
    %v1052 = vunpack.c.l.b16 %v1002
    %v1053 = vunpack.c.h.b16 %v1002
    %v1054 = vunpack.c.l.b16 %v1003
    %v1055 = vunpack.c.h.b16 %v1003
    %v1056 = vunpack.c.l.b16 %v1004
    %v1057 = vunpack.c.h.b16 %v1004
    %v1058 = vunpack.c.l.b16 %v1005
    %v1059 = vunpack.c.h.b16 %v1005
    %v1060 = vunpack.c.l.b16 %v1006
    %v1061 = vunpack.c.h.b16 %v1006
    %v1062 = vpack.c.b16 %v1032, %v1030
    %v1063 = vpack.c.b16 %v1033, %v1031
    %v1064 = vpack.c.b16 %v1036, %v1034
    %v1065 = vpack.c.b16 %v1037, %v1035
    %v1066 = vpack.c.b16 %v1040, %v1038
    %v1067 = vpack.c.b16 %v1041, %v1039
    %v1068 = vpack.c.b16 %v1044, %v1042
    %v1069 = vpack.c.b16 %v1045, %v1043
    %v1070 = vpack.c.b16 %v1048, %v1046
    %v1071 = vpack.c.b16 %v1049, %v1047
    %v1072 = vpack.c.b16 %v1052, %v1050
    %v1073 = vpack.c.b16 %v1053, %v1051
    %v1074 = vpack.c.b16 %v1056, %v1054
    %v1075 = vpack.c.b16 %v1057, %v1055
    %v1076 = vpack.c.b16 %v1060, %v1058
    %v1077 = vpack.c.b16 %v1061, %v1059
    %1094 = vmatpush.bf16.msra.mxu0 %v1076
    %1095 = vmatpush.bf16.msra.mxu0 %v1074
    %1096 = vmatpush.bf16.msra.mxu0 %v1072
    %1097 = vmatpush.bf16.msra.mxu0 %v1070
    %1098 = vmatpush.bf16.msra.mxu0 %v1068
    %1099 = vmatpush.bf16.msra.mxu0 %v1066
    %1100 = vmatpush.bf16.msra.mxu0 %v1064
    %1101 = vmatpush.bf16.msra.mxu0 %v1062
    %1102 = vmatmul.bf16.gmra.mxu0 %v175
    %v1103 = vpop.f32.mrf.mxu0
    %v1104 = vadd.f32 %v1010, %v1103
    %v1105 = vpop.f32.mrf.mxu0
    %1106 = vdwg.mxu0
    %1107 = vmatpush.bf16.msra.mxu0 %v1077
    %1108 = vmatpush.bf16.msra.mxu0 %v1075
    %1109 = vmatpush.bf16.msra.mxu0 %v1073
    %1110 = vmatpush.bf16.msra.mxu0 %v1071
    %1111 = vmatpush.bf16.msra.mxu0 %v1069
    %1112 = vmatpush.bf16.msra.mxu0 %v1067
    %1113 = vmatpush.bf16.msra.mxu0 %v1065
    %1114 = vmatpush.bf16.msra.mxu0 %v1063
    %1115 = vmatmul.bf16.gmra.mxu0 %v175
    %v1116 = vpop.f32.mrf.mxu0
    %v1117 = vadd.f32 %v1011, %v1116
    %v1118 = vpop.f32.mrf.mxu0
    %1119 = vdwg.mxu0
    %v1120 = vmax.f32 %v1104, 0.0
    %v1121 = vmax.f32 %v1117, 0.0
    %v1122 = vpack.c.bf16 %v1121, %v1120
    %v1124 = vrot.slane %v1122, 6
    %1126 = vst [vmem:[#allocation2 + $0x8] sm:$0x44] %v1124
    %s1127 = scalar_lea.vmem [#allocation5], 896
    %v1128 = vld [vmem:[%s1127] sm:$0xff]
    %v1129 = vld [vmem:[%s1127 + $0x8] sm:$0xff]
    %v1130 = vld [vmem:[%s1127 + $0x10] sm:$0xff]
    %v1131 = vld [vmem:[%s1127 + $0x18] sm:$0xff]
    %v1132 = vld [vmem:[%s1127 + $0x20] sm:$0xff]
    %v1133 = vld [vmem:[%s1127 + $0x28] sm:$0xff]
    %v1134 = vld [vmem:[%s1127 + $0x30] sm:$0xff]
    %v1135 = vld [vmem:[%s1127 + $0x38] sm:$0xff]
    %v1136 = vld [vmem:[%s1127 + $0x40] sm:$0xff]
    %v1137 = vld [vmem:[%s1127 + $0x48] sm:$0xff]
    %v1138 = vld [vmem:[%s1127 + $0x50] sm:$0xff]
    %v1139 = vld [vmem:[%s1127 + $0x58] sm:$0xff]
    %v1140 = vld [vmem:[%s1127 + $0x60] sm:$0xff]
    %v1141 = vld [vmem:[%s1127 + $0x68] sm:$0xff]
    %v1142 = vld [vmem:[%s1127 + $0x70] sm:$0xff]
    %v1143 = vld [vmem:[%s1127 + $0x78] sm:$0xff]
    %s1144 = scalar_lea.vmem [#allocation7], 14
    %v1145 = vld [vmem:[%s1144] sm:$0x3]
    %v1147 = vperm.slane %v1145, 0
    %v1148 = vperm.slane %v1145, 1
    %v1167 = vunpack.c.l.b16 %v1128
    %v1168 = vunpack.c.h.b16 %v1128
    %v1169 = vunpack.c.l.b16 %v1129
    %v1170 = vunpack.c.h.b16 %v1129
    %v1171 = vunpack.c.l.b16 %v1130
    %v1172 = vunpack.c.h.b16 %v1130
    %v1173 = vunpack.c.l.b16 %v1131
    %v1174 = vunpack.c.h.b16 %v1131
    %v1175 = vunpack.c.l.b16 %v1132
    %v1176 = vunpack.c.h.b16 %v1132
    %v1177 = vunpack.c.l.b16 %v1133
    %v1178 = vunpack.c.h.b16 %v1133
    %v1179 = vunpack.c.l.b16 %v1134
    %v1180 = vunpack.c.h.b16 %v1134
    %v1181 = vunpack.c.l.b16 %v1135
    %v1182 = vunpack.c.h.b16 %v1135
    %v1183 = vunpack.c.l.b16 %v1136
    %v1184 = vunpack.c.h.b16 %v1136
    %v1185 = vunpack.c.l.b16 %v1137
    %v1186 = vunpack.c.h.b16 %v1137
    %v1187 = vunpack.c.l.b16 %v1138
    %v1188 = vunpack.c.h.b16 %v1138
    %v1189 = vunpack.c.l.b16 %v1139
    %v1190 = vunpack.c.h.b16 %v1139
    %v1191 = vunpack.c.l.b16 %v1140
    %v1192 = vunpack.c.h.b16 %v1140
    %v1193 = vunpack.c.l.b16 %v1141
    %v1194 = vunpack.c.h.b16 %v1141
    %v1195 = vunpack.c.l.b16 %v1142
    %v1196 = vunpack.c.h.b16 %v1142
    %v1197 = vunpack.c.l.b16 %v1143
    %v1198 = vunpack.c.h.b16 %v1143
    %v1199 = vpack.c.b16 %v1169, %v1167
    %v1200 = vpack.c.b16 %v1170, %v1168
    %v1201 = vpack.c.b16 %v1173, %v1171
    %v1202 = vpack.c.b16 %v1174, %v1172
    %v1203 = vpack.c.b16 %v1177, %v1175
    %v1204 = vpack.c.b16 %v1178, %v1176
    %v1205 = vpack.c.b16 %v1181, %v1179
    %v1206 = vpack.c.b16 %v1182, %v1180
    %v1207 = vpack.c.b16 %v1185, %v1183
    %v1208 = vpack.c.b16 %v1186, %v1184
    %v1209 = vpack.c.b16 %v1189, %v1187
    %v1210 = vpack.c.b16 %v1190, %v1188
    %v1211 = vpack.c.b16 %v1193, %v1191
    %v1212 = vpack.c.b16 %v1194, %v1192
    %v1213 = vpack.c.b16 %v1197, %v1195
    %v1214 = vpack.c.b16 %v1198, %v1196
    %1231 = vmatpush.bf16.msra.mxu0 %v1213
    %1232 = vmatpush.bf16.msra.mxu0 %v1211
    %1233 = vmatpush.bf16.msra.mxu0 %v1209
    %1234 = vmatpush.bf16.msra.mxu0 %v1207
    %1235 = vmatpush.bf16.msra.mxu0 %v1205
    %1236 = vmatpush.bf16.msra.mxu0 %v1203
    %1237 = vmatpush.bf16.msra.mxu0 %v1201
    %1238 = vmatpush.bf16.msra.mxu0 %v1199
    %1239 = vmatmul.bf16.gmra.mxu0 %v175
    %v1240 = vpop.f32.mrf.mxu0
    %v1241 = vadd.f32 %v1147, %v1240
    %v1242 = vpop.f32.mrf.mxu0
    %1243 = vdwg.mxu0
    %1244 = vmatpush.bf16.msra.mxu0 %v1214
    %1245 = vmatpush.bf16.msra.mxu0 %v1212
    %1246 = vmatpush.bf16.msra.mxu0 %v1210
    %1247 = vmatpush.bf16.msra.mxu0 %v1208
    %1248 = vmatpush.bf16.msra.mxu0 %v1206
    %1249 = vmatpush.bf16.msra.mxu0 %v1204
    %1250 = vmatpush.bf16.msra.mxu0 %v1202
    %1251 = vmatpush.bf16.msra.mxu0 %v1200
    %1252 = vmatmul.bf16.gmra.mxu0 %v175
    %v1253 = vpop.f32.mrf.mxu0
    %v1254 = vadd.f32 %v1148, %v1253
    %v1255 = vpop.f32.mrf.mxu0
    %1256 = vdwg.mxu0
    %v1257 = vmax.f32 %v1241, 0.0
    %v1258 = vmax.f32 %v1254, 0.0
    %v1259 = vpack.c.bf16 %v1258, %v1257
    %v1261 = vrot.slane %v1259, 5
    %1263 = vst [vmem:[#allocation2 + $0x8] sm:$0x88] %v1261
    %s1264 = scalar_lea.vmem [#allocation5], 1024
    %v1265 = vld [vmem:[%s1264] sm:$0xff]
    %v1266 = vld [vmem:[%s1264 + $0x8] sm:$0xff]
    %v1267 = vld [vmem:[%s1264 + $0x10] sm:$0xff]
    %v1268 = vld [vmem:[%s1264 + $0x18] sm:$0xff]
    %v1269 = vld [vmem:[%s1264 + $0x20] sm:$0xff]
    %v1270 = vld [vmem:[%s1264 + $0x28] sm:$0xff]
    %v1271 = vld [vmem:[%s1264 + $0x30] sm:$0xff]
    %v1272 = vld [vmem:[%s1264 + $0x38] sm:$0xff]
    %v1273 = vld [vmem:[%s1264 + $0x40] sm:$0xff]
    %v1274 = vld [vmem:[%s1264 + $0x48] sm:$0xff]
    %v1275 = vld [vmem:[%s1264 + $0x50] sm:$0xff]
    %v1276 = vld [vmem:[%s1264 + $0x58] sm:$0xff]
    %v1277 = vld [vmem:[%s1264 + $0x60] sm:$0xff]
    %v1278 = vld [vmem:[%s1264 + $0x68] sm:$0xff]
    %v1279 = vld [vmem:[%s1264 + $0x70] sm:$0xff]
    %v1280 = vld [vmem:[%s1264 + $0x78] sm:$0xff]
    %s1281 = scalar_lea.vmem [#allocation7], 16
    %v1282 = vld [vmem:[%s1281] sm:$0x3]
    %v1284 = vperm.slane %v1282, 0
    %v1285 = vperm.slane %v1282, 1
    %v1304 = vunpack.c.l.b16 %v1265
    %v1305 = vunpack.c.h.b16 %v1265
    %v1306 = vunpack.c.l.b16 %v1266
    %v1307 = vunpack.c.h.b16 %v1266
    %v1308 = vunpack.c.l.b16 %v1267
    %v1309 = vunpack.c.h.b16 %v1267
    %v1310 = vunpack.c.l.b16 %v1268
    %v1311 = vunpack.c.h.b16 %v1268
    %v1312 = vunpack.c.l.b16 %v1269
    %v1313 = vunpack.c.h.b16 %v1269
    %v1314 = vunpack.c.l.b16 %v1270
    %v1315 = vunpack.c.h.b16 %v1270
    %v1316 = vunpack.c.l.b16 %v1271
    %v1317 = vunpack.c.h.b16 %v1271
    %v1318 = vunpack.c.l.b16 %v1272
    %v1319 = vunpack.c.h.b16 %v1272
    %v1320 = vunpack.c.l.b16 %v1273
    %v1321 = vunpack.c.h.b16 %v1273
    %v1322 = vunpack.c.l.b16 %v1274
    %v1323 = vunpack.c.h.b16 %v1274
    %v1324 = vunpack.c.l.b16 %v1275
    %v1325 = vunpack.c.h.b16 %v1275
    %v1326 = vunpack.c.l.b16 %v1276
    %v1327 = vunpack.c.h.b16 %v1276
    %v1328 = vunpack.c.l.b16 %v1277
    %v1329 = vunpack.c.h.b16 %v1277
    %v1330 = vunpack.c.l.b16 %v1278
    %v1331 = vunpack.c.h.b16 %v1278
    %v1332 = vunpack.c.l.b16 %v1279
    %v1333 = vunpack.c.h.b16 %v1279
    %v1334 = vunpack.c.l.b16 %v1280
    %v1335 = vunpack.c.h.b16 %v1280
    %v1336 = vpack.c.b16 %v1306, %v1304
    %v1337 = vpack.c.b16 %v1307, %v1305
    %v1338 = vpack.c.b16 %v1310, %v1308
    %v1339 = vpack.c.b16 %v1311, %v1309
    %v1340 = vpack.c.b16 %v1314, %v1312
    %v1341 = vpack.c.b16 %v1315, %v1313
    %v1342 = vpack.c.b16 %v1318, %v1316
    %v1343 = vpack.c.b16 %v1319, %v1317
    %v1344 = vpack.c.b16 %v1322, %v1320
    %v1345 = vpack.c.b16 %v1323, %v1321
    %v1346 = vpack.c.b16 %v1326, %v1324
    %v1347 = vpack.c.b16 %v1327, %v1325
    %v1348 = vpack.c.b16 %v1330, %v1328
    %v1349 = vpack.c.b16 %v1331, %v1329
    %v1350 = vpack.c.b16 %v1334, %v1332
    %v1351 = vpack.c.b16 %v1335, %v1333
    %1368 = vmatpush.bf16.msra.mxu0 %v1350
    %1369 = vmatpush.bf16.msra.mxu0 %v1348
    %1370 = vmatpush.bf16.msra.mxu0 %v1346
    %1371 = vmatpush.bf16.msra.mxu0 %v1344
    %1372 = vmatpush.bf16.msra.mxu0 %v1342
    %1373 = vmatpush.bf16.msra.mxu0 %v1340
    %1374 = vmatpush.bf16.msra.mxu0 %v1338
    %1375 = vmatpush.bf16.msra.mxu0 %v1336
    %1376 = vmatmul.bf16.gmra.mxu0 %v175
    %v1377 = vpop.f32.mrf.mxu0
    %v1378 = vadd.f32 %v1284, %v1377
    %v1379 = vpop.f32.mrf.mxu0
    %1380 = vdwg.mxu0
    %1381 = vmatpush.bf16.msra.mxu0 %v1351
    %1382 = vmatpush.bf16.msra.mxu0 %v1349
    %1383 = vmatpush.bf16.msra.mxu0 %v1347
    %1384 = vmatpush.bf16.msra.mxu0 %v1345
    %1385 = vmatpush.bf16.msra.mxu0 %v1343
    %1386 = vmatpush.bf16.msra.mxu0 %v1341
    %1387 = vmatpush.bf16.msra.mxu0 %v1339
    %1388 = vmatpush.bf16.msra.mxu0 %v1337
    %1389 = vmatmul.bf16.gmra.mxu0 %v175
    %v1390 = vpop.f32.mrf.mxu0
    %v1391 = vadd.f32 %v1285, %v1390
    %v1392 = vpop.f32.mrf.mxu0
    %1393 = vdwg.mxu0
    %v1394 = vmax.f32 %v1378, 0.0
    %v1395 = vmax.f32 %v1391, 0.0
    %v1396 = vpack.c.bf16 %v1395, %v1394
    %1397 = vst [vmem:[#allocation2 + $0x10] sm:$0x11] %v1396
    %s1398 = scalar_lea.vmem [#allocation5], 1152
    %v1399 = vld [vmem:[%s1398] sm:$0xff]
    %v1400 = vld [vmem:[%s1398 + $0x8] sm:$0xff]
    %v1401 = vld [vmem:[%s1398 + $0x10] sm:$0xff]
    %v1402 = vld [vmem:[%s1398 + $0x18] sm:$0xff]
    %v1403 = vld [vmem:[%s1398 + $0x20] sm:$0xff]
    %v1404 = vld [vmem:[%s1398 + $0x28] sm:$0xff]
    %v1405 = vld [vmem:[%s1398 + $0x30] sm:$0xff]
    %v1406 = vld [vmem:[%s1398 + $0x38] sm:$0xff]
    %v1407 = vld [vmem:[%s1398 + $0x40] sm:$0xff]
    %v1408 = vld [vmem:[%s1398 + $0x48] sm:$0xff]
    %v1409 = vld [vmem:[%s1398 + $0x50] sm:$0xff]
    %v1410 = vld [vmem:[%s1398 + $0x58] sm:$0xff]
    %v1411 = vld [vmem:[%s1398 + $0x60] sm:$0xff]
    %v1412 = vld [vmem:[%s1398 + $0x68] sm:$0xff]
    %v1413 = vld [vmem:[%s1398 + $0x70] sm:$0xff]
    %v1414 = vld [vmem:[%s1398 + $0x78] sm:$0xff]
    %s1415 = scalar_lea.vmem [#allocation7], 18
    %v1416 = vld [vmem:[%s1415] sm:$0x3]
    %v1418 = vperm.slane %v1416, 0
    %v1419 = vperm.slane %v1416, 1
    %v1438 = vunpack.c.l.b16 %v1399
    %v1439 = vunpack.c.h.b16 %v1399
    %v1440 = vunpack.c.l.b16 %v1400
    %v1441 = vunpack.c.h.b16 %v1400
    %v1442 = vunpack.c.l.b16 %v1401
    %v1443 = vunpack.c.h.b16 %v1401
    %v1444 = vunpack.c.l.b16 %v1402
    %v1445 = vunpack.c.h.b16 %v1402
    %v1446 = vunpack.c.l.b16 %v1403
    %v1447 = vunpack.c.h.b16 %v1403
    %v1448 = vunpack.c.l.b16 %v1404
    %v1449 = vunpack.c.h.b16 %v1404
    %v1450 = vunpack.c.l.b16 %v1405
    %v1451 = vunpack.c.h.b16 %v1405
    %v1452 = vunpack.c.l.b16 %v1406
    %v1453 = vunpack.c.h.b16 %v1406
    %v1454 = vunpack.c.l.b16 %v1407
    %v1455 = vunpack.c.h.b16 %v1407
    %v1456 = vunpack.c.l.b16 %v1408
    %v1457 = vunpack.c.h.b16 %v1408
    %v1458 = vunpack.c.l.b16 %v1409
    %v1459 = vunpack.c.h.b16 %v1409
    %v1460 = vunpack.c.l.b16 %v1410
    %v1461 = vunpack.c.h.b16 %v1410
    %v1462 = vunpack.c.l.b16 %v1411
    %v1463 = vunpack.c.h.b16 %v1411
    %v1464 = vunpack.c.l.b16 %v1412
    %v1465 = vunpack.c.h.b16 %v1412
    %v1466 = vunpack.c.l.b16 %v1413
    %v1467 = vunpack.c.h.b16 %v1413
    %v1468 = vunpack.c.l.b16 %v1414
    %v1469 = vunpack.c.h.b16 %v1414
    %v1470 = vpack.c.b16 %v1440, %v1438
    %v1471 = vpack.c.b16 %v1441, %v1439
    %v1472 = vpack.c.b16 %v1444, %v1442
    %v1473 = vpack.c.b16 %v1445, %v1443
    %v1474 = vpack.c.b16 %v1448, %v1446
    %v1475 = vpack.c.b16 %v1449, %v1447
    %v1476 = vpack.c.b16 %v1452, %v1450
    %v1477 = vpack.c.b16 %v1453, %v1451
    %v1478 = vpack.c.b16 %v1456, %v1454
    %v1479 = vpack.c.b16 %v1457, %v1455
    %v1480 = vpack.c.b16 %v1460, %v1458
    %v1481 = vpack.c.b16 %v1461, %v1459
    %v1482 = vpack.c.b16 %v1464, %v1462
    %v1483 = vpack.c.b16 %v1465, %v1463
    %v1484 = vpack.c.b16 %v1468, %v1466
    %v1485 = vpack.c.b16 %v1469, %v1467
    %1502 = vmatpush.bf16.msra.mxu0 %v1484
    %1503 = vmatpush.bf16.msra.mxu0 %v1482
    %1504 = vmatpush.bf16.msra.mxu0 %v1480
    %1505 = vmatpush.bf16.msra.mxu0 %v1478
    %1506 = vmatpush.bf16.msra.mxu0 %v1476
    %1507 = vmatpush.bf16.msra.mxu0 %v1474
    %1508 = vmatpush.bf16.msra.mxu0 %v1472
    %1509 = vmatpush.bf16.msra.mxu0 %v1470
    %1510 = vmatmul.bf16.gmra.mxu0 %v175
    %v1511 = vpop.f32.mrf.mxu0
    %v1512 = vadd.f32 %v1418, %v1511
    %v1513 = vpop.f32.mrf.mxu0
    %1514 = vdwg.mxu0
    %1515 = vmatpush.bf16.msra.mxu0 %v1485
    %1516 = vmatpush.bf16.msra.mxu0 %v1483
    %1517 = vmatpush.bf16.msra.mxu0 %v1481
    %1518 = vmatpush.bf16.msra.mxu0 %v1479
    %1519 = vmatpush.bf16.msra.mxu0 %v1477
    %1520 = vmatpush.bf16.msra.mxu0 %v1475
    %1521 = vmatpush.bf16.msra.mxu0 %v1473
    %1522 = vmatpush.bf16.msra.mxu0 %v1471
    %1523 = vmatmul.bf16.gmra.mxu0 %v175
    %v1524 = vpop.f32.mrf.mxu0
    %v1525 = vadd.f32 %v1419, %v1524
    %v1526 = vpop.f32.mrf.mxu0
    %1527 = vdwg.mxu0
    %v1528 = vmax.f32 %v1512, 0.0
    %v1529 = vmax.f32 %v1525, 0.0
    %v1530 = vpack.c.bf16 %v1529, %v1528
    %v1532 = vrot.slane %v1530, 7
    %1534 = vst [vmem:[#allocation2 + $0x10] sm:$0x22] %v1532
    %s1535 = scalar_lea.vmem [#allocation5], 1280
    %v1536 = vld [vmem:[%s1535] sm:$0xff]
    %v1537 = vld [vmem:[%s1535 + $0x8] sm:$0xff]
    %v1538 = vld [vmem:[%s1535 + $0x10] sm:$0xff]
    %v1539 = vld [vmem:[%s1535 + $0x18] sm:$0xff]
    %v1540 = vld [vmem:[%s1535 + $0x20] sm:$0xff]
    %v1541 = vld [vmem:[%s1535 + $0x28] sm:$0xff]
    %v1542 = vld [vmem:[%s1535 + $0x30] sm:$0xff]
    %v1543 = vld [vmem:[%s1535 + $0x38] sm:$0xff]
    %v1544 = vld [vmem:[%s1535 + $0x40] sm:$0xff]
    %v1545 = vld [vmem:[%s1535 + $0x48] sm:$0xff]
    %v1546 = vld [vmem:[%s1535 + $0x50] sm:$0xff]
    %v1547 = vld [vmem:[%s1535 + $0x58] sm:$0xff]
    %v1548 = vld [vmem:[%s1535 + $0x60] sm:$0xff]
    %v1549 = vld [vmem:[%s1535 + $0x68] sm:$0xff]
    %v1550 = vld [vmem:[%s1535 + $0x70] sm:$0xff]
    %v1551 = vld [vmem:[%s1535 + $0x78] sm:$0xff]
    %s1552 = scalar_lea.vmem [#allocation7], 20
    %v1553 = vld [vmem:[%s1552] sm:$0x3]
    %v1555 = vperm.slane %v1553, 0
    %v1556 = vperm.slane %v1553, 1
    %v1575 = vunpack.c.l.b16 %v1536
    %v1576 = vunpack.c.h.b16 %v1536
    %v1577 = vunpack.c.l.b16 %v1537
    %v1578 = vunpack.c.h.b16 %v1537
    %v1579 = vunpack.c.l.b16 %v1538
    %v1580 = vunpack.c.h.b16 %v1538
    %v1581 = vunpack.c.l.b16 %v1539
    %v1582 = vunpack.c.h.b16 %v1539
    %v1583 = vunpack.c.l.b16 %v1540
    %v1584 = vunpack.c.h.b16 %v1540
    %v1585 = vunpack.c.l.b16 %v1541
    %v1586 = vunpack.c.h.b16 %v1541
    %v1587 = vunpack.c.l.b16 %v1542
    %v1588 = vunpack.c.h.b16 %v1542
    %v1589 = vunpack.c.l.b16 %v1543
    %v1590 = vunpack.c.h.b16 %v1543
    %v1591 = vunpack.c.l.b16 %v1544
    %v1592 = vunpack.c.h.b16 %v1544
    %v1593 = vunpack.c.l.b16 %v1545
    %v1594 = vunpack.c.h.b16 %v1545
    %v1595 = vunpack.c.l.b16 %v1546
    %v1596 = vunpack.c.h.b16 %v1546
    %v1597 = vunpack.c.l.b16 %v1547
    %v1598 = vunpack.c.h.b16 %v1547
    %v1599 = vunpack.c.l.b16 %v1548
    %v1600 = vunpack.c.h.b16 %v1548
    %v1601 = vunpack.c.l.b16 %v1549
    %v1602 = vunpack.c.h.b16 %v1549
    %v1603 = vunpack.c.l.b16 %v1550
    %v1604 = vunpack.c.h.b16 %v1550
    %v1605 = vunpack.c.l.b16 %v1551
    %v1606 = vunpack.c.h.b16 %v1551
    %v1607 = vpack.c.b16 %v1577, %v1575
    %v1608 = vpack.c.b16 %v1578, %v1576
    %v1609 = vpack.c.b16 %v1581, %v1579
    %v1610 = vpack.c.b16 %v1582, %v1580
    %v1611 = vpack.c.b16 %v1585, %v1583
    %v1612 = vpack.c.b16 %v1586, %v1584
    %v1613 = vpack.c.b16 %v1589, %v1587
    %v1614 = vpack.c.b16 %v1590, %v1588
    %v1615 = vpack.c.b16 %v1593, %v1591
    %v1616 = vpack.c.b16 %v1594, %v1592
    %v1617 = vpack.c.b16 %v1597, %v1595
    %v1618 = vpack.c.b16 %v1598, %v1596
    %v1619 = vpack.c.b16 %v1601, %v1599
    %v1620 = vpack.c.b16 %v1602, %v1600
    %v1621 = vpack.c.b16 %v1605, %v1603
    %v1622 = vpack.c.b16 %v1606, %v1604
    %1639 = vmatpush.bf16.msra.mxu0 %v1621
    %1640 = vmatpush.bf16.msra.mxu0 %v1619
    %1641 = vmatpush.bf16.msra.mxu0 %v1617
    %1642 = vmatpush.bf16.msra.mxu0 %v1615
    %1643 = vmatpush.bf16.msra.mxu0 %v1613
    %1644 = vmatpush.bf16.msra.mxu0 %v1611
    %1645 = vmatpush.bf16.msra.mxu0 %v1609
    %1646 = vmatpush.bf16.msra.mxu0 %v1607
    %1647 = vmatmul.bf16.gmra.mxu0 %v175
    %v1648 = vpop.f32.mrf.mxu0
    %v1649 = vadd.f32 %v1555, %v1648
    %v1650 = vpop.f32.mrf.mxu0
    %1651 = vdwg.mxu0
    %1652 = vmatpush.bf16.msra.mxu0 %v1622
    %1653 = vmatpush.bf16.msra.mxu0 %v1620
    %1654 = vmatpush.bf16.msra.mxu0 %v1618
    %1655 = vmatpush.bf16.msra.mxu0 %v1616
    %1656 = vmatpush.bf16.msra.mxu0 %v1614
    %1657 = vmatpush.bf16.msra.mxu0 %v1612
    %1658 = vmatpush.bf16.msra.mxu0 %v1610
    %1659 = vmatpush.bf16.msra.mxu0 %v1608
    %1660 = vmatmul.bf16.gmra.mxu0 %v175
    %v1661 = vpop.f32.mrf.mxu0
    %v1662 = vadd.f32 %v1556, %v1661
    %v1663 = vpop.f32.mrf.mxu0
    %1664 = vdwg.mxu0
    %v1665 = vmax.f32 %v1649, 0.0
    %v1666 = vmax.f32 %v1662, 0.0
    %v1667 = vpack.c.bf16 %v1666, %v1665
    %v1669 = vrot.slane %v1667, 6
    %1671 = vst [vmem:[#allocation2 + $0x10] sm:$0x44] %v1669
    %s1672 = scalar_lea.vmem [#allocation5], 1408
    %v1673 = vld [vmem:[%s1672] sm:$0xff]
    %v1674 = vld [vmem:[%s1672 + $0x8] sm:$0xff]
    %v1675 = vld [vmem:[%s1672 + $0x10] sm:$0xff]
    %v1676 = vld [vmem:[%s1672 + $0x18] sm:$0xff]
    %v1677 = vld [vmem:[%s1672 + $0x20] sm:$0xff]
    %v1678 = vld [vmem:[%s1672 + $0x28] sm:$0xff]
    %v1679 = vld [vmem:[%s1672 + $0x30] sm:$0xff]
    %v1680 = vld [vmem:[%s1672 + $0x38] sm:$0xff]
    %v1681 = vld [vmem:[%s1672 + $0x40] sm:$0xff]
    %v1682 = vld [vmem:[%s1672 + $0x48] sm:$0xff]
    %v1683 = vld [vmem:[%s1672 + $0x50] sm:$0xff]
    %v1684 = vld [vmem:[%s1672 + $0x58] sm:$0xff]
    %v1685 = vld [vmem:[%s1672 + $0x60] sm:$0xff]
    %v1686 = vld [vmem:[%s1672 + $0x68] sm:$0xff]
    %v1687 = vld [vmem:[%s1672 + $0x70] sm:$0xff]
    %v1688 = vld [vmem:[%s1672 + $0x78] sm:$0xff]
    %s1689 = scalar_lea.vmem [#allocation7], 22
    %v1690 = vld [vmem:[%s1689] sm:$0x3]
    %v1692 = vperm.slane %v1690, 0
    %v1693 = vperm.slane %v1690, 1
    %v1712 = vunpack.c.l.b16 %v1673
    %v1713 = vunpack.c.h.b16 %v1673
    %v1714 = vunpack.c.l.b16 %v1674
    %v1715 = vunpack.c.h.b16 %v1674
    %v1716 = vunpack.c.l.b16 %v1675
    %v1717 = vunpack.c.h.b16 %v1675
    %v1718 = vunpack.c.l.b16 %v1676
    %v1719 = vunpack.c.h.b16 %v1676
    %v1720 = vunpack.c.l.b16 %v1677
    %v1721 = vunpack.c.h.b16 %v1677
    %v1722 = vunpack.c.l.b16 %v1678
    %v1723 = vunpack.c.h.b16 %v1678
    %v1724 = vunpack.c.l.b16 %v1679
    %v1725 = vunpack.c.h.b16 %v1679
    %v1726 = vunpack.c.l.b16 %v1680
    %v1727 = vunpack.c.h.b16 %v1680
    %v1728 = vunpack.c.l.b16 %v1681
    %v1729 = vunpack.c.h.b16 %v1681
    %v1730 = vunpack.c.l.b16 %v1682
    %v1731 = vunpack.c.h.b16 %v1682
    %v1732 = vunpack.c.l.b16 %v1683
    %v1733 = vunpack.c.h.b16 %v1683
    %v1734 = vunpack.c.l.b16 %v1684
    %v1735 = vunpack.c.h.b16 %v1684
    %v1736 = vunpack.c.l.b16 %v1685
    %v1737 = vunpack.c.h.b16 %v1685
    %v1738 = vunpack.c.l.b16 %v1686
    %v1739 = vunpack.c.h.b16 %v1686
    %v1740 = vunpack.c.l.b16 %v1687
    %v1741 = vunpack.c.h.b16 %v1687
    %v1742 = vunpack.c.l.b16 %v1688
    %v1743 = vunpack.c.h.b16 %v1688
    %v1744 = vpack.c.b16 %v1714, %v1712
    %v1745 = vpack.c.b16 %v1715, %v1713
    %v1746 = vpack.c.b16 %v1718, %v1716
    %v1747 = vpack.c.b16 %v1719, %v1717
    %v1748 = vpack.c.b16 %v1722, %v1720
    %v1749 = vpack.c.b16 %v1723, %v1721
    %v1750 = vpack.c.b16 %v1726, %v1724
    %v1751 = vpack.c.b16 %v1727, %v1725
    %v1752 = vpack.c.b16 %v1730, %v1728
    %v1753 = vpack.c.b16 %v1731, %v1729
    %v1754 = vpack.c.b16 %v1734, %v1732
    %v1755 = vpack.c.b16 %v1735, %v1733
    %v1756 = vpack.c.b16 %v1738, %v1736
    %v1757 = vpack.c.b16 %v1739, %v1737
    %v1758 = vpack.c.b16 %v1742, %v1740
    %v1759 = vpack.c.b16 %v1743, %v1741
    %1776 = vmatpush.bf16.msra.mxu0 %v1758
    %1777 = vmatpush.bf16.msra.mxu0 %v1756
    %1778 = vmatpush.bf16.msra.mxu0 %v1754
    %1779 = vmatpush.bf16.msra.mxu0 %v1752
    %1780 = vmatpush.bf16.msra.mxu0 %v1750
    %1781 = vmatpush.bf16.msra.mxu0 %v1748
    %1782 = vmatpush.bf16.msra.mxu0 %v1746
    %1783 = vmatpush.bf16.msra.mxu0 %v1744
    %1784 = vmatmul.bf16.gmra.mxu0 %v175
    %v1785 = vpop.f32.mrf.mxu0
    %v1786 = vadd.f32 %v1692, %v1785
    %v1787 = vpop.f32.mrf.mxu0
    %1788 = vdwg.mxu0
    %1789 = vmatpush.bf16.msra.mxu0 %v1759
    %1790 = vmatpush.bf16.msra.mxu0 %v1757
    %1791 = vmatpush.bf16.msra.mxu0 %v1755
    %1792 = vmatpush.bf16.msra.mxu0 %v1753
    %1793 = vmatpush.bf16.msra.mxu0 %v1751
    %1794 = vmatpush.bf16.msra.mxu0 %v1749
    %1795 = vmatpush.bf16.msra.mxu0 %v1747
    %1796 = vmatpush.bf16.msra.mxu0 %v1745
    %1797 = vmatmul.bf16.gmra.mxu0 %v175
    %v1798 = vpop.f32.mrf.mxu0
    %v1799 = vadd.f32 %v1693, %v1798
    %v1800 = vpop.f32.mrf.mxu0
    %1801 = vdwg.mxu0
    %v1802 = vmax.f32 %v1786, 0.0
    %v1803 = vmax.f32 %v1799, 0.0
    %v1804 = vpack.c.bf16 %v1803, %v1802
    %v1806 = vrot.slane %v1804, 5
    %1808 = vst [vmem:[#allocation2 + $0x10] sm:$0x88] %v1806
    %s1809 = scalar_lea.vmem [#allocation5], 1536
    %v1810 = vld [vmem:[%s1809] sm:$0xff]
    %v1811 = vld [vmem:[%s1809 + $0x8] sm:$0xff]
    %v1812 = vld [vmem:[%s1809 + $0x10] sm:$0xff]
    %v1813 = vld [vmem:[%s1809 + $0x18] sm:$0xff]
    %v1814 = vld [vmem:[%s1809 + $0x20] sm:$0xff]
    %v1815 = vld [vmem:[%s1809 + $0x28] sm:$0xff]
    %v1816 = vld [vmem:[%s1809 + $0x30] sm:$0xff]
    %v1817 = vld [vmem:[%s1809 + $0x38] sm:$0xff]
    %v1818 = vld [vmem:[%s1809 + $0x40] sm:$0xff]
    %v1819 = vld [vmem:[%s1809 + $0x48] sm:$0xff]
    %v1820 = vld [vmem:[%s1809 + $0x50] sm:$0xff]
    %v1821 = vld [vmem:[%s1809 + $0x58] sm:$0xff]
    %v1822 = vld [vmem:[%s1809 + $0x60] sm:$0xff]
    %v1823 = vld [vmem:[%s1809 + $0x68] sm:$0xff]
    %v1824 = vld [vmem:[%s1809 + $0x70] sm:$0xff]
    %v1825 = vld [vmem:[%s1809 + $0x78] sm:$0xff]
    %s1826 = scalar_lea.vmem [#allocation7], 24
    %v1827 = vld [vmem:[%s1826] sm:$0x3]
    %v1829 = vperm.slane %v1827, 0
    %v1830 = vperm.slane %v1827, 1
    %v1849 = vunpack.c.l.b16 %v1810
    %v1850 = vunpack.c.h.b16 %v1810
    %v1851 = vunpack.c.l.b16 %v1811
    %v1852 = vunpack.c.h.b16 %v1811
    %v1853 = vunpack.c.l.b16 %v1812
    %v1854 = vunpack.c.h.b16 %v1812
    %v1855 = vunpack.c.l.b16 %v1813
    %v1856 = vunpack.c.h.b16 %v1813
    %v1857 = vunpack.c.l.b16 %v1814
    %v1858 = vunpack.c.h.b16 %v1814
    %v1859 = vunpack.c.l.b16 %v1815
    %v1860 = vunpack.c.h.b16 %v1815
    %v1861 = vunpack.c.l.b16 %v1816
    %v1862 = vunpack.c.h.b16 %v1816
    %v1863 = vunpack.c.l.b16 %v1817
    %v1864 = vunpack.c.h.b16 %v1817
    %v1865 = vunpack.c.l.b16 %v1818
    %v1866 = vunpack.c.h.b16 %v1818
    %v1867 = vunpack.c.l.b16 %v1819
    %v1868 = vunpack.c.h.b16 %v1819
    %v1869 = vunpack.c.l.b16 %v1820
    %v1870 = vunpack.c.h.b16 %v1820
    %v1871 = vunpack.c.l.b16 %v1821
    %v1872 = vunpack.c.h.b16 %v1821
    %v1873 = vunpack.c.l.b16 %v1822
    %v1874 = vunpack.c.h.b16 %v1822
    %v1875 = vunpack.c.l.b16 %v1823
    %v1876 = vunpack.c.h.b16 %v1823
    %v1877 = vunpack.c.l.b16 %v1824
    %v1878 = vunpack.c.h.b16 %v1824
    %v1879 = vunpack.c.l.b16 %v1825
    %v1880 = vunpack.c.h.b16 %v1825
    %v1881 = vpack.c.b16 %v1851, %v1849
    %v1882 = vpack.c.b16 %v1852, %v1850
    %v1883 = vpack.c.b16 %v1855, %v1853
    %v1884 = vpack.c.b16 %v1856, %v1854
    %v1885 = vpack.c.b16 %v1859, %v1857
    %v1886 = vpack.c.b16 %v1860, %v1858
    %v1887 = vpack.c.b16 %v1863, %v1861
    %v1888 = vpack.c.b16 %v1864, %v1862
    %v1889 = vpack.c.b16 %v1867, %v1865
    %v1890 = vpack.c.b16 %v1868, %v1866
    %v1891 = vpack.c.b16 %v1871, %v1869
    %v1892 = vpack.c.b16 %v1872, %v1870
    %v1893 = vpack.c.b16 %v1875, %v1873
    %v1894 = vpack.c.b16 %v1876, %v1874
    %v1895 = vpack.c.b16 %v1879, %v1877
    %v1896 = vpack.c.b16 %v1880, %v1878
    %1913 = vmatpush.bf16.msra.mxu0 %v1895
    %1914 = vmatpush.bf16.msra.mxu0 %v1893
    %1915 = vmatpush.bf16.msra.mxu0 %v1891
    %1916 = vmatpush.bf16.msra.mxu0 %v1889
    %1917 = vmatpush.bf16.msra.mxu0 %v1887
    %1918 = vmatpush.bf16.msra.mxu0 %v1885
    %1919 = vmatpush.bf16.msra.mxu0 %v1883
    %1920 = vmatpush.bf16.msra.mxu0 %v1881
    %1921 = vmatmul.bf16.gmra.mxu0 %v175
    %v1922 = vpop.f32.mrf.mxu0
    %v1923 = vadd.f32 %v1829, %v1922
    %v1924 = vpop.f32.mrf.mxu0
    %1925 = vdwg.mxu0
    %1926 = vmatpush.bf16.msra.mxu0 %v1896
    %1927 = vmatpush.bf16.msra.mxu0 %v1894
    %1928 = vmatpush.bf16.msra.mxu0 %v1892
    %1929 = vmatpush.bf16.msra.mxu0 %v1890
    %1930 = vmatpush.bf16.msra.mxu0 %v1888
    %1931 = vmatpush.bf16.msra.mxu0 %v1886
    %1932 = vmatpush.bf16.msra.mxu0 %v1884
    %1933 = vmatpush.bf16.msra.mxu0 %v1882
    %1934 = vmatmul.bf16.gmra.mxu0 %v175
    %v1935 = vpop.f32.mrf.mxu0
    %v1936 = vadd.f32 %v1830, %v1935
    %v1937 = vpop.f32.mrf.mxu0
    %1938 = vdwg.mxu0
    %v1939 = vmax.f32 %v1923, 0.0
    %v1940 = vmax.f32 %v1936, 0.0
    %v1941 = vpack.c.bf16 %v1940, %v1939
    %1942 = vst [vmem:[#allocation2 + $0x18] sm:$0x11] %v1941
    %s1943 = scalar_lea.vmem [#allocation5], 1664
    %v1944 = vld [vmem:[%s1943] sm:$0xff]
    %v1945 = vld [vmem:[%s1943 + $0x8] sm:$0xff]
    %v1946 = vld [vmem:[%s1943 + $0x10] sm:$0xff]
    %v1947 = vld [vmem:[%s1943 + $0x18] sm:$0xff]
    %v1948 = vld [vmem:[%s1943 + $0x20] sm:$0xff]
    %v1949 = vld [vmem:[%s1943 + $0x28] sm:$0xff]
    %v1950 = vld [vmem:[%s1943 + $0x30] sm:$0xff]
    %v1951 = vld [vmem:[%s1943 + $0x38] sm:$0xff]
    %v1952 = vld [vmem:[%s1943 + $0x40] sm:$0xff]
    %v1953 = vld [vmem:[%s1943 + $0x48] sm:$0xff]
    %v1954 = vld [vmem:[%s1943 + $0x50] sm:$0xff]
    %v1955 = vld [vmem:[%s1943 + $0x58] sm:$0xff]
    %v1956 = vld [vmem:[%s1943 + $0x60] sm:$0xff]
    %v1957 = vld [vmem:[%s1943 + $0x68] sm:$0xff]
    %v1958 = vld [vmem:[%s1943 + $0x70] sm:$0xff]
    %v1959 = vld [vmem:[%s1943 + $0x78] sm:$0xff]
    %s1960 = scalar_lea.vmem [#allocation7], 26
    %v1961 = vld [vmem:[%s1960] sm:$0x3]
    %v1963 = vperm.slane %v1961, 0
    %v1964 = vperm.slane %v1961, 1
    %v1983 = vunpack.c.l.b16 %v1944
    %v1984 = vunpack.c.h.b16 %v1944
    %v1985 = vunpack.c.l.b16 %v1945
    %v1986 = vunpack.c.h.b16 %v1945
    %v1987 = vunpack.c.l.b16 %v1946
    %v1988 = vunpack.c.h.b16 %v1946
    %v1989 = vunpack.c.l.b16 %v1947
    %v1990 = vunpack.c.h.b16 %v1947
    %v1991 = vunpack.c.l.b16 %v1948
    %v1992 = vunpack.c.h.b16 %v1948
    %v1993 = vunpack.c.l.b16 %v1949
    %v1994 = vunpack.c.h.b16 %v1949
    %v1995 = vunpack.c.l.b16 %v1950
    %v1996 = vunpack.c.h.b16 %v1950
    %v1997 = vunpack.c.l.b16 %v1951
    %v1998 = vunpack.c.h.b16 %v1951
    %v1999 = vunpack.c.l.b16 %v1952
    %v2000 = vunpack.c.h.b16 %v1952
    %v2001 = vunpack.c.l.b16 %v1953
    %v2002 = vunpack.c.h.b16 %v1953
    %v2003 = vunpack.c.l.b16 %v1954
    %v2004 = vunpack.c.h.b16 %v1954
    %v2005 = vunpack.c.l.b16 %v1955
    %v2006 = vunpack.c.h.b16 %v1955
    %v2007 = vunpack.c.l.b16 %v1956
    %v2008 = vunpack.c.h.b16 %v1956
    %v2009 = vunpack.c.l.b16 %v1957
    %v2010 = vunpack.c.h.b16 %v1957
    %v2011 = vunpack.c.l.b16 %v1958
    %v2012 = vunpack.c.h.b16 %v1958
    %v2013 = vunpack.c.l.b16 %v1959
    %v2014 = vunpack.c.h.b16 %v1959
    %v2015 = vpack.c.b16 %v1985, %v1983
    %v2016 = vpack.c.b16 %v1986, %v1984
    %v2017 = vpack.c.b16 %v1989, %v1987
    %v2018 = vpack.c.b16 %v1990, %v1988
    %v2019 = vpack.c.b16 %v1993, %v1991
    %v2020 = vpack.c.b16 %v1994, %v1992
    %v2021 = vpack.c.b16 %v1997, %v1995
    %v2022 = vpack.c.b16 %v1998, %v1996
    %v2023 = vpack.c.b16 %v2001, %v1999
    %v2024 = vpack.c.b16 %v2002, %v2000
    %v2025 = vpack.c.b16 %v2005, %v2003
    %v2026 = vpack.c.b16 %v2006, %v2004
    %v2027 = vpack.c.b16 %v2009, %v2007
    %v2028 = vpack.c.b16 %v2010, %v2008
    %v2029 = vpack.c.b16 %v2013, %v2011
    %v2030 = vpack.c.b16 %v2014, %v2012
    %2047 = vmatpush.bf16.msra.mxu0 %v2029
    %2048 = vmatpush.bf16.msra.mxu0 %v2027
    %2049 = vmatpush.bf16.msra.mxu0 %v2025
    %2050 = vmatpush.bf16.msra.mxu0 %v2023
    %2051 = vmatpush.bf16.msra.mxu0 %v2021
    %2052 = vmatpush.bf16.msra.mxu0 %v2019
    %2053 = vmatpush.bf16.msra.mxu0 %v2017
    %2054 = vmatpush.bf16.msra.mxu0 %v2015
    %2055 = vmatmul.bf16.gmra.mxu0 %v175
    %v2056 = vpop.f32.mrf.mxu0
    %v2057 = vadd.f32 %v1963, %v2056
    %v2058 = vpop.f32.mrf.mxu0
    %2059 = vdwg.mxu0
    %2060 = vmatpush.bf16.msra.mxu0 %v2030
    %2061 = vmatpush.bf16.msra.mxu0 %v2028
    %2062 = vmatpush.bf16.msra.mxu0 %v2026
    %2063 = vmatpush.bf16.msra.mxu0 %v2024
    %2064 = vmatpush.bf16.msra.mxu0 %v2022
    %2065 = vmatpush.bf16.msra.mxu0 %v2020
    %2066 = vmatpush.bf16.msra.mxu0 %v2018
    %2067 = vmatpush.bf16.msra.mxu0 %v2016
    %2068 = vmatmul.bf16.gmra.mxu0 %v175
    %v2069 = vpop.f32.mrf.mxu0
    %v2070 = vadd.f32 %v1964, %v2069
    %v2071 = vpop.f32.mrf.mxu0
    %2072 = vdwg.mxu0
    %v2073 = vmax.f32 %v2057, 0.0
    %v2074 = vmax.f32 %v2070, 0.0
    %v2075 = vpack.c.bf16 %v2074, %v2073
    %v2077 = vrot.slane %v2075, 7
    %2079 = vst [vmem:[#allocation2 + $0x18] sm:$0x22] %v2077
    %s2080 = scalar_lea.vmem [#allocation5], 1792
    %v2081 = vld [vmem:[%s2080] sm:$0xff]
    %v2082 = vld [vmem:[%s2080 + $0x8] sm:$0xff]
    %v2083 = vld [vmem:[%s2080 + $0x10] sm:$0xff]
    %v2084 = vld [vmem:[%s2080 + $0x18] sm:$0xff]
    %v2085 = vld [vmem:[%s2080 + $0x20] sm:$0xff]
    %v2086 = vld [vmem:[%s2080 + $0x28] sm:$0xff]
    %v2087 = vld [vmem:[%s2080 + $0x30] sm:$0xff]
    %v2088 = vld [vmem:[%s2080 + $0x38] sm:$0xff]
    %v2089 = vld [vmem:[%s2080 + $0x40] sm:$0xff]
    %v2090 = vld [vmem:[%s2080 + $0x48] sm:$0xff]
    %v2091 = vld [vmem:[%s2080 + $0x50] sm:$0xff]
    %v2092 = vld [vmem:[%s2080 + $0x58] sm:$0xff]
    %v2093 = vld [vmem:[%s2080 + $0x60] sm:$0xff]
    %v2094 = vld [vmem:[%s2080 + $0x68] sm:$0xff]
    %v2095 = vld [vmem:[%s2080 + $0x70] sm:$0xff]
    %v2096 = vld [vmem:[%s2080 + $0x78] sm:$0xff]
    %s2097 = scalar_lea.vmem [#allocation7], 28
    %v2098 = vld [vmem:[%s2097] sm:$0x3]
    %v2100 = vperm.slane %v2098, 0
    %v2101 = vperm.slane %v2098, 1
    %v2120 = vunpack.c.l.b16 %v2081
    %v2121 = vunpack.c.h.b16 %v2081
    %v2122 = vunpack.c.l.b16 %v2082
    %v2123 = vunpack.c.h.b16 %v2082
    %v2124 = vunpack.c.l.b16 %v2083
    %v2125 = vunpack.c.h.b16 %v2083
    %v2126 = vunpack.c.l.b16 %v2084
    %v2127 = vunpack.c.h.b16 %v2084
    %v2128 = vunpack.c.l.b16 %v2085
    %v2129 = vunpack.c.h.b16 %v2085
    %v2130 = vunpack.c.l.b16 %v2086
    %v2131 = vunpack.c.h.b16 %v2086
    %v2132 = vunpack.c.l.b16 %v2087
    %v2133 = vunpack.c.h.b16 %v2087
    %v2134 = vunpack.c.l.b16 %v2088
    %v2135 = vunpack.c.h.b16 %v2088
    %v2136 = vunpack.c.l.b16 %v2089
    %v2137 = vunpack.c.h.b16 %v2089
    %v2138 = vunpack.c.l.b16 %v2090
    %v2139 = vunpack.c.h.b16 %v2090
    %v2140 = vunpack.c.l.b16 %v2091
    %v2141 = vunpack.c.h.b16 %v2091
    %v2142 = vunpack.c.l.b16 %v2092
    %v2143 = vunpack.c.h.b16 %v2092
    %v2144 = vunpack.c.l.b16 %v2093
    %v2145 = vunpack.c.h.b16 %v2093
    %v2146 = vunpack.c.l.b16 %v2094
    %v2147 = vunpack.c.h.b16 %v2094
    %v2148 = vunpack.c.l.b16 %v2095
    %v2149 = vunpack.c.h.b16 %v2095
    %v2150 = vunpack.c.l.b16 %v2096
    %v2151 = vunpack.c.h.b16 %v2096
    %v2152 = vpack.c.b16 %v2122, %v2120
    %v2153 = vpack.c.b16 %v2123, %v2121
    %v2154 = vpack.c.b16 %v2126, %v2124
    %v2155 = vpack.c.b16 %v2127, %v2125
    %v2156 = vpack.c.b16 %v2130, %v2128
    %v2157 = vpack.c.b16 %v2131, %v2129
    %v2158 = vpack.c.b16 %v2134, %v2132
    %v2159 = vpack.c.b16 %v2135, %v2133
    %v2160 = vpack.c.b16 %v2138, %v2136
    %v2161 = vpack.c.b16 %v2139, %v2137
    %v2162 = vpack.c.b16 %v2142, %v2140
    %v2163 = vpack.c.b16 %v2143, %v2141
    %v2164 = vpack.c.b16 %v2146, %v2144
    %v2165 = vpack.c.b16 %v2147, %v2145
    %v2166 = vpack.c.b16 %v2150, %v2148
    %v2167 = vpack.c.b16 %v2151, %v2149
    %2184 = vmatpush.bf16.msra.mxu0 %v2166
    %2185 = vmatpush.bf16.msra.mxu0 %v2164
    %2186 = vmatpush.bf16.msra.mxu0 %v2162
    %2187 = vmatpush.bf16.msra.mxu0 %v2160
    %2188 = vmatpush.bf16.msra.mxu0 %v2158
    %2189 = vmatpush.bf16.msra.mxu0 %v2156
    %2190 = vmatpush.bf16.msra.mxu0 %v2154
    %2191 = vmatpush.bf16.msra.mxu0 %v2152
    %2192 = vmatmul.bf16.gmra.mxu0 %v175
    %v2193 = vpop.f32.mrf.mxu0
    %v2194 = vadd.f32 %v2100, %v2193
    %v2195 = vpop.f32.mrf.mxu0
    %2196 = vdwg.mxu0
    %2197 = vmatpush.bf16.msra.mxu0 %v2167
    %2198 = vmatpush.bf16.msra.mxu0 %v2165
    %2199 = vmatpush.bf16.msra.mxu0 %v2163
    %2200 = vmatpush.bf16.msra.mxu0 %v2161
    %2201 = vmatpush.bf16.msra.mxu0 %v2159
    %2202 = vmatpush.bf16.msra.mxu0 %v2157
    %2203 = vmatpush.bf16.msra.mxu0 %v2155
    %2204 = vmatpush.bf16.msra.mxu0 %v2153
    %2205 = vmatmul.bf16.gmra.mxu0 %v175
    %v2206 = vpop.f32.mrf.mxu0
    %v2207 = vadd.f32 %v2101, %v2206
    %v2208 = vpop.f32.mrf.mxu0
    %2209 = vdwg.mxu0
    %v2210 = vmax.f32 %v2194, 0.0
    %v2211 = vmax.f32 %v2207, 0.0
    %v2212 = vpack.c.bf16 %v2211, %v2210
    %v2214 = vrot.slane %v2212, 6
    %2216 = vst [vmem:[#allocation2 + $0x18] sm:$0x44] %v2214
    %s2217 = scalar_lea.vmem [#allocation5], 1920
    %v2218 = vld [vmem:[%s2217] sm:$0xff]
    %v2219 = vld [vmem:[%s2217 + $0x8] sm:$0xff]
    %v2220 = vld [vmem:[%s2217 + $0x10] sm:$0xff]
    %v2221 = vld [vmem:[%s2217 + $0x18] sm:$0xff]
    %v2222 = vld [vmem:[%s2217 + $0x20] sm:$0xff]
    %v2223 = vld [vmem:[%s2217 + $0x28] sm:$0xff]
    %v2224 = vld [vmem:[%s2217 + $0x30] sm:$0xff]
    %v2225 = vld [vmem:[%s2217 + $0x38] sm:$0xff]
    %v2226 = vld [vmem:[%s2217 + $0x40] sm:$0xff]
    %v2227 = vld [vmem:[%s2217 + $0x48] sm:$0xff]
    %v2228 = vld [vmem:[%s2217 + $0x50] sm:$0xff]
    %v2229 = vld [vmem:[%s2217 + $0x58] sm:$0xff]
    %v2230 = vld [vmem:[%s2217 + $0x60] sm:$0xff]
    %v2231 = vld [vmem:[%s2217 + $0x68] sm:$0xff]
    %v2232 = vld [vmem:[%s2217 + $0x70] sm:$0xff]
    %v2233 = vld [vmem:[%s2217 + $0x78] sm:$0xff]
    %s2234 = scalar_lea.vmem [#allocation7], 30
    %v2235 = vld [vmem:[%s2234] sm:$0x3]
    %v2237 = vperm.slane %v2235, 0
    %v2238 = vperm.slane %v2235, 1
    %v2257 = vunpack.c.l.b16 %v2218
    %v2258 = vunpack.c.h.b16 %v2218
    %v2259 = vunpack.c.l.b16 %v2219
    %v2260 = vunpack.c.h.b16 %v2219
    %v2261 = vunpack.c.l.b16 %v2220
    %v2262 = vunpack.c.h.b16 %v2220
    %v2263 = vunpack.c.l.b16 %v2221
    %v2264 = vunpack.c.h.b16 %v2221
    %v2265 = vunpack.c.l.b16 %v2222
    %v2266 = vunpack.c.h.b16 %v2222
    %v2267 = vunpack.c.l.b16 %v2223
    %v2268 = vunpack.c.h.b16 %v2223
    %v2269 = vunpack.c.l.b16 %v2224
    %v2270 = vunpack.c.h.b16 %v2224
    %v2271 = vunpack.c.l.b16 %v2225
    %v2272 = vunpack.c.h.b16 %v2225
    %v2273 = vunpack.c.l.b16 %v2226
    %v2274 = vunpack.c.h.b16 %v2226
    %v2275 = vunpack.c.l.b16 %v2227
    %v2276 = vunpack.c.h.b16 %v2227
    %v2277 = vunpack.c.l.b16 %v2228
    %v2278 = vunpack.c.h.b16 %v2228
    %v2279 = vunpack.c.l.b16 %v2229
    %v2280 = vunpack.c.h.b16 %v2229
    %v2281 = vunpack.c.l.b16 %v2230
    %v2282 = vunpack.c.h.b16 %v2230
    %v2283 = vunpack.c.l.b16 %v2231
    %v2284 = vunpack.c.h.b16 %v2231
    %v2285 = vunpack.c.l.b16 %v2232
    %v2286 = vunpack.c.h.b16 %v2232
    %v2287 = vunpack.c.l.b16 %v2233
    %v2288 = vunpack.c.h.b16 %v2233
    %v2289 = vpack.c.b16 %v2259, %v2257
    %v2290 = vpack.c.b16 %v2260, %v2258
    %v2291 = vpack.c.b16 %v2263, %v2261
    %v2292 = vpack.c.b16 %v2264, %v2262
    %v2293 = vpack.c.b16 %v2267, %v2265
    %v2294 = vpack.c.b16 %v2268, %v2266
    %v2295 = vpack.c.b16 %v2271, %v2269
    %v2296 = vpack.c.b16 %v2272, %v2270
    %v2297 = vpack.c.b16 %v2275, %v2273
    %v2298 = vpack.c.b16 %v2276, %v2274
    %v2299 = vpack.c.b16 %v2279, %v2277
    %v2300 = vpack.c.b16 %v2280, %v2278
    %v2301 = vpack.c.b16 %v2283, %v2281
    %v2302 = vpack.c.b16 %v2284, %v2282
    %v2303 = vpack.c.b16 %v2287, %v2285
    %v2304 = vpack.c.b16 %v2288, %v2286
    %2321 = vmatpush.bf16.msra.mxu0 %v2303
    %2322 = vmatpush.bf16.msra.mxu0 %v2301
    %2323 = vmatpush.bf16.msra.mxu0 %v2299
    %2324 = vmatpush.bf16.msra.mxu0 %v2297
    %2325 = vmatpush.bf16.msra.mxu0 %v2295
    %2326 = vmatpush.bf16.msra.mxu0 %v2293
    %2327 = vmatpush.bf16.msra.mxu0 %v2291
    %2328 = vmatpush.bf16.msra.mxu0 %v2289
    %2329 = vmatmul.bf16.gmra.mxu0 %v175
    %v2330 = vpop.f32.mrf.mxu0
    %v2331 = vadd.f32 %v2237, %v2330
    %v2332 = vpop.f32.mrf.mxu0
    %2333 = vdwg.mxu0
    %2334 = vmatpush.bf16.msra.mxu0 %v2304
    %2335 = vmatpush.bf16.msra.mxu0 %v2302
    %2336 = vmatpush.bf16.msra.mxu0 %v2300
    %2337 = vmatpush.bf16.msra.mxu0 %v2298
    %2338 = vmatpush.bf16.msra.mxu0 %v2296
    %2339 = vmatpush.bf16.msra.mxu0 %v2294
    %2340 = vmatpush.bf16.msra.mxu0 %v2292
    %2341 = vmatpush.bf16.msra.mxu0 %v2290
    %2342 = vmatmul.bf16.gmra.mxu0 %v175
    %v2343 = vpop.f32.mrf.mxu0
    %v2344 = vadd.f32 %v2238, %v2343
    %v2345 = vpop.f32.mrf.mxu0
    %2346 = vdwg.mxu0
    %v2347 = vmax.f32 %v2331, 0.0
    %v2348 = vmax.f32 %v2344, 0.0
    %v2349 = vpack.c.bf16 %v2348, %v2347
    %v2351 = vrot.slane %v2349, 5
    %2353 = vst [vmem:[#allocation2 + $0x18] sm:$0x88] %v2351
    %s2354 = scalar_lea.vmem [#allocation5], 2048
    %v2355 = vld [vmem:[%s2354] sm:$0xff]
    %v2356 = vld [vmem:[%s2354 + $0x8] sm:$0xff]
    %v2357 = vld [vmem:[%s2354 + $0x10] sm:$0xff]
    %v2358 = vld [vmem:[%s2354 + $0x18] sm:$0xff]
    %v2359 = vld [vmem:[%s2354 + $0x20] sm:$0xff]
    %v2360 = vld [vmem:[%s2354 + $0x28] sm:$0xff]
    %v2361 = vld [vmem:[%s2354 + $0x30] sm:$0xff]
    %v2362 = vld [vmem:[%s2354 + $0x38] sm:$0xff]
    %v2363 = vld [vmem:[%s2354 + $0x40] sm:$0xff]
    %v2364 = vld [vmem:[%s2354 + $0x48] sm:$0xff]
    %v2365 = vld [vmem:[%s2354 + $0x50] sm:$0xff]
    %v2366 = vld [vmem:[%s2354 + $0x58] sm:$0xff]
    %v2367 = vld [vmem:[%s2354 + $0x60] sm:$0xff]
    %v2368 = vld [vmem:[%s2354 + $0x68] sm:$0xff]
    %v2369 = vld [vmem:[%s2354 + $0x70] sm:$0xff]
    %v2370 = vld [vmem:[%s2354 + $0x78] sm:$0xff]
    %s2371 = scalar_lea.vmem [#allocation7], 32
    %v2372 = vld [vmem:[%s2371] sm:$0x3]
    %v2374 = vperm.slane %v2372, 0
    %v2375 = vperm.slane %v2372, 1
    %v2394 = vunpack.c.l.b16 %v2355
    %v2395 = vunpack.c.h.b16 %v2355
    %v2396 = vunpack.c.l.b16 %v2356
    %v2397 = vunpack.c.h.b16 %v2356
    %v2398 = vunpack.c.l.b16 %v2357
    %v2399 = vunpack.c.h.b16 %v2357
    %v2400 = vunpack.c.l.b16 %v2358
    %v2401 = vunpack.c.h.b16 %v2358
    %v2402 = vunpack.c.l.b16 %v2359
    %v2403 = vunpack.c.h.b16 %v2359
    %v2404 = vunpack.c.l.b16 %v2360
    %v2405 = vunpack.c.h.b16 %v2360
    %v2406 = vunpack.c.l.b16 %v2361
    %v2407 = vunpack.c.h.b16 %v2361
    %v2408 = vunpack.c.l.b16 %v2362
    %v2409 = vunpack.c.h.b16 %v2362
    %v2410 = vunpack.c.l.b16 %v2363
    %v2411 = vunpack.c.h.b16 %v2363
    %v2412 = vunpack.c.l.b16 %v2364
    %v2413 = vunpack.c.h.b16 %v2364
    %v2414 = vunpack.c.l.b16 %v2365
    %v2415 = vunpack.c.h.b16 %v2365
    %v2416 = vunpack.c.l.b16 %v2366
    %v2417 = vunpack.c.h.b16 %v2366
    %v2418 = vunpack.c.l.b16 %v2367
    %v2419 = vunpack.c.h.b16 %v2367
    %v2420 = vunpack.c.l.b16 %v2368
    %v2421 = vunpack.c.h.b16 %v2368
    %v2422 = vunpack.c.l.b16 %v2369
    %v2423 = vunpack.c.h.b16 %v2369
    %v2424 = vunpack.c.l.b16 %v2370
    %v2425 = vunpack.c.h.b16 %v2370
    %v2426 = vpack.c.b16 %v2396, %v2394
    %v2427 = vpack.c.b16 %v2397, %v2395
    %v2428 = vpack.c.b16 %v2400, %v2398
    %v2429 = vpack.c.b16 %v2401, %v2399
    %v2430 = vpack.c.b16 %v2404, %v2402
    %v2431 = vpack.c.b16 %v2405, %v2403
    %v2432 = vpack.c.b16 %v2408, %v2406
    %v2433 = vpack.c.b16 %v2409, %v2407
    %v2434 = vpack.c.b16 %v2412, %v2410
    %v2435 = vpack.c.b16 %v2413, %v2411
    %v2436 = vpack.c.b16 %v2416, %v2414
    %v2437 = vpack.c.b16 %v2417, %v2415
    %v2438 = vpack.c.b16 %v2420, %v2418
    %v2439 = vpack.c.b16 %v2421, %v2419
    %v2440 = vpack.c.b16 %v2424, %v2422
    %v2441 = vpack.c.b16 %v2425, %v2423
    %2458 = vmatpush.bf16.msra.mxu0 %v2440
    %2459 = vmatpush.bf16.msra.mxu0 %v2438
    %2460 = vmatpush.bf16.msra.mxu0 %v2436
    %2461 = vmatpush.bf16.msra.mxu0 %v2434
    %2462 = vmatpush.bf16.msra.mxu0 %v2432
    %2463 = vmatpush.bf16.msra.mxu0 %v2430
    %2464 = vmatpush.bf16.msra.mxu0 %v2428
    %2465 = vmatpush.bf16.msra.mxu0 %v2426
    %2466 = vmatmul.bf16.gmra.mxu0 %v175
    %v2467 = vpop.f32.mrf.mxu0
    %v2468 = vadd.f32 %v2374, %v2467
    %v2469 = vpop.f32.mrf.mxu0
    %2470 = vdwg.mxu0
    %2471 = vmatpush.bf16.msra.mxu0 %v2441
    %2472 = vmatpush.bf16.msra.mxu0 %v2439
    %2473 = vmatpush.bf16.msra.mxu0 %v2437
    %2474 = vmatpush.bf16.msra.mxu0 %v2435
    %2475 = vmatpush.bf16.msra.mxu0 %v2433
    %2476 = vmatpush.bf16.msra.mxu0 %v2431
    %2477 = vmatpush.bf16.msra.mxu0 %v2429
    %2478 = vmatpush.bf16.msra.mxu0 %v2427
    %2479 = vmatmul.bf16.gmra.mxu0 %v175
    %v2480 = vpop.f32.mrf.mxu0
    %v2481 = vadd.f32 %v2375, %v2480
    %v2482 = vpop.f32.mrf.mxu0
    %2483 = vdwg.mxu0
    %v2484 = vmax.f32 %v2468, 0.0
    %v2485 = vmax.f32 %v2481, 0.0
    %v2486 = vpack.c.bf16 %v2485, %v2484
    %2487 = vst [vmem:[#allocation2 + $0x20] sm:$0x11] %v2486
    %s2488 = scalar_lea.vmem [#allocation5], 2176
    %v2489 = vld [vmem:[%s2488] sm:$0xff]
    %v2490 = vld [vmem:[%s2488 + $0x8] sm:$0xff]
    %v2491 = vld [vmem:[%s2488 + $0x10] sm:$0xff]
    %v2492 = vld [vmem:[%s2488 + $0x18] sm:$0xff]
    %v2493 = vld [vmem:[%s2488 + $0x20] sm:$0xff]
    %v2494 = vld [vmem:[%s2488 + $0x28] sm:$0xff]
    %v2495 = vld [vmem:[%s2488 + $0x30] sm:$0xff]
    %v2496 = vld [vmem:[%s2488 + $0x38] sm:$0xff]
    %v2497 = vld [vmem:[%s2488 + $0x40] sm:$0xff]
    %v2498 = vld [vmem:[%s2488 + $0x48] sm:$0xff]
    %v2499 = vld [vmem:[%s2488 + $0x50] sm:$0xff]
    %v2500 = vld [vmem:[%s2488 + $0x58] sm:$0xff]
    %v2501 = vld [vmem:[%s2488 + $0x60] sm:$0xff]
    %v2502 = vld [vmem:[%s2488 + $0x68] sm:$0xff]
    %v2503 = vld [vmem:[%s2488 + $0x70] sm:$0xff]
    %v2504 = vld [vmem:[%s2488 + $0x78] sm:$0xff]
    %s2505 = scalar_lea.vmem [#allocation7], 34
    %v2506 = vld [vmem:[%s2505] sm:$0x3]
    %v2508 = vperm.slane %v2506, 0
    %v2509 = vperm.slane %v2506, 1
    %v2528 = vunpack.c.l.b16 %v2489
    %v2529 = vunpack.c.h.b16 %v2489
    %v2530 = vunpack.c.l.b16 %v2490
    %v2531 = vunpack.c.h.b16 %v2490
    %v2532 = vunpack.c.l.b16 %v2491
    %v2533 = vunpack.c.h.b16 %v2491
    %v2534 = vunpack.c.l.b16 %v2492
    %v2535 = vunpack.c.h.b16 %v2492
    %v2536 = vunpack.c.l.b16 %v2493
    %v2537 = vunpack.c.h.b16 %v2493
    %v2538 = vunpack.c.l.b16 %v2494
    %v2539 = vunpack.c.h.b16 %v2494
    %v2540 = vunpack.c.l.b16 %v2495
    %v2541 = vunpack.c.h.b16 %v2495
    %v2542 = vunpack.c.l.b16 %v2496
    %v2543 = vunpack.c.h.b16 %v2496
    %v2544 = vunpack.c.l.b16 %v2497
    %v2545 = vunpack.c.h.b16 %v2497
    %v2546 = vunpack.c.l.b16 %v2498
    %v2547 = vunpack.c.h.b16 %v2498
    %v2548 = vunpack.c.l.b16 %v2499
    %v2549 = vunpack.c.h.b16 %v2499
    %v2550 = vunpack.c.l.b16 %v2500
    %v2551 = vunpack.c.h.b16 %v2500
    %v2552 = vunpack.c.l.b16 %v2501
    %v2553 = vunpack.c.h.b16 %v2501
    %v2554 = vunpack.c.l.b16 %v2502
    %v2555 = vunpack.c.h.b16 %v2502
    %v2556 = vunpack.c.l.b16 %v2503
    %v2557 = vunpack.c.h.b16 %v2503
    %v2558 = vunpack.c.l.b16 %v2504
    %v2559 = vunpack.c.h.b16 %v2504
    %v2560 = vpack.c.b16 %v2530, %v2528
    %v2561 = vpack.c.b16 %v2531, %v2529
    %v2562 = vpack.c.b16 %v2534, %v2532
    %v2563 = vpack.c.b16 %v2535, %v2533
    %v2564 = vpack.c.b16 %v2538, %v2536
    %v2565 = vpack.c.b16 %v2539, %v2537
    %v2566 = vpack.c.b16 %v2542, %v2540
    %v2567 = vpack.c.b16 %v2543, %v2541
    %v2568 = vpack.c.b16 %v2546, %v2544
    %v2569 = vpack.c.b16 %v2547, %v2545
    %v2570 = vpack.c.b16 %v2550, %v2548
    %v2571 = vpack.c.b16 %v2551, %v2549
    %v2572 = vpack.c.b16 %v2554, %v2552
    %v2573 = vpack.c.b16 %v2555, %v2553
    %v2574 = vpack.c.b16 %v2558, %v2556
    %v2575 = vpack.c.b16 %v2559, %v2557
    %2592 = vmatpush.bf16.msra.mxu0 %v2574
    %2593 = vmatpush.bf16.msra.mxu0 %v2572
    %2594 = vmatpush.bf16.msra.mxu0 %v2570
    %2595 = vmatpush.bf16.msra.mxu0 %v2568
    %2596 = vmatpush.bf16.msra.mxu0 %v2566
    %2597 = vmatpush.bf16.msra.mxu0 %v2564
    %2598 = vmatpush.bf16.msra.mxu0 %v2562
    %2599 = vmatpush.bf16.msra.mxu0 %v2560
    %2600 = vmatmul.bf16.gmra.mxu0 %v175
    %v2601 = vpop.f32.mrf.mxu0
    %v2602 = vadd.f32 %v2508, %v2601
    %v2603 = vpop.f32.mrf.mxu0
    %2604 = vdwg.mxu0
    %2605 = vmatpush.bf16.msra.mxu0 %v2575
    %2606 = vmatpush.bf16.msra.mxu0 %v2573
    %2607 = vmatpush.bf16.msra.mxu0 %v2571
    %2608 = vmatpush.bf16.msra.mxu0 %v2569
    %2609 = vmatpush.bf16.msra.mxu0 %v2567
    %2610 = vmatpush.bf16.msra.mxu0 %v2565
    %2611 = vmatpush.bf16.msra.mxu0 %v2563
    %2612 = vmatpush.bf16.msra.mxu0 %v2561
    %2613 = vmatmul.bf16.gmra.mxu0 %v175
    %v2614 = vpop.f32.mrf.mxu0
    %v2615 = vadd.f32 %v2509, %v2614
    %v2616 = vpop.f32.mrf.mxu0
    %2617 = vdwg.mxu0
    %v2618 = vmax.f32 %v2602, 0.0
    %v2619 = vmax.f32 %v2615, 0.0
    %v2620 = vpack.c.bf16 %v2619, %v2618
    %v2622 = vrot.slane %v2620, 7
    %2624 = vst [vmem:[#allocation2 + $0x20] sm:$0x22] %v2622
    %s2625 = scalar_lea.vmem [#allocation5], 2304
    %v2626 = vld [vmem:[%s2625] sm:$0xff]
    %v2627 = vld [vmem:[%s2625 + $0x8] sm:$0xff]
    %v2628 = vld [vmem:[%s2625 + $0x10] sm:$0xff]
    %v2629 = vld [vmem:[%s2625 + $0x18] sm:$0xff]
    %v2630 = vld [vmem:[%s2625 + $0x20] sm:$0xff]
    %v2631 = vld [vmem:[%s2625 + $0x28] sm:$0xff]
    %v2632 = vld [vmem:[%s2625 + $0x30] sm:$0xff]
    %v2633 = vld [vmem:[%s2625 + $0x38] sm:$0xff]
    %v2634 = vld [vmem:[%s2625 + $0x40] sm:$0xff]
    %v2635 = vld [vmem:[%s2625 + $0x48] sm:$0xff]
    %v2636 = vld [vmem:[%s2625 + $0x50] sm:$0xff]
    %v2637 = vld [vmem:[%s2625 + $0x58] sm:$0xff]
    %v2638 = vld [vmem:[%s2625 + $0x60] sm:$0xff]
    %v2639 = vld [vmem:[%s2625 + $0x68] sm:$0xff]
    %v2640 = vld [vmem:[%s2625 + $0x70] sm:$0xff]
    %v2641 = vld [vmem:[%s2625 + $0x78] sm:$0xff]
    %s2642 = scalar_lea.vmem [#allocation7], 36
    %v2643 = vld [vmem:[%s2642] sm:$0x3]
    %v2645 = vperm.slane %v2643, 0
    %v2646 = vperm.slane %v2643, 1
    %v2665 = vunpack.c.l.b16 %v2626
    %v2666 = vunpack.c.h.b16 %v2626
    %v2667 = vunpack.c.l.b16 %v2627
    %v2668 = vunpack.c.h.b16 %v2627
    %v2669 = vunpack.c.l.b16 %v2628
    %v2670 = vunpack.c.h.b16 %v2628
    %v2671 = vunpack.c.l.b16 %v2629
    %v2672 = vunpack.c.h.b16 %v2629
    %v2673 = vunpack.c.l.b16 %v2630
    %v2674 = vunpack.c.h.b16 %v2630
    %v2675 = vunpack.c.l.b16 %v2631
    %v2676 = vunpack.c.h.b16 %v2631
    %v2677 = vunpack.c.l.b16 %v2632
    %v2678 = vunpack.c.h.b16 %v2632
    %v2679 = vunpack.c.l.b16 %v2633
    %v2680 = vunpack.c.h.b16 %v2633
    %v2681 = vunpack.c.l.b16 %v2634
    %v2682 = vunpack.c.h.b16 %v2634
    %v2683 = vunpack.c.l.b16 %v2635
    %v2684 = vunpack.c.h.b16 %v2635
    %v2685 = vunpack.c.l.b16 %v2636
    %v2686 = vunpack.c.h.b16 %v2636
    %v2687 = vunpack.c.l.b16 %v2637
    %v2688 = vunpack.c.h.b16 %v2637
    %v2689 = vunpack.c.l.b16 %v2638
    %v2690 = vunpack.c.h.b16 %v2638
    %v2691 = vunpack.c.l.b16 %v2639
    %v2692 = vunpack.c.h.b16 %v2639
    %v2693 = vunpack.c.l.b16 %v2640
    %v2694 = vunpack.c.h.b16 %v2640
    %v2695 = vunpack.c.l.b16 %v2641
    %v2696 = vunpack.c.h.b16 %v2641
    %v2697 = vpack.c.b16 %v2667, %v2665
    %v2698 = vpack.c.b16 %v2668, %v2666
    %v2699 = vpack.c.b16 %v2671, %v2669
    %v2700 = vpack.c.b16 %v2672, %v2670
    %v2701 = vpack.c.b16 %v2675, %v2673
    %v2702 = vpack.c.b16 %v2676, %v2674
    %v2703 = vpack.c.b16 %v2679, %v2677
    %v2704 = vpack.c.b16 %v2680, %v2678
    %v2705 = vpack.c.b16 %v2683, %v2681
    %v2706 = vpack.c.b16 %v2684, %v2682
    %v2707 = vpack.c.b16 %v2687, %v2685
    %v2708 = vpack.c.b16 %v2688, %v2686
    %v2709 = vpack.c.b16 %v2691, %v2689
    %v2710 = vpack.c.b16 %v2692, %v2690
    %v2711 = vpack.c.b16 %v2695, %v2693
    %v2712 = vpack.c.b16 %v2696, %v2694
    %2729 = vmatpush.bf16.msra.mxu0 %v2711
    %2730 = vmatpush.bf16.msra.mxu0 %v2709
    %2731 = vmatpush.bf16.msra.mxu0 %v2707
    %2732 = vmatpush.bf16.msra.mxu0 %v2705
    %2733 = vmatpush.bf16.msra.mxu0 %v2703
    %2734 = vmatpush.bf16.msra.mxu0 %v2701
    %2735 = vmatpush.bf16.msra.mxu0 %v2699
    %2736 = vmatpush.bf16.msra.mxu0 %v2697
    %2737 = vmatmul.bf16.gmra.mxu0 %v175
    %v2738 = vpop.f32.mrf.mxu0
    %v2739 = vadd.f32 %v2645, %v2738
    %v2740 = vpop.f32.mrf.mxu0
    %2741 = vdwg.mxu0
    %2742 = vmatpush.bf16.msra.mxu0 %v2712
    %2743 = vmatpush.bf16.msra.mxu0 %v2710
    %2744 = vmatpush.bf16.msra.mxu0 %v2708
    %2745 = vmatpush.bf16.msra.mxu0 %v2706
    %2746 = vmatpush.bf16.msra.mxu0 %v2704
    %2747 = vmatpush.bf16.msra.mxu0 %v2702
    %2748 = vmatpush.bf16.msra.mxu0 %v2700
    %2749 = vmatpush.bf16.msra.mxu0 %v2698
    %2750 = vmatmul.bf16.gmra.mxu0 %v175
    %v2751 = vpop.f32.mrf.mxu0
    %v2752 = vadd.f32 %v2646, %v2751
    %v2753 = vpop.f32.mrf.mxu0
    %2754 = vdwg.mxu0
    %v2755 = vmax.f32 %v2739, 0.0
    %v2756 = vmax.f32 %v2752, 0.0
    %v2757 = vpack.c.bf16 %v2756, %v2755
    %v2759 = vrot.slane %v2757, 6
    %2761 = vst [vmem:[#allocation2 + $0x20] sm:$0x44] %v2759
    %s2762 = scalar_lea.vmem [#allocation5], 2432
    %v2763 = vld [vmem:[%s2762] sm:$0xff]
    %v2764 = vld [vmem:[%s2762 + $0x8] sm:$0xff]
    %v2765 = vld [vmem:[%s2762 + $0x10] sm:$0xff]
    %v2766 = vld [vmem:[%s2762 + $0x18] sm:$0xff]
    %v2767 = vld [vmem:[%s2762 + $0x20] sm:$0xff]
    %v2768 = vld [vmem:[%s2762 + $0x28] sm:$0xff]
    %v2769 = vld [vmem:[%s2762 + $0x30] sm:$0xff]
    %v2770 = vld [vmem:[%s2762 + $0x38] sm:$0xff]
    %v2771 = vld [vmem:[%s2762 + $0x40] sm:$0xff]
    %v2772 = vld [vmem:[%s2762 + $0x48] sm:$0xff]
    %v2773 = vld [vmem:[%s2762 + $0x50] sm:$0xff]
    %v2774 = vld [vmem:[%s2762 + $0x58] sm:$0xff]
    %v2775 = vld [vmem:[%s2762 + $0x60] sm:$0xff]
    %v2776 = vld [vmem:[%s2762 + $0x68] sm:$0xff]
    %v2777 = vld [vmem:[%s2762 + $0x70] sm:$0xff]
    %v2778 = vld [vmem:[%s2762 + $0x78] sm:$0xff]
    %s2779 = scalar_lea.vmem [#allocation7], 38
    %v2780 = vld [vmem:[%s2779] sm:$0x3]
    %v2782 = vperm.slane %v2780, 0
    %v2783 = vperm.slane %v2780, 1
    %v2802 = vunpack.c.l.b16 %v2763
    %v2803 = vunpack.c.h.b16 %v2763
    %v2804 = vunpack.c.l.b16 %v2764
    %v2805 = vunpack.c.h.b16 %v2764
    %v2806 = vunpack.c.l.b16 %v2765
    %v2807 = vunpack.c.h.b16 %v2765
    %v2808 = vunpack.c.l.b16 %v2766
    %v2809 = vunpack.c.h.b16 %v2766
    %v2810 = vunpack.c.l.b16 %v2767
    %v2811 = vunpack.c.h.b16 %v2767
    %v2812 = vunpack.c.l.b16 %v2768
    %v2813 = vunpack.c.h.b16 %v2768
    %v2814 = vunpack.c.l.b16 %v2769
    %v2815 = vunpack.c.h.b16 %v2769
    %v2816 = vunpack.c.l.b16 %v2770
    %v2817 = vunpack.c.h.b16 %v2770
    %v2818 = vunpack.c.l.b16 %v2771
    %v2819 = vunpack.c.h.b16 %v2771
    %v2820 = vunpack.c.l.b16 %v2772
    %v2821 = vunpack.c.h.b16 %v2772
    %v2822 = vunpack.c.l.b16 %v2773
    %v2823 = vunpack.c.h.b16 %v2773
    %v2824 = vunpack.c.l.b16 %v2774
    %v2825 = vunpack.c.h.b16 %v2774
    %v2826 = vunpack.c.l.b16 %v2775
    %v2827 = vunpack.c.h.b16 %v2775
    %v2828 = vunpack.c.l.b16 %v2776
    %v2829 = vunpack.c.h.b16 %v2776
    %v2830 = vunpack.c.l.b16 %v2777
    %v2831 = vunpack.c.h.b16 %v2777
    %v2832 = vunpack.c.l.b16 %v2778
    %v2833 = vunpack.c.h.b16 %v2778
    %v2834 = vpack.c.b16 %v2804, %v2802
    %v2835 = vpack.c.b16 %v2805, %v2803
    %v2836 = vpack.c.b16 %v2808, %v2806
    %v2837 = vpack.c.b16 %v2809, %v2807
    %v2838 = vpack.c.b16 %v2812, %v2810
    %v2839 = vpack.c.b16 %v2813, %v2811
    %v2840 = vpack.c.b16 %v2816, %v2814
    %v2841 = vpack.c.b16 %v2817, %v2815
    %v2842 = vpack.c.b16 %v2820, %v2818
    %v2843 = vpack.c.b16 %v2821, %v2819
    %v2844 = vpack.c.b16 %v2824, %v2822
    %v2845 = vpack.c.b16 %v2825, %v2823
    %v2846 = vpack.c.b16 %v2828, %v2826
    %v2847 = vpack.c.b16 %v2829, %v2827
    %v2848 = vpack.c.b16 %v2832, %v2830
    %v2849 = vpack.c.b16 %v2833, %v2831
    %2866 = vmatpush.bf16.msra.mxu0 %v2848
    %2867 = vmatpush.bf16.msra.mxu0 %v2846
    %2868 = vmatpush.bf16.msra.mxu0 %v2844
    %2869 = vmatpush.bf16.msra.mxu0 %v2842
    %2870 = vmatpush.bf16.msra.mxu0 %v2840
    %2871 = vmatpush.bf16.msra.mxu0 %v2838
    %2872 = vmatpush.bf16.msra.mxu0 %v2836
    %2873 = vmatpush.bf16.msra.mxu0 %v2834
    %2874 = vmatmul.bf16.gmra.mxu0 %v175
    %v2875 = vpop.f32.mrf.mxu0
    %v2876 = vadd.f32 %v2782, %v2875
    %v2877 = vpop.f32.mrf.mxu0
    %2878 = vdwg.mxu0
    %2879 = vmatpush.bf16.msra.mxu0 %v2849
    %2880 = vmatpush.bf16.msra.mxu0 %v2847
    %2881 = vmatpush.bf16.msra.mxu0 %v2845
    %2882 = vmatpush.bf16.msra.mxu0 %v2843
    %2883 = vmatpush.bf16.msra.mxu0 %v2841
    %2884 = vmatpush.bf16.msra.mxu0 %v2839
    %2885 = vmatpush.bf16.msra.mxu0 %v2837
    %2886 = vmatpush.bf16.msra.mxu0 %v2835
    %2887 = vmatmul.bf16.gmra.mxu0 %v175
    %v2888 = vpop.f32.mrf.mxu0
    %v2889 = vadd.f32 %v2783, %v2888
    %v2890 = vpop.f32.mrf.mxu0
    %2891 = vdwg.mxu0
    %v2892 = vmax.f32 %v2876, 0.0
    %v2893 = vmax.f32 %v2889, 0.0
    %v2894 = vpack.c.bf16 %v2893, %v2892
    %v2896 = vrot.slane %v2894, 5
    %2898 = vst [vmem:[#allocation2 + $0x20] sm:$0x88] %v2896
    %s2899 = scalar_lea.vmem [#allocation5], 2560
    %v2900 = vld [vmem:[%s2899] sm:$0xff]
    %v2901 = vld [vmem:[%s2899 + $0x8] sm:$0xff]
    %v2902 = vld [vmem:[%s2899 + $0x10] sm:$0xff]
    %v2903 = vld [vmem:[%s2899 + $0x18] sm:$0xff]
    %v2904 = vld [vmem:[%s2899 + $0x20] sm:$0xff]
    %v2905 = vld [vmem:[%s2899 + $0x28] sm:$0xff]
    %v2906 = vld [vmem:[%s2899 + $0x30] sm:$0xff]
    %v2907 = vld [vmem:[%s2899 + $0x38] sm:$0xff]
    %v2908 = vld [vmem:[%s2899 + $0x40] sm:$0xff]
    %v2909 = vld [vmem:[%s2899 + $0x48] sm:$0xff]
    %v2910 = vld [vmem:[%s2899 + $0x50] sm:$0xff]
    %v2911 = vld [vmem:[%s2899 + $0x58] sm:$0xff]
    %v2912 = vld [vmem:[%s2899 + $0x60] sm:$0xff]
    %v2913 = vld [vmem:[%s2899 + $0x68] sm:$0xff]
    %v2914 = vld [vmem:[%s2899 + $0x70] sm:$0xff]
    %v2915 = vld [vmem:[%s2899 + $0x78] sm:$0xff]
    %s2916 = scalar_lea.vmem [#allocation7], 40
    %v2917 = vld [vmem:[%s2916] sm:$0x3]
    %v2919 = vperm.slane %v2917, 0
    %v2920 = vperm.slane %v2917, 1
    %v2939 = vunpack.c.l.b16 %v2900
    %v2940 = vunpack.c.h.b16 %v2900
    %v2941 = vunpack.c.l.b16 %v2901
    %v2942 = vunpack.c.h.b16 %v2901
    %v2943 = vunpack.c.l.b16 %v2902
    %v2944 = vunpack.c.h.b16 %v2902
    %v2945 = vunpack.c.l.b16 %v2903
    %v2946 = vunpack.c.h.b16 %v2903
    %v2947 = vunpack.c.l.b16 %v2904
    %v2948 = vunpack.c.h.b16 %v2904
    %v2949 = vunpack.c.l.b16 %v2905
    %v2950 = vunpack.c.h.b16 %v2905
    %v2951 = vunpack.c.l.b16 %v2906
    %v2952 = vunpack.c.h.b16 %v2906
    %v2953 = vunpack.c.l.b16 %v2907
    %v2954 = vunpack.c.h.b16 %v2907
    %v2955 = vunpack.c.l.b16 %v2908
    %v2956 = vunpack.c.h.b16 %v2908
    %v2957 = vunpack.c.l.b16 %v2909
    %v2958 = vunpack.c.h.b16 %v2909
    %v2959 = vunpack.c.l.b16 %v2910
    %v2960 = vunpack.c.h.b16 %v2910
    %v2961 = vunpack.c.l.b16 %v2911
    %v2962 = vunpack.c.h.b16 %v2911
    %v2963 = vunpack.c.l.b16 %v2912
    %v2964 = vunpack.c.h.b16 %v2912
    %v2965 = vunpack.c.l.b16 %v2913
    %v2966 = vunpack.c.h.b16 %v2913
    %v2967 = vunpack.c.l.b16 %v2914
    %v2968 = vunpack.c.h.b16 %v2914
    %v2969 = vunpack.c.l.b16 %v2915
    %v2970 = vunpack.c.h.b16 %v2915
    %v2971 = vpack.c.b16 %v2941, %v2939
    %v2972 = vpack.c.b16 %v2942, %v2940
    %v2973 = vpack.c.b16 %v2945, %v2943
    %v2974 = vpack.c.b16 %v2946, %v2944
    %v2975 = vpack.c.b16 %v2949, %v2947
    %v2976 = vpack.c.b16 %v2950, %v2948
    %v2977 = vpack.c.b16 %v2953, %v2951
    %v2978 = vpack.c.b16 %v2954, %v2952
    %v2979 = vpack.c.b16 %v2957, %v2955
    %v2980 = vpack.c.b16 %v2958, %v2956
    %v2981 = vpack.c.b16 %v2961, %v2959
    %v2982 = vpack.c.b16 %v2962, %v2960
    %v2983 = vpack.c.b16 %v2965, %v2963
    %v2984 = vpack.c.b16 %v2966, %v2964
    %v2985 = vpack.c.b16 %v2969, %v2967
    %v2986 = vpack.c.b16 %v2970, %v2968
    %3003 = vmatpush.bf16.msra.mxu0 %v2985
    %3004 = vmatpush.bf16.msra.mxu0 %v2983
    %3005 = vmatpush.bf16.msra.mxu0 %v2981
    %3006 = vmatpush.bf16.msra.mxu0 %v2979
    %3007 = vmatpush.bf16.msra.mxu0 %v2977
    %3008 = vmatpush.bf16.msra.mxu0 %v2975
    %3009 = vmatpush.bf16.msra.mxu0 %v2973
    %3010 = vmatpush.bf16.msra.mxu0 %v2971
    %3011 = vmatmul.bf16.gmra.mxu0 %v175
    %v3012 = vpop.f32.mrf.mxu0
    %v3013 = vadd.f32 %v2919, %v3012
    %v3014 = vpop.f32.mrf.mxu0
    %3015 = vdwg.mxu0
    %3016 = vmatpush.bf16.msra.mxu0 %v2986
    %3017 = vmatpush.bf16.msra.mxu0 %v2984
    %3018 = vmatpush.bf16.msra.mxu0 %v2982
    %3019 = vmatpush.bf16.msra.mxu0 %v2980
    %3020 = vmatpush.bf16.msra.mxu0 %v2978
    %3021 = vmatpush.bf16.msra.mxu0 %v2976
    %3022 = vmatpush.bf16.msra.mxu0 %v2974
    %3023 = vmatpush.bf16.msra.mxu0 %v2972
    %3024 = vmatmul.bf16.gmra.mxu0 %v175
    %v3025 = vpop.f32.mrf.mxu0
    %v3026 = vadd.f32 %v2920, %v3025
    %v3027 = vpop.f32.mrf.mxu0
    %3028 = vdwg.mxu0
    %v3029 = vmax.f32 %v3013, 0.0
    %v3030 = vmax.f32 %v3026, 0.0
    %v3031 = vpack.c.bf16 %v3030, %v3029
    %3032 = vst [vmem:[#allocation2 + $0x28] sm:$0x11] %v3031
    %s3033 = scalar_lea.vmem [#allocation5], 2688
    %v3034 = vld [vmem:[%s3033] sm:$0xff]
    %v3035 = vld [vmem:[%s3033 + $0x8] sm:$0xff]
    %v3036 = vld [vmem:[%s3033 + $0x10] sm:$0xff]
    %v3037 = vld [vmem:[%s3033 + $0x18] sm:$0xff]
    %v3038 = vld [vmem:[%s3033 + $0x20] sm:$0xff]
    %v3039 = vld [vmem:[%s3033 + $0x28] sm:$0xff]
    %v3040 = vld [vmem:[%s3033 + $0x30] sm:$0xff]
    %v3041 = vld [vmem:[%s3033 + $0x38] sm:$0xff]
    %v3042 = vld [vmem:[%s3033 + $0x40] sm:$0xff]
    %v3043 = vld [vmem:[%s3033 + $0x48] sm:$0xff]
    %v3044 = vld [vmem:[%s3033 + $0x50] sm:$0xff]
    %v3045 = vld [vmem:[%s3033 + $0x58] sm:$0xff]
    %v3046 = vld [vmem:[%s3033 + $0x60] sm:$0xff]
    %v3047 = vld [vmem:[%s3033 + $0x68] sm:$0xff]
    %v3048 = vld [vmem:[%s3033 + $0x70] sm:$0xff]
    %v3049 = vld [vmem:[%s3033 + $0x78] sm:$0xff]
    %s3050 = scalar_lea.vmem [#allocation7], 42
    %v3051 = vld [vmem:[%s3050] sm:$0x3]
    %v3053 = vperm.slane %v3051, 0
    %v3054 = vperm.slane %v3051, 1
    %v3073 = vunpack.c.l.b16 %v3034
    %v3074 = vunpack.c.h.b16 %v3034
    %v3075 = vunpack.c.l.b16 %v3035
    %v3076 = vunpack.c.h.b16 %v3035
    %v3077 = vunpack.c.l.b16 %v3036
    %v3078 = vunpack.c.h.b16 %v3036
    %v3079 = vunpack.c.l.b16 %v3037
    %v3080 = vunpack.c.h.b16 %v3037
    %v3081 = vunpack.c.l.b16 %v3038
    %v3082 = vunpack.c.h.b16 %v3038
    %v3083 = vunpack.c.l.b16 %v3039
    %v3084 = vunpack.c.h.b16 %v3039
    %v3085 = vunpack.c.l.b16 %v3040
    %v3086 = vunpack.c.h.b16 %v3040
    %v3087 = vunpack.c.l.b16 %v3041
    %v3088 = vunpack.c.h.b16 %v3041
    %v3089 = vunpack.c.l.b16 %v3042
    %v3090 = vunpack.c.h.b16 %v3042
    %v3091 = vunpack.c.l.b16 %v3043
    %v3092 = vunpack.c.h.b16 %v3043
    %v3093 = vunpack.c.l.b16 %v3044
    %v3094 = vunpack.c.h.b16 %v3044
    %v3095 = vunpack.c.l.b16 %v3045
    %v3096 = vunpack.c.h.b16 %v3045
    %v3097 = vunpack.c.l.b16 %v3046
    %v3098 = vunpack.c.h.b16 %v3046
    %v3099 = vunpack.c.l.b16 %v3047
    %v3100 = vunpack.c.h.b16 %v3047
    %v3101 = vunpack.c.l.b16 %v3048
    %v3102 = vunpack.c.h.b16 %v3048
    %v3103 = vunpack.c.l.b16 %v3049
    %v3104 = vunpack.c.h.b16 %v3049
    %v3105 = vpack.c.b16 %v3075, %v3073
    %v3106 = vpack.c.b16 %v3076, %v3074
    %v3107 = vpack.c.b16 %v3079, %v3077
    %v3108 = vpack.c.b16 %v3080, %v3078
    %v3109 = vpack.c.b16 %v3083, %v3081
    %v3110 = vpack.c.b16 %v3084, %v3082
    %v3111 = vpack.c.b16 %v3087, %v3085
    %v3112 = vpack.c.b16 %v3088, %v3086
    %v3113 = vpack.c.b16 %v3091, %v3089
    %v3114 = vpack.c.b16 %v3092, %v3090
    %v3115 = vpack.c.b16 %v3095, %v3093
    %v3116 = vpack.c.b16 %v3096, %v3094
    %v3117 = vpack.c.b16 %v3099, %v3097
    %v3118 = vpack.c.b16 %v3100, %v3098
    %v3119 = vpack.c.b16 %v3103, %v3101
    %v3120 = vpack.c.b16 %v3104, %v3102
    %3137 = vmatpush.bf16.msra.mxu0 %v3119
    %3138 = vmatpush.bf16.msra.mxu0 %v3117
    %3139 = vmatpush.bf16.msra.mxu0 %v3115
    %3140 = vmatpush.bf16.msra.mxu0 %v3113
    %3141 = vmatpush.bf16.msra.mxu0 %v3111
    %3142 = vmatpush.bf16.msra.mxu0 %v3109
    %3143 = vmatpush.bf16.msra.mxu0 %v3107
    %3144 = vmatpush.bf16.msra.mxu0 %v3105
    %3145 = vmatmul.bf16.gmra.mxu0 %v175
    %v3146 = vpop.f32.mrf.mxu0
    %v3147 = vadd.f32 %v3053, %v3146
    %v3148 = vpop.f32.mrf.mxu0
    %3149 = vdwg.mxu0
    %3150 = vmatpush.bf16.msra.mxu0 %v3120
    %3151 = vmatpush.bf16.msra.mxu0 %v3118
    %3152 = vmatpush.bf16.msra.mxu0 %v3116
    %3153 = vmatpush.bf16.msra.mxu0 %v3114
    %3154 = vmatpush.bf16.msra.mxu0 %v3112
    %3155 = vmatpush.bf16.msra.mxu0 %v3110
    %3156 = vmatpush.bf16.msra.mxu0 %v3108
    %3157 = vmatpush.bf16.msra.mxu0 %v3106
    %3158 = vmatmul.bf16.gmra.mxu0 %v175
    %v3159 = vpop.f32.mrf.mxu0
    %v3160 = vadd.f32 %v3054, %v3159
    %v3161 = vpop.f32.mrf.mxu0
    %3162 = vdwg.mxu0
    %v3163 = vmax.f32 %v3147, 0.0
    %v3164 = vmax.f32 %v3160, 0.0
    %v3165 = vpack.c.bf16 %v3164, %v3163
    %v3167 = vrot.slane %v3165, 7
    %3169 = vst [vmem:[#allocation2 + $0x28] sm:$0x22] %v3167
    %s3170 = scalar_lea.vmem [#allocation5], 2816
    %v3171 = vld [vmem:[%s3170] sm:$0xff]
    %v3172 = vld [vmem:[%s3170 + $0x8] sm:$0xff]
    %v3173 = vld [vmem:[%s3170 + $0x10] sm:$0xff]
    %v3174 = vld [vmem:[%s3170 + $0x18] sm:$0xff]
    %v3175 = vld [vmem:[%s3170 + $0x20] sm:$0xff]
    %v3176 = vld [vmem:[%s3170 + $0x28] sm:$0xff]
    %v3177 = vld [vmem:[%s3170 + $0x30] sm:$0xff]
    %v3178 = vld [vmem:[%s3170 + $0x38] sm:$0xff]
    %v3179 = vld [vmem:[%s3170 + $0x40] sm:$0xff]
    %v3180 = vld [vmem:[%s3170 + $0x48] sm:$0xff]
    %v3181 = vld [vmem:[%s3170 + $0x50] sm:$0xff]
    %v3182 = vld [vmem:[%s3170 + $0x58] sm:$0xff]
    %v3183 = vld [vmem:[%s3170 + $0x60] sm:$0xff]
    %v3184 = vld [vmem:[%s3170 + $0x68] sm:$0xff]
    %v3185 = vld [vmem:[%s3170 + $0x70] sm:$0xff]
    %v3186 = vld [vmem:[%s3170 + $0x78] sm:$0xff]
    %s3187 = scalar_lea.vmem [#allocation7], 44
    %v3188 = vld [vmem:[%s3187] sm:$0x3]
    %v3190 = vperm.slane %v3188, 0
    %v3191 = vperm.slane %v3188, 1
    %v3210 = vunpack.c.l.b16 %v3171
    %v3211 = vunpack.c.h.b16 %v3171
    %v3212 = vunpack.c.l.b16 %v3172
    %v3213 = vunpack.c.h.b16 %v3172
    %v3214 = vunpack.c.l.b16 %v3173
    %v3215 = vunpack.c.h.b16 %v3173
    %v3216 = vunpack.c.l.b16 %v3174
    %v3217 = vunpack.c.h.b16 %v3174
    %v3218 = vunpack.c.l.b16 %v3175
    %v3219 = vunpack.c.h.b16 %v3175
    %v3220 = vunpack.c.l.b16 %v3176
    %v3221 = vunpack.c.h.b16 %v3176
    %v3222 = vunpack.c.l.b16 %v3177
    %v3223 = vunpack.c.h.b16 %v3177
    %v3224 = vunpack.c.l.b16 %v3178
    %v3225 = vunpack.c.h.b16 %v3178
    %v3226 = vunpack.c.l.b16 %v3179
    %v3227 = vunpack.c.h.b16 %v3179
    %v3228 = vunpack.c.l.b16 %v3180
    %v3229 = vunpack.c.h.b16 %v3180
    %v3230 = vunpack.c.l.b16 %v3181
    %v3231 = vunpack.c.h.b16 %v3181
    %v3232 = vunpack.c.l.b16 %v3182
    %v3233 = vunpack.c.h.b16 %v3182
    %v3234 = vunpack.c.l.b16 %v3183
    %v3235 = vunpack.c.h.b16 %v3183
    %v3236 = vunpack.c.l.b16 %v3184
    %v3237 = vunpack.c.h.b16 %v3184
    %v3238 = vunpack.c.l.b16 %v3185
    %v3239 = vunpack.c.h.b16 %v3185
    %v3240 = vunpack.c.l.b16 %v3186
    %v3241 = vunpack.c.h.b16 %v3186
    %v3242 = vpack.c.b16 %v3212, %v3210
    %v3243 = vpack.c.b16 %v3213, %v3211
    %v3244 = vpack.c.b16 %v3216, %v3214
    %v3245 = vpack.c.b16 %v3217, %v3215
    %v3246 = vpack.c.b16 %v3220, %v3218
    %v3247 = vpack.c.b16 %v3221, %v3219
    %v3248 = vpack.c.b16 %v3224, %v3222
    %v3249 = vpack.c.b16 %v3225, %v3223
    %v3250 = vpack.c.b16 %v3228, %v3226
    %v3251 = vpack.c.b16 %v3229, %v3227
    %v3252 = vpack.c.b16 %v3232, %v3230
    %v3253 = vpack.c.b16 %v3233, %v3231
    %v3254 = vpack.c.b16 %v3236, %v3234
    %v3255 = vpack.c.b16 %v3237, %v3235
    %v3256 = vpack.c.b16 %v3240, %v3238
    %v3257 = vpack.c.b16 %v3241, %v3239
    %3274 = vmatpush.bf16.msra.mxu0 %v3256
    %3275 = vmatpush.bf16.msra.mxu0 %v3254
    %3276 = vmatpush.bf16.msra.mxu0 %v3252
    %3277 = vmatpush.bf16.msra.mxu0 %v3250
    %3278 = vmatpush.bf16.msra.mxu0 %v3248
    %3279 = vmatpush.bf16.msra.mxu0 %v3246
    %3280 = vmatpush.bf16.msra.mxu0 %v3244
    %3281 = vmatpush.bf16.msra.mxu0 %v3242
    %3282 = vmatmul.bf16.gmra.mxu0 %v175
    %v3283 = vpop.f32.mrf.mxu0
    %v3284 = vadd.f32 %v3190, %v3283
    %v3285 = vpop.f32.mrf.mxu0
    %3286 = vdwg.mxu0
    %3287 = vmatpush.bf16.msra.mxu0 %v3257
    %3288 = vmatpush.bf16.msra.mxu0 %v3255
    %3289 = vmatpush.bf16.msra.mxu0 %v3253
    %3290 = vmatpush.bf16.msra.mxu0 %v3251
    %3291 = vmatpush.bf16.msra.mxu0 %v3249
    %3292 = vmatpush.bf16.msra.mxu0 %v3247
    %3293 = vmatpush.bf16.msra.mxu0 %v3245
    %3294 = vmatpush.bf16.msra.mxu0 %v3243
    %3295 = vmatmul.bf16.gmra.mxu0 %v175
    %v3296 = vpop.f32.mrf.mxu0
    %v3297 = vadd.f32 %v3191, %v3296
    %v3298 = vpop.f32.mrf.mxu0
    %3299 = vdwg.mxu0
    %v3300 = vmax.f32 %v3284, 0.0
    %v3301 = vmax.f32 %v3297, 0.0
    %v3302 = vpack.c.bf16 %v3301, %v3300
    %v3304 = vrot.slane %v3302, 6
    %3306 = vst [vmem:[#allocation2 + $0x28] sm:$0x44] %v3304
    %s3307 = scalar_lea.vmem [#allocation5], 2944
    %v3308 = vld [vmem:[%s3307] sm:$0xff]
    %v3309 = vld [vmem:[%s3307 + $0x8] sm:$0xff]
    %v3310 = vld [vmem:[%s3307 + $0x10] sm:$0xff]
    %v3311 = vld [vmem:[%s3307 + $0x18] sm:$0xff]
    %v3312 = vld [vmem:[%s3307 + $0x20] sm:$0xff]
    %v3313 = vld [vmem:[%s3307 + $0x28] sm:$0xff]
    %v3314 = vld [vmem:[%s3307 + $0x30] sm:$0xff]
    %v3315 = vld [vmem:[%s3307 + $0x38] sm:$0xff]
    %v3316 = vld [vmem:[%s3307 + $0x40] sm:$0xff]
    %v3317 = vld [vmem:[%s3307 + $0x48] sm:$0xff]
    %v3318 = vld [vmem:[%s3307 + $0x50] sm:$0xff]
    %v3319 = vld [vmem:[%s3307 + $0x58] sm:$0xff]
    %v3320 = vld [vmem:[%s3307 + $0x60] sm:$0xff]
    %v3321 = vld [vmem:[%s3307 + $0x68] sm:$0xff]
    %v3322 = vld [vmem:[%s3307 + $0x70] sm:$0xff]
    %v3323 = vld [vmem:[%s3307 + $0x78] sm:$0xff]
    %s3324 = scalar_lea.vmem [#allocation7], 46
    %v3325 = vld [vmem:[%s3324] sm:$0x3]
    %v3327 = vperm.slane %v3325, 0
    %v3328 = vperm.slane %v3325, 1
    %v3347 = vunpack.c.l.b16 %v3308
    %v3348 = vunpack.c.h.b16 %v3308
    %v3349 = vunpack.c.l.b16 %v3309
    %v3350 = vunpack.c.h.b16 %v3309
    %v3351 = vunpack.c.l.b16 %v3310
    %v3352 = vunpack.c.h.b16 %v3310
    %v3353 = vunpack.c.l.b16 %v3311
    %v3354 = vunpack.c.h.b16 %v3311
    %v3355 = vunpack.c.l.b16 %v3312
    %v3356 = vunpack.c.h.b16 %v3312
    %v3357 = vunpack.c.l.b16 %v3313
    %v3358 = vunpack.c.h.b16 %v3313
    %v3359 = vunpack.c.l.b16 %v3314
    %v3360 = vunpack.c.h.b16 %v3314
    %v3361 = vunpack.c.l.b16 %v3315
    %v3362 = vunpack.c.h.b16 %v3315
    %v3363 = vunpack.c.l.b16 %v3316
    %v3364 = vunpack.c.h.b16 %v3316
    %v3365 = vunpack.c.l.b16 %v3317
    %v3366 = vunpack.c.h.b16 %v3317
    %v3367 = vunpack.c.l.b16 %v3318
    %v3368 = vunpack.c.h.b16 %v3318
    %v3369 = vunpack.c.l.b16 %v3319
    %v3370 = vunpack.c.h.b16 %v3319
    %v3371 = vunpack.c.l.b16 %v3320
    %v3372 = vunpack.c.h.b16 %v3320
    %v3373 = vunpack.c.l.b16 %v3321
    %v3374 = vunpack.c.h.b16 %v3321
    %v3375 = vunpack.c.l.b16 %v3322
    %v3376 = vunpack.c.h.b16 %v3322
    %v3377 = vunpack.c.l.b16 %v3323
    %v3378 = vunpack.c.h.b16 %v3323
    %v3379 = vpack.c.b16 %v3349, %v3347
    %v3380 = vpack.c.b16 %v3350, %v3348
    %v3381 = vpack.c.b16 %v3353, %v3351
    %v3382 = vpack.c.b16 %v3354, %v3352
    %v3383 = vpack.c.b16 %v3357, %v3355
    %v3384 = vpack.c.b16 %v3358, %v3356
    %v3385 = vpack.c.b16 %v3361, %v3359
    %v3386 = vpack.c.b16 %v3362, %v3360
    %v3387 = vpack.c.b16 %v3365, %v3363
    %v3388 = vpack.c.b16 %v3366, %v3364
    %v3389 = vpack.c.b16 %v3369, %v3367
    %v3390 = vpack.c.b16 %v3370, %v3368
    %v3391 = vpack.c.b16 %v3373, %v3371
    %v3392 = vpack.c.b16 %v3374, %v3372
    %v3393 = vpack.c.b16 %v3377, %v3375
    %v3394 = vpack.c.b16 %v3378, %v3376
    %3411 = vmatpush.bf16.msra.mxu0 %v3393
    %3412 = vmatpush.bf16.msra.mxu0 %v3391
    %3413 = vmatpush.bf16.msra.mxu0 %v3389
    %3414 = vmatpush.bf16.msra.mxu0 %v3387
    %3415 = vmatpush.bf16.msra.mxu0 %v3385
    %3416 = vmatpush.bf16.msra.mxu0 %v3383
    %3417 = vmatpush.bf16.msra.mxu0 %v3381
    %3418 = vmatpush.bf16.msra.mxu0 %v3379
    %3419 = vmatmul.bf16.gmra.mxu0 %v175
    %v3420 = vpop.f32.mrf.mxu0
    %v3421 = vadd.f32 %v3327, %v3420
    %v3422 = vpop.f32.mrf.mxu0
    %3423 = vdwg.mxu0
    %3424 = vmatpush.bf16.msra.mxu0 %v3394
    %3425 = vmatpush.bf16.msra.mxu0 %v3392
    %3426 = vmatpush.bf16.msra.mxu0 %v3390
    %3427 = vmatpush.bf16.msra.mxu0 %v3388
    %3428 = vmatpush.bf16.msra.mxu0 %v3386
    %3429 = vmatpush.bf16.msra.mxu0 %v3384
    %3430 = vmatpush.bf16.msra.mxu0 %v3382
    %3431 = vmatpush.bf16.msra.mxu0 %v3380
    %3432 = vmatmul.bf16.gmra.mxu0 %v175
    %v3433 = vpop.f32.mrf.mxu0
    %v3434 = vadd.f32 %v3328, %v3433
    %v3435 = vpop.f32.mrf.mxu0
    %3436 = vdwg.mxu0
    %v3437 = vmax.f32 %v3421, 0.0
    %v3438 = vmax.f32 %v3434, 0.0
    %v3439 = vpack.c.bf16 %v3438, %v3437
    %v3441 = vrot.slane %v3439, 5
    %3443 = vst [vmem:[#allocation2 + $0x28] sm:$0x88] %v3441
    %s3444 = scalar_lea.vmem [#allocation5], 3072
    %v3445 = vld [vmem:[%s3444] sm:$0xff]
    %v3446 = vld [vmem:[%s3444 + $0x8] sm:$0xff]
    %v3447 = vld [vmem:[%s3444 + $0x10] sm:$0xff]
    %v3448 = vld [vmem:[%s3444 + $0x18] sm:$0xff]
    %v3449 = vld [vmem:[%s3444 + $0x20] sm:$0xff]
    %v3450 = vld [vmem:[%s3444 + $0x28] sm:$0xff]
    %v3451 = vld [vmem:[%s3444 + $0x30] sm:$0xff]
    %v3452 = vld [vmem:[%s3444 + $0x38] sm:$0xff]
    %v3453 = vld [vmem:[%s3444 + $0x40] sm:$0xff]
    %v3454 = vld [vmem:[%s3444 + $0x48] sm:$0xff]
    %v3455 = vld [vmem:[%s3444 + $0x50] sm:$0xff]
    %v3456 = vld [vmem:[%s3444 + $0x58] sm:$0xff]
    %v3457 = vld [vmem:[%s3444 + $0x60] sm:$0xff]
    %v3458 = vld [vmem:[%s3444 + $0x68] sm:$0xff]
    %v3459 = vld [vmem:[%s3444 + $0x70] sm:$0xff]
    %v3460 = vld [vmem:[%s3444 + $0x78] sm:$0xff]
    %s3461 = scalar_lea.vmem [#allocation7], 48
    %v3462 = vld [vmem:[%s3461] sm:$0x3]
    %v3464 = vperm.slane %v3462, 0
    %v3465 = vperm.slane %v3462, 1
    %v3484 = vunpack.c.l.b16 %v3445
    %v3485 = vunpack.c.h.b16 %v3445
    %v3486 = vunpack.c.l.b16 %v3446
    %v3487 = vunpack.c.h.b16 %v3446
    %v3488 = vunpack.c.l.b16 %v3447
    %v3489 = vunpack.c.h.b16 %v3447
    %v3490 = vunpack.c.l.b16 %v3448
    %v3491 = vunpack.c.h.b16 %v3448
    %v3492 = vunpack.c.l.b16 %v3449
    %v3493 = vunpack.c.h.b16 %v3449
    %v3494 = vunpack.c.l.b16 %v3450
    %v3495 = vunpack.c.h.b16 %v3450
    %v3496 = vunpack.c.l.b16 %v3451
    %v3497 = vunpack.c.h.b16 %v3451
    %v3498 = vunpack.c.l.b16 %v3452
    %v3499 = vunpack.c.h.b16 %v3452
    %v3500 = vunpack.c.l.b16 %v3453
    %v3501 = vunpack.c.h.b16 %v3453
    %v3502 = vunpack.c.l.b16 %v3454
    %v3503 = vunpack.c.h.b16 %v3454
    %v3504 = vunpack.c.l.b16 %v3455
    %v3505 = vunpack.c.h.b16 %v3455
    %v3506 = vunpack.c.l.b16 %v3456
    %v3507 = vunpack.c.h.b16 %v3456
    %v3508 = vunpack.c.l.b16 %v3457
    %v3509 = vunpack.c.h.b16 %v3457
    %v3510 = vunpack.c.l.b16 %v3458
    %v3511 = vunpack.c.h.b16 %v3458
    %v3512 = vunpack.c.l.b16 %v3459
    %v3513 = vunpack.c.h.b16 %v3459
    %v3514 = vunpack.c.l.b16 %v3460
    %v3515 = vunpack.c.h.b16 %v3460
    %v3516 = vpack.c.b16 %v3486, %v3484
    %v3517 = vpack.c.b16 %v3487, %v3485
    %v3518 = vpack.c.b16 %v3490, %v3488
    %v3519 = vpack.c.b16 %v3491, %v3489
    %v3520 = vpack.c.b16 %v3494, %v3492
    %v3521 = vpack.c.b16 %v3495, %v3493
    %v3522 = vpack.c.b16 %v3498, %v3496
    %v3523 = vpack.c.b16 %v3499, %v3497
    %v3524 = vpack.c.b16 %v3502, %v3500
    %v3525 = vpack.c.b16 %v3503, %v3501
    %v3526 = vpack.c.b16 %v3506, %v3504
    %v3527 = vpack.c.b16 %v3507, %v3505
    %v3528 = vpack.c.b16 %v3510, %v3508
    %v3529 = vpack.c.b16 %v3511, %v3509
    %v3530 = vpack.c.b16 %v3514, %v3512
    %v3531 = vpack.c.b16 %v3515, %v3513
    %3548 = vmatpush.bf16.msra.mxu0 %v3530
    %3549 = vmatpush.bf16.msra.mxu0 %v3528
    %3550 = vmatpush.bf16.msra.mxu0 %v3526
    %3551 = vmatpush.bf16.msra.mxu0 %v3524
    %3552 = vmatpush.bf16.msra.mxu0 %v3522
    %3553 = vmatpush.bf16.msra.mxu0 %v3520
    %3554 = vmatpush.bf16.msra.mxu0 %v3518
    %3555 = vmatpush.bf16.msra.mxu0 %v3516
    %3556 = vmatmul.bf16.gmra.mxu0 %v175
    %v3557 = vpop.f32.mrf.mxu0
    %v3558 = vadd.f32 %v3464, %v3557
    %v3559 = vpop.f32.mrf.mxu0
    %3560 = vdwg.mxu0
    %3561 = vmatpush.bf16.msra.mxu0 %v3531
    %3562 = vmatpush.bf16.msra.mxu0 %v3529
    %3563 = vmatpush.bf16.msra.mxu0 %v3527
    %3564 = vmatpush.bf16.msra.mxu0 %v3525
    %3565 = vmatpush.bf16.msra.mxu0 %v3523
    %3566 = vmatpush.bf16.msra.mxu0 %v3521
    %3567 = vmatpush.bf16.msra.mxu0 %v3519
    %3568 = vmatpush.bf16.msra.mxu0 %v3517
    %3569 = vmatmul.bf16.gmra.mxu0 %v175
    %v3570 = vpop.f32.mrf.mxu0
    %v3571 = vadd.f32 %v3465, %v3570
    %v3572 = vpop.f32.mrf.mxu0
    %3573 = vdwg.mxu0
    %v3574 = vmax.f32 %v3558, 0.0
    %v3575 = vmax.f32 %v3571, 0.0
    %v3576 = vpack.c.bf16 %v3575, %v3574
    %3577 = vst [vmem:[#allocation2 + $0x30] sm:$0x11] %v3576
    %v3578 = vld [vmem:[#allocation2] sm:$0xff]
    %v3579 = vld [vmem:[#allocation2 + $0x8] sm:$0xff]
    %v3580 = vld [vmem:[#allocation2 + $0x10] sm:$0xff]
    %v3581 = vld [vmem:[#allocation2 + $0x18] sm:$0xff]
    %v3582 = vld [vmem:[#allocation2 + $0x20] sm:$0xff]
    %v3583 = vld [vmem:[#allocation2 + $0x28] sm:$0xff]
    %v3584 = vld [vmem:[#allocation2 + $0x30] sm:$0x11]
    %v3585 = vld [vmem:[#allocation8] sm:$0xf]
    %v3586 = vld [vmem:[#allocation8 + $0x4] sm:$0xf]
    %v3587 = vld [vmem:[#allocation8 + $0x8] sm:$0xf]
    %v3588 = vld [vmem:[#allocation8 + $0xc] sm:$0xf]
    %v3589 = vld [vmem:[#allocation8 + $0x10] sm:$0xf]
    %v3590 = vld [vmem:[#allocation8 + $0x14] sm:$0xf]
    %v3591 = vld [vmem:[#allocation8 + $0x18] sm:$0xf]
    %v3592 = vld [vmem:[#allocation8 + $0x1c] sm:$0xf]
    %v3593 = vld [vmem:[#allocation8 + $0x20] sm:$0xf]
    %v3594 = vld [vmem:[#allocation8 + $0x24] sm:$0xf]
    %v3595 = vld [vmem:[#allocation8 + $0x28] sm:$0xf]
    %v3596 = vld [vmem:[#allocation8 + $0x2c] sm:$0xf]
    %v3597 = vld [vmem:[#allocation8 + $0x30] sm:$0xf]
    %v3598 = vld [vmem:[#allocation8 + $0x34] sm:$0xf]
    %v3599 = vld [vmem:[#allocation8 + $0x38] sm:$0xf]
    %v3600 = vld [vmem:[#allocation8 + $0x3c] sm:$0xf]
    %v3601 = vld [vmem:[#allocation8 + $0x40] sm:$0xf]
    %v3602 = vld [vmem:[#allocation8 + $0x44] sm:$0xf]
    %v3603 = vld [vmem:[#allocation8 + $0x48] sm:$0xf]
    %v3604 = vld [vmem:[#allocation8 + $0x4c] sm:$0xf]
    %v3605 = vld [vmem:[#allocation8 + $0x50] sm:$0xf]
    %v3606 = vld [vmem:[#allocation8 + $0x54] sm:$0xf]
    %v3607 = vld [vmem:[#allocation8 + $0x58] sm:$0xf]
    %v3608 = vld [vmem:[#allocation8 + $0x5c] sm:$0xf]
    %v3609 = vld [vmem:[#allocation8 + $0x60] sm:$0xf]
    %v3610 = vld [vmem:[#allocation8 + $0x64] sm:$0xf]
    %v3611 = vld [vmem:[#allocation8 + $0x68] sm:$0xf]
    %v3612 = vld [vmem:[#allocation8 + $0x6c] sm:$0xf]
    %v3613 = vld [vmem:[#allocation8 + $0x70] sm:$0xf]
    %v3614 = vld [vmem:[#allocation8 + $0x74] sm:$0xf]
    %v3615 = vld [vmem:[#allocation8 + $0x78] sm:$0xf]
    %v3616 = vld [vmem:[#allocation8 + $0x7c] sm:$0xf]
    %v3624 = vunpack.c.l.b16 %v3578
    %v3625 = vunpack.c.h.b16 %v3578
    %v3626 = vunpack.c.l.b16 %v3579
    %v3627 = vunpack.c.h.b16 %v3579
    %v3628 = vunpack.c.l.b16 %v3580
    %v3629 = vunpack.c.h.b16 %v3580
    %v3630 = vunpack.c.l.b16 %v3581
    %v3631 = vunpack.c.h.b16 %v3581
    %v3632 = vunpack.c.l.b16 %v3582
    %v3633 = vunpack.c.h.b16 %v3582
    %v3634 = vunpack.c.l.b16 %v3583
    %v3635 = vunpack.c.h.b16 %v3583
    %v3636 = vunpack.c.l.b16 %v3584
    %v3637 = vunpack.c.h.b16 %v3584
    %v3638 = vpack.c.b16 %v3626, %v3624
    %v3639 = vpack.c.b16 %v3627, %v3625
    %v3640 = vpack.c.b16 %v3630, %v3628
    %v3641 = vpack.c.b16 %v3631, %v3629
    %v3642 = vpack.c.b16 %v3634, %v3632
    %v3643 = vpack.c.b16 %v3635, %v3633
    %v3644 = vpack.c.b16 %v3636, %v3636
    %v3645 = vpack.c.b16 %v3637, %v3637
    %v3686 = vunpack.c.l.b16 %v3585
    %v3687 = vunpack.c.l.b16 %v3586
    %v3688 = vunpack.c.l.b16 %v3587
    %v3689 = vunpack.c.l.b16 %v3588
    %v3690 = vunpack.c.l.b16 %v3589
    %v3691 = vunpack.c.l.b16 %v3590
    %v3692 = vunpack.c.l.b16 %v3591
    %v3693 = vunpack.c.l.b16 %v3592
    %v3694 = vunpack.c.l.b16 %v3593
    %v3695 = vunpack.c.l.b16 %v3594
    %v3696 = vunpack.c.l.b16 %v3595
    %v3697 = vunpack.c.l.b16 %v3596
    %v3698 = vunpack.c.l.b16 %v3597
    %v3699 = vunpack.c.l.b16 %v3598
    %v3700 = vunpack.c.l.b16 %v3599
    %v3701 = vunpack.c.l.b16 %v3600
    %v3702 = vunpack.c.l.b16 %v3601
    %v3703 = vunpack.c.l.b16 %v3602
    %v3704 = vunpack.c.l.b16 %v3603
    %v3705 = vunpack.c.l.b16 %v3604
    %v3706 = vunpack.c.l.b16 %v3605
    %v3707 = vunpack.c.l.b16 %v3606
    %v3708 = vunpack.c.l.b16 %v3607
    %v3709 = vunpack.c.l.b16 %v3608
    %v3710 = vunpack.c.l.b16 %v3609
    %v3711 = vunpack.c.l.b16 %v3610
    %v3712 = vunpack.c.l.b16 %v3611
    %v3713 = vunpack.c.l.b16 %v3612
    %v3714 = vunpack.c.l.b16 %v3613
    %v3715 = vunpack.c.l.b16 %v3614
    %v3716 = vunpack.c.l.b16 %v3615
    %v3717 = vunpack.c.l.b16 %v3616
    %v3718 = vpack.c.b16 %v3687, %v3686
    %v3719 = vpack.c.b16 %v3689, %v3688
    %v3720 = vpack.c.b16 %v3691, %v3690
    %v3721 = vpack.c.b16 %v3693, %v3692
    %v3722 = vpack.c.b16 %v3695, %v3694
    %v3723 = vpack.c.b16 %v3697, %v3696
    %v3724 = vpack.c.b16 %v3699, %v3698
    %v3725 = vpack.c.b16 %v3701, %v3700
    %v3726 = vpack.c.b16 %v3703, %v3702
    %v3727 = vpack.c.b16 %v3705, %v3704
    %v3728 = vpack.c.b16 %v3707, %v3706
    %v3729 = vpack.c.b16 %v3709, %v3708
    %v3730 = vpack.c.b16 %v3711, %v3710
    %v3731 = vpack.c.b16 %v3713, %v3712
    %v3732 = vpack.c.b16 %v3715, %v3714
    %v3733 = vpack.c.b16 %v3717, %v3716
    %3750 = vmatpush.bf16.msra.mxu0 %v3725
    %3751 = vmatpush.bf16.msra.mxu0 %v3724
    %3752 = vmatpush.bf16.msra.mxu0 %v3723
    %3753 = vmatpush.bf16.msra.mxu0 %v3722
    %3754 = vmatpush.bf16.msra.mxu0 %v3721
    %3755 = vmatpush.bf16.msra.mxu0 %v3720
    %3756 = vmatpush.bf16.msra.mxu0 %v3719
    %3757 = vmatpush.bf16.msra.mxu0 %v3718
    %3758 = vmatmul.bf16.gmra.mxu0 %v3638
    %v3759 = vpop.f32.mrf.mxu0
    %v3760 = vadd.f32 0.0, %v3759
    %v3761 = vpop.f32.mrf.mxu0
    %v3762 = vadd.f32 0.0, %v3761
    %3763 = vmatmul.bf16.gmra.mxu0 %v3640
    %v3764 = vpop.f32.mrf.mxu0
    %v3765 = vadd.f32 0.0, %v3764
    %v3766 = vpop.f32.mrf.mxu0
    %v3767 = vadd.f32 0.0, %v3766
    %3768 = vmatmul.bf16.gmra.mxu0 %v3642
    %v3769 = vpop.f32.mrf.mxu0
    %v3770 = vadd.f32 0.0, %v3769
    %v3771 = vpop.f32.mrf.mxu0
    %v3772 = vadd.f32 0.0, %v3771
    %3773 = vmatmul.bf16.gmra.mxu0 %v3644
    %v3774 = vpop.f32.mrf.mxu0
    %v3775 = vadd.f32 0.0, %v3774
    %v3776 = vpop.f32.mrf.mxu0
    %3777 = vdwg.mxu0
    %3778 = vmatpush.bf16.msra.mxu0 %v3733
    %3779 = vmatpush.bf16.msra.mxu0 %v3732
    %3780 = vmatpush.bf16.msra.mxu0 %v3731
    %3781 = vmatpush.bf16.msra.mxu0 %v3730
    %3782 = vmatpush.bf16.msra.mxu0 %v3729
    %3783 = vmatpush.bf16.msra.mxu0 %v3728
    %3784 = vmatpush.bf16.msra.mxu0 %v3727
    %3785 = vmatpush.bf16.msra.mxu0 %v3726
    %3786 = vmatmul.bf16.gmra.mxu0 %v3639
    %v3787 = vpop.f32.mrf.mxu0
    %v3788 = vadd.f32 %v3760, %v3787
    %v3789 = vpop.f32.mrf.mxu0
    %v3790 = vadd.f32 %v3762, %v3789
    %3791 = vmatmul.bf16.gmra.mxu0 %v3641
    %v3792 = vpop.f32.mrf.mxu0
    %v3793 = vadd.f32 %v3765, %v3792
    %v3794 = vpop.f32.mrf.mxu0
    %v3795 = vadd.f32 %v3767, %v3794
    %3796 = vmatmul.bf16.gmra.mxu0 %v3643
    %v3797 = vpop.f32.mrf.mxu0
    %v3798 = vadd.f32 %v3770, %v3797
    %v3799 = vpop.f32.mrf.mxu0
    %v3800 = vadd.f32 %v3772, %v3799
    %3801 = vmatmul.bf16.gmra.mxu0 %v3645
    %v3802 = vpop.f32.mrf.mxu0
    %v3803 = vadd.f32 %v3775, %v3802
    %v3804 = vpop.f32.mrf.mxu0
    %3805 = vdwg.mxu0
    %v3806 = vld [vmem:[#allocation11] sm:$0xf]
    %v3807 = vld [vmem:[#allocation11 + $0x4] sm:$0xf]
    %v3808 = vld [vmem:[#allocation11 + $0x8] sm:$0xf]
    %v3809 = vld [vmem:[#allocation11 + $0xc] sm:$0xf]
    %v3810 = vld [vmem:[#allocation11 + $0x10] sm:$0xf]
    %v3811 = vld [vmem:[#allocation11 + $0x14] sm:$0xf]
    %v3812 = vld [vmem:[#allocation11 + $0x18] sm:$0x1]
    %v3813 = vunpack.c.l.bf16 %v3806
    %v3814 = vunpack.c.l.bf16 %v3807
    %v3815 = vunpack.c.l.bf16 %v3808
    %v3816 = vunpack.c.l.bf16 %v3809
    %v3817 = vunpack.c.l.bf16 %v3810
    %v3818 = vunpack.c.l.bf16 %v3811
    %v3819 = vunpack.c.l.bf16 %v3812
    %s3820 = scalar_lea.vmem [#allocation8], 128
    %v3821 = vld [vmem:[%s3820] sm:$0xf]
    %v3822 = vld [vmem:[%s3820 + $0x4] sm:$0xf]
    %v3823 = vld [vmem:[%s3820 + $0x8] sm:$0xf]
    %v3824 = vld [vmem:[%s3820 + $0xc] sm:$0xf]
    %v3825 = vld [vmem:[%s3820 + $0x10] sm:$0xf]
    %v3826 = vld [vmem:[%s3820 + $0x14] sm:$0xf]
    %v3827 = vld [vmem:[%s3820 + $0x18] sm:$0xf]
    %v3828 = vld [vmem:[%s3820 + $0x1c] sm:$0xf]
    %v3829 = vld [vmem:[%s3820 + $0x20] sm:$0xf]
    %v3830 = vld [vmem:[%s3820 + $0x24] sm:$0xf]
    %v3831 = vld [vmem:[%s3820 + $0x28] sm:$0xf]
    %v3832 = vld [vmem:[%s3820 + $0x2c] sm:$0xf]
    %v3833 = vld [vmem:[%s3820 + $0x30] sm:$0xf]
    %v3834 = vld [vmem:[%s3820 + $0x34] sm:$0xf]
    %v3835 = vld [vmem:[%s3820 + $0x38] sm:$0xf]
    %v3836 = vld [vmem:[%s3820 + $0x3c] sm:$0xf]
    %v3837 = vld [vmem:[%s3820 + $0x40] sm:$0xf]
    %v3838 = vld [vmem:[%s3820 + $0x44] sm:$0xf]
    %v3839 = vld [vmem:[%s3820 + $0x48] sm:$0xf]
    %v3840 = vld [vmem:[%s3820 + $0x4c] sm:$0xf]
    %v3841 = vld [vmem:[%s3820 + $0x50] sm:$0xf]
    %v3842 = vld [vmem:[%s3820 + $0x54] sm:$0xf]
    %v3843 = vld [vmem:[%s3820 + $0x58] sm:$0xf]
    %v3844 = vld [vmem:[%s3820 + $0x5c] sm:$0xf]
    %v3845 = vld [vmem:[%s3820 + $0x60] sm:$0xf]
    %v3846 = vld [vmem:[%s3820 + $0x64] sm:$0xf]
    %v3847 = vld [vmem:[%s3820 + $0x68] sm:$0xf]
    %v3848 = vld [vmem:[%s3820 + $0x6c] sm:$0xf]
    %v3849 = vld [vmem:[%s3820 + $0x70] sm:$0xf]
    %v3850 = vld [vmem:[%s3820 + $0x74] sm:$0xf]
    %v3851 = vld [vmem:[%s3820 + $0x78] sm:$0xf]
    %v3852 = vld [vmem:[%s3820 + $0x7c] sm:$0xf]
    %v3885 = vunpack.c.l.b16 %v3821
    %v3886 = vunpack.c.l.b16 %v3822
    %v3887 = vunpack.c.l.b16 %v3823
    %v3888 = vunpack.c.l.b16 %v3824
    %v3889 = vunpack.c.l.b16 %v3825
    %v3890 = vunpack.c.l.b16 %v3826
    %v3891 = vunpack.c.l.b16 %v3827
    %v3892 = vunpack.c.l.b16 %v3828
    %v3893 = vunpack.c.l.b16 %v3829
    %v3894 = vunpack.c.l.b16 %v3830
    %v3895 = vunpack.c.l.b16 %v3831
    %v3896 = vunpack.c.l.b16 %v3832
    %v3897 = vunpack.c.l.b16 %v3833
    %v3898 = vunpack.c.l.b16 %v3834
    %v3899 = vunpack.c.l.b16 %v3835
    %v3900 = vunpack.c.l.b16 %v3836
    %v3901 = vunpack.c.l.b16 %v3837
    %v3902 = vunpack.c.l.b16 %v3838
    %v3903 = vunpack.c.l.b16 %v3839
    %v3904 = vunpack.c.l.b16 %v3840
    %v3905 = vunpack.c.l.b16 %v3841
    %v3906 = vunpack.c.l.b16 %v3842
    %v3907 = vunpack.c.l.b16 %v3843
    %v3908 = vunpack.c.l.b16 %v3844
    %v3909 = vunpack.c.l.b16 %v3845
    %v3910 = vunpack.c.l.b16 %v3846
    %v3911 = vunpack.c.l.b16 %v3847
    %v3912 = vunpack.c.l.b16 %v3848
    %v3913 = vunpack.c.l.b16 %v3849
    %v3914 = vunpack.c.l.b16 %v3850
    %v3915 = vunpack.c.l.b16 %v3851
    %v3916 = vunpack.c.l.b16 %v3852
    %v3917 = vpack.c.b16 %v3886, %v3885
    %v3918 = vpack.c.b16 %v3888, %v3887
    %v3919 = vpack.c.b16 %v3890, %v3889
    %v3920 = vpack.c.b16 %v3892, %v3891
    %v3921 = vpack.c.b16 %v3894, %v3893
    %v3922 = vpack.c.b16 %v3896, %v3895
    %v3923 = vpack.c.b16 %v3898, %v3897
    %v3924 = vpack.c.b16 %v3900, %v3899
    %v3925 = vpack.c.b16 %v3902, %v3901
    %v3926 = vpack.c.b16 %v3904, %v3903
    %v3927 = vpack.c.b16 %v3906, %v3905
    %v3928 = vpack.c.b16 %v3908, %v3907
    %v3929 = vpack.c.b16 %v3910, %v3909
    %v3930 = vpack.c.b16 %v3912, %v3911
    %v3931 = vpack.c.b16 %v3914, %v3913
    %v3932 = vpack.c.b16 %v3916, %v3915
    %3949 = vmatpush.bf16.msra.mxu0 %v3924
    %3950 = vmatpush.bf16.msra.mxu0 %v3923
    %3951 = vmatpush.bf16.msra.mxu0 %v3922
    %3952 = vmatpush.bf16.msra.mxu0 %v3921
    %3953 = vmatpush.bf16.msra.mxu0 %v3920
    %3954 = vmatpush.bf16.msra.mxu0 %v3919
    %3955 = vmatpush.bf16.msra.mxu0 %v3918
    %3956 = vmatpush.bf16.msra.mxu0 %v3917
    %3957 = vmatmul.bf16.gmra.mxu0 %v3638
    %v3958 = vpop.f32.mrf.mxu0
    %v3959 = vadd.f32 0.0, %v3958
    %v3960 = vpop.f32.mrf.mxu0
    %v3961 = vadd.f32 0.0, %v3960
    %3962 = vmatmul.bf16.gmra.mxu0 %v3640
    %v3963 = vpop.f32.mrf.mxu0
    %v3964 = vadd.f32 0.0, %v3963
    %v3965 = vpop.f32.mrf.mxu0
    %v3966 = vadd.f32 0.0, %v3965
    %3967 = vmatmul.bf16.gmra.mxu0 %v3642
    %v3968 = vpop.f32.mrf.mxu0
    %v3969 = vadd.f32 0.0, %v3968
    %v3970 = vpop.f32.mrf.mxu0
    %v3971 = vadd.f32 0.0, %v3970
    %3972 = vmatmul.bf16.gmra.mxu0 %v3644
    %v3973 = vpop.f32.mrf.mxu0
    %v3974 = vadd.f32 0.0, %v3973
    %v3975 = vpop.f32.mrf.mxu0
    %3976 = vdwg.mxu0
    %3977 = vmatpush.bf16.msra.mxu0 %v3932
    %3978 = vmatpush.bf16.msra.mxu0 %v3931
    %3979 = vmatpush.bf16.msra.mxu0 %v3930
    %3980 = vmatpush.bf16.msra.mxu0 %v3929
    %3981 = vmatpush.bf16.msra.mxu0 %v3928
    %3982 = vmatpush.bf16.msra.mxu0 %v3927
    %3983 = vmatpush.bf16.msra.mxu0 %v3926
    %3984 = vmatpush.bf16.msra.mxu0 %v3925
    %3985 = vmatmul.bf16.gmra.mxu0 %v3639
    %v3986 = vpop.f32.mrf.mxu0
    %v3987 = vadd.f32 %v3959, %v3986
    %v3988 = vpop.f32.mrf.mxu0
    %v3989 = vadd.f32 %v3961, %v3988
    %3990 = vmatmul.bf16.gmra.mxu0 %v3641
    %v3991 = vpop.f32.mrf.mxu0
    %v3992 = vadd.f32 %v3964, %v3991
    %v3993 = vpop.f32.mrf.mxu0
    %v3994 = vadd.f32 %v3966, %v3993
    %3995 = vmatmul.bf16.gmra.mxu0 %v3643
    %v3996 = vpop.f32.mrf.mxu0
    %v3997 = vadd.f32 %v3969, %v3996
    %v3998 = vpop.f32.mrf.mxu0
    %v3999 = vadd.f32 %v3971, %v3998
    %4000 = vmatmul.bf16.gmra.mxu0 %v3645
    %v4001 = vpop.f32.mrf.mxu0
    %v4002 = vadd.f32 %v3974, %v4001
    %v4003 = vpop.f32.mrf.mxu0
    %4004 = vdwg.mxu0
    %s4005 = scalar_lea.vmem [#allocation11], 28
    %v4006 = vld [vmem:[%s4005] sm:$0xf]
    %v4007 = vld [vmem:[%s4005 + $0x4] sm:$0xf]
    %v4008 = vld [vmem:[%s4005 + $0x8] sm:$0xf]
    %v4009 = vld [vmem:[%s4005 + $0xc] sm:$0xf]
    %v4010 = vld [vmem:[%s4005 + $0x10] sm:$0xf]
    %v4011 = vld [vmem:[%s4005 + $0x14] sm:$0xf]
    %v4012 = vld [vmem:[%s4005 + $0x18] sm:$0x1]
    %v4013 = vunpack.c.l.bf16 %v4006
    %v4014 = vunpack.c.l.bf16 %v4007
    %v4015 = vunpack.c.l.bf16 %v4008
    %v4016 = vunpack.c.l.bf16 %v4009
    %v4017 = vunpack.c.l.bf16 %v4010
    %v4018 = vunpack.c.l.bf16 %v4011
    %v4019 = vunpack.c.l.bf16 %v4012
    %vm4020 = vcmask 408576
    %v4022 = vsel %vm4020, %v4013, 0
    %v4025 = vsel %vm4020, %v4014, 0
    %v4028 = vsel %vm4020, %v4015, 0
    %v4031 = vsel %vm4020, %v4016, 0
    %v4034 = vsel %vm4020, %v4017, 0
    %v4037 = vsel %vm4020, %v4018, 0
    %v4040 = vsel %vm4020, %v4019, 0
    %vm4042 = vcmask 1041408
    %v4044 = vsel %vm4042, %v4002, 0
    %4046 = vmatpush.msra.mxu0 0.0
    %4047 = vmatpush.msra.mxu0 0.0
    %4048 = vmatpush.msra.mxu0 0.0
    %4049 = vmatpush.msra.mxu0 0.0
    %4050 = vmatpush.msra.mxu0 0.0
    %4051 = vmatpush.msra.mxu0 0.0
    %4052 = vmatpush.msra.mxu0 0.0
    %4053 = vmatpush.msra.mxu0 0.0
    %4054 = vmatpush.msra.mxu0 0.0
    %4055 = vmatpush.msra.mxu0 %v4044
    %4056 = vmatpush.msra.mxu0 %v3999
    %4057 = vmatpush.msra.mxu0 %v3997
    %4058 = vmatpush.msra.mxu0 %v3994
    %4059 = vmatpush.msra.mxu0 %v3992
    %4060 = vmatpush.msra.mxu0 %v3989
    %4061 = vmatpush.msra.mxu0 %v3987
    %4062 = vmatmul.f32.gmra.mxu0 %v4022
    %v4063 = vpop.f32.mrf.mxu0
    %v4064 = vadd.f32 0.0, %v4063
    %4065 = vmatmul.f32.gmra.mxu0 %v4025
    %v4066 = vpop.f32.mrf.mxu0
    %v4067 = vadd.f32 0.0, %v4066
    %4068 = vmatmul.f32.gmra.mxu0 %v4028
    %v4069 = vpop.f32.mrf.mxu0
    %v4070 = vadd.f32 0.0, %v4069
    %4071 = vmatmul.f32.gmra.mxu0 %v4031
    %v4072 = vpop.f32.mrf.mxu0
    %v4073 = vadd.f32 0.0, %v4072
    %4074 = vmatmul.f32.gmra.mxu0 %v4034
    %v4075 = vpop.f32.mrf.mxu0
    %v4076 = vadd.f32 0.0, %v4075
    %4077 = vmatmul.f32.gmra.mxu0 %v4037
    %v4078 = vpop.f32.mrf.mxu0
    %v4079 = vadd.f32 0.0, %v4078
    %4080 = vmatmul.f32.gmra.mxu0 %v4040
    %v4081 = vpop.f32.mrf.mxu0
    %v4082 = vadd.f32 0.0, %v4081
    %4083 = vdwg.mxu0
    %v4085 = vsel %vm4020, %v3813, 0
    %v4088 = vsel %vm4020, %v3814, 0
    %v4091 = vsel %vm4020, %v3815, 0
    %v4094 = vsel %vm4020, %v3816, 0
    %v4097 = vsel %vm4020, %v3817, 0
    %v4100 = vsel %vm4020, %v3818, 0
    %v4103 = vsel %vm4020, %v3819, 0
    %v4106 = vsel %vm4042, %v3803, 0
    %4108 = vmatpush.msra.mxu0 0.0
    %4109 = vmatpush.msra.mxu0 0.0
    %4110 = vmatpush.msra.mxu0 0.0
    %4111 = vmatpush.msra.mxu0 0.0
    %4112 = vmatpush.msra.mxu0 0.0
    %4113 = vmatpush.msra.mxu0 0.0
    %4114 = vmatpush.msra.mxu0 0.0
    %4115 = vmatpush.msra.mxu0 0.0
    %4116 = vmatpush.msra.mxu0 0.0
    %4117 = vmatpush.msra.mxu0 %v4106
    %4118 = vmatpush.msra.mxu0 %v3800
    %4119 = vmatpush.msra.mxu0 %v3798
    %4120 = vmatpush.msra.mxu0 %v3795
    %4121 = vmatpush.msra.mxu0 %v3793
    %4122 = vmatpush.msra.mxu0 %v3790
    %4123 = vmatpush.msra.mxu0 %v3788
    %4124 = vmatmul.f32.gmra.mxu0 %v4085
    %v4125 = vpop.f32.mrf.mxu0
    %v4126 = vadd.f32 %v4064, %v4125
    %4127 = vmatmul.f32.gmra.mxu0 %v4088
    %v4128 = vpop.f32.mrf.mxu0
    %v4129 = vadd.f32 %v4067, %v4128
    %4130 = vmatmul.f32.gmra.mxu0 %v4091
    %v4131 = vpop.f32.mrf.mxu0
    %v4132 = vadd.f32 %v4070, %v4131
    %4133 = vmatmul.f32.gmra.mxu0 %v4094
    %v4134 = vpop.f32.mrf.mxu0
    %v4135 = vadd.f32 %v4073, %v4134
    %4136 = vmatmul.f32.gmra.mxu0 %v4097
    %v4137 = vpop.f32.mrf.mxu0
    %v4138 = vadd.f32 %v4076, %v4137
    %4139 = vmatmul.f32.gmra.mxu0 %v4100
    %v4140 = vpop.f32.mrf.mxu0
    %v4141 = vadd.f32 %v4079, %v4140
    %4142 = vmatmul.f32.gmra.mxu0 %v4103
    %v4143 = vpop.f32.mrf.mxu0
    %v4144 = vadd.f32 %v4082, %v4143
    %4145 = vdwg.mxu0
    %s4146 = scalar_lea.vmem [#allocation8], 256
    %v4147 = vld [vmem:[%s4146] sm:$0xf]
    %v4148 = vld [vmem:[%s4146 + $0x4] sm:$0xf]
    %v4149 = vld [vmem:[%s4146 + $0x8] sm:$0xf]
    %v4150 = vld [vmem:[%s4146 + $0xc] sm:$0xf]
    %v4151 = vld [vmem:[%s4146 + $0x10] sm:$0xf]
    %v4152 = vld [vmem:[%s4146 + $0x14] sm:$0xf]
    %v4153 = vld [vmem:[%s4146 + $0x18] sm:$0xf]
    %v4154 = vld [vmem:[%s4146 + $0x1c] sm:$0xf]
    %v4155 = vld [vmem:[%s4146 + $0x20] sm:$0xf]
    %v4156 = vld [vmem:[%s4146 + $0x24] sm:$0xf]
    %v4157 = vld [vmem:[%s4146 + $0x28] sm:$0xf]
    %v4158 = vld [vmem:[%s4146 + $0x2c] sm:$0xf]
    %v4159 = vld [vmem:[%s4146 + $0x30] sm:$0xf]
    %v4160 = vld [vmem:[%s4146 + $0x34] sm:$0xf]
    %v4161 = vld [vmem:[%s4146 + $0x38] sm:$0xf]
    %v4162 = vld [vmem:[%s4146 + $0x3c] sm:$0xf]
    %v4163 = vld [vmem:[%s4146 + $0x40] sm:$0xf]
    %v4164 = vld [vmem:[%s4146 + $0x44] sm:$0xf]
    %v4165 = vld [vmem:[%s4146 + $0x48] sm:$0xf]
    %v4166 = vld [vmem:[%s4146 + $0x4c] sm:$0xf]
    %v4167 = vld [vmem:[%s4146 + $0x50] sm:$0xf]
    %v4168 = vld [vmem:[%s4146 + $0x54] sm:$0xf]
    %v4169 = vld [vmem:[%s4146 + $0x58] sm:$0xf]
    %v4170 = vld [vmem:[%s4146 + $0x5c] sm:$0xf]
    %v4171 = vld [vmem:[%s4146 + $0x60] sm:$0xf]
    %v4172 = vld [vmem:[%s4146 + $0x64] sm:$0xf]
    %v4173 = vld [vmem:[%s4146 + $0x68] sm:$0xf]
    %v4174 = vld [vmem:[%s4146 + $0x6c] sm:$0xf]
    %v4175 = vld [vmem:[%s4146 + $0x70] sm:$0xf]
    %v4176 = vld [vmem:[%s4146 + $0x74] sm:$0xf]
    %v4177 = vld [vmem:[%s4146 + $0x78] sm:$0xf]
    %v4178 = vld [vmem:[%s4146 + $0x7c] sm:$0xf]
    %v4211 = vunpack.c.l.b16 %v4147
    %v4212 = vunpack.c.l.b16 %v4148
    %v4213 = vunpack.c.l.b16 %v4149
    %v4214 = vunpack.c.l.b16 %v4150
    %v4215 = vunpack.c.l.b16 %v4151
    %v4216 = vunpack.c.l.b16 %v4152
    %v4217 = vunpack.c.l.b16 %v4153
    %v4218 = vunpack.c.l.b16 %v4154
    %v4219 = vunpack.c.l.b16 %v4155
    %v4220 = vunpack.c.l.b16 %v4156
    %v4221 = vunpack.c.l.b16 %v4157
    %v4222 = vunpack.c.l.b16 %v4158
    %v4223 = vunpack.c.l.b16 %v4159
    %v4224 = vunpack.c.l.b16 %v4160
    %v4225 = vunpack.c.l.b16 %v4161
    %v4226 = vunpack.c.l.b16 %v4162
    %v4227 = vunpack.c.l.b16 %v4163
    %v4228 = vunpack.c.l.b16 %v4164
    %v4229 = vunpack.c.l.b16 %v4165
    %v4230 = vunpack.c.l.b16 %v4166
    %v4231 = vunpack.c.l.b16 %v4167
    %v4232 = vunpack.c.l.b16 %v4168
    %v4233 = vunpack.c.l.b16 %v4169
    %v4234 = vunpack.c.l.b16 %v4170
    %v4235 = vunpack.c.l.b16 %v4171
    %v4236 = vunpack.c.l.b16 %v4172
    %v4237 = vunpack.c.l.b16 %v4173
    %v4238 = vunpack.c.l.b16 %v4174
    %v4239 = vunpack.c.l.b16 %v4175
    %v4240 = vunpack.c.l.b16 %v4176
    %v4241 = vunpack.c.l.b16 %v4177
    %v4242 = vunpack.c.l.b16 %v4178
    %v4243 = vpack.c.b16 %v4212, %v4211
    %v4244 = vpack.c.b16 %v4214, %v4213
    %v4245 = vpack.c.b16 %v4216, %v4215
    %v4246 = vpack.c.b16 %v4218, %v4217
    %v4247 = vpack.c.b16 %v4220, %v4219
    %v4248 = vpack.c.b16 %v4222, %v4221
    %v4249 = vpack.c.b16 %v4224, %v4223
    %v4250 = vpack.c.b16 %v4226, %v4225
    %v4251 = vpack.c.b16 %v4228, %v4227
    %v4252 = vpack.c.b16 %v4230, %v4229
    %v4253 = vpack.c.b16 %v4232, %v4231
    %v4254 = vpack.c.b16 %v4234, %v4233
    %v4255 = vpack.c.b16 %v4236, %v4235
    %v4256 = vpack.c.b16 %v4238, %v4237
    %v4257 = vpack.c.b16 %v4240, %v4239
    %v4258 = vpack.c.b16 %v4242, %v4241
    %4275 = vmatpush.bf16.msra.mxu0 %v4250
    %4276 = vmatpush.bf16.msra.mxu0 %v4249
    %4277 = vmatpush.bf16.msra.mxu0 %v4248
    %4278 = vmatpush.bf16.msra.mxu0 %v4247
    %4279 = vmatpush.bf16.msra.mxu0 %v4246
    %4280 = vmatpush.bf16.msra.mxu0 %v4245
    %4281 = vmatpush.bf16.msra.mxu0 %v4244
    %4282 = vmatpush.bf16.msra.mxu0 %v4243
    %4283 = vmatmul.bf16.gmra.mxu0 %v3638
    %v4284 = vpop.f32.mrf.mxu0
    %v4285 = vadd.f32 0.0, %v4284
    %v4286 = vpop.f32.mrf.mxu0
    %v4287 = vadd.f32 0.0, %v4286
    %4288 = vmatmul.bf16.gmra.mxu0 %v3640
    %v4289 = vpop.f32.mrf.mxu0
    %v4290 = vadd.f32 0.0, %v4289
    %v4291 = vpop.f32.mrf.mxu0
    %v4292 = vadd.f32 0.0, %v4291
    %4293 = vmatmul.bf16.gmra.mxu0 %v3642
    %v4294 = vpop.f32.mrf.mxu0
    %v4295 = vadd.f32 0.0, %v4294
    %v4296 = vpop.f32.mrf.mxu0
    %v4297 = vadd.f32 0.0, %v4296
    %4298 = vmatmul.bf16.gmra.mxu0 %v3644
    %v4299 = vpop.f32.mrf.mxu0
    %v4300 = vadd.f32 0.0, %v4299
    %v4301 = vpop.f32.mrf.mxu0
    %4302 = vdwg.mxu0
    %4303 = vmatpush.bf16.msra.mxu0 %v4258
    %4304 = vmatpush.bf16.msra.mxu0 %v4257
    %4305 = vmatpush.bf16.msra.mxu0 %v4256
    %4306 = vmatpush.bf16.msra.mxu0 %v4255
    %4307 = vmatpush.bf16.msra.mxu0 %v4254
    %4308 = vmatpush.bf16.msra.mxu0 %v4253
    %4309 = vmatpush.bf16.msra.mxu0 %v4252
    %4310 = vmatpush.bf16.msra.mxu0 %v4251
    %4311 = vmatmul.bf16.gmra.mxu0 %v3639
    %v4312 = vpop.f32.mrf.mxu0
    %v4313 = vadd.f32 %v4285, %v4312
    %v4314 = vpop.f32.mrf.mxu0
    %v4315 = vadd.f32 %v4287, %v4314
    %4316 = vmatmul.bf16.gmra.mxu0 %v3641
    %v4317 = vpop.f32.mrf.mxu0
    %v4318 = vadd.f32 %v4290, %v4317
    %v4319 = vpop.f32.mrf.mxu0
    %v4320 = vadd.f32 %v4292, %v4319
    %4321 = vmatmul.bf16.gmra.mxu0 %v3643
    %v4322 = vpop.f32.mrf.mxu0
    %v4323 = vadd.f32 %v4295, %v4322
    %v4324 = vpop.f32.mrf.mxu0
    %v4325 = vadd.f32 %v4297, %v4324
    %4326 = vmatmul.bf16.gmra.mxu0 %v3645
    %v4327 = vpop.f32.mrf.mxu0
    %v4328 = vadd.f32 %v4300, %v4327
    %v4329 = vpop.f32.mrf.mxu0
    %4330 = vdwg.mxu0
    %s4331 = scalar_lea.vmem [#allocation11], 56
    %v4332 = vld [vmem:[%s4331] sm:$0xf]
    %v4333 = vld [vmem:[%s4331 + $0x4] sm:$0xf]
    %v4334 = vld [vmem:[%s4331 + $0x8] sm:$0xf]
    %v4335 = vld [vmem:[%s4331 + $0xc] sm:$0xf]
    %v4336 = vld [vmem:[%s4331 + $0x10] sm:$0xf]
    %v4337 = vld [vmem:[%s4331 + $0x14] sm:$0xf]
    %v4338 = vld [vmem:[%s4331 + $0x18] sm:$0x1]
    %v4339 = vunpack.c.l.bf16 %v4332
    %v4340 = vunpack.c.l.bf16 %v4333
    %v4341 = vunpack.c.l.bf16 %v4334
    %v4342 = vunpack.c.l.bf16 %v4335
    %v4343 = vunpack.c.l.bf16 %v4336
    %v4344 = vunpack.c.l.bf16 %v4337
    %v4345 = vunpack.c.l.bf16 %v4338
    %v4347 = vsel %vm4020, %v4339, 0
    %v4350 = vsel %vm4020, %v4340, 0
    %v4353 = vsel %vm4020, %v4341, 0
    %v4356 = vsel %vm4020, %v4342, 0
    %v4359 = vsel %vm4020, %v4343, 0
    %v4362 = vsel %vm4020, %v4344, 0
    %v4365 = vsel %vm4020, %v4345, 0
    %v4368 = vsel %vm4042, %v4328, 0
    %4370 = vmatpush.msra.mxu0 0.0
    %4371 = vmatpush.msra.mxu0 0.0
    %4372 = vmatpush.msra.mxu0 0.0
    %4373 = vmatpush.msra.mxu0 0.0
    %4374 = vmatpush.msra.mxu0 0.0
    %4375 = vmatpush.msra.mxu0 0.0
    %4376 = vmatpush.msra.mxu0 0.0
    %4377 = vmatpush.msra.mxu0 0.0
    %4378 = vmatpush.msra.mxu0 0.0
    %4379 = vmatpush.msra.mxu0 %v4368
    %4380 = vmatpush.msra.mxu0 %v4325
    %4381 = vmatpush.msra.mxu0 %v4323
    %4382 = vmatpush.msra.mxu0 %v4320
    %4383 = vmatpush.msra.mxu0 %v4318
    %4384 = vmatpush.msra.mxu0 %v4315
    %4385 = vmatpush.msra.mxu0 %v4313
    %4386 = vmatmul.f32.gmra.mxu0 %v4347
    %v4387 = vpop.f32.mrf.mxu0
    %v4388 = vadd.f32 0.0, %v4387
    %4389 = vmatmul.f32.gmra.mxu0 %v4350
    %v4390 = vpop.f32.mrf.mxu0
    %v4391 = vadd.f32 0.0, %v4390
    %4392 = vmatmul.f32.gmra.mxu0 %v4353
    %v4393 = vpop.f32.mrf.mxu0
    %v4394 = vadd.f32 0.0, %v4393
    %4395 = vmatmul.f32.gmra.mxu0 %v4356
    %v4396 = vpop.f32.mrf.mxu0
    %v4397 = vadd.f32 0.0, %v4396
    %4398 = vmatmul.f32.gmra.mxu0 %v4359
    %v4399 = vpop.f32.mrf.mxu0
    %v4400 = vadd.f32 0.0, %v4399
    %4401 = vmatmul.f32.gmra.mxu0 %v4362
    %v4402 = vpop.f32.mrf.mxu0
    %v4403 = vadd.f32 0.0, %v4402
    %4404 = vmatmul.f32.gmra.mxu0 %v4365
    %v4405 = vpop.f32.mrf.mxu0
    %v4406 = vadd.f32 0.0, %v4405
    %4407 = vdwg.mxu0
    %v4408 = vadd.f32 %v4126, %v4388
    %v4409 = vadd.f32 %v4129, %v4391
    %v4410 = vadd.f32 %v4132, %v4394
    %v4411 = vadd.f32 %v4135, %v4397
    %v4412 = vadd.f32 %v4138, %v4400
    %v4413 = vadd.f32 %v4141, %v4403
    %v4414 = vadd.f32 %v4144, %v4406
    %s4415 = scalar_lea.vmem [#allocation8], 384
    %v4416 = vld [vmem:[%s4415] sm:$0xf]
    %v4417 = vld [vmem:[%s4415 + $0x4] sm:$0xf]
    %v4418 = vld [vmem:[%s4415 + $0x8] sm:$0xf]
    %v4419 = vld [vmem:[%s4415 + $0xc] sm:$0xf]
    %v4420 = vld [vmem:[%s4415 + $0x10] sm:$0xf]
    %v4421 = vld [vmem:[%s4415 + $0x14] sm:$0xf]
    %v4422 = vld [vmem:[%s4415 + $0x18] sm:$0xf]
    %v4423 = vld [vmem:[%s4415 + $0x1c] sm:$0xf]
    %v4424 = vld [vmem:[%s4415 + $0x20] sm:$0xf]
    %v4425 = vld [vmem:[%s4415 + $0x24] sm:$0xf]
    %v4426 = vld [vmem:[%s4415 + $0x28] sm:$0xf]
    %v4427 = vld [vmem:[%s4415 + $0x2c] sm:$0xf]
    %v4428 = vld [vmem:[%s4415 + $0x30] sm:$0xf]
    %v4429 = vld [vmem:[%s4415 + $0x34] sm:$0xf]
    %v4430 = vld [vmem:[%s4415 + $0x38] sm:$0xf]
    %v4431 = vld [vmem:[%s4415 + $0x3c] sm:$0xf]
    %v4432 = vld [vmem:[%s4415 + $0x40] sm:$0xf]
    %v4433 = vld [vmem:[%s4415 + $0x44] sm:$0xf]
    %v4434 = vld [vmem:[%s4415 + $0x48] sm:$0xf]
    %v4435 = vld [vmem:[%s4415 + $0x4c] sm:$0xf]
    %v4436 = vld [vmem:[%s4415 + $0x50] sm:$0xf]
    %v4437 = vld [vmem:[%s4415 + $0x54] sm:$0xf]
    %v4438 = vld [vmem:[%s4415 + $0x58] sm:$0xf]
    %v4439 = vld [vmem:[%s4415 + $0x5c] sm:$0xf]
    %v4440 = vld [vmem:[%s4415 + $0x60] sm:$0xf]
    %v4441 = vld [vmem:[%s4415 + $0x64] sm:$0xf]
    %v4442 = vld [vmem:[%s4415 + $0x68] sm:$0xf]
    %v4443 = vld [vmem:[%s4415 + $0x6c] sm:$0xf]
    %v4444 = vld [vmem:[%s4415 + $0x70] sm:$0xf]
    %v4445 = vld [vmem:[%s4415 + $0x74] sm:$0xf]
    %v4446 = vld [vmem:[%s4415 + $0x78] sm:$0xf]
    %v4447 = vld [vmem:[%s4415 + $0x7c] sm:$0xf]
    %v4480 = vunpack.c.l.b16 %v4416
    %v4481 = vunpack.c.l.b16 %v4417
    %v4482 = vunpack.c.l.b16 %v4418
    %v4483 = vunpack.c.l.b16 %v4419
    %v4484 = vunpack.c.l.b16 %v4420
    %v4485 = vunpack.c.l.b16 %v4421
    %v4486 = vunpack.c.l.b16 %v4422
    %v4487 = vunpack.c.l.b16 %v4423
    %v4488 = vunpack.c.l.b16 %v4424
    %v4489 = vunpack.c.l.b16 %v4425
    %v4490 = vunpack.c.l.b16 %v4426
    %v4491 = vunpack.c.l.b16 %v4427
    %v4492 = vunpack.c.l.b16 %v4428
    %v4493 = vunpack.c.l.b16 %v4429
    %v4494 = vunpack.c.l.b16 %v4430
    %v4495 = vunpack.c.l.b16 %v4431
    %v4496 = vunpack.c.l.b16 %v4432
    %v4497 = vunpack.c.l.b16 %v4433
    %v4498 = vunpack.c.l.b16 %v4434
    %v4499 = vunpack.c.l.b16 %v4435
    %v4500 = vunpack.c.l.b16 %v4436
    %v4501 = vunpack.c.l.b16 %v4437
    %v4502 = vunpack.c.l.b16 %v4438
    %v4503 = vunpack.c.l.b16 %v4439
    %v4504 = vunpack.c.l.b16 %v4440
    %v4505 = vunpack.c.l.b16 %v4441
    %v4506 = vunpack.c.l.b16 %v4442
    %v4507 = vunpack.c.l.b16 %v4443
    %v4508 = vunpack.c.l.b16 %v4444
    %v4509 = vunpack.c.l.b16 %v4445
    %v4510 = vunpack.c.l.b16 %v4446
    %v4511 = vunpack.c.l.b16 %v4447
    %v4512 = vpack.c.b16 %v4481, %v4480
    %v4513 = vpack.c.b16 %v4483, %v4482
    %v4514 = vpack.c.b16 %v4485, %v4484
    %v4515 = vpack.c.b16 %v4487, %v4486
    %v4516 = vpack.c.b16 %v4489, %v4488
    %v4517 = vpack.c.b16 %v4491, %v4490
    %v4518 = vpack.c.b16 %v4493, %v4492
    %v4519 = vpack.c.b16 %v4495, %v4494
    %v4520 = vpack.c.b16 %v4497, %v4496
    %v4521 = vpack.c.b16 %v4499, %v4498
    %v4522 = vpack.c.b16 %v4501, %v4500
    %v4523 = vpack.c.b16 %v4503, %v4502
    %v4524 = vpack.c.b16 %v4505, %v4504
    %v4525 = vpack.c.b16 %v4507, %v4506
    %v4526 = vpack.c.b16 %v4509, %v4508
    %v4527 = vpack.c.b16 %v4511, %v4510
    %4544 = vmatpush.bf16.msra.mxu0 %v4519
    %4545 = vmatpush.bf16.msra.mxu0 %v4518
    %4546 = vmatpush.bf16.msra.mxu0 %v4517
    %4547 = vmatpush.bf16.msra.mxu0 %v4516
    %4548 = vmatpush.bf16.msra.mxu0 %v4515
    %4549 = vmatpush.bf16.msra.mxu0 %v4514
    %4550 = vmatpush.bf16.msra.mxu0 %v4513
    %4551 = vmatpush.bf16.msra.mxu0 %v4512
    %4552 = vmatmul.bf16.gmra.mxu0 %v3638
    %v4553 = vpop.f32.mrf.mxu0
    %v4554 = vadd.f32 0.0, %v4553
    %v4555 = vpop.f32.mrf.mxu0
    %v4556 = vadd.f32 0.0, %v4555
    %4557 = vmatmul.bf16.gmra.mxu0 %v3640
    %v4558 = vpop.f32.mrf.mxu0
    %v4559 = vadd.f32 0.0, %v4558
    %v4560 = vpop.f32.mrf.mxu0
    %v4561 = vadd.f32 0.0, %v4560
    %4562 = vmatmul.bf16.gmra.mxu0 %v3642
    %v4563 = vpop.f32.mrf.mxu0
    %v4564 = vadd.f32 0.0, %v4563
    %v4565 = vpop.f32.mrf.mxu0
    %v4566 = vadd.f32 0.0, %v4565
    %4567 = vmatmul.bf16.gmra.mxu0 %v3644
    %v4568 = vpop.f32.mrf.mxu0
    %v4569 = vadd.f32 0.0, %v4568
    %v4570 = vpop.f32.mrf.mxu0
    %4571 = vdwg.mxu0
    %4572 = vmatpush.bf16.msra.mxu0 %v4527
    %4573 = vmatpush.bf16.msra.mxu0 %v4526
    %4574 = vmatpush.bf16.msra.mxu0 %v4525
    %4575 = vmatpush.bf16.msra.mxu0 %v4524
    %4576 = vmatpush.bf16.msra.mxu0 %v4523
    %4577 = vmatpush.bf16.msra.mxu0 %v4522
    %4578 = vmatpush.bf16.msra.mxu0 %v4521
    %4579 = vmatpush.bf16.msra.mxu0 %v4520
    %4580 = vmatmul.bf16.gmra.mxu0 %v3639
    %v4581 = vpop.f32.mrf.mxu0
    %v4582 = vadd.f32 %v4554, %v4581
    %v4583 = vpop.f32.mrf.mxu0
    %v4584 = vadd.f32 %v4556, %v4583
    %4585 = vmatmul.bf16.gmra.mxu0 %v3641
    %v4586 = vpop.f32.mrf.mxu0
    %v4587 = vadd.f32 %v4559, %v4586
    %v4588 = vpop.f32.mrf.mxu0
    %v4589 = vadd.f32 %v4561, %v4588
    %4590 = vmatmul.bf16.gmra.mxu0 %v3643
    %v4591 = vpop.f32.mrf.mxu0
    %v4592 = vadd.f32 %v4564, %v4591
    %v4593 = vpop.f32.mrf.mxu0
    %v4594 = vadd.f32 %v4566, %v4593
    %4595 = vmatmul.bf16.gmra.mxu0 %v3645
    %v4596 = vpop.f32.mrf.mxu0
    %v4597 = vadd.f32 %v4569, %v4596
    %v4598 = vpop.f32.mrf.mxu0
    %4599 = vdwg.mxu0
    %s4600 = scalar_lea.vmem [#allocation11], 84
    %v4601 = vld [vmem:[%s4600] sm:$0xf]
    %v4602 = vld [vmem:[%s4600 + $0x4] sm:$0xf]
    %v4603 = vld [vmem:[%s4600 + $0x8] sm:$0xf]
    %v4604 = vld [vmem:[%s4600 + $0xc] sm:$0xf]
    %v4605 = vld [vmem:[%s4600 + $0x10] sm:$0xf]
    %v4606 = vld [vmem:[%s4600 + $0x14] sm:$0xf]
    %v4607 = vld [vmem:[%s4600 + $0x18] sm:$0x1]
    %v4608 = vunpack.c.l.bf16 %v4601
    %v4609 = vunpack.c.l.bf16 %v4602
    %v4610 = vunpack.c.l.bf16 %v4603
    %v4611 = vunpack.c.l.bf16 %v4604
    %v4612 = vunpack.c.l.bf16 %v4605
    %v4613 = vunpack.c.l.bf16 %v4606
    %v4614 = vunpack.c.l.bf16 %v4607
    %v4616 = vsel %vm4020, %v4608, 0
    %v4619 = vsel %vm4020, %v4609, 0
    %v4622 = vsel %vm4020, %v4610, 0
    %v4625 = vsel %vm4020, %v4611, 0
    %v4628 = vsel %vm4020, %v4612, 0
    %v4631 = vsel %vm4020, %v4613, 0
    %v4634 = vsel %vm4020, %v4614, 0
    %v4637 = vsel %vm4042, %v4597, 0
    %4639 = vmatpush.msra.mxu0 0.0
    %4640 = vmatpush.msra.mxu0 0.0
    %4641 = vmatpush.msra.mxu0 0.0
    %4642 = vmatpush.msra.mxu0 0.0
    %4643 = vmatpush.msra.mxu0 0.0
    %4644 = vmatpush.msra.mxu0 0.0
    %4645 = vmatpush.msra.mxu0 0.0
    %4646 = vmatpush.msra.mxu0 0.0
    %4647 = vmatpush.msra.mxu0 0.0
    %4648 = vmatpush.msra.mxu0 %v4637
    %4649 = vmatpush.msra.mxu0 %v4594
    %4650 = vmatpush.msra.mxu0 %v4592
    %4651 = vmatpush.msra.mxu0 %v4589
    %4652 = vmatpush.msra.mxu0 %v4587
    %4653 = vmatpush.msra.mxu0 %v4584
    %4654 = vmatpush.msra.mxu0 %v4582
    %4655 = vmatmul.f32.gmra.mxu0 %v4616
    %v4656 = vpop.f32.mrf.mxu0
    %v4657 = vadd.f32 0.0, %v4656
    %4658 = vmatmul.f32.gmra.mxu0 %v4619
    %v4659 = vpop.f32.mrf.mxu0
    %v4660 = vadd.f32 0.0, %v4659
    %4661 = vmatmul.f32.gmra.mxu0 %v4622
    %v4662 = vpop.f32.mrf.mxu0
    %v4663 = vadd.f32 0.0, %v4662
    %4664 = vmatmul.f32.gmra.mxu0 %v4625
    %v4665 = vpop.f32.mrf.mxu0
    %v4666 = vadd.f32 0.0, %v4665
    %4667 = vmatmul.f32.gmra.mxu0 %v4628
    %v4668 = vpop.f32.mrf.mxu0
    %v4669 = vadd.f32 0.0, %v4668
    %4670 = vmatmul.f32.gmra.mxu0 %v4631
    %v4671 = vpop.f32.mrf.mxu0
    %v4672 = vadd.f32 0.0, %v4671
    %4673 = vmatmul.f32.gmra.mxu0 %v4634
    %v4674 = vpop.f32.mrf.mxu0
    %v4675 = vadd.f32 0.0, %v4674
    %4676 = vdwg.mxu0
    %v4677 = vadd.f32 %v4408, %v4657
    %v4678 = vadd.f32 %v4409, %v4660
    %v4679 = vadd.f32 %v4410, %v4663
    %v4680 = vadd.f32 %v4411, %v4666
    %v4681 = vadd.f32 %v4412, %v4669
    %v4682 = vadd.f32 %v4413, %v4672
    %v4683 = vadd.f32 %v4414, %v4675
    %s4684 = scalar_lea.vmem [#allocation8], 512
    %v4685 = vld [vmem:[%s4684] sm:$0xf]
    %v4686 = vld [vmem:[%s4684 + $0x4] sm:$0xf]
    %v4687 = vld [vmem:[%s4684 + $0x8] sm:$0xf]
    %v4688 = vld [vmem:[%s4684 + $0xc] sm:$0xf]
    %v4689 = vld [vmem:[%s4684 + $0x10] sm:$0xf]
    %v4690 = vld [vmem:[%s4684 + $0x14] sm:$0xf]
    %v4691 = vld [vmem:[%s4684 + $0x18] sm:$0xf]
    %v4692 = vld [vmem:[%s4684 + $0x1c] sm:$0xf]
    %v4693 = vld [vmem:[%s4684 + $0x20] sm:$0xf]
    %v4694 = vld [vmem:[%s4684 + $0x24] sm:$0xf]
    %v4695 = vld [vmem:[%s4684 + $0x28] sm:$0xf]
    %v4696 = vld [vmem:[%s4684 + $0x2c] sm:$0xf]
    %v4697 = vld [vmem:[%s4684 + $0x30] sm:$0xf]
    %v4698 = vld [vmem:[%s4684 + $0x34] sm:$0xf]
    %v4699 = vld [vmem:[%s4684 + $0x38] sm:$0xf]
    %v4700 = vld [vmem:[%s4684 + $0x3c] sm:$0xf]
    %v4701 = vld [vmem:[%s4684 + $0x40] sm:$0xf]
    %v4702 = vld [vmem:[%s4684 + $0x44] sm:$0xf]
    %v4703 = vld [vmem:[%s4684 + $0x48] sm:$0xf]
    %v4704 = vld [vmem:[%s4684 + $0x4c] sm:$0xf]
    %v4705 = vld [vmem:[%s4684 + $0x50] sm:$0xf]
    %v4706 = vld [vmem:[%s4684 + $0x54] sm:$0xf]
    %v4707 = vld [vmem:[%s4684 + $0x58] sm:$0xf]
    %v4708 = vld [vmem:[%s4684 + $0x5c] sm:$0xf]
    %v4709 = vld [vmem:[%s4684 + $0x60] sm:$0xf]
    %v4710 = vld [vmem:[%s4684 + $0x64] sm:$0xf]
    %v4711 = vld [vmem:[%s4684 + $0x68] sm:$0xf]
    %v4712 = vld [vmem:[%s4684 + $0x6c] sm:$0xf]
    %v4713 = vld [vmem:[%s4684 + $0x70] sm:$0xf]
    %v4714 = vld [vmem:[%s4684 + $0x74] sm:$0xf]
    %v4715 = vld [vmem:[%s4684 + $0x78] sm:$0xf]
    %v4716 = vld [vmem:[%s4684 + $0x7c] sm:$0xf]
    %v4749 = vunpack.c.l.b16 %v4685
    %v4750 = vunpack.c.l.b16 %v4686
    %v4751 = vunpack.c.l.b16 %v4687
    %v4752 = vunpack.c.l.b16 %v4688
    %v4753 = vunpack.c.l.b16 %v4689
    %v4754 = vunpack.c.l.b16 %v4690
    %v4755 = vunpack.c.l.b16 %v4691
    %v4756 = vunpack.c.l.b16 %v4692
    %v4757 = vunpack.c.l.b16 %v4693
    %v4758 = vunpack.c.l.b16 %v4694
    %v4759 = vunpack.c.l.b16 %v4695
    %v4760 = vunpack.c.l.b16 %v4696
    %v4761 = vunpack.c.l.b16 %v4697
    %v4762 = vunpack.c.l.b16 %v4698
    %v4763 = vunpack.c.l.b16 %v4699
    %v4764 = vunpack.c.l.b16 %v4700
    %v4765 = vunpack.c.l.b16 %v4701
    %v4766 = vunpack.c.l.b16 %v4702
    %v4767 = vunpack.c.l.b16 %v4703
    %v4768 = vunpack.c.l.b16 %v4704
    %v4769 = vunpack.c.l.b16 %v4705
    %v4770 = vunpack.c.l.b16 %v4706
    %v4771 = vunpack.c.l.b16 %v4707
    %v4772 = vunpack.c.l.b16 %v4708
    %v4773 = vunpack.c.l.b16 %v4709
    %v4774 = vunpack.c.l.b16 %v4710
    %v4775 = vunpack.c.l.b16 %v4711
    %v4776 = vunpack.c.l.b16 %v4712
    %v4777 = vunpack.c.l.b16 %v4713
    %v4778 = vunpack.c.l.b16 %v4714
    %v4779 = vunpack.c.l.b16 %v4715
    %v4780 = vunpack.c.l.b16 %v4716
    %v4781 = vpack.c.b16 %v4750, %v4749
    %v4782 = vpack.c.b16 %v4752, %v4751
    %v4783 = vpack.c.b16 %v4754, %v4753
    %v4784 = vpack.c.b16 %v4756, %v4755
    %v4785 = vpack.c.b16 %v4758, %v4757
    %v4786 = vpack.c.b16 %v4760, %v4759
    %v4787 = vpack.c.b16 %v4762, %v4761
    %v4788 = vpack.c.b16 %v4764, %v4763
    %v4789 = vpack.c.b16 %v4766, %v4765
    %v4790 = vpack.c.b16 %v4768, %v4767
    %v4791 = vpack.c.b16 %v4770, %v4769
    %v4792 = vpack.c.b16 %v4772, %v4771
    %v4793 = vpack.c.b16 %v4774, %v4773
    %v4794 = vpack.c.b16 %v4776, %v4775
    %v4795 = vpack.c.b16 %v4778, %v4777
    %v4796 = vpack.c.b16 %v4780, %v4779
    %4813 = vmatpush.bf16.msra.mxu0 %v4788
    %4814 = vmatpush.bf16.msra.mxu0 %v4787
    %4815 = vmatpush.bf16.msra.mxu0 %v4786
    %4816 = vmatpush.bf16.msra.mxu0 %v4785
    %4817 = vmatpush.bf16.msra.mxu0 %v4784
    %4818 = vmatpush.bf16.msra.mxu0 %v4783
    %4819 = vmatpush.bf16.msra.mxu0 %v4782
    %4820 = vmatpush.bf16.msra.mxu0 %v4781
    %4821 = vmatmul.bf16.gmra.mxu0 %v3638
    %v4822 = vpop.f32.mrf.mxu0
    %v4823 = vadd.f32 0.0, %v4822
    %v4824 = vpop.f32.mrf.mxu0
    %v4825 = vadd.f32 0.0, %v4824
    %4826 = vmatmul.bf16.gmra.mxu0 %v3640
    %v4827 = vpop.f32.mrf.mxu0
    %v4828 = vadd.f32 0.0, %v4827
    %v4829 = vpop.f32.mrf.mxu0
    %v4830 = vadd.f32 0.0, %v4829
    %4831 = vmatmul.bf16.gmra.mxu0 %v3642
    %v4832 = vpop.f32.mrf.mxu0
    %v4833 = vadd.f32 0.0, %v4832
    %v4834 = vpop.f32.mrf.mxu0
    %v4835 = vadd.f32 0.0, %v4834
    %4836 = vmatmul.bf16.gmra.mxu0 %v3644
    %v4837 = vpop.f32.mrf.mxu0
    %v4838 = vadd.f32 0.0, %v4837
    %v4839 = vpop.f32.mrf.mxu0
    %4840 = vdwg.mxu0
    %4841 = vmatpush.bf16.msra.mxu0 %v4796
    %4842 = vmatpush.bf16.msra.mxu0 %v4795
    %4843 = vmatpush.bf16.msra.mxu0 %v4794
    %4844 = vmatpush.bf16.msra.mxu0 %v4793
    %4845 = vmatpush.bf16.msra.mxu0 %v4792
    %4846 = vmatpush.bf16.msra.mxu0 %v4791
    %4847 = vmatpush.bf16.msra.mxu0 %v4790
    %4848 = vmatpush.bf16.msra.mxu0 %v4789
    %4849 = vmatmul.bf16.gmra.mxu0 %v3639
    %v4850 = vpop.f32.mrf.mxu0
    %v4851 = vadd.f32 %v4823, %v4850
    %v4852 = vpop.f32.mrf.mxu0
    %v4853 = vadd.f32 %v4825, %v4852
    %4854 = vmatmul.bf16.gmra.mxu0 %v3641
    %v4855 = vpop.f32.mrf.mxu0
    %v4856 = vadd.f32 %v4828, %v4855
    %v4857 = vpop.f32.mrf.mxu0
    %v4858 = vadd.f32 %v4830, %v4857
    %4859 = vmatmul.bf16.gmra.mxu0 %v3643
    %v4860 = vpop.f32.mrf.mxu0
    %v4861 = vadd.f32 %v4833, %v4860
    %v4862 = vpop.f32.mrf.mxu0
    %v4863 = vadd.f32 %v4835, %v4862
    %4864 = vmatmul.bf16.gmra.mxu0 %v3645
    %v4865 = vpop.f32.mrf.mxu0
    %v4866 = vadd.f32 %v4838, %v4865
    %v4867 = vpop.f32.mrf.mxu0
    %4868 = vdwg.mxu0
    %s4869 = scalar_lea.vmem [#allocation11], 112
    %v4870 = vld [vmem:[%s4869] sm:$0xf]
    %v4871 = vld [vmem:[%s4869 + $0x4] sm:$0xf]
    %v4872 = vld [vmem:[%s4869 + $0x8] sm:$0xf]
    %v4873 = vld [vmem:[%s4869 + $0xc] sm:$0xf]
    %v4874 = vld [vmem:[%s4869 + $0x10] sm:$0xf]
    %v4875 = vld [vmem:[%s4869 + $0x14] sm:$0xf]
    %v4876 = vld [vmem:[%s4869 + $0x18] sm:$0x1]
    %v4877 = vunpack.c.l.bf16 %v4870
    %v4878 = vunpack.c.l.bf16 %v4871
    %v4879 = vunpack.c.l.bf16 %v4872
    %v4880 = vunpack.c.l.bf16 %v4873
    %v4881 = vunpack.c.l.bf16 %v4874
    %v4882 = vunpack.c.l.bf16 %v4875
    %v4883 = vunpack.c.l.bf16 %v4876
    %v4885 = vsel %vm4020, %v4877, 0
    %v4888 = vsel %vm4020, %v4878, 0
    %v4891 = vsel %vm4020, %v4879, 0
    %v4894 = vsel %vm4020, %v4880, 0
    %v4897 = vsel %vm4020, %v4881, 0
    %v4900 = vsel %vm4020, %v4882, 0
    %v4903 = vsel %vm4020, %v4883, 0
    %v4906 = vsel %vm4042, %v4866, 0
    %4908 = vmatpush.msra.mxu0 0.0
    %4909 = vmatpush.msra.mxu0 0.0
    %4910 = vmatpush.msra.mxu0 0.0
    %4911 = vmatpush.msra.mxu0 0.0
    %4912 = vmatpush.msra.mxu0 0.0
    %4913 = vmatpush.msra.mxu0 0.0
    %4914 = vmatpush.msra.mxu0 0.0
    %4915 = vmatpush.msra.mxu0 0.0
    %4916 = vmatpush.msra.mxu0 0.0
    %4917 = vmatpush.msra.mxu0 %v4906
    %4918 = vmatpush.msra.mxu0 %v4863
    %4919 = vmatpush.msra.mxu0 %v4861
    %4920 = vmatpush.msra.mxu0 %v4858
    %4921 = vmatpush.msra.mxu0 %v4856
    %4922 = vmatpush.msra.mxu0 %v4853
    %4923 = vmatpush.msra.mxu0 %v4851
    %4924 = vmatmul.f32.gmra.mxu0 %v4885
    %v4925 = vpop.f32.mrf.mxu0
    %v4926 = vadd.f32 0.0, %v4925
    %4927 = vmatmul.f32.gmra.mxu0 %v4888
    %v4928 = vpop.f32.mrf.mxu0
    %v4929 = vadd.f32 0.0, %v4928
    %4930 = vmatmul.f32.gmra.mxu0 %v4891
    %v4931 = vpop.f32.mrf.mxu0
    %v4932 = vadd.f32 0.0, %v4931
    %4933 = vmatmul.f32.gmra.mxu0 %v4894
    %v4934 = vpop.f32.mrf.mxu0
    %v4935 = vadd.f32 0.0, %v4934
    %4936 = vmatmul.f32.gmra.mxu0 %v4897
    %v4937 = vpop.f32.mrf.mxu0
    %v4938 = vadd.f32 0.0, %v4937
    %4939 = vmatmul.f32.gmra.mxu0 %v4900
    %v4940 = vpop.f32.mrf.mxu0
    %v4941 = vadd.f32 0.0, %v4940
    %4942 = vmatmul.f32.gmra.mxu0 %v4903
    %v4943 = vpop.f32.mrf.mxu0
    %v4944 = vadd.f32 0.0, %v4943
    %4945 = vdwg.mxu0
    %v4946 = vadd.f32 %v4677, %v4926
    %v4947 = vadd.f32 %v4678, %v4929
    %v4948 = vadd.f32 %v4679, %v4932
    %v4949 = vadd.f32 %v4680, %v4935
    %v4950 = vadd.f32 %v4681, %v4938
    %v4951 = vadd.f32 %v4682, %v4941
    %v4952 = vadd.f32 %v4683, %v4944
    %s4953 = scalar_lea.vmem [#allocation8], 640
    %v4954 = vld [vmem:[%s4953] sm:$0xf]
    %v4955 = vld [vmem:[%s4953 + $0x4] sm:$0xf]
    %v4956 = vld [vmem:[%s4953 + $0x8] sm:$0xf]
    %v4957 = vld [vmem:[%s4953 + $0xc] sm:$0xf]
    %v4958 = vld [vmem:[%s4953 + $0x10] sm:$0xf]
    %v4959 = vld [vmem:[%s4953 + $0x14] sm:$0xf]
    %v4960 = vld [vmem:[%s4953 + $0x18] sm:$0xf]
    %v4961 = vld [vmem:[%s4953 + $0x1c] sm:$0xf]
    %v4962 = vld [vmem:[%s4953 + $0x20] sm:$0xf]
    %v4963 = vld [vmem:[%s4953 + $0x24] sm:$0xf]
    %v4964 = vld [vmem:[%s4953 + $0x28] sm:$0xf]
    %v4965 = vld [vmem:[%s4953 + $0x2c] sm:$0xf]
    %v4966 = vld [vmem:[%s4953 + $0x30] sm:$0xf]
    %v4967 = vld [vmem:[%s4953 + $0x34] sm:$0xf]
    %v4968 = vld [vmem:[%s4953 + $0x38] sm:$0xf]
    %v4969 = vld [vmem:[%s4953 + $0x3c] sm:$0xf]
    %v4970 = vld [vmem:[%s4953 + $0x40] sm:$0xf]
    %v4971 = vld [vmem:[%s4953 + $0x44] sm:$0xf]
    %v4972 = vld [vmem:[%s4953 + $0x48] sm:$0xf]
    %v4973 = vld [vmem:[%s4953 + $0x4c] sm:$0xf]
    %v4974 = vld [vmem:[%s4953 + $0x50] sm:$0xf]
    %v4975 = vld [vmem:[%s4953 + $0x54] sm:$0xf]
    %v4976 = vld [vmem:[%s4953 + $0x58] sm:$0xf]
    %v4977 = vld [vmem:[%s4953 + $0x5c] sm:$0xf]
    %v4978 = vld [vmem:[%s4953 + $0x60] sm:$0xf]
    %v4979 = vld [vmem:[%s4953 + $0x64] sm:$0xf]
    %v4980 = vld [vmem:[%s4953 + $0x68] sm:$0xf]
    %v4981 = vld [vmem:[%s4953 + $0x6c] sm:$0xf]
    %v4982 = vld [vmem:[%s4953 + $0x70] sm:$0xf]
    %v4983 = vld [vmem:[%s4953 + $0x74] sm:$0xf]
    %v4984 = vld [vmem:[%s4953 + $0x78] sm:$0xf]
    %v4985 = vld [vmem:[%s4953 + $0x7c] sm:$0xf]
    %v5018 = vunpack.c.l.b16 %v4954
    %v5019 = vunpack.c.l.b16 %v4955
    %v5020 = vunpack.c.l.b16 %v4956
    %v5021 = vunpack.c.l.b16 %v4957
    %v5022 = vunpack.c.l.b16 %v4958
    %v5023 = vunpack.c.l.b16 %v4959
    %v5024 = vunpack.c.l.b16 %v4960
    %v5025 = vunpack.c.l.b16 %v4961
    %v5026 = vunpack.c.l.b16 %v4962
    %v5027 = vunpack.c.l.b16 %v4963
    %v5028 = vunpack.c.l.b16 %v4964
    %v5029 = vunpack.c.l.b16 %v4965
    %v5030 = vunpack.c.l.b16 %v4966
    %v5031 = vunpack.c.l.b16 %v4967
    %v5032 = vunpack.c.l.b16 %v4968
    %v5033 = vunpack.c.l.b16 %v4969
    %v5034 = vunpack.c.l.b16 %v4970
    %v5035 = vunpack.c.l.b16 %v4971
    %v5036 = vunpack.c.l.b16 %v4972
    %v5037 = vunpack.c.l.b16 %v4973
    %v5038 = vunpack.c.l.b16 %v4974
    %v5039 = vunpack.c.l.b16 %v4975
    %v5040 = vunpack.c.l.b16 %v4976
    %v5041 = vunpack.c.l.b16 %v4977
    %v5042 = vunpack.c.l.b16 %v4978
    %v5043 = vunpack.c.l.b16 %v4979
    %v5044 = vunpack.c.l.b16 %v4980
    %v5045 = vunpack.c.l.b16 %v4981
    %v5046 = vunpack.c.l.b16 %v4982
    %v5047 = vunpack.c.l.b16 %v4983
    %v5048 = vunpack.c.l.b16 %v4984
    %v5049 = vunpack.c.l.b16 %v4985
    %v5050 = vpack.c.b16 %v5019, %v5018
    %v5051 = vpack.c.b16 %v5021, %v5020
    %v5052 = vpack.c.b16 %v5023, %v5022
    %v5053 = vpack.c.b16 %v5025, %v5024
    %v5054 = vpack.c.b16 %v5027, %v5026
    %v5055 = vpack.c.b16 %v5029, %v5028
    %v5056 = vpack.c.b16 %v5031, %v5030
    %v5057 = vpack.c.b16 %v5033, %v5032
    %v5058 = vpack.c.b16 %v5035, %v5034
    %v5059 = vpack.c.b16 %v5037, %v5036
    %v5060 = vpack.c.b16 %v5039, %v5038
    %v5061 = vpack.c.b16 %v5041, %v5040
    %v5062 = vpack.c.b16 %v5043, %v5042
    %v5063 = vpack.c.b16 %v5045, %v5044
    %v5064 = vpack.c.b16 %v5047, %v5046
    %v5065 = vpack.c.b16 %v5049, %v5048
    %5082 = vmatpush.bf16.msra.mxu0 %v5057
    %5083 = vmatpush.bf16.msra.mxu0 %v5056
    %5084 = vmatpush.bf16.msra.mxu0 %v5055
    %5085 = vmatpush.bf16.msra.mxu0 %v5054
    %5086 = vmatpush.bf16.msra.mxu0 %v5053
    %5087 = vmatpush.bf16.msra.mxu0 %v5052
    %5088 = vmatpush.bf16.msra.mxu0 %v5051
    %5089 = vmatpush.bf16.msra.mxu0 %v5050
    %5090 = vmatmul.bf16.gmra.mxu0 %v3638
    %v5091 = vpop.f32.mrf.mxu0
    %v5092 = vadd.f32 0.0, %v5091
    %v5093 = vpop.f32.mrf.mxu0
    %v5094 = vadd.f32 0.0, %v5093
    %5095 = vmatmul.bf16.gmra.mxu0 %v3640
    %v5096 = vpop.f32.mrf.mxu0
    %v5097 = vadd.f32 0.0, %v5096
    %v5098 = vpop.f32.mrf.mxu0
    %v5099 = vadd.f32 0.0, %v5098
    %5100 = vmatmul.bf16.gmra.mxu0 %v3642
    %v5101 = vpop.f32.mrf.mxu0
    %v5102 = vadd.f32 0.0, %v5101
    %v5103 = vpop.f32.mrf.mxu0
    %v5104 = vadd.f32 0.0, %v5103
    %5105 = vmatmul.bf16.gmra.mxu0 %v3644
    %v5106 = vpop.f32.mrf.mxu0
    %v5107 = vadd.f32 0.0, %v5106
    %v5108 = vpop.f32.mrf.mxu0
    %5109 = vdwg.mxu0
    %5110 = vmatpush.bf16.msra.mxu0 %v5065
    %5111 = vmatpush.bf16.msra.mxu0 %v5064
    %5112 = vmatpush.bf16.msra.mxu0 %v5063
    %5113 = vmatpush.bf16.msra.mxu0 %v5062
    %5114 = vmatpush.bf16.msra.mxu0 %v5061
    %5115 = vmatpush.bf16.msra.mxu0 %v5060
    %5116 = vmatpush.bf16.msra.mxu0 %v5059
    %5117 = vmatpush.bf16.msra.mxu0 %v5058
    %5118 = vmatmul.bf16.gmra.mxu0 %v3639
    %v5119 = vpop.f32.mrf.mxu0
    %v5120 = vadd.f32 %v5092, %v5119
    %v5121 = vpop.f32.mrf.mxu0
    %v5122 = vadd.f32 %v5094, %v5121
    %5123 = vmatmul.bf16.gmra.mxu0 %v3641
    %v5124 = vpop.f32.mrf.mxu0
    %v5125 = vadd.f32 %v5097, %v5124
    %v5126 = vpop.f32.mrf.mxu0
    %v5127 = vadd.f32 %v5099, %v5126
    %5128 = vmatmul.bf16.gmra.mxu0 %v3643
    %v5129 = vpop.f32.mrf.mxu0
    %v5130 = vadd.f32 %v5102, %v5129
    %v5131 = vpop.f32.mrf.mxu0
    %v5132 = vadd.f32 %v5104, %v5131
    %5133 = vmatmul.bf16.gmra.mxu0 %v3645
    %v5134 = vpop.f32.mrf.mxu0
    %v5135 = vadd.f32 %v5107, %v5134
    %v5136 = vpop.f32.mrf.mxu0
    %5137 = vdwg.mxu0
    %s5138 = scalar_lea.vmem [#allocation11], 140
    %v5139 = vld [vmem:[%s5138] sm:$0xf]
    %v5140 = vld [vmem:[%s5138 + $0x4] sm:$0xf]
    %v5141 = vld [vmem:[%s5138 + $0x8] sm:$0xf]
    %v5142 = vld [vmem:[%s5138 + $0xc] sm:$0xf]
    %v5143 = vld [vmem:[%s5138 + $0x10] sm:$0xf]
    %v5144 = vld [vmem:[%s5138 + $0x14] sm:$0xf]
    %v5145 = vld [vmem:[%s5138 + $0x18] sm:$0x1]
    %v5146 = vunpack.c.l.bf16 %v5139
    %v5147 = vunpack.c.l.bf16 %v5140
    %v5148 = vunpack.c.l.bf16 %v5141
    %v5149 = vunpack.c.l.bf16 %v5142
    %v5150 = vunpack.c.l.bf16 %v5143
    %v5151 = vunpack.c.l.bf16 %v5144
    %v5152 = vunpack.c.l.bf16 %v5145
    %v5154 = vsel %vm4020, %v5146, 0
    %v5157 = vsel %vm4020, %v5147, 0
    %v5160 = vsel %vm4020, %v5148, 0
    %v5163 = vsel %vm4020, %v5149, 0
    %v5166 = vsel %vm4020, %v5150, 0
    %v5169 = vsel %vm4020, %v5151, 0
    %v5172 = vsel %vm4020, %v5152, 0
    %v5175 = vsel %vm4042, %v5135, 0
    %5177 = vmatpush.msra.mxu0 0.0
    %5178 = vmatpush.msra.mxu0 0.0
    %5179 = vmatpush.msra.mxu0 0.0
    %5180 = vmatpush.msra.mxu0 0.0
    %5181 = vmatpush.msra.mxu0 0.0
    %5182 = vmatpush.msra.mxu0 0.0
    %5183 = vmatpush.msra.mxu0 0.0
    %5184 = vmatpush.msra.mxu0 0.0
    %5185 = vmatpush.msra.mxu0 0.0
    %5186 = vmatpush.msra.mxu0 %v5175
    %5187 = vmatpush.msra.mxu0 %v5132
    %5188 = vmatpush.msra.mxu0 %v5130
    %5189 = vmatpush.msra.mxu0 %v5127
    %5190 = vmatpush.msra.mxu0 %v5125
    %5191 = vmatpush.msra.mxu0 %v5122
    %5192 = vmatpush.msra.mxu0 %v5120
    %5193 = vmatmul.f32.gmra.mxu0 %v5154
    %v5194 = vpop.f32.mrf.mxu0
    %v5195 = vadd.f32 0.0, %v5194
    %5196 = vmatmul.f32.gmra.mxu0 %v5157
    %v5197 = vpop.f32.mrf.mxu0
    %v5198 = vadd.f32 0.0, %v5197
    %5199 = vmatmul.f32.gmra.mxu0 %v5160
    %v5200 = vpop.f32.mrf.mxu0
    %v5201 = vadd.f32 0.0, %v5200
    %5202 = vmatmul.f32.gmra.mxu0 %v5163
    %v5203 = vpop.f32.mrf.mxu0
    %v5204 = vadd.f32 0.0, %v5203
    %5205 = vmatmul.f32.gmra.mxu0 %v5166
    %v5206 = vpop.f32.mrf.mxu0
    %v5207 = vadd.f32 0.0, %v5206
    %5208 = vmatmul.f32.gmra.mxu0 %v5169
    %v5209 = vpop.f32.mrf.mxu0
    %v5210 = vadd.f32 0.0, %v5209
    %5211 = vmatmul.f32.gmra.mxu0 %v5172
    %v5212 = vpop.f32.mrf.mxu0
    %v5213 = vadd.f32 0.0, %v5212
    %5214 = vdwg.mxu0
    %v5215 = vadd.f32 %v4946, %v5195
    %v5216 = vadd.f32 %v4947, %v5198
    %v5217 = vadd.f32 %v4948, %v5201
    %v5218 = vadd.f32 %v4949, %v5204
    %v5219 = vadd.f32 %v4950, %v5207
    %v5220 = vadd.f32 %v4951, %v5210
    %v5221 = vadd.f32 %v4952, %v5213
    %s5222 = scalar_lea.vmem [#allocation8], 768
    %v5223 = vld [vmem:[%s5222] sm:$0xf]
    %v5224 = vld [vmem:[%s5222 + $0x4] sm:$0xf]
    %v5225 = vld [vmem:[%s5222 + $0x8] sm:$0xf]
    %v5226 = vld [vmem:[%s5222 + $0xc] sm:$0xf]
    %v5227 = vld [vmem:[%s5222 + $0x10] sm:$0xf]
    %v5228 = vld [vmem:[%s5222 + $0x14] sm:$0xf]
    %v5229 = vld [vmem:[%s5222 + $0x18] sm:$0xf]
    %v5230 = vld [vmem:[%s5222 + $0x1c] sm:$0xf]
    %v5231 = vld [vmem:[%s5222 + $0x20] sm:$0xf]
    %v5232 = vld [vmem:[%s5222 + $0x24] sm:$0xf]
    %v5233 = vld [vmem:[%s5222 + $0x28] sm:$0xf]
    %v5234 = vld [vmem:[%s5222 + $0x2c] sm:$0xf]
    %v5235 = vld [vmem:[%s5222 + $0x30] sm:$0xf]
    %v5236 = vld [vmem:[%s5222 + $0x34] sm:$0xf]
    %v5237 = vld [vmem:[%s5222 + $0x38] sm:$0xf]
    %v5238 = vld [vmem:[%s5222 + $0x3c] sm:$0xf]
    %v5239 = vld [vmem:[%s5222 + $0x40] sm:$0xf]
    %v5240 = vld [vmem:[%s5222 + $0x44] sm:$0xf]
    %v5241 = vld [vmem:[%s5222 + $0x48] sm:$0xf]
    %v5242 = vld [vmem:[%s5222 + $0x4c] sm:$0xf]
    %v5243 = vld [vmem:[%s5222 + $0x50] sm:$0xf]
    %v5244 = vld [vmem:[%s5222 + $0x54] sm:$0xf]
    %v5245 = vld [vmem:[%s5222 + $0x58] sm:$0xf]
    %v5246 = vld [vmem:[%s5222 + $0x5c] sm:$0xf]
    %v5247 = vld [vmem:[%s5222 + $0x60] sm:$0xf]
    %v5248 = vld [vmem:[%s5222 + $0x64] sm:$0xf]
    %v5249 = vld [vmem:[%s5222 + $0x68] sm:$0xf]
    %v5250 = vld [vmem:[%s5222 + $0x6c] sm:$0xf]
    %v5251 = vld [vmem:[%s5222 + $0x70] sm:$0xf]
    %v5252 = vld [vmem:[%s5222 + $0x74] sm:$0xf]
    %v5253 = vld [vmem:[%s5222 + $0x78] sm:$0xf]
    %v5254 = vld [vmem:[%s5222 + $0x7c] sm:$0xf]
    %v5287 = vunpack.c.l.b16 %v5223
    %v5288 = vunpack.c.l.b16 %v5224
    %v5289 = vunpack.c.l.b16 %v5225
    %v5290 = vunpack.c.l.b16 %v5226
    %v5291 = vunpack.c.l.b16 %v5227
    %v5292 = vunpack.c.l.b16 %v5228
    %v5293 = vunpack.c.l.b16 %v5229
    %v5294 = vunpack.c.l.b16 %v5230
    %v5295 = vunpack.c.l.b16 %v5231
    %v5296 = vunpack.c.l.b16 %v5232
    %v5297 = vunpack.c.l.b16 %v5233
    %v5298 = vunpack.c.l.b16 %v5234
    %v5299 = vunpack.c.l.b16 %v5235
    %v5300 = vunpack.c.l.b16 %v5236
    %v5301 = vunpack.c.l.b16 %v5237
    %v5302 = vunpack.c.l.b16 %v5238
    %v5303 = vunpack.c.l.b16 %v5239
    %v5304 = vunpack.c.l.b16 %v5240
    %v5305 = vunpack.c.l.b16 %v5241
    %v5306 = vunpack.c.l.b16 %v5242
    %v5307 = vunpack.c.l.b16 %v5243
    %v5308 = vunpack.c.l.b16 %v5244
    %v5309 = vunpack.c.l.b16 %v5245
    %v5310 = vunpack.c.l.b16 %v5246
    %v5311 = vunpack.c.l.b16 %v5247
    %v5312 = vunpack.c.l.b16 %v5248
    %v5313 = vunpack.c.l.b16 %v5249
    %v5314 = vunpack.c.l.b16 %v5250
    %v5315 = vunpack.c.l.b16 %v5251
    %v5316 = vunpack.c.l.b16 %v5252
    %v5317 = vunpack.c.l.b16 %v5253
    %v5318 = vunpack.c.l.b16 %v5254
    %v5319 = vpack.c.b16 %v5288, %v5287
    %v5320 = vpack.c.b16 %v5290, %v5289
    %v5321 = vpack.c.b16 %v5292, %v5291
    %v5322 = vpack.c.b16 %v5294, %v5293
    %v5323 = vpack.c.b16 %v5296, %v5295
    %v5324 = vpack.c.b16 %v5298, %v5297
    %v5325 = vpack.c.b16 %v5300, %v5299
    %v5326 = vpack.c.b16 %v5302, %v5301
    %v5327 = vpack.c.b16 %v5304, %v5303
    %v5328 = vpack.c.b16 %v5306, %v5305
    %v5329 = vpack.c.b16 %v5308, %v5307
    %v5330 = vpack.c.b16 %v5310, %v5309
    %v5331 = vpack.c.b16 %v5312, %v5311
    %v5332 = vpack.c.b16 %v5314, %v5313
    %v5333 = vpack.c.b16 %v5316, %v5315
    %v5334 = vpack.c.b16 %v5318, %v5317
    %5351 = vmatpush.bf16.msra.mxu0 %v5326
    %5352 = vmatpush.bf16.msra.mxu0 %v5325
    %5353 = vmatpush.bf16.msra.mxu0 %v5324
    %5354 = vmatpush.bf16.msra.mxu0 %v5323
    %5355 = vmatpush.bf16.msra.mxu0 %v5322
    %5356 = vmatpush.bf16.msra.mxu0 %v5321
    %5357 = vmatpush.bf16.msra.mxu0 %v5320
    %5358 = vmatpush.bf16.msra.mxu0 %v5319
    %5359 = vmatmul.bf16.gmra.mxu0 %v3638
    %v5360 = vpop.f32.mrf.mxu0
    %v5361 = vadd.f32 0.0, %v5360
    %v5362 = vpop.f32.mrf.mxu0
    %v5363 = vadd.f32 0.0, %v5362
    %5364 = vmatmul.bf16.gmra.mxu0 %v3640
    %v5365 = vpop.f32.mrf.mxu0
    %v5366 = vadd.f32 0.0, %v5365
    %v5367 = vpop.f32.mrf.mxu0
    %v5368 = vadd.f32 0.0, %v5367
    %5369 = vmatmul.bf16.gmra.mxu0 %v3642
    %v5370 = vpop.f32.mrf.mxu0
    %v5371 = vadd.f32 0.0, %v5370
    %v5372 = vpop.f32.mrf.mxu0
    %v5373 = vadd.f32 0.0, %v5372
    %5374 = vmatmul.bf16.gmra.mxu0 %v3644
    %v5375 = vpop.f32.mrf.mxu0
    %v5376 = vadd.f32 0.0, %v5375
    %v5377 = vpop.f32.mrf.mxu0
    %5378 = vdwg.mxu0
    %5379 = vmatpush.bf16.msra.mxu0 %v5334
    %5380 = vmatpush.bf16.msra.mxu0 %v5333
    %5381 = vmatpush.bf16.msra.mxu0 %v5332
    %5382 = vmatpush.bf16.msra.mxu0 %v5331
    %5383 = vmatpush.bf16.msra.mxu0 %v5330
    %5384 = vmatpush.bf16.msra.mxu0 %v5329
    %5385 = vmatpush.bf16.msra.mxu0 %v5328
    %5386 = vmatpush.bf16.msra.mxu0 %v5327
    %5387 = vmatmul.bf16.gmra.mxu0 %v3639
    %v5388 = vpop.f32.mrf.mxu0
    %v5389 = vadd.f32 %v5361, %v5388
    %v5390 = vpop.f32.mrf.mxu0
    %v5391 = vadd.f32 %v5363, %v5390
    %5392 = vmatmul.bf16.gmra.mxu0 %v3641
    %v5393 = vpop.f32.mrf.mxu0
    %v5394 = vadd.f32 %v5366, %v5393
    %v5395 = vpop.f32.mrf.mxu0
    %v5396 = vadd.f32 %v5368, %v5395
    %5397 = vmatmul.bf16.gmra.mxu0 %v3643
    %v5398 = vpop.f32.mrf.mxu0
    %v5399 = vadd.f32 %v5371, %v5398
    %v5400 = vpop.f32.mrf.mxu0
    %v5401 = vadd.f32 %v5373, %v5400
    %5402 = vmatmul.bf16.gmra.mxu0 %v3645
    %v5403 = vpop.f32.mrf.mxu0
    %v5404 = vadd.f32 %v5376, %v5403
    %v5405 = vpop.f32.mrf.mxu0
    %5406 = vdwg.mxu0
    %s5407 = scalar_lea.vmem [#allocation11], 168
    %v5408 = vld [vmem:[%s5407] sm:$0xf]
    %v5409 = vld [vmem:[%s5407 + $0x4] sm:$0xf]
    %v5410 = vld [vmem:[%s5407 + $0x8] sm:$0xf]
    %v5411 = vld [vmem:[%s5407 + $0xc] sm:$0xf]
    %v5412 = vld [vmem:[%s5407 + $0x10] sm:$0xf]
    %v5413 = vld [vmem:[%s5407 + $0x14] sm:$0xf]
    %v5414 = vld [vmem:[%s5407 + $0x18] sm:$0x1]
    %v5415 = vunpack.c.l.bf16 %v5408
    %v5416 = vunpack.c.l.bf16 %v5409
    %v5417 = vunpack.c.l.bf16 %v5410
    %v5418 = vunpack.c.l.bf16 %v5411
    %v5419 = vunpack.c.l.bf16 %v5412
    %v5420 = vunpack.c.l.bf16 %v5413
    %v5421 = vunpack.c.l.bf16 %v5414
    %v5423 = vsel %vm4020, %v5415, 0
    %v5426 = vsel %vm4020, %v5416, 0
    %v5429 = vsel %vm4020, %v5417, 0
    %v5432 = vsel %vm4020, %v5418, 0
    %v5435 = vsel %vm4020, %v5419, 0
    %v5438 = vsel %vm4020, %v5420, 0
    %v5441 = vsel %vm4020, %v5421, 0
    %v5444 = vsel %vm4042, %v5404, 0
    %5446 = vmatpush.msra.mxu0 0.0
    %5447 = vmatpush.msra.mxu0 0.0
    %5448 = vmatpush.msra.mxu0 0.0
    %5449 = vmatpush.msra.mxu0 0.0
    %5450 = vmatpush.msra.mxu0 0.0
    %5451 = vmatpush.msra.mxu0 0.0
    %5452 = vmatpush.msra.mxu0 0.0
    %5453 = vmatpush.msra.mxu0 0.0
    %5454 = vmatpush.msra.mxu0 0.0
    %5455 = vmatpush.msra.mxu0 %v5444
    %5456 = vmatpush.msra.mxu0 %v5401
    %5457 = vmatpush.msra.mxu0 %v5399
    %5458 = vmatpush.msra.mxu0 %v5396
    %5459 = vmatpush.msra.mxu0 %v5394
    %5460 = vmatpush.msra.mxu0 %v5391
    %5461 = vmatpush.msra.mxu0 %v5389
    %5462 = vmatmul.f32.gmra.mxu0 %v5423
    %v5463 = vpop.f32.mrf.mxu0
    %v5464 = vadd.f32 0.0, %v5463
    %5465 = vmatmul.f32.gmra.mxu0 %v5426
    %v5466 = vpop.f32.mrf.mxu0
    %v5467 = vadd.f32 0.0, %v5466
    %5468 = vmatmul.f32.gmra.mxu0 %v5429
    %v5469 = vpop.f32.mrf.mxu0
    %v5470 = vadd.f32 0.0, %v5469
    %5471 = vmatmul.f32.gmra.mxu0 %v5432
    %v5472 = vpop.f32.mrf.mxu0
    %v5473 = vadd.f32 0.0, %v5472
    %5474 = vmatmul.f32.gmra.mxu0 %v5435
    %v5475 = vpop.f32.mrf.mxu0
    %v5476 = vadd.f32 0.0, %v5475
    %5477 = vmatmul.f32.gmra.mxu0 %v5438
    %v5478 = vpop.f32.mrf.mxu0
    %v5479 = vadd.f32 0.0, %v5478
    %5480 = vmatmul.f32.gmra.mxu0 %v5441
    %v5481 = vpop.f32.mrf.mxu0
    %v5482 = vadd.f32 0.0, %v5481
    %5483 = vdwg.mxu0
    %v5484 = vadd.f32 %v5215, %v5464
    %v5485 = vadd.f32 %v5216, %v5467
    %v5486 = vadd.f32 %v5217, %v5470
    %v5487 = vadd.f32 %v5218, %v5473
    %v5488 = vadd.f32 %v5219, %v5476
    %v5489 = vadd.f32 %v5220, %v5479
    %v5490 = vadd.f32 %v5221, %v5482
    %s5491 = scalar_lea.vmem [#allocation8], 896
    %v5492 = vld [vmem:[%s5491] sm:$0xf]
    %v5493 = vld [vmem:[%s5491 + $0x4] sm:$0xf]
    %v5494 = vld [vmem:[%s5491 + $0x8] sm:$0xf]
    %v5495 = vld [vmem:[%s5491 + $0xc] sm:$0xf]
    %v5496 = vld [vmem:[%s5491 + $0x10] sm:$0xf]
    %v5497 = vld [vmem:[%s5491 + $0x14] sm:$0xf]
    %v5498 = vld [vmem:[%s5491 + $0x18] sm:$0xf]
    %v5499 = vld [vmem:[%s5491 + $0x1c] sm:$0xf]
    %v5500 = vld [vmem:[%s5491 + $0x20] sm:$0xf]
    %v5501 = vld [vmem:[%s5491 + $0x24] sm:$0xf]
    %v5502 = vld [vmem:[%s5491 + $0x28] sm:$0xf]
    %v5503 = vld [vmem:[%s5491 + $0x2c] sm:$0xf]
    %v5504 = vld [vmem:[%s5491 + $0x30] sm:$0xf]
    %v5505 = vld [vmem:[%s5491 + $0x34] sm:$0xf]
    %v5506 = vld [vmem:[%s5491 + $0x38] sm:$0xf]
    %v5507 = vld [vmem:[%s5491 + $0x3c] sm:$0xf]
    %v5508 = vld [vmem:[%s5491 + $0x40] sm:$0xf]
    %v5509 = vld [vmem:[%s5491 + $0x44] sm:$0xf]
    %v5510 = vld [vmem:[%s5491 + $0x48] sm:$0xf]
    %v5511 = vld [vmem:[%s5491 + $0x4c] sm:$0xf]
    %v5512 = vld [vmem:[%s5491 + $0x50] sm:$0xf]
    %v5513 = vld [vmem:[%s5491 + $0x54] sm:$0xf]
    %v5514 = vld [vmem:[%s5491 + $0x58] sm:$0xf]
    %v5515 = vld [vmem:[%s5491 + $0x5c] sm:$0xf]
    %v5516 = vld [vmem:[%s5491 + $0x60] sm:$0xf]
    %v5517 = vld [vmem:[%s5491 + $0x64] sm:$0xf]
    %v5518 = vld [vmem:[%s5491 + $0x68] sm:$0xf]
    %v5519 = vld [vmem:[%s5491 + $0x6c] sm:$0xf]
    %v5520 = vld [vmem:[%s5491 + $0x70] sm:$0xf]
    %v5521 = vld [vmem:[%s5491 + $0x74] sm:$0xf]
    %v5522 = vld [vmem:[%s5491 + $0x78] sm:$0xf]
    %v5523 = vld [vmem:[%s5491 + $0x7c] sm:$0xf]
    %v5556 = vunpack.c.l.b16 %v5492
    %v5557 = vunpack.c.l.b16 %v5493
    %v5558 = vunpack.c.l.b16 %v5494
    %v5559 = vunpack.c.l.b16 %v5495
    %v5560 = vunpack.c.l.b16 %v5496
    %v5561 = vunpack.c.l.b16 %v5497
    %v5562 = vunpack.c.l.b16 %v5498
    %v5563 = vunpack.c.l.b16 %v5499
    %v5564 = vunpack.c.l.b16 %v5500
    %v5565 = vunpack.c.l.b16 %v5501
    %v5566 = vunpack.c.l.b16 %v5502
    %v5567 = vunpack.c.l.b16 %v5503
    %v5568 = vunpack.c.l.b16 %v5504
    %v5569 = vunpack.c.l.b16 %v5505
    %v5570 = vunpack.c.l.b16 %v5506
    %v5571 = vunpack.c.l.b16 %v5507
    %v5572 = vunpack.c.l.b16 %v5508
    %v5573 = vunpack.c.l.b16 %v5509
    %v5574 = vunpack.c.l.b16 %v5510
    %v5575 = vunpack.c.l.b16 %v5511
    %v5576 = vunpack.c.l.b16 %v5512
    %v5577 = vunpack.c.l.b16 %v5513
    %v5578 = vunpack.c.l.b16 %v5514
    %v5579 = vunpack.c.l.b16 %v5515
    %v5580 = vunpack.c.l.b16 %v5516
    %v5581 = vunpack.c.l.b16 %v5517
    %v5582 = vunpack.c.l.b16 %v5518
    %v5583 = vunpack.c.l.b16 %v5519
    %v5584 = vunpack.c.l.b16 %v5520
    %v5585 = vunpack.c.l.b16 %v5521
    %v5586 = vunpack.c.l.b16 %v5522
    %v5587 = vunpack.c.l.b16 %v5523
    %v5588 = vpack.c.b16 %v5557, %v5556
    %v5589 = vpack.c.b16 %v5559, %v5558
    %v5590 = vpack.c.b16 %v5561, %v5560
    %v5591 = vpack.c.b16 %v5563, %v5562
    %v5592 = vpack.c.b16 %v5565, %v5564
    %v5593 = vpack.c.b16 %v5567, %v5566
    %v5594 = vpack.c.b16 %v5569, %v5568
    %v5595 = vpack.c.b16 %v5571, %v5570
    %v5596 = vpack.c.b16 %v5573, %v5572
    %v5597 = vpack.c.b16 %v5575, %v5574
    %v5598 = vpack.c.b16 %v5577, %v5576
    %v5599 = vpack.c.b16 %v5579, %v5578
    %v5600 = vpack.c.b16 %v5581, %v5580
    %v5601 = vpack.c.b16 %v5583, %v5582
    %v5602 = vpack.c.b16 %v5585, %v5584
    %v5603 = vpack.c.b16 %v5587, %v5586
    %5620 = vmatpush.bf16.msra.mxu0 %v5595
    %5621 = vmatpush.bf16.msra.mxu0 %v5594
    %5622 = vmatpush.bf16.msra.mxu0 %v5593
    %5623 = vmatpush.bf16.msra.mxu0 %v5592
    %5624 = vmatpush.bf16.msra.mxu0 %v5591
    %5625 = vmatpush.bf16.msra.mxu0 %v5590
    %5626 = vmatpush.bf16.msra.mxu0 %v5589
    %5627 = vmatpush.bf16.msra.mxu0 %v5588
    %5628 = vmatmul.bf16.gmra.mxu0 %v3638
    %v5629 = vpop.f32.mrf.mxu0
    %v5630 = vadd.f32 0.0, %v5629
    %v5631 = vpop.f32.mrf.mxu0
    %v5632 = vadd.f32 0.0, %v5631
    %5633 = vmatmul.bf16.gmra.mxu0 %v3640
    %v5634 = vpop.f32.mrf.mxu0
    %v5635 = vadd.f32 0.0, %v5634
    %v5636 = vpop.f32.mrf.mxu0
    %v5637 = vadd.f32 0.0, %v5636
    %5638 = vmatmul.bf16.gmra.mxu0 %v3642
    %v5639 = vpop.f32.mrf.mxu0
    %v5640 = vadd.f32 0.0, %v5639
    %v5641 = vpop.f32.mrf.mxu0
    %v5642 = vadd.f32 0.0, %v5641
    %5643 = vmatmul.bf16.gmra.mxu0 %v3644
    %v5644 = vpop.f32.mrf.mxu0
    %v5645 = vadd.f32 0.0, %v5644
    %v5646 = vpop.f32.mrf.mxu0
    %5647 = vdwg.mxu0
    %5648 = vmatpush.bf16.msra.mxu0 %v5603
    %5649 = vmatpush.bf16.msra.mxu0 %v5602
    %5650 = vmatpush.bf16.msra.mxu0 %v5601
    %5651 = vmatpush.bf16.msra.mxu0 %v5600
    %5652 = vmatpush.bf16.msra.mxu0 %v5599
    %5653 = vmatpush.bf16.msra.mxu0 %v5598
    %5654 = vmatpush.bf16.msra.mxu0 %v5597
    %5655 = vmatpush.bf16.msra.mxu0 %v5596
    %5656 = vmatmul.bf16.gmra.mxu0 %v3639
    %v5657 = vpop.f32.mrf.mxu0
    %v5658 = vadd.f32 %v5630, %v5657
    %v5659 = vpop.f32.mrf.mxu0
    %v5660 = vadd.f32 %v5632, %v5659
    %5661 = vmatmul.bf16.gmra.mxu0 %v3641
    %v5662 = vpop.f32.mrf.mxu0
    %v5663 = vadd.f32 %v5635, %v5662
    %v5664 = vpop.f32.mrf.mxu0
    %v5665 = vadd.f32 %v5637, %v5664
    %5666 = vmatmul.bf16.gmra.mxu0 %v3643
    %v5667 = vpop.f32.mrf.mxu0
    %v5668 = vadd.f32 %v5640, %v5667
    %v5669 = vpop.f32.mrf.mxu0
    %v5670 = vadd.f32 %v5642, %v5669
    %5671 = vmatmul.bf16.gmra.mxu0 %v3645
    %v5672 = vpop.f32.mrf.mxu0
    %v5673 = vadd.f32 %v5645, %v5672
    %v5674 = vpop.f32.mrf.mxu0
    %5675 = vdwg.mxu0
    %s5676 = scalar_lea.vmem [#allocation11], 196
    %v5677 = vld [vmem:[%s5676] sm:$0xf]
    %v5678 = vld [vmem:[%s5676 + $0x4] sm:$0xf]
    %v5679 = vld [vmem:[%s5676 + $0x8] sm:$0xf]
    %v5680 = vld [vmem:[%s5676 + $0xc] sm:$0xf]
    %v5681 = vld [vmem:[%s5676 + $0x10] sm:$0xf]
    %v5682 = vld [vmem:[%s5676 + $0x14] sm:$0xf]
    %v5683 = vld [vmem:[%s5676 + $0x18] sm:$0x1]
    %v5684 = vunpack.c.l.bf16 %v5677
    %v5685 = vunpack.c.l.bf16 %v5678
    %v5686 = vunpack.c.l.bf16 %v5679
    %v5687 = vunpack.c.l.bf16 %v5680
    %v5688 = vunpack.c.l.bf16 %v5681
    %v5689 = vunpack.c.l.bf16 %v5682
    %v5690 = vunpack.c.l.bf16 %v5683
    %v5692 = vsel %vm4020, %v5684, 0
    %v5695 = vsel %vm4020, %v5685, 0
    %v5698 = vsel %vm4020, %v5686, 0
    %v5701 = vsel %vm4020, %v5687, 0
    %v5704 = vsel %vm4020, %v5688, 0
    %v5707 = vsel %vm4020, %v5689, 0
    %v5710 = vsel %vm4020, %v5690, 0
    %v5713 = vsel %vm4042, %v5673, 0
    %5715 = vmatpush.msra.mxu0 0.0
    %5716 = vmatpush.msra.mxu0 0.0
    %5717 = vmatpush.msra.mxu0 0.0
    %5718 = vmatpush.msra.mxu0 0.0
    %5719 = vmatpush.msra.mxu0 0.0
    %5720 = vmatpush.msra.mxu0 0.0
    %5721 = vmatpush.msra.mxu0 0.0
    %5722 = vmatpush.msra.mxu0 0.0
    %5723 = vmatpush.msra.mxu0 0.0
    %5724 = vmatpush.msra.mxu0 %v5713
    %5725 = vmatpush.msra.mxu0 %v5670
    %5726 = vmatpush.msra.mxu0 %v5668
    %5727 = vmatpush.msra.mxu0 %v5665
    %5728 = vmatpush.msra.mxu0 %v5663
    %5729 = vmatpush.msra.mxu0 %v5660
    %5730 = vmatpush.msra.mxu0 %v5658
    %5731 = vmatmul.f32.gmra.mxu0 %v5692
    %v5732 = vpop.f32.mrf.mxu0
    %v5733 = vadd.f32 0.0, %v5732
    %5734 = vmatmul.f32.gmra.mxu0 %v5695
    %v5735 = vpop.f32.mrf.mxu0
    %v5736 = vadd.f32 0.0, %v5735
    %5737 = vmatmul.f32.gmra.mxu0 %v5698
    %v5738 = vpop.f32.mrf.mxu0
    %v5739 = vadd.f32 0.0, %v5738
    %5740 = vmatmul.f32.gmra.mxu0 %v5701
    %v5741 = vpop.f32.mrf.mxu0
    %v5742 = vadd.f32 0.0, %v5741
    %5743 = vmatmul.f32.gmra.mxu0 %v5704
    %v5744 = vpop.f32.mrf.mxu0
    %v5745 = vadd.f32 0.0, %v5744
    %5746 = vmatmul.f32.gmra.mxu0 %v5707
    %v5747 = vpop.f32.mrf.mxu0
    %v5748 = vadd.f32 0.0, %v5747
    %5749 = vmatmul.f32.gmra.mxu0 %v5710
    %v5750 = vpop.f32.mrf.mxu0
    %v5751 = vadd.f32 0.0, %v5750
    %5752 = vdwg.mxu0
    %v5753 = vadd.f32 %v5484, %v5733
    %v5754 = vadd.f32 %v5485, %v5736
    %v5755 = vadd.f32 %v5486, %v5739
    %v5756 = vadd.f32 %v5487, %v5742
    %v5757 = vadd.f32 %v5488, %v5745
    %v5758 = vadd.f32 %v5489, %v5748
    %v5759 = vadd.f32 %v5490, %v5751
    %s5760 = scalar_lea.vmem [#allocation8], 1024
    %v5761 = vld [vmem:[%s5760] sm:$0xf]
    %v5762 = vld [vmem:[%s5760 + $0x4] sm:$0xf]
    %v5763 = vld [vmem:[%s5760 + $0x8] sm:$0xf]
    %v5764 = vld [vmem:[%s5760 + $0xc] sm:$0xf]
    %v5765 = vld [vmem:[%s5760 + $0x10] sm:$0xf]
    %v5766 = vld [vmem:[%s5760 + $0x14] sm:$0xf]
    %v5767 = vld [vmem:[%s5760 + $0x18] sm:$0xf]
    %v5768 = vld [vmem:[%s5760 + $0x1c] sm:$0xf]
    %v5769 = vld [vmem:[%s5760 + $0x20] sm:$0xf]
    %v5770 = vld [vmem:[%s5760 + $0x24] sm:$0xf]
    %v5771 = vld [vmem:[%s5760 + $0x28] sm:$0xf]
    %v5772 = vld [vmem:[%s5760 + $0x2c] sm:$0xf]
    %v5773 = vld [vmem:[%s5760 + $0x30] sm:$0xf]
    %v5774 = vld [vmem:[%s5760 + $0x34] sm:$0xf]
    %v5775 = vld [vmem:[%s5760 + $0x38] sm:$0xf]
    %v5776 = vld [vmem:[%s5760 + $0x3c] sm:$0xf]
    %v5777 = vld [vmem:[%s5760 + $0x40] sm:$0xf]
    %v5778 = vld [vmem:[%s5760 + $0x44] sm:$0xf]
    %v5779 = vld [vmem:[%s5760 + $0x48] sm:$0xf]
    %v5780 = vld [vmem:[%s5760 + $0x4c] sm:$0xf]
    %v5781 = vld [vmem:[%s5760 + $0x50] sm:$0xf]
    %v5782 = vld [vmem:[%s5760 + $0x54] sm:$0xf]
    %v5783 = vld [vmem:[%s5760 + $0x58] sm:$0xf]
    %v5784 = vld [vmem:[%s5760 + $0x5c] sm:$0xf]
    %v5785 = vld [vmem:[%s5760 + $0x60] sm:$0xf]
    %v5786 = vld [vmem:[%s5760 + $0x64] sm:$0xf]
    %v5787 = vld [vmem:[%s5760 + $0x68] sm:$0xf]
    %v5788 = vld [vmem:[%s5760 + $0x6c] sm:$0xf]
    %v5789 = vld [vmem:[%s5760 + $0x70] sm:$0xf]
    %v5790 = vld [vmem:[%s5760 + $0x74] sm:$0xf]
    %v5791 = vld [vmem:[%s5760 + $0x78] sm:$0xf]
    %v5792 = vld [vmem:[%s5760 + $0x7c] sm:$0xf]
    %v5825 = vunpack.c.l.b16 %v5761
    %v5826 = vunpack.c.l.b16 %v5762
    %v5827 = vunpack.c.l.b16 %v5763
    %v5828 = vunpack.c.l.b16 %v5764
    %v5829 = vunpack.c.l.b16 %v5765
    %v5830 = vunpack.c.l.b16 %v5766
    %v5831 = vunpack.c.l.b16 %v5767
    %v5832 = vunpack.c.l.b16 %v5768
    %v5833 = vunpack.c.l.b16 %v5769
    %v5834 = vunpack.c.l.b16 %v5770
    %v5835 = vunpack.c.l.b16 %v5771
    %v5836 = vunpack.c.l.b16 %v5772
    %v5837 = vunpack.c.l.b16 %v5773
    %v5838 = vunpack.c.l.b16 %v5774
    %v5839 = vunpack.c.l.b16 %v5775
    %v5840 = vunpack.c.l.b16 %v5776
    %v5841 = vunpack.c.l.b16 %v5777
    %v5842 = vunpack.c.l.b16 %v5778
    %v5843 = vunpack.c.l.b16 %v5779
    %v5844 = vunpack.c.l.b16 %v5780
    %v5845 = vunpack.c.l.b16 %v5781
    %v5846 = vunpack.c.l.b16 %v5782
    %v5847 = vunpack.c.l.b16 %v5783
    %v5848 = vunpack.c.l.b16 %v5784
    %v5849 = vunpack.c.l.b16 %v5785
    %v5850 = vunpack.c.l.b16 %v5786
    %v5851 = vunpack.c.l.b16 %v5787
    %v5852 = vunpack.c.l.b16 %v5788
    %v5853 = vunpack.c.l.b16 %v5789
    %v5854 = vunpack.c.l.b16 %v5790
    %v5855 = vunpack.c.l.b16 %v5791
    %v5856 = vunpack.c.l.b16 %v5792
    %v5857 = vpack.c.b16 %v5826, %v5825
    %v5858 = vpack.c.b16 %v5828, %v5827
    %v5859 = vpack.c.b16 %v5830, %v5829
    %v5860 = vpack.c.b16 %v5832, %v5831
    %v5861 = vpack.c.b16 %v5834, %v5833
    %v5862 = vpack.c.b16 %v5836, %v5835
    %v5863 = vpack.c.b16 %v5838, %v5837
    %v5864 = vpack.c.b16 %v5840, %v5839
    %v5865 = vpack.c.b16 %v5842, %v5841
    %v5866 = vpack.c.b16 %v5844, %v5843
    %v5867 = vpack.c.b16 %v5846, %v5845
    %v5868 = vpack.c.b16 %v5848, %v5847
    %v5869 = vpack.c.b16 %v5850, %v5849
    %v5870 = vpack.c.b16 %v5852, %v5851
    %v5871 = vpack.c.b16 %v5854, %v5853
    %v5872 = vpack.c.b16 %v5856, %v5855
    %5889 = vmatpush.bf16.msra.mxu0 %v5864
    %5890 = vmatpush.bf16.msra.mxu0 %v5863
    %5891 = vmatpush.bf16.msra.mxu0 %v5862
    %5892 = vmatpush.bf16.msra.mxu0 %v5861
    %5893 = vmatpush.bf16.msra.mxu0 %v5860
    %5894 = vmatpush.bf16.msra.mxu0 %v5859
    %5895 = vmatpush.bf16.msra.mxu0 %v5858
    %5896 = vmatpush.bf16.msra.mxu0 %v5857
    %5897 = vmatmul.bf16.gmra.mxu0 %v3638
    %v5898 = vpop.f32.mrf.mxu0
    %v5899 = vadd.f32 0.0, %v5898
    %v5900 = vpop.f32.mrf.mxu0
    %v5901 = vadd.f32 0.0, %v5900
    %5902 = vmatmul.bf16.gmra.mxu0 %v3640
    %v5903 = vpop.f32.mrf.mxu0
    %v5904 = vadd.f32 0.0, %v5903
    %v5905 = vpop.f32.mrf.mxu0
    %v5906 = vadd.f32 0.0, %v5905
    %5907 = vmatmul.bf16.gmra.mxu0 %v3642
    %v5908 = vpop.f32.mrf.mxu0
    %v5909 = vadd.f32 0.0, %v5908
    %v5910 = vpop.f32.mrf.mxu0
    %v5911 = vadd.f32 0.0, %v5910
    %5912 = vmatmul.bf16.gmra.mxu0 %v3644
    %v5913 = vpop.f32.mrf.mxu0
    %v5914 = vadd.f32 0.0, %v5913
    %v5915 = vpop.f32.mrf.mxu0
    %5916 = vdwg.mxu0
    %5917 = vmatpush.bf16.msra.mxu0 %v5872
    %5918 = vmatpush.bf16.msra.mxu0 %v5871
    %5919 = vmatpush.bf16.msra.mxu0 %v5870
    %5920 = vmatpush.bf16.msra.mxu0 %v5869
    %5921 = vmatpush.bf16.msra.mxu0 %v5868
    %5922 = vmatpush.bf16.msra.mxu0 %v5867
    %5923 = vmatpush.bf16.msra.mxu0 %v5866
    %5924 = vmatpush.bf16.msra.mxu0 %v5865
    %5925 = vmatmul.bf16.gmra.mxu0 %v3639
    %v5926 = vpop.f32.mrf.mxu0
    %v5927 = vadd.f32 %v5899, %v5926
    %v5928 = vpop.f32.mrf.mxu0
    %v5929 = vadd.f32 %v5901, %v5928
    %5930 = vmatmul.bf16.gmra.mxu0 %v3641
    %v5931 = vpop.f32.mrf.mxu0
    %v5932 = vadd.f32 %v5904, %v5931
    %v5933 = vpop.f32.mrf.mxu0
    %v5934 = vadd.f32 %v5906, %v5933
    %5935 = vmatmul.bf16.gmra.mxu0 %v3643
    %v5936 = vpop.f32.mrf.mxu0
    %v5937 = vadd.f32 %v5909, %v5936
    %v5938 = vpop.f32.mrf.mxu0
    %v5939 = vadd.f32 %v5911, %v5938
    %5940 = vmatmul.bf16.gmra.mxu0 %v3645
    %v5941 = vpop.f32.mrf.mxu0
    %v5942 = vadd.f32 %v5914, %v5941
    %v5943 = vpop.f32.mrf.mxu0
    %5944 = vdwg.mxu0
    %s5945 = scalar_lea.vmem [#allocation11], 224
    %v5946 = vld [vmem:[%s5945] sm:$0xf]
    %v5947 = vld [vmem:[%s5945 + $0x4] sm:$0xf]
    %v5948 = vld [vmem:[%s5945 + $0x8] sm:$0xf]
    %v5949 = vld [vmem:[%s5945 + $0xc] sm:$0xf]
    %v5950 = vld [vmem:[%s5945 + $0x10] sm:$0xf]
    %v5951 = vld [vmem:[%s5945 + $0x14] sm:$0xf]
    %v5952 = vld [vmem:[%s5945 + $0x18] sm:$0x1]
    %v5953 = vunpack.c.l.bf16 %v5946
    %v5954 = vunpack.c.l.bf16 %v5947
    %v5955 = vunpack.c.l.bf16 %v5948
    %v5956 = vunpack.c.l.bf16 %v5949
    %v5957 = vunpack.c.l.bf16 %v5950
    %v5958 = vunpack.c.l.bf16 %v5951
    %v5959 = vunpack.c.l.bf16 %v5952
    %v5961 = vsel %vm4020, %v5953, 0
    %v5964 = vsel %vm4020, %v5954, 0
    %v5967 = vsel %vm4020, %v5955, 0
    %v5970 = vsel %vm4020, %v5956, 0
    %v5973 = vsel %vm4020, %v5957, 0
    %v5976 = vsel %vm4020, %v5958, 0
    %v5979 = vsel %vm4020, %v5959, 0
    %v5982 = vsel %vm4042, %v5942, 0
    %5984 = vmatpush.msra.mxu0 0.0
    %5985 = vmatpush.msra.mxu0 0.0
    %5986 = vmatpush.msra.mxu0 0.0
    %5987 = vmatpush.msra.mxu0 0.0
    %5988 = vmatpush.msra.mxu0 0.0
    %5989 = vmatpush.msra.mxu0 0.0
    %5990 = vmatpush.msra.mxu0 0.0
    %5991 = vmatpush.msra.mxu0 0.0
    %5992 = vmatpush.msra.mxu0 0.0
    %5993 = vmatpush.msra.mxu0 %v5982
    %5994 = vmatpush.msra.mxu0 %v5939
    %5995 = vmatpush.msra.mxu0 %v5937
    %5996 = vmatpush.msra.mxu0 %v5934
    %5997 = vmatpush.msra.mxu0 %v5932
    %5998 = vmatpush.msra.mxu0 %v5929
    %5999 = vmatpush.msra.mxu0 %v5927
    %6000 = vmatmul.f32.gmra.mxu0 %v5961
    %v6001 = vpop.f32.mrf.mxu0
    %v6002 = vadd.f32 0.0, %v6001
    %6003 = vmatmul.f32.gmra.mxu0 %v5964
    %v6004 = vpop.f32.mrf.mxu0
    %v6005 = vadd.f32 0.0, %v6004
    %6006 = vmatmul.f32.gmra.mxu0 %v5967
    %v6007 = vpop.f32.mrf.mxu0
    %v6008 = vadd.f32 0.0, %v6007
    %6009 = vmatmul.f32.gmra.mxu0 %v5970
    %v6010 = vpop.f32.mrf.mxu0
    %v6011 = vadd.f32 0.0, %v6010
    %6012 = vmatmul.f32.gmra.mxu0 %v5973
    %v6013 = vpop.f32.mrf.mxu0
    %v6014 = vadd.f32 0.0, %v6013
    %6015 = vmatmul.f32.gmra.mxu0 %v5976
    %v6016 = vpop.f32.mrf.mxu0
    %v6017 = vadd.f32 0.0, %v6016
    %6018 = vmatmul.f32.gmra.mxu0 %v5979
    %v6019 = vpop.f32.mrf.mxu0
    %v6020 = vadd.f32 0.0, %v6019
    %6021 = vdwg.mxu0
    %v6022 = vadd.f32 %v5753, %v6002
    %v6023 = vadd.f32 %v5754, %v6005
    %v6024 = vadd.f32 %v5755, %v6008
    %v6025 = vadd.f32 %v5756, %v6011
    %v6026 = vadd.f32 %v5757, %v6014
    %v6027 = vadd.f32 %v5758, %v6017
    %v6028 = vadd.f32 %v5759, %v6020
    %v6029 = vld [vmem:[#allocation10] sm:$0x1]
    %v6031 = vperm.slane %v6029, 0
    %v6033 = vadd.f32 %v6022, %v6031
    %v6034 = vadd.f32 %v6023, %v6031
    %v6035 = vadd.f32 %v6024, %v6031
    %v6036 = vadd.f32 %v6025, %v6031
    %v6037 = vadd.f32 %v6026, %v6031
    %v6038 = vadd.f32 %v6027, %v6031
    %v6039 = vadd.f32 %v6028, %v6031
    %v6040 = vmax.f32 %v6033, 0.0
    %v6041 = vmax.f32 %v6034, 0.0
    %v6042 = vmax.f32 %v6035, 0.0
    %v6043 = vmax.f32 %v6036, 0.0
    %v6044 = vmax.f32 %v6037, 0.0
    %v6045 = vmax.f32 %v6038, 0.0
    %v6046 = vmax.f32 %v6039, 0.0
    %v6047 = vpack.c.bf16 %v6041, %v6040
    %v6048 = vpack.c.bf16 %v6043, %v6042
    %v6049 = vpack.c.bf16 %v6045, %v6044
    %v6050 = vpack.c.bf16 %v6046, %v6046
    %v6051 = vld [vmem:[%s6] sm:$0xf]
    %v6052 = vld [vmem:[%s6 + $0x4] sm:$0xf]
    %v6053 = vld [vmem:[%s6 + $0x8] sm:$0xf]
    %v6054 = vld [vmem:[%s6 + $0xc] sm:$0xf]
    %v6055 = vld [vmem:[%s6 + $0x10] sm:$0xf]
    %v6056 = vld [vmem:[%s6 + $0x14] sm:$0xf]
    %v6057 = vld [vmem:[%s6 + $0x18] sm:$0xf]
    %v6058 = vld [vmem:[%s6 + $0x1c] sm:$0xf]
    %v6059 = vld [vmem:[%s6 + $0x20] sm:$0xf]
    %v6060 = vld [vmem:[%s6 + $0x24] sm:$0xf]
    %v6061 = vld [vmem:[%s6 + $0x28] sm:$0xf]
    %v6062 = vld [vmem:[%s6 + $0x2c] sm:$0xf]
    %v6063 = vld [vmem:[%s6 + $0x30] sm:$0xf]
    %v6064 = vld [vmem:[%s6 + $0x34] sm:$0xf]
    %v6065 = vld [vmem:[%s6 + $0x38] sm:$0xf]
    %v6066 = vld [vmem:[%s6 + $0x3c] sm:$0xf]
    %v6083 = vunpack.c.l.b16 %v6051
    %v6084 = vunpack.c.l.b16 %v6052
    %v6085 = vunpack.c.l.b16 %v6053
    %v6086 = vunpack.c.l.b16 %v6054
    %v6087 = vunpack.c.l.b16 %v6055
    %v6088 = vunpack.c.l.b16 %v6056
    %v6089 = vunpack.c.l.b16 %v6057
    %v6090 = vunpack.c.l.b16 %v6058
    %v6091 = vunpack.c.l.b16 %v6059
    %v6092 = vunpack.c.l.b16 %v6060
    %v6093 = vunpack.c.l.b16 %v6061
    %v6094 = vunpack.c.l.b16 %v6062
    %v6095 = vunpack.c.l.b16 %v6063
    %v6096 = vunpack.c.l.b16 %v6064
    %v6097 = vunpack.c.l.b16 %v6065
    %v6098 = vunpack.c.l.b16 %v6066
    %v6099 = vpack.c.b16 %v6084, %v6083
    %v6100 = vpack.c.b16 %v6086, %v6085
    %v6101 = vpack.c.b16 %v6088, %v6087
    %v6102 = vpack.c.b16 %v6090, %v6089
    %v6103 = vpack.c.b16 %v6092, %v6091
    %v6104 = vpack.c.b16 %v6094, %v6093
    %v6105 = vpack.c.b16 %v6096, %v6095
    %v6106 = vpack.c.b16 %v6098, %v6097
    %6115 = vmatpush.bf16.msra.mxu0 %v6106
    %6116 = vmatpush.bf16.msra.mxu0 %v6105
    %6117 = vmatpush.bf16.msra.mxu0 %v6104
    %6118 = vmatpush.bf16.msra.mxu0 %v6103
    %6119 = vmatpush.bf16.msra.mxu0 %v6102
    %6120 = vmatpush.bf16.msra.mxu0 %v6101
    %6121 = vmatpush.bf16.msra.mxu0 %v6100
    %6122 = vmatpush.bf16.msra.mxu0 %v6099
    %6123 = vmatmul.bf16.gmra.mxu0 %v6047
    %v6124 = vpop.f32.mrf.mxu0
    %v6125 = vadd.f32 0.0, %v6124
    %v6126 = vpop.f32.mrf.mxu0
    %v6127 = vadd.f32 0.0, %v6126
    %6128 = vmatmul.bf16.gmra.mxu0 %v6048
    %v6129 = vpop.f32.mrf.mxu0
    %v6130 = vadd.f32 0.0, %v6129
    %v6131 = vpop.f32.mrf.mxu0
    %v6132 = vadd.f32 0.0, %v6131
    %6133 = vmatmul.bf16.gmra.mxu0 %v6049
    %v6134 = vpop.f32.mrf.mxu0
    %v6135 = vadd.f32 0.0, %v6134
    %v6136 = vpop.f32.mrf.mxu0
    %v6137 = vadd.f32 0.0, %v6136
    %6138 = vmatmul.bf16.gmra.mxu0 %v6050
    %v6139 = vpop.f32.mrf.mxu0
    %v6140 = vadd.f32 0.0, %v6139
    %v6141 = vpop.f32.mrf.mxu0
    %6142 = vdwg.mxu0
    %v6143 = vld [vmem:[%s8] sm:$0xf]
    %v6144 = vld [vmem:[%s8 + $0x4] sm:$0xf]
    %v6145 = vld [vmem:[%s8 + $0x8] sm:$0xf]
    %v6146 = vld [vmem:[%s8 + $0xc] sm:$0xf]
    %v6147 = vld [vmem:[%s8 + $0x10] sm:$0xf]
    %v6148 = vld [vmem:[%s8 + $0x14] sm:$0xf]
    %v6149 = vld [vmem:[%s8 + $0x18] sm:$0xf]
    %v6150 = vld [vmem:[%s8 + $0x1c] sm:$0xf]
    %v6151 = vld [vmem:[%s8 + $0x20] sm:$0xf]
    %v6152 = vld [vmem:[%s8 + $0x24] sm:$0xf]
    %v6153 = vld [vmem:[%s8 + $0x28] sm:$0xf]
    %v6154 = vld [vmem:[%s8 + $0x2c] sm:$0xf]
    %v6155 = vld [vmem:[%s8 + $0x30] sm:$0x1]
    %v6156 = vunpack.c.l.bf16 %v6143
    %v6157 = vunpack.c.l.bf16 %v6144
    %v6158 = vunpack.c.l.bf16 %v6145
    %v6159 = vunpack.c.l.bf16 %v6146
    %v6160 = vunpack.c.l.bf16 %v6147
    %v6161 = vunpack.c.l.bf16 %v6148
    %v6162 = vunpack.c.l.bf16 %v6149
    %v6163 = vunpack.c.l.bf16 %v6150
    %v6164 = vunpack.c.l.bf16 %v6151
    %v6165 = vunpack.c.l.bf16 %v6152
    %v6166 = vunpack.c.l.bf16 %v6153
    %v6167 = vunpack.c.l.bf16 %v6154
    %v6168 = vunpack.c.l.bf16 %v6155
    %s6169 = scalar_lea.vmem %s6, 64
    %v6170 = vld [vmem:[%s6169] sm:$0xf]
    %v6171 = vld [vmem:[%s6169 + $0x4] sm:$0xf]
    %v6172 = vld [vmem:[%s6169 + $0x8] sm:$0xf]
    %v6173 = vld [vmem:[%s6169 + $0xc] sm:$0xf]
    %v6174 = vld [vmem:[%s6169 + $0x10] sm:$0xf]
    %v6175 = vld [vmem:[%s6169 + $0x14] sm:$0xf]
    %v6176 = vld [vmem:[%s6169 + $0x18] sm:$0xf]
    %v6177 = vld [vmem:[%s6169 + $0x1c] sm:$0xf]
    %v6178 = vld [vmem:[%s6169 + $0x20] sm:$0xf]
    %v6179 = vld [vmem:[%s6169 + $0x24] sm:$0xf]
    %v6180 = vld [vmem:[%s6169 + $0x28] sm:$0xf]
    %v6181 = vld [vmem:[%s6169 + $0x2c] sm:$0xf]
    %v6182 = vld [vmem:[%s6169 + $0x30] sm:$0xf]
    %v6183 = vld [vmem:[%s6169 + $0x34] sm:$0xf]
    %v6184 = vld [vmem:[%s6169 + $0x38] sm:$0xf]
    %v6185 = vld [vmem:[%s6169 + $0x3c] sm:$0xf]
    %v6202 = vunpack.c.l.b16 %v6170
    %v6203 = vunpack.c.l.b16 %v6171
    %v6204 = vunpack.c.l.b16 %v6172
    %v6205 = vunpack.c.l.b16 %v6173
    %v6206 = vunpack.c.l.b16 %v6174
    %v6207 = vunpack.c.l.b16 %v6175
    %v6208 = vunpack.c.l.b16 %v6176
    %v6209 = vunpack.c.l.b16 %v6177
    %v6210 = vunpack.c.l.b16 %v6178
    %v6211 = vunpack.c.l.b16 %v6179
    %v6212 = vunpack.c.l.b16 %v6180
    %v6213 = vunpack.c.l.b16 %v6181
    %v6214 = vunpack.c.l.b16 %v6182
    %v6215 = vunpack.c.l.b16 %v6183
    %v6216 = vunpack.c.l.b16 %v6184
    %v6217 = vunpack.c.l.b16 %v6185
    %v6218 = vpack.c.b16 %v6203, %v6202
    %v6219 = vpack.c.b16 %v6205, %v6204
    %v6220 = vpack.c.b16 %v6207, %v6206
    %v6221 = vpack.c.b16 %v6209, %v6208
    %v6222 = vpack.c.b16 %v6211, %v6210
    %v6223 = vpack.c.b16 %v6213, %v6212
    %v6224 = vpack.c.b16 %v6215, %v6214
    %v6225 = vpack.c.b16 %v6217, %v6216
    %6234 = vmatpush.bf16.msra.mxu0 %v6225
    %6235 = vmatpush.bf16.msra.mxu0 %v6224
    %6236 = vmatpush.bf16.msra.mxu0 %v6223
    %6237 = vmatpush.bf16.msra.mxu0 %v6222
    %6238 = vmatpush.bf16.msra.mxu0 %v6221
    %6239 = vmatpush.bf16.msra.mxu0 %v6220
    %6240 = vmatpush.bf16.msra.mxu0 %v6219
    %6241 = vmatpush.bf16.msra.mxu0 %v6218
    %6242 = vmatmul.bf16.gmra.mxu0 %v6047
    %v6243 = vpop.f32.mrf.mxu0
    %v6244 = vadd.f32 0.0, %v6243
    %v6245 = vpop.f32.mrf.mxu0
    %v6246 = vadd.f32 0.0, %v6245
    %6247 = vmatmul.bf16.gmra.mxu0 %v6048
    %v6248 = vpop.f32.mrf.mxu0
    %v6249 = vadd.f32 0.0, %v6248
    %v6250 = vpop.f32.mrf.mxu0
    %v6251 = vadd.f32 0.0, %v6250
    %6252 = vmatmul.bf16.gmra.mxu0 %v6049
    %v6253 = vpop.f32.mrf.mxu0
    %v6254 = vadd.f32 0.0, %v6253
    %v6255 = vpop.f32.mrf.mxu0
    %v6256 = vadd.f32 0.0, %v6255
    %6257 = vmatmul.bf16.gmra.mxu0 %v6050
    %v6258 = vpop.f32.mrf.mxu0
    %v6259 = vadd.f32 0.0, %v6258
    %v6260 = vpop.f32.mrf.mxu0
    %6261 = vdwg.mxu0
    %s6262 = scalar_lea.vmem %s8, 52
    %v6263 = vld [vmem:[%s6262] sm:$0xf]
    %v6264 = vld [vmem:[%s6262 + $0x4] sm:$0xf]
    %v6265 = vld [vmem:[%s6262 + $0x8] sm:$0xf]
    %v6266 = vld [vmem:[%s6262 + $0xc] sm:$0xf]
    %v6267 = vld [vmem:[%s6262 + $0x10] sm:$0xf]
    %v6268 = vld [vmem:[%s6262 + $0x14] sm:$0xf]
    %v6269 = vld [vmem:[%s6262 + $0x18] sm:$0xf]
    %v6270 = vld [vmem:[%s6262 + $0x1c] sm:$0xf]
    %v6271 = vld [vmem:[%s6262 + $0x20] sm:$0xf]
    %v6272 = vld [vmem:[%s6262 + $0x24] sm:$0xf]
    %v6273 = vld [vmem:[%s6262 + $0x28] sm:$0xf]
    %v6274 = vld [vmem:[%s6262 + $0x2c] sm:$0xf]
    %v6275 = vld [vmem:[%s6262 + $0x30] sm:$0x1]
    %v6276 = vunpack.c.l.bf16 %v6263
    %v6277 = vunpack.c.l.bf16 %v6264
    %v6278 = vunpack.c.l.bf16 %v6265
    %v6279 = vunpack.c.l.bf16 %v6266
    %v6280 = vunpack.c.l.bf16 %v6267
    %v6281 = vunpack.c.l.bf16 %v6268
    %v6282 = vunpack.c.l.bf16 %v6269
    %v6283 = vunpack.c.l.bf16 %v6270
    %v6284 = vunpack.c.l.bf16 %v6271
    %v6285 = vunpack.c.l.bf16 %v6272
    %v6286 = vunpack.c.l.bf16 %v6273
    %v6287 = vunpack.c.l.bf16 %v6274
    %v6288 = vunpack.c.l.bf16 %v6275
    %v6290 = vsel %vm4020, %v6276, 0
    %v6293 = vsel %vm4020, %v6277, 0
    %v6296 = vsel %vm4020, %v6278, 0
    %v6299 = vsel %vm4020, %v6279, 0
    %v6302 = vsel %vm4020, %v6280, 0
    %v6305 = vsel %vm4020, %v6281, 0
    %v6308 = vsel %vm4020, %v6282, 0
    %v6311 = vsel %vm4020, %v6283, 0
    %v6314 = vsel %vm4020, %v6284, 0
    %v6317 = vsel %vm4020, %v6285, 0
    %v6320 = vsel %vm4020, %v6286, 0
    %v6323 = vsel %vm4020, %v6287, 0
    %v6326 = vsel %vm4020, %v6288, 0
    %v6329 = vsel %vm4042, %v6259, 0
    %6331 = vmatpush.msra.mxu0 0.0
    %6332 = vmatpush.msra.mxu0 0.0
    %6333 = vmatpush.msra.mxu0 0.0
    %6334 = vmatpush.msra.mxu0 0.0
    %6335 = vmatpush.msra.mxu0 0.0
    %6336 = vmatpush.msra.mxu0 0.0
    %6337 = vmatpush.msra.mxu0 0.0
    %6338 = vmatpush.msra.mxu0 0.0
    %6339 = vmatpush.msra.mxu0 0.0
    %6340 = vmatpush.msra.mxu0 %v6329
    %6341 = vmatpush.msra.mxu0 %v6256
    %6342 = vmatpush.msra.mxu0 %v6254
    %6343 = vmatpush.msra.mxu0 %v6251
    %6344 = vmatpush.msra.mxu0 %v6249
    %6345 = vmatpush.msra.mxu0 %v6246
    %6346 = vmatpush.msra.mxu0 %v6244
    %6347 = vmatmul.f32.gmra.mxu0 %v6290
    %v6348 = vpop.f32.mrf.mxu0
    %v6349 = vadd.f32 0.0, %v6348
    %6350 = vmatmul.f32.gmra.mxu0 %v6293
    %v6351 = vpop.f32.mrf.mxu0
    %v6352 = vadd.f32 0.0, %v6351
    %6353 = vmatmul.f32.gmra.mxu0 %v6296
    %v6354 = vpop.f32.mrf.mxu0
    %v6355 = vadd.f32 0.0, %v6354
    %6356 = vmatmul.f32.gmra.mxu0 %v6299
    %v6357 = vpop.f32.mrf.mxu0
    %v6358 = vadd.f32 0.0, %v6357
    %6359 = vmatmul.f32.gmra.mxu0 %v6302
    %v6360 = vpop.f32.mrf.mxu0
    %v6361 = vadd.f32 0.0, %v6360
    %6362 = vmatmul.f32.gmra.mxu0 %v6305
    %v6363 = vpop.f32.mrf.mxu0
    %v6364 = vadd.f32 0.0, %v6363
    %6365 = vmatmul.f32.gmra.mxu0 %v6308
    %v6366 = vpop.f32.mrf.mxu0
    %v6367 = vadd.f32 0.0, %v6366
    %6368 = vmatmul.f32.gmra.mxu0 %v6311
    %v6369 = vpop.f32.mrf.mxu0
    %v6370 = vadd.f32 0.0, %v6369
    %6371 = vmatmul.f32.gmra.mxu0 %v6314
    %v6372 = vpop.f32.mrf.mxu0
    %v6373 = vadd.f32 0.0, %v6372
    %6374 = vmatmul.f32.gmra.mxu0 %v6317
    %v6375 = vpop.f32.mrf.mxu0
    %v6376 = vadd.f32 0.0, %v6375
    %6377 = vmatmul.f32.gmra.mxu0 %v6320
    %v6378 = vpop.f32.mrf.mxu0
    %v6379 = vadd.f32 0.0, %v6378
    %6380 = vmatmul.f32.gmra.mxu0 %v6323
    %v6381 = vpop.f32.mrf.mxu0
    %v6382 = vadd.f32 0.0, %v6381
    %6383 = vmatmul.f32.gmra.mxu0 %v6326
    %v6384 = vpop.f32.mrf.mxu0
    %v6385 = vadd.f32 0.0, %v6384
    %6386 = vdwg.mxu0
    %v6388 = vsel %vm4020, %v6156, 0
    %v6391 = vsel %vm4020, %v6157, 0
    %v6394 = vsel %vm4020, %v6158, 0
    %v6397 = vsel %vm4020, %v6159, 0
    %v6400 = vsel %vm4020, %v6160, 0
    %v6403 = vsel %vm4020, %v6161, 0
    %v6406 = vsel %vm4020, %v6162, 0
    %v6409 = vsel %vm4020, %v6163, 0
    %v6412 = vsel %vm4020, %v6164, 0
    %v6415 = vsel %vm4020, %v6165, 0
    %v6418 = vsel %vm4020, %v6166, 0
    %v6421 = vsel %vm4020, %v6167, 0
    %v6424 = vsel %vm4020, %v6168, 0
    %v6427 = vsel %vm4042, %v6140, 0
    %6429 = vmatpush.msra.mxu0 0.0
    %6430 = vmatpush.msra.mxu0 0.0
    %6431 = vmatpush.msra.mxu0 0.0
    %6432 = vmatpush.msra.mxu0 0.0
    %6433 = vmatpush.msra.mxu0 0.0
    %6434 = vmatpush.msra.mxu0 0.0
    %6435 = vmatpush.msra.mxu0 0.0
    %6436 = vmatpush.msra.mxu0 0.0
    %6437 = vmatpush.msra.mxu0 0.0
    %6438 = vmatpush.msra.mxu0 %v6427
    %6439 = vmatpush.msra.mxu0 %v6137
    %6440 = vmatpush.msra.mxu0 %v6135
    %6441 = vmatpush.msra.mxu0 %v6132
    %6442 = vmatpush.msra.mxu0 %v6130
    %6443 = vmatpush.msra.mxu0 %v6127
    %6444 = vmatpush.msra.mxu0 %v6125
    %6445 = vmatmul.f32.gmra.mxu0 %v6388
    %v6446 = vpop.f32.mrf.mxu0
    %v6447 = vadd.f32 %v6349, %v6446
    %6448 = vmatmul.f32.gmra.mxu0 %v6391
    %v6449 = vpop.f32.mrf.mxu0
    %v6450 = vadd.f32 %v6352, %v6449
    %6451 = vmatmul.f32.gmra.mxu0 %v6394
    %v6452 = vpop.f32.mrf.mxu0
    %v6453 = vadd.f32 %v6355, %v6452
    %6454 = vmatmul.f32.gmra.mxu0 %v6397
    %v6455 = vpop.f32.mrf.mxu0
    %v6456 = vadd.f32 %v6358, %v6455
    %6457 = vmatmul.f32.gmra.mxu0 %v6400
    %v6458 = vpop.f32.mrf.mxu0
    %v6459 = vadd.f32 %v6361, %v6458
    %6460 = vmatmul.f32.gmra.mxu0 %v6403
    %v6461 = vpop.f32.mrf.mxu0
    %v6462 = vadd.f32 %v6364, %v6461
    %6463 = vmatmul.f32.gmra.mxu0 %v6406
    %v6464 = vpop.f32.mrf.mxu0
    %v6465 = vadd.f32 %v6367, %v6464
    %6466 = vmatmul.f32.gmra.mxu0 %v6409
    %v6467 = vpop.f32.mrf.mxu0
    %v6468 = vadd.f32 %v6370, %v6467
    %6469 = vmatmul.f32.gmra.mxu0 %v6412
    %v6470 = vpop.f32.mrf.mxu0
    %v6471 = vadd.f32 %v6373, %v6470
    %6472 = vmatmul.f32.gmra.mxu0 %v6415
    %v6473 = vpop.f32.mrf.mxu0
    %v6474 = vadd.f32 %v6376, %v6473
    %6475 = vmatmul.f32.gmra.mxu0 %v6418
    %v6476 = vpop.f32.mrf.mxu0
    %v6477 = vadd.f32 %v6379, %v6476
    %6478 = vmatmul.f32.gmra.mxu0 %v6421
    %v6479 = vpop.f32.mrf.mxu0
    %v6480 = vadd.f32 %v6382, %v6479
    %6481 = vmatmul.f32.gmra.mxu0 %v6424
    %v6482 = vpop.f32.mrf.mxu0
    %v6483 = vadd.f32 %v6385, %v6482
    %6484 = vdwg.mxu0
    %s6485 = scalar_lea.vmem %s6, 128
    %v6486 = vld [vmem:[%s6485] sm:$0xf]
    %v6487 = vld [vmem:[%s6485 + $0x4] sm:$0xf]
    %v6488 = vld [vmem:[%s6485 + $0x8] sm:$0xf]
    %v6489 = vld [vmem:[%s6485 + $0xc] sm:$0xf]
    %v6490 = vld [vmem:[%s6485 + $0x10] sm:$0xf]
    %v6491 = vld [vmem:[%s6485 + $0x14] sm:$0xf]
    %v6492 = vld [vmem:[%s6485 + $0x18] sm:$0xf]
    %v6493 = vld [vmem:[%s6485 + $0x1c] sm:$0xf]
    %v6494 = vld [vmem:[%s6485 + $0x20] sm:$0xf]
    %v6495 = vld [vmem:[%s6485 + $0x24] sm:$0xf]
    %v6496 = vld [vmem:[%s6485 + $0x28] sm:$0xf]
    %v6497 = vld [vmem:[%s6485 + $0x2c] sm:$0xf]
    %v6498 = vld [vmem:[%s6485 + $0x30] sm:$0xf]
    %v6499 = vld [vmem:[%s6485 + $0x34] sm:$0xf]
    %v6500 = vld [vmem:[%s6485 + $0x38] sm:$0xf]
    %v6501 = vld [vmem:[%s6485 + $0x3c] sm:$0xf]
    %v6518 = vunpack.c.l.b16 %v6486
    %v6519 = vunpack.c.l.b16 %v6487
    %v6520 = vunpack.c.l.b16 %v6488
    %v6521 = vunpack.c.l.b16 %v6489
    %v6522 = vunpack.c.l.b16 %v6490
    %v6523 = vunpack.c.l.b16 %v6491
    %v6524 = vunpack.c.l.b16 %v6492
    %v6525 = vunpack.c.l.b16 %v6493
    %v6526 = vunpack.c.l.b16 %v6494
    %v6527 = vunpack.c.l.b16 %v6495
    %v6528 = vunpack.c.l.b16 %v6496
    %v6529 = vunpack.c.l.b16 %v6497
    %v6530 = vunpack.c.l.b16 %v6498
    %v6531 = vunpack.c.l.b16 %v6499
    %v6532 = vunpack.c.l.b16 %v6500
    %v6533 = vunpack.c.l.b16 %v6501
    %v6534 = vpack.c.b16 %v6519, %v6518
    %v6535 = vpack.c.b16 %v6521, %v6520
    %v6536 = vpack.c.b16 %v6523, %v6522
    %v6537 = vpack.c.b16 %v6525, %v6524
    %v6538 = vpack.c.b16 %v6527, %v6526
    %v6539 = vpack.c.b16 %v6529, %v6528
    %v6540 = vpack.c.b16 %v6531, %v6530
    %v6541 = vpack.c.b16 %v6533, %v6532
    %6550 = vmatpush.bf16.msra.mxu0 %v6541
    %6551 = vmatpush.bf16.msra.mxu0 %v6540
    %6552 = vmatpush.bf16.msra.mxu0 %v6539
    %6553 = vmatpush.bf16.msra.mxu0 %v6538
    %6554 = vmatpush.bf16.msra.mxu0 %v6537
    %6555 = vmatpush.bf16.msra.mxu0 %v6536
    %6556 = vmatpush.bf16.msra.mxu0 %v6535
    %6557 = vmatpush.bf16.msra.mxu0 %v6534
    %6558 = vmatmul.bf16.gmra.mxu0 %v6047
    %v6559 = vpop.f32.mrf.mxu0
    %v6560 = vadd.f32 0.0, %v6559
    %v6561 = vpop.f32.mrf.mxu0
    %v6562 = vadd.f32 0.0, %v6561
    %6563 = vmatmul.bf16.gmra.mxu0 %v6048
    %v6564 = vpop.f32.mrf.mxu0
    %v6565 = vadd.f32 0.0, %v6564
    %v6566 = vpop.f32.mrf.mxu0
    %v6567 = vadd.f32 0.0, %v6566
    %6568 = vmatmul.bf16.gmra.mxu0 %v6049
    %v6569 = vpop.f32.mrf.mxu0
    %v6570 = vadd.f32 0.0, %v6569
    %v6571 = vpop.f32.mrf.mxu0
    %v6572 = vadd.f32 0.0, %v6571
    %6573 = vmatmul.bf16.gmra.mxu0 %v6050
    %v6574 = vpop.f32.mrf.mxu0
    %v6575 = vadd.f32 0.0, %v6574
    %v6576 = vpop.f32.mrf.mxu0
    %6577 = vdwg.mxu0
    %s6578 = scalar_lea.vmem %s8, 104
    %v6579 = vld [vmem:[%s6578] sm:$0xf]
    %v6580 = vld [vmem:[%s6578 + $0x4] sm:$0xf]
    %v6581 = vld [vmem:[%s6578 + $0x8] sm:$0xf]
    %v6582 = vld [vmem:[%s6578 + $0xc] sm:$0xf]
    %v6583 = vld [vmem:[%s6578 + $0x10] sm:$0xf]
    %v6584 = vld [vmem:[%s6578 + $0x14] sm:$0xf]
    %v6585 = vld [vmem:[%s6578 + $0x18] sm:$0xf]
    %v6586 = vld [vmem:[%s6578 + $0x1c] sm:$0xf]
    %v6587 = vld [vmem:[%s6578 + $0x20] sm:$0xf]
    %v6588 = vld [vmem:[%s6578 + $0x24] sm:$0xf]
    %v6589 = vld [vmem:[%s6578 + $0x28] sm:$0xf]
    %v6590 = vld [vmem:[%s6578 + $0x2c] sm:$0xf]
    %v6591 = vld [vmem:[%s6578 + $0x30] sm:$0x1]
    %v6592 = vunpack.c.l.bf16 %v6579
    %v6593 = vunpack.c.l.bf16 %v6580
    %v6594 = vunpack.c.l.bf16 %v6581
    %v6595 = vunpack.c.l.bf16 %v6582
    %v6596 = vunpack.c.l.bf16 %v6583
    %v6597 = vunpack.c.l.bf16 %v6584
    %v6598 = vunpack.c.l.bf16 %v6585
    %v6599 = vunpack.c.l.bf16 %v6586
    %v6600 = vunpack.c.l.bf16 %v6587
    %v6601 = vunpack.c.l.bf16 %v6588
    %v6602 = vunpack.c.l.bf16 %v6589
    %v6603 = vunpack.c.l.bf16 %v6590
    %v6604 = vunpack.c.l.bf16 %v6591
    %v6606 = vsel %vm4020, %v6592, 0
    %v6609 = vsel %vm4020, %v6593, 0
    %v6612 = vsel %vm4020, %v6594, 0
    %v6615 = vsel %vm4020, %v6595, 0
    %v6618 = vsel %vm4020, %v6596, 0
    %v6621 = vsel %vm4020, %v6597, 0
    %v6624 = vsel %vm4020, %v6598, 0
    %v6627 = vsel %vm4020, %v6599, 0
    %v6630 = vsel %vm4020, %v6600, 0
    %v6633 = vsel %vm4020, %v6601, 0
    %v6636 = vsel %vm4020, %v6602, 0
    %v6639 = vsel %vm4020, %v6603, 0
    %v6642 = vsel %vm4020, %v6604, 0
    %v6645 = vsel %vm4042, %v6575, 0
    %6647 = vmatpush.msra.mxu0 0.0
    %6648 = vmatpush.msra.mxu0 0.0
    %6649 = vmatpush.msra.mxu0 0.0
    %6650 = vmatpush.msra.mxu0 0.0
    %6651 = vmatpush.msra.mxu0 0.0
    %6652 = vmatpush.msra.mxu0 0.0
    %6653 = vmatpush.msra.mxu0 0.0
    %6654 = vmatpush.msra.mxu0 0.0
    %6655 = vmatpush.msra.mxu0 0.0
    %6656 = vmatpush.msra.mxu0 %v6645
    %6657 = vmatpush.msra.mxu0 %v6572
    %6658 = vmatpush.msra.mxu0 %v6570
    %6659 = vmatpush.msra.mxu0 %v6567
    %6660 = vmatpush.msra.mxu0 %v6565
    %6661 = vmatpush.msra.mxu0 %v6562
    %6662 = vmatpush.msra.mxu0 %v6560
    %6663 = vmatmul.f32.gmra.mxu0 %v6606
    %v6664 = vpop.f32.mrf.mxu0
    %v6665 = vadd.f32 0.0, %v6664
    %6666 = vmatmul.f32.gmra.mxu0 %v6609
    %v6667 = vpop.f32.mrf.mxu0
    %v6668 = vadd.f32 0.0, %v6667
    %6669 = vmatmul.f32.gmra.mxu0 %v6612
    %v6670 = vpop.f32.mrf.mxu0
    %v6671 = vadd.f32 0.0, %v6670
    %6672 = vmatmul.f32.gmra.mxu0 %v6615
    %v6673 = vpop.f32.mrf.mxu0
    %v6674 = vadd.f32 0.0, %v6673
    %6675 = vmatmul.f32.gmra.mxu0 %v6618
    %v6676 = vpop.f32.mrf.mxu0
    %v6677 = vadd.f32 0.0, %v6676
    %6678 = vmatmul.f32.gmra.mxu0 %v6621
    %v6679 = vpop.f32.mrf.mxu0
    %v6680 = vadd.f32 0.0, %v6679
    %6681 = vmatmul.f32.gmra.mxu0 %v6624
    %v6682 = vpop.f32.mrf.mxu0
    %v6683 = vadd.f32 0.0, %v6682
    %6684 = vmatmul.f32.gmra.mxu0 %v6627
    %v6685 = vpop.f32.mrf.mxu0
    %v6686 = vadd.f32 0.0, %v6685
    %6687 = vmatmul.f32.gmra.mxu0 %v6630
    %v6688 = vpop.f32.mrf.mxu0
    %v6689 = vadd.f32 0.0, %v6688
    %6690 = vmatmul.f32.gmra.mxu0 %v6633
    %v6691 = vpop.f32.mrf.mxu0
    %v6692 = vadd.f32 0.0, %v6691
    %6693 = vmatmul.f32.gmra.mxu0 %v6636
    %v6694 = vpop.f32.mrf.mxu0
    %v6695 = vadd.f32 0.0, %v6694
    %6696 = vmatmul.f32.gmra.mxu0 %v6639
    %v6697 = vpop.f32.mrf.mxu0
    %v6698 = vadd.f32 0.0, %v6697
    %6699 = vmatmul.f32.gmra.mxu0 %v6642
    %v6700 = vpop.f32.mrf.mxu0
    %v6701 = vadd.f32 0.0, %v6700
    %6702 = vdwg.mxu0
    %v6703 = vadd.f32 %v6447, %v6665
    %v6704 = vadd.f32 %v6450, %v6668
    %v6705 = vadd.f32 %v6453, %v6671
    %v6706 = vadd.f32 %v6456, %v6674
    %v6707 = vadd.f32 %v6459, %v6677
    %v6708 = vadd.f32 %v6462, %v6680
    %v6709 = vadd.f32 %v6465, %v6683
    %v6710 = vadd.f32 %v6468, %v6686
    %v6711 = vadd.f32 %v6471, %v6689
    %v6712 = vadd.f32 %v6474, %v6692
    %v6713 = vadd.f32 %v6477, %v6695
    %v6714 = vadd.f32 %v6480, %v6698
    %v6715 = vadd.f32 %v6483, %v6701
    %s6716 = scalar_lea.vmem %s6, 192
    %v6717 = vld [vmem:[%s6716] sm:$0xf]
    %v6718 = vld [vmem:[%s6716 + $0x4] sm:$0xf]
    %v6719 = vld [vmem:[%s6716 + $0x8] sm:$0xf]
    %v6720 = vld [vmem:[%s6716 + $0xc] sm:$0xf]
    %v6721 = vld [vmem:[%s6716 + $0x10] sm:$0xf]
    %v6722 = vld [vmem:[%s6716 + $0x14] sm:$0xf]
    %v6723 = vld [vmem:[%s6716 + $0x18] sm:$0xf]
    %v6724 = vld [vmem:[%s6716 + $0x1c] sm:$0xf]
    %v6725 = vld [vmem:[%s6716 + $0x20] sm:$0xf]
    %v6726 = vld [vmem:[%s6716 + $0x24] sm:$0xf]
    %v6727 = vld [vmem:[%s6716 + $0x28] sm:$0xf]
    %v6728 = vld [vmem:[%s6716 + $0x2c] sm:$0xf]
    %v6729 = vld [vmem:[%s6716 + $0x30] sm:$0xf]
    %v6730 = vld [vmem:[%s6716 + $0x34] sm:$0xf]
    %v6731 = vld [vmem:[%s6716 + $0x38] sm:$0xf]
    %v6732 = vld [vmem:[%s6716 + $0x3c] sm:$0xf]
    %v6749 = vunpack.c.l.b16 %v6717
    %v6750 = vunpack.c.l.b16 %v6718
    %v6751 = vunpack.c.l.b16 %v6719
    %v6752 = vunpack.c.l.b16 %v6720
    %v6753 = vunpack.c.l.b16 %v6721
    %v6754 = vunpack.c.l.b16 %v6722
    %v6755 = vunpack.c.l.b16 %v6723
    %v6756 = vunpack.c.l.b16 %v6724
    %v6757 = vunpack.c.l.b16 %v6725
    %v6758 = vunpack.c.l.b16 %v6726
    %v6759 = vunpack.c.l.b16 %v6727
    %v6760 = vunpack.c.l.b16 %v6728
    %v6761 = vunpack.c.l.b16 %v6729
    %v6762 = vunpack.c.l.b16 %v6730
    %v6763 = vunpack.c.l.b16 %v6731
    %v6764 = vunpack.c.l.b16 %v6732
    %v6765 = vpack.c.b16 %v6750, %v6749
    %v6766 = vpack.c.b16 %v6752, %v6751
    %v6767 = vpack.c.b16 %v6754, %v6753
    %v6768 = vpack.c.b16 %v6756, %v6755
    %v6769 = vpack.c.b16 %v6758, %v6757
    %v6770 = vpack.c.b16 %v6760, %v6759
    %v6771 = vpack.c.b16 %v6762, %v6761
    %v6772 = vpack.c.b16 %v6764, %v6763
    %6781 = vmatpush.bf16.msra.mxu0 %v6772
    %6782 = vmatpush.bf16.msra.mxu0 %v6771
    %6783 = vmatpush.bf16.msra.mxu0 %v6770
    %6784 = vmatpush.bf16.msra.mxu0 %v6769
    %6785 = vmatpush.bf16.msra.mxu0 %v6768
    %6786 = vmatpush.bf16.msra.mxu0 %v6767
    %6787 = vmatpush.bf16.msra.mxu0 %v6766
    %6788 = vmatpush.bf16.msra.mxu0 %v6765
    %6789 = vmatmul.bf16.gmra.mxu0 %v6047
    %v6790 = vpop.f32.mrf.mxu0
    %v6791 = vadd.f32 0.0, %v6790
    %v6792 = vpop.f32.mrf.mxu0
    %v6793 = vadd.f32 0.0, %v6792
    %6794 = vmatmul.bf16.gmra.mxu0 %v6048
    %v6795 = vpop.f32.mrf.mxu0
    %v6796 = vadd.f32 0.0, %v6795
    %v6797 = vpop.f32.mrf.mxu0
    %v6798 = vadd.f32 0.0, %v6797
    %6799 = vmatmul.bf16.gmra.mxu0 %v6049
    %v6800 = vpop.f32.mrf.mxu0
    %v6801 = vadd.f32 0.0, %v6800
    %v6802 = vpop.f32.mrf.mxu0
    %v6803 = vadd.f32 0.0, %v6802
    %6804 = vmatmul.bf16.gmra.mxu0 %v6050
    %v6805 = vpop.f32.mrf.mxu0
    %v6806 = vadd.f32 0.0, %v6805
    %v6807 = vpop.f32.mrf.mxu0
    %6808 = vdwg.mxu0
    %s6809 = scalar_lea.vmem %s8, 156
    %v6810 = vld [vmem:[%s6809] sm:$0xf]
    %v6811 = vld [vmem:[%s6809 + $0x4] sm:$0xf]
    %v6812 = vld [vmem:[%s6809 + $0x8] sm:$0xf]
    %v6813 = vld [vmem:[%s6809 + $0xc] sm:$0xf]
    %v6814 = vld [vmem:[%s6809 + $0x10] sm:$0xf]
    %v6815 = vld [vmem:[%s6809 + $0x14] sm:$0xf]
    %v6816 = vld [vmem:[%s6809 + $0x18] sm:$0xf]
    %v6817 = vld [vmem:[%s6809 + $0x1c] sm:$0xf]
    %v6818 = vld [vmem:[%s6809 + $0x20] sm:$0xf]
    %v6819 = vld [vmem:[%s6809 + $0x24] sm:$0xf]
    %v6820 = vld [vmem:[%s6809 + $0x28] sm:$0xf]
    %v6821 = vld [vmem:[%s6809 + $0x2c] sm:$0xf]
    %v6822 = vld [vmem:[%s6809 + $0x30] sm:$0x1]
    %v6823 = vunpack.c.l.bf16 %v6810
    %v6824 = vunpack.c.l.bf16 %v6811
    %v6825 = vunpack.c.l.bf16 %v6812
    %v6826 = vunpack.c.l.bf16 %v6813
    %v6827 = vunpack.c.l.bf16 %v6814
    %v6828 = vunpack.c.l.bf16 %v6815
    %v6829 = vunpack.c.l.bf16 %v6816
    %v6830 = vunpack.c.l.bf16 %v6817
    %v6831 = vunpack.c.l.bf16 %v6818
    %v6832 = vunpack.c.l.bf16 %v6819
    %v6833 = vunpack.c.l.bf16 %v6820
    %v6834 = vunpack.c.l.bf16 %v6821
    %v6835 = vunpack.c.l.bf16 %v6822
    %v6837 = vsel %vm4020, %v6823, 0
    %v6840 = vsel %vm4020, %v6824, 0
    %v6843 = vsel %vm4020, %v6825, 0
    %v6846 = vsel %vm4020, %v6826, 0
    %v6849 = vsel %vm4020, %v6827, 0
    %v6852 = vsel %vm4020, %v6828, 0
    %v6855 = vsel %vm4020, %v6829, 0
    %v6858 = vsel %vm4020, %v6830, 0
    %v6861 = vsel %vm4020, %v6831, 0
    %v6864 = vsel %vm4020, %v6832, 0
    %v6867 = vsel %vm4020, %v6833, 0
    %v6870 = vsel %vm4020, %v6834, 0
    %v6873 = vsel %vm4020, %v6835, 0
    %v6876 = vsel %vm4042, %v6806, 0
    %6878 = vmatpush.msra.mxu0 0.0
    %6879 = vmatpush.msra.mxu0 0.0
    %6880 = vmatpush.msra.mxu0 0.0
    %6881 = vmatpush.msra.mxu0 0.0
    %6882 = vmatpush.msra.mxu0 0.0
    %6883 = vmatpush.msra.mxu0 0.0
    %6884 = vmatpush.msra.mxu0 0.0
    %6885 = vmatpush.msra.mxu0 0.0
    %6886 = vmatpush.msra.mxu0 0.0
    %6887 = vmatpush.msra.mxu0 %v6876
    %6888 = vmatpush.msra.mxu0 %v6803
    %6889 = vmatpush.msra.mxu0 %v6801
    %6890 = vmatpush.msra.mxu0 %v6798
    %6891 = vmatpush.msra.mxu0 %v6796
    %6892 = vmatpush.msra.mxu0 %v6793
    %6893 = vmatpush.msra.mxu0 %v6791
    %6894 = vmatmul.f32.gmra.mxu0 %v6837
    %v6895 = vpop.f32.mrf.mxu0
    %v6896 = vadd.f32 0.0, %v6895
    %6897 = vmatmul.f32.gmra.mxu0 %v6840
    %v6898 = vpop.f32.mrf.mxu0
    %v6899 = vadd.f32 0.0, %v6898
    %6900 = vmatmul.f32.gmra.mxu0 %v6843
    %v6901 = vpop.f32.mrf.mxu0
    %v6902 = vadd.f32 0.0, %v6901
    %6903 = vmatmul.f32.gmra.mxu0 %v6846
    %v6904 = vpop.f32.mrf.mxu0
    %v6905 = vadd.f32 0.0, %v6904
    %6906 = vmatmul.f32.gmra.mxu0 %v6849
    %v6907 = vpop.f32.mrf.mxu0
    %v6908 = vadd.f32 0.0, %v6907
    %6909 = vmatmul.f32.gmra.mxu0 %v6852
    %v6910 = vpop.f32.mrf.mxu0
    %v6911 = vadd.f32 0.0, %v6910
    %6912 = vmatmul.f32.gmra.mxu0 %v6855
    %v6913 = vpop.f32.mrf.mxu0
    %v6914 = vadd.f32 0.0, %v6913
    %6915 = vmatmul.f32.gmra.mxu0 %v6858
    %v6916 = vpop.f32.mrf.mxu0
    %v6917 = vadd.f32 0.0, %v6916
    %6918 = vmatmul.f32.gmra.mxu0 %v6861
    %v6919 = vpop.f32.mrf.mxu0
    %v6920 = vadd.f32 0.0, %v6919
    %6921 = vmatmul.f32.gmra.mxu0 %v6864
    %v6922 = vpop.f32.mrf.mxu0
    %v6923 = vadd.f32 0.0, %v6922
    %6924 = vmatmul.f32.gmra.mxu0 %v6867
    %v6925 = vpop.f32.mrf.mxu0
    %v6926 = vadd.f32 0.0, %v6925
    %6927 = vmatmul.f32.gmra.mxu0 %v6870
    %v6928 = vpop.f32.mrf.mxu0
    %v6929 = vadd.f32 0.0, %v6928
    %6930 = vmatmul.f32.gmra.mxu0 %v6873
    %v6931 = vpop.f32.mrf.mxu0
    %v6932 = vadd.f32 0.0, %v6931
    %6933 = vdwg.mxu0
    %v6934 = vadd.f32 %v6703, %v6896
    %v6935 = vadd.f32 %v6704, %v6899
    %v6936 = vadd.f32 %v6705, %v6902
    %v6937 = vadd.f32 %v6706, %v6905
    %v6938 = vadd.f32 %v6707, %v6908
    %v6939 = vadd.f32 %v6708, %v6911
    %v6940 = vadd.f32 %v6709, %v6914
    %v6941 = vadd.f32 %v6710, %v6917
    %v6942 = vadd.f32 %v6711, %v6920
    %v6943 = vadd.f32 %v6712, %v6923
    %v6944 = vadd.f32 %v6713, %v6926
    %v6945 = vadd.f32 %v6714, %v6929
    %v6946 = vadd.f32 %v6715, %v6932
    %s6947 = scalar_lea.vmem %s6, 256
    %v6948 = vld [vmem:[%s6947] sm:$0xf]
    %v6949 = vld [vmem:[%s6947 + $0x4] sm:$0xf]
    %v6950 = vld [vmem:[%s6947 + $0x8] sm:$0xf]
    %v6951 = vld [vmem:[%s6947 + $0xc] sm:$0xf]
    %v6952 = vld [vmem:[%s6947 + $0x10] sm:$0xf]
    %v6953 = vld [vmem:[%s6947 + $0x14] sm:$0xf]
    %v6954 = vld [vmem:[%s6947 + $0x18] sm:$0xf]
    %v6955 = vld [vmem:[%s6947 + $0x1c] sm:$0xf]
    %v6956 = vld [vmem:[%s6947 + $0x20] sm:$0xf]
    %v6957 = vld [vmem:[%s6947 + $0x24] sm:$0xf]
    %v6958 = vld [vmem:[%s6947 + $0x28] sm:$0xf]
    %v6959 = vld [vmem:[%s6947 + $0x2c] sm:$0xf]
    %v6960 = vld [vmem:[%s6947 + $0x30] sm:$0xf]
    %v6961 = vld [vmem:[%s6947 + $0x34] sm:$0xf]
    %v6962 = vld [vmem:[%s6947 + $0x38] sm:$0xf]
    %v6963 = vld [vmem:[%s6947 + $0x3c] sm:$0xf]
    %v6980 = vunpack.c.l.b16 %v6948
    %v6981 = vunpack.c.l.b16 %v6949
    %v6982 = vunpack.c.l.b16 %v6950
    %v6983 = vunpack.c.l.b16 %v6951
    %v6984 = vunpack.c.l.b16 %v6952
    %v6985 = vunpack.c.l.b16 %v6953
    %v6986 = vunpack.c.l.b16 %v6954
    %v6987 = vunpack.c.l.b16 %v6955
    %v6988 = vunpack.c.l.b16 %v6956
    %v6989 = vunpack.c.l.b16 %v6957
    %v6990 = vunpack.c.l.b16 %v6958
    %v6991 = vunpack.c.l.b16 %v6959
    %v6992 = vunpack.c.l.b16 %v6960
    %v6993 = vunpack.c.l.b16 %v6961
    %v6994 = vunpack.c.l.b16 %v6962
    %v6995 = vunpack.c.l.b16 %v6963
    %v6996 = vpack.c.b16 %v6981, %v6980
    %v6997 = vpack.c.b16 %v6983, %v6982
    %v6998 = vpack.c.b16 %v6985, %v6984
    %v6999 = vpack.c.b16 %v6987, %v6986
    %v7000 = vpack.c.b16 %v6989, %v6988
    %v7001 = vpack.c.b16 %v6991, %v6990
    %v7002 = vpack.c.b16 %v6993, %v6992
    %v7003 = vpack.c.b16 %v6995, %v6994
    %7012 = vmatpush.bf16.msra.mxu0 %v7003
    %7013 = vmatpush.bf16.msra.mxu0 %v7002
    %7014 = vmatpush.bf16.msra.mxu0 %v7001
    %7015 = vmatpush.bf16.msra.mxu0 %v7000
    %7016 = vmatpush.bf16.msra.mxu0 %v6999
    %7017 = vmatpush.bf16.msra.mxu0 %v6998
    %7018 = vmatpush.bf16.msra.mxu0 %v6997
    %7019 = vmatpush.bf16.msra.mxu0 %v6996
    %7020 = vmatmul.bf16.gmra.mxu0 %v6047
    %v7021 = vpop.f32.mrf.mxu0
    %v7022 = vadd.f32 0.0, %v7021
    %v7023 = vpop.f32.mrf.mxu0
    %v7024 = vadd.f32 0.0, %v7023
    %7025 = vmatmul.bf16.gmra.mxu0 %v6048
    %v7026 = vpop.f32.mrf.mxu0
    %v7027 = vadd.f32 0.0, %v7026
    %v7028 = vpop.f32.mrf.mxu0
    %v7029 = vadd.f32 0.0, %v7028
    %7030 = vmatmul.bf16.gmra.mxu0 %v6049
    %v7031 = vpop.f32.mrf.mxu0
    %v7032 = vadd.f32 0.0, %v7031
    %v7033 = vpop.f32.mrf.mxu0
    %v7034 = vadd.f32 0.0, %v7033
    %7035 = vmatmul.bf16.gmra.mxu0 %v6050
    %v7036 = vpop.f32.mrf.mxu0
    %v7037 = vadd.f32 0.0, %v7036
    %v7038 = vpop.f32.mrf.mxu0
    %7039 = vdwg.mxu0
    %s7040 = scalar_lea.vmem %s8, 208
    %v7041 = vld [vmem:[%s7040] sm:$0xf]
    %v7042 = vld [vmem:[%s7040 + $0x4] sm:$0xf]
    %v7043 = vld [vmem:[%s7040 + $0x8] sm:$0xf]
    %v7044 = vld [vmem:[%s7040 + $0xc] sm:$0xf]
    %v7045 = vld [vmem:[%s7040 + $0x10] sm:$0xf]
    %v7046 = vld [vmem:[%s7040 + $0x14] sm:$0xf]
    %v7047 = vld [vmem:[%s7040 + $0x18] sm:$0xf]
    %v7048 = vld [vmem:[%s7040 + $0x1c] sm:$0xf]
    %v7049 = vld [vmem:[%s7040 + $0x20] sm:$0xf]
    %v7050 = vld [vmem:[%s7040 + $0x24] sm:$0xf]
    %v7051 = vld [vmem:[%s7040 + $0x28] sm:$0xf]
    %v7052 = vld [vmem:[%s7040 + $0x2c] sm:$0xf]
    %v7053 = vld [vmem:[%s7040 + $0x30] sm:$0x1]
    %v7054 = vunpack.c.l.bf16 %v7041
    %v7055 = vunpack.c.l.bf16 %v7042
    %v7056 = vunpack.c.l.bf16 %v7043
    %v7057 = vunpack.c.l.bf16 %v7044
    %v7058 = vunpack.c.l.bf16 %v7045
    %v7059 = vunpack.c.l.bf16 %v7046
    %v7060 = vunpack.c.l.bf16 %v7047
    %v7061 = vunpack.c.l.bf16 %v7048
    %v7062 = vunpack.c.l.bf16 %v7049
    %v7063 = vunpack.c.l.bf16 %v7050
    %v7064 = vunpack.c.l.bf16 %v7051
    %v7065 = vunpack.c.l.bf16 %v7052
    %v7066 = vunpack.c.l.bf16 %v7053
    %v7068 = vsel %vm4020, %v7054, 0
    %v7071 = vsel %vm4020, %v7055, 0
    %v7074 = vsel %vm4020, %v7056, 0
    %v7077 = vsel %vm4020, %v7057, 0
    %v7080 = vsel %vm4020, %v7058, 0
    %v7083 = vsel %vm4020, %v7059, 0
    %v7086 = vsel %vm4020, %v7060, 0
    %v7089 = vsel %vm4020, %v7061, 0
    %v7092 = vsel %vm4020, %v7062, 0
    %v7095 = vsel %vm4020, %v7063, 0
    %v7098 = vsel %vm4020, %v7064, 0
    %v7101 = vsel %vm4020, %v7065, 0
    %v7104 = vsel %vm4020, %v7066, 0
    %v7107 = vsel %vm4042, %v7037, 0
    %7109 = vmatpush.msra.mxu0 0.0
    %7110 = vmatpush.msra.mxu0 0.0
    %7111 = vmatpush.msra.mxu0 0.0
    %7112 = vmatpush.msra.mxu0 0.0
    %7113 = vmatpush.msra.mxu0 0.0
    %7114 = vmatpush.msra.mxu0 0.0
    %7115 = vmatpush.msra.mxu0 0.0
    %7116 = vmatpush.msra.mxu0 0.0
    %7117 = vmatpush.msra.mxu0 0.0
    %7118 = vmatpush.msra.mxu0 %v7107
    %7119 = vmatpush.msra.mxu0 %v7034
    %7120 = vmatpush.msra.mxu0 %v7032
    %7121 = vmatpush.msra.mxu0 %v7029
    %7122 = vmatpush.msra.mxu0 %v7027
    %7123 = vmatpush.msra.mxu0 %v7024
    %7124 = vmatpush.msra.mxu0 %v7022
    %7125 = vmatmul.f32.gmra.mxu0 %v7068
    %v7126 = vpop.f32.mrf.mxu0
    %v7127 = vadd.f32 0.0, %v7126
    %7128 = vmatmul.f32.gmra.mxu0 %v7071
    %v7129 = vpop.f32.mrf.mxu0
    %v7130 = vadd.f32 0.0, %v7129
    %7131 = vmatmul.f32.gmra.mxu0 %v7074
    %v7132 = vpop.f32.mrf.mxu0
    %v7133 = vadd.f32 0.0, %v7132
    %7134 = vmatmul.f32.gmra.mxu0 %v7077
    %v7135 = vpop.f32.mrf.mxu0
    %v7136 = vadd.f32 0.0, %v7135
    %7137 = vmatmul.f32.gmra.mxu0 %v7080
    %v7138 = vpop.f32.mrf.mxu0
    %v7139 = vadd.f32 0.0, %v7138
    %7140 = vmatmul.f32.gmra.mxu0 %v7083
    %v7141 = vpop.f32.mrf.mxu0
    %v7142 = vadd.f32 0.0, %v7141
    %7143 = vmatmul.f32.gmra.mxu0 %v7086
    %v7144 = vpop.f32.mrf.mxu0
    %v7145 = vadd.f32 0.0, %v7144
    %7146 = vmatmul.f32.gmra.mxu0 %v7089
    %v7147 = vpop.f32.mrf.mxu0
    %v7148 = vadd.f32 0.0, %v7147
    %7149 = vmatmul.f32.gmra.mxu0 %v7092
    %v7150 = vpop.f32.mrf.mxu0
    %v7151 = vadd.f32 0.0, %v7150
    %7152 = vmatmul.f32.gmra.mxu0 %v7095
    %v7153 = vpop.f32.mrf.mxu0
    %v7154 = vadd.f32 0.0, %v7153
    %7155 = vmatmul.f32.gmra.mxu0 %v7098
    %v7156 = vpop.f32.mrf.mxu0
    %v7157 = vadd.f32 0.0, %v7156
    %7158 = vmatmul.f32.gmra.mxu0 %v7101
    %v7159 = vpop.f32.mrf.mxu0
    %v7160 = vadd.f32 0.0, %v7159
    %7161 = vmatmul.f32.gmra.mxu0 %v7104
    %v7162 = vpop.f32.mrf.mxu0
    %v7163 = vadd.f32 0.0, %v7162
    %7164 = vdwg.mxu0
    %v7165 = vadd.f32 %v6934, %v7127
    %v7166 = vadd.f32 %v6935, %v7130
    %v7167 = vadd.f32 %v6936, %v7133
    %v7168 = vadd.f32 %v6937, %v7136
    %v7169 = vadd.f32 %v6938, %v7139
    %v7170 = vadd.f32 %v6939, %v7142
    %v7171 = vadd.f32 %v6940, %v7145
    %v7172 = vadd.f32 %v6941, %v7148
    %v7173 = vadd.f32 %v6942, %v7151
    %v7174 = vadd.f32 %v6943, %v7154
    %v7175 = vadd.f32 %v6944, %v7157
    %v7176 = vadd.f32 %v6945, %v7160
    %v7177 = vadd.f32 %v6946, %v7163
    %s7178 = scalar_lea.vmem %s6, 320
    %v7179 = vld [vmem:[%s7178] sm:$0xf]
    %v7180 = vld [vmem:[%s7178 + $0x4] sm:$0xf]
    %v7181 = vld [vmem:[%s7178 + $0x8] sm:$0xf]
    %v7182 = vld [vmem:[%s7178 + $0xc] sm:$0xf]
    %v7183 = vld [vmem:[%s7178 + $0x10] sm:$0xf]
    %v7184 = vld [vmem:[%s7178 + $0x14] sm:$0xf]
    %v7185 = vld [vmem:[%s7178 + $0x18] sm:$0xf]
    %v7186 = vld [vmem:[%s7178 + $0x1c] sm:$0xf]
    %v7187 = vld [vmem:[%s7178 + $0x20] sm:$0xf]
    %v7188 = vld [vmem:[%s7178 + $0x24] sm:$0xf]
    %v7189 = vld [vmem:[%s7178 + $0x28] sm:$0xf]
    %v7190 = vld [vmem:[%s7178 + $0x2c] sm:$0xf]
    %v7191 = vld [vmem:[%s7178 + $0x30] sm:$0xf]
    %v7192 = vld [vmem:[%s7178 + $0x34] sm:$0xf]
    %v7193 = vld [vmem:[%s7178 + $0x38] sm:$0xf]
    %v7194 = vld [vmem:[%s7178 + $0x3c] sm:$0xf]
    %v7211 = vunpack.c.l.b16 %v7179
    %v7212 = vunpack.c.l.b16 %v7180
    %v7213 = vunpack.c.l.b16 %v7181
    %v7214 = vunpack.c.l.b16 %v7182
    %v7215 = vunpack.c.l.b16 %v7183
    %v7216 = vunpack.c.l.b16 %v7184
    %v7217 = vunpack.c.l.b16 %v7185
    %v7218 = vunpack.c.l.b16 %v7186
    %v7219 = vunpack.c.l.b16 %v7187
    %v7220 = vunpack.c.l.b16 %v7188
    %v7221 = vunpack.c.l.b16 %v7189
    %v7222 = vunpack.c.l.b16 %v7190
    %v7223 = vunpack.c.l.b16 %v7191
    %v7224 = vunpack.c.l.b16 %v7192
    %v7225 = vunpack.c.l.b16 %v7193
    %v7226 = vunpack.c.l.b16 %v7194
    %v7227 = vpack.c.b16 %v7212, %v7211
    %v7228 = vpack.c.b16 %v7214, %v7213
    %v7229 = vpack.c.b16 %v7216, %v7215
    %v7230 = vpack.c.b16 %v7218, %v7217
    %v7231 = vpack.c.b16 %v7220, %v7219
    %v7232 = vpack.c.b16 %v7222, %v7221
    %v7233 = vpack.c.b16 %v7224, %v7223
    %v7234 = vpack.c.b16 %v7226, %v7225
    %7243 = vmatpush.bf16.msra.mxu0 %v7234
    %7244 = vmatpush.bf16.msra.mxu0 %v7233
    %7245 = vmatpush.bf16.msra.mxu0 %v7232
    %7246 = vmatpush.bf16.msra.mxu0 %v7231
    %7247 = vmatpush.bf16.msra.mxu0 %v7230
    %7248 = vmatpush.bf16.msra.mxu0 %v7229
    %7249 = vmatpush.bf16.msra.mxu0 %v7228
    %7250 = vmatpush.bf16.msra.mxu0 %v7227
    %7251 = vmatmul.bf16.gmra.mxu0 %v6047
    %v7252 = vpop.f32.mrf.mxu0
    %v7253 = vadd.f32 0.0, %v7252
    %v7254 = vpop.f32.mrf.mxu0
    %v7255 = vadd.f32 0.0, %v7254
    %7256 = vmatmul.bf16.gmra.mxu0 %v6048
    %v7257 = vpop.f32.mrf.mxu0
    %v7258 = vadd.f32 0.0, %v7257
    %v7259 = vpop.f32.mrf.mxu0
    %v7260 = vadd.f32 0.0, %v7259
    %7261 = vmatmul.bf16.gmra.mxu0 %v6049
    %v7262 = vpop.f32.mrf.mxu0
    %v7263 = vadd.f32 0.0, %v7262
    %v7264 = vpop.f32.mrf.mxu0
    %v7265 = vadd.f32 0.0, %v7264
    %7266 = vmatmul.bf16.gmra.mxu0 %v6050
    %v7267 = vpop.f32.mrf.mxu0
    %v7268 = vadd.f32 0.0, %v7267
    %v7269 = vpop.f32.mrf.mxu0
    %7270 = vdwg.mxu0
    %s7271 = scalar_lea.vmem %s8, 260
    %v7272 = vld [vmem:[%s7271] sm:$0xf]
    %v7273 = vld [vmem:[%s7271 + $0x4] sm:$0xf]
    %v7274 = vld [vmem:[%s7271 + $0x8] sm:$0xf]
    %v7275 = vld [vmem:[%s7271 + $0xc] sm:$0xf]
    %v7276 = vld [vmem:[%s7271 + $0x10] sm:$0xf]
    %v7277 = vld [vmem:[%s7271 + $0x14] sm:$0xf]
    %v7278 = vld [vmem:[%s7271 + $0x18] sm:$0xf]
    %v7279 = vld [vmem:[%s7271 + $0x1c] sm:$0xf]
    %v7280 = vld [vmem:[%s7271 + $0x20] sm:$0xf]
    %v7281 = vld [vmem:[%s7271 + $0x24] sm:$0xf]
    %v7282 = vld [vmem:[%s7271 + $0x28] sm:$0xf]
    %v7283 = vld [vmem:[%s7271 + $0x2c] sm:$0xf]
    %v7284 = vld [vmem:[%s7271 + $0x30] sm:$0x1]
    %v7285 = vunpack.c.l.bf16 %v7272
    %v7286 = vunpack.c.l.bf16 %v7273
    %v7287 = vunpack.c.l.bf16 %v7274
    %v7288 = vunpack.c.l.bf16 %v7275
    %v7289 = vunpack.c.l.bf16 %v7276
    %v7290 = vunpack.c.l.bf16 %v7277
    %v7291 = vunpack.c.l.bf16 %v7278
    %v7292 = vunpack.c.l.bf16 %v7279
    %v7293 = vunpack.c.l.bf16 %v7280
    %v7294 = vunpack.c.l.bf16 %v7281
    %v7295 = vunpack.c.l.bf16 %v7282
    %v7296 = vunpack.c.l.bf16 %v7283
    %v7297 = vunpack.c.l.bf16 %v7284
    %v7299 = vsel %vm4020, %v7285, 0
    %v7302 = vsel %vm4020, %v7286, 0
    %v7305 = vsel %vm4020, %v7287, 0
    %v7308 = vsel %vm4020, %v7288, 0
    %v7311 = vsel %vm4020, %v7289, 0
    %v7314 = vsel %vm4020, %v7290, 0
    %v7317 = vsel %vm4020, %v7291, 0
    %v7320 = vsel %vm4020, %v7292, 0
    %v7323 = vsel %vm4020, %v7293, 0
    %v7326 = vsel %vm4020, %v7294, 0
    %v7329 = vsel %vm4020, %v7295, 0
    %v7332 = vsel %vm4020, %v7296, 0
    %v7335 = vsel %vm4020, %v7297, 0
    %v7338 = vsel %vm4042, %v7268, 0
    %7340 = vmatpush.msra.mxu0 0.0
    %7341 = vmatpush.msra.mxu0 0.0
    %7342 = vmatpush.msra.mxu0 0.0
    %7343 = vmatpush.msra.mxu0 0.0
    %7344 = vmatpush.msra.mxu0 0.0
    %7345 = vmatpush.msra.mxu0 0.0
    %7346 = vmatpush.msra.mxu0 0.0
    %7347 = vmatpush.msra.mxu0 0.0
    %7348 = vmatpush.msra.mxu0 0.0
    %7349 = vmatpush.msra.mxu0 %v7338
    %7350 = vmatpush.msra.mxu0 %v7265
    %7351 = vmatpush.msra.mxu0 %v7263
    %7352 = vmatpush.msra.mxu0 %v7260
    %7353 = vmatpush.msra.mxu0 %v7258
    %7354 = vmatpush.msra.mxu0 %v7255
    %7355 = vmatpush.msra.mxu0 %v7253
    %7356 = vmatmul.f32.gmra.mxu0 %v7299
    %v7357 = vpop.f32.mrf.mxu0
    %v7358 = vadd.f32 0.0, %v7357
    %7359 = vmatmul.f32.gmra.mxu0 %v7302
    %v7360 = vpop.f32.mrf.mxu0
    %v7361 = vadd.f32 0.0, %v7360
    %7362 = vmatmul.f32.gmra.mxu0 %v7305
    %v7363 = vpop.f32.mrf.mxu0
    %v7364 = vadd.f32 0.0, %v7363
    %7365 = vmatmul.f32.gmra.mxu0 %v7308
    %v7366 = vpop.f32.mrf.mxu0
    %v7367 = vadd.f32 0.0, %v7366
    %7368 = vmatmul.f32.gmra.mxu0 %v7311
    %v7369 = vpop.f32.mrf.mxu0
    %v7370 = vadd.f32 0.0, %v7369
    %7371 = vmatmul.f32.gmra.mxu0 %v7314
    %v7372 = vpop.f32.mrf.mxu0
    %v7373 = vadd.f32 0.0, %v7372
    %7374 = vmatmul.f32.gmra.mxu0 %v7317
    %v7375 = vpop.f32.mrf.mxu0
    %v7376 = vadd.f32 0.0, %v7375
    %7377 = vmatmul.f32.gmra.mxu0 %v7320
    %v7378 = vpop.f32.mrf.mxu0
    %v7379 = vadd.f32 0.0, %v7378
    %7380 = vmatmul.f32.gmra.mxu0 %v7323
    %v7381 = vpop.f32.mrf.mxu0
    %v7382 = vadd.f32 0.0, %v7381
    %7383 = vmatmul.f32.gmra.mxu0 %v7326
    %v7384 = vpop.f32.mrf.mxu0
    %v7385 = vadd.f32 0.0, %v7384
    %7386 = vmatmul.f32.gmra.mxu0 %v7329
    %v7387 = vpop.f32.mrf.mxu0
    %v7388 = vadd.f32 0.0, %v7387
    %7389 = vmatmul.f32.gmra.mxu0 %v7332
    %v7390 = vpop.f32.mrf.mxu0
    %v7391 = vadd.f32 0.0, %v7390
    %7392 = vmatmul.f32.gmra.mxu0 %v7335
    %v7393 = vpop.f32.mrf.mxu0
    %v7394 = vadd.f32 0.0, %v7393
    %7395 = vdwg.mxu0
    %v7396 = vadd.f32 %v7165, %v7358
    %v7397 = vadd.f32 %v7166, %v7361
    %v7398 = vadd.f32 %v7167, %v7364
    %v7399 = vadd.f32 %v7168, %v7367
    %v7400 = vadd.f32 %v7169, %v7370
    %v7401 = vadd.f32 %v7170, %v7373
    %v7402 = vadd.f32 %v7171, %v7376
    %v7403 = vadd.f32 %v7172, %v7379
    %v7404 = vadd.f32 %v7173, %v7382
    %v7405 = vadd.f32 %v7174, %v7385
    %v7406 = vadd.f32 %v7175, %v7388
    %v7407 = vadd.f32 %v7176, %v7391
    %v7408 = vadd.f32 %v7177, %v7394
    %s7409 = scalar_lea.vmem %s6, 384
    %v7410 = vld [vmem:[%s7409] sm:$0xf]
    %v7411 = vld [vmem:[%s7409 + $0x4] sm:$0xf]
    %v7412 = vld [vmem:[%s7409 + $0x8] sm:$0xf]
    %v7413 = vld [vmem:[%s7409 + $0xc] sm:$0xf]
    %v7414 = vld [vmem:[%s7409 + $0x10] sm:$0xf]
    %v7415 = vld [vmem:[%s7409 + $0x14] sm:$0xf]
    %v7416 = vld [vmem:[%s7409 + $0x18] sm:$0xf]
    %v7417 = vld [vmem:[%s7409 + $0x1c] sm:$0xf]
    %v7418 = vld [vmem:[%s7409 + $0x20] sm:$0xf]
    %v7419 = vld [vmem:[%s7409 + $0x24] sm:$0xf]
    %v7420 = vld [vmem:[%s7409 + $0x28] sm:$0xf]
    %v7421 = vld [vmem:[%s7409 + $0x2c] sm:$0xf]
    %v7422 = vld [vmem:[%s7409 + $0x30] sm:$0xf]
    %v7423 = vld [vmem:[%s7409 + $0x34] sm:$0xf]
    %v7424 = vld [vmem:[%s7409 + $0x38] sm:$0xf]
    %v7425 = vld [vmem:[%s7409 + $0x3c] sm:$0xf]
    %v7442 = vunpack.c.l.b16 %v7410
    %v7443 = vunpack.c.l.b16 %v7411
    %v7444 = vunpack.c.l.b16 %v7412
    %v7445 = vunpack.c.l.b16 %v7413
    %v7446 = vunpack.c.l.b16 %v7414
    %v7447 = vunpack.c.l.b16 %v7415
    %v7448 = vunpack.c.l.b16 %v7416
    %v7449 = vunpack.c.l.b16 %v7417
    %v7450 = vunpack.c.l.b16 %v7418
    %v7451 = vunpack.c.l.b16 %v7419
    %v7452 = vunpack.c.l.b16 %v7420
    %v7453 = vunpack.c.l.b16 %v7421
    %v7454 = vunpack.c.l.b16 %v7422
    %v7455 = vunpack.c.l.b16 %v7423
    %v7456 = vunpack.c.l.b16 %v7424
    %v7457 = vunpack.c.l.b16 %v7425
    %v7458 = vpack.c.b16 %v7443, %v7442
    %v7459 = vpack.c.b16 %v7445, %v7444
    %v7460 = vpack.c.b16 %v7447, %v7446
    %v7461 = vpack.c.b16 %v7449, %v7448
    %v7462 = vpack.c.b16 %v7451, %v7450
    %v7463 = vpack.c.b16 %v7453, %v7452
    %v7464 = vpack.c.b16 %v7455, %v7454
    %v7465 = vpack.c.b16 %v7457, %v7456
    %7474 = vmatpush.bf16.msra.mxu0 %v7465
    %7475 = vmatpush.bf16.msra.mxu0 %v7464
    %7476 = vmatpush.bf16.msra.mxu0 %v7463
    %7477 = vmatpush.bf16.msra.mxu0 %v7462
    %7478 = vmatpush.bf16.msra.mxu0 %v7461
    %7479 = vmatpush.bf16.msra.mxu0 %v7460
    %7480 = vmatpush.bf16.msra.mxu0 %v7459
    %7481 = vmatpush.bf16.msra.mxu0 %v7458
    %7482 = vmatmul.bf16.gmra.mxu0 %v6047
    %v7483 = vpop.f32.mrf.mxu0
    %v7484 = vadd.f32 0.0, %v7483
    %v7485 = vpop.f32.mrf.mxu0
    %v7486 = vadd.f32 0.0, %v7485
    %7487 = vmatmul.bf16.gmra.mxu0 %v6048
    %v7488 = vpop.f32.mrf.mxu0
    %v7489 = vadd.f32 0.0, %v7488
    %v7490 = vpop.f32.mrf.mxu0
    %v7491 = vadd.f32 0.0, %v7490
    %7492 = vmatmul.bf16.gmra.mxu0 %v6049
    %v7493 = vpop.f32.mrf.mxu0
    %v7494 = vadd.f32 0.0, %v7493
    %v7495 = vpop.f32.mrf.mxu0
    %v7496 = vadd.f32 0.0, %v7495
    %7497 = vmatmul.bf16.gmra.mxu0 %v6050
    %v7498 = vpop.f32.mrf.mxu0
    %v7499 = vadd.f32 0.0, %v7498
    %v7500 = vpop.f32.mrf.mxu0
    %7501 = vdwg.mxu0
    %s7502 = scalar_lea.vmem %s8, 312
    %v7503 = vld [vmem:[%s7502] sm:$0xf]
    %v7504 = vld [vmem:[%s7502 + $0x4] sm:$0xf]
    %v7505 = vld [vmem:[%s7502 + $0x8] sm:$0xf]
    %v7506 = vld [vmem:[%s7502 + $0xc] sm:$0xf]
    %v7507 = vld [vmem:[%s7502 + $0x10] sm:$0xf]
    %v7508 = vld [vmem:[%s7502 + $0x14] sm:$0xf]
    %v7509 = vld [vmem:[%s7502 + $0x18] sm:$0xf]
    %v7510 = vld [vmem:[%s7502 + $0x1c] sm:$0xf]
    %v7511 = vld [vmem:[%s7502 + $0x20] sm:$0xf]
    %v7512 = vld [vmem:[%s7502 + $0x24] sm:$0xf]
    %v7513 = vld [vmem:[%s7502 + $0x28] sm:$0xf]
    %v7514 = vld [vmem:[%s7502 + $0x2c] sm:$0xf]
    %v7515 = vld [vmem:[%s7502 + $0x30] sm:$0x1]
    %v7516 = vunpack.c.l.bf16 %v7503
    %v7517 = vunpack.c.l.bf16 %v7504
    %v7518 = vunpack.c.l.bf16 %v7505
    %v7519 = vunpack.c.l.bf16 %v7506
    %v7520 = vunpack.c.l.bf16 %v7507
    %v7521 = vunpack.c.l.bf16 %v7508
    %v7522 = vunpack.c.l.bf16 %v7509
    %v7523 = vunpack.c.l.bf16 %v7510
    %v7524 = vunpack.c.l.bf16 %v7511
    %v7525 = vunpack.c.l.bf16 %v7512
    %v7526 = vunpack.c.l.bf16 %v7513
    %v7527 = vunpack.c.l.bf16 %v7514
    %v7528 = vunpack.c.l.bf16 %v7515
    %v7530 = vsel %vm4020, %v7516, 0
    %v7533 = vsel %vm4020, %v7517, 0
    %v7536 = vsel %vm4020, %v7518, 0
    %v7539 = vsel %vm4020, %v7519, 0
    %v7542 = vsel %vm4020, %v7520, 0
    %v7545 = vsel %vm4020, %v7521, 0
    %v7548 = vsel %vm4020, %v7522, 0
    %v7551 = vsel %vm4020, %v7523, 0
    %v7554 = vsel %vm4020, %v7524, 0
    %v7557 = vsel %vm4020, %v7525, 0
    %v7560 = vsel %vm4020, %v7526, 0
    %v7563 = vsel %vm4020, %v7527, 0
    %v7566 = vsel %vm4020, %v7528, 0
    %v7569 = vsel %vm4042, %v7499, 0
    %7571 = vmatpush.msra.mxu0 0.0
    %7572 = vmatpush.msra.mxu0 0.0
    %7573 = vmatpush.msra.mxu0 0.0
    %7574 = vmatpush.msra.mxu0 0.0
    %7575 = vmatpush.msra.mxu0 0.0
    %7576 = vmatpush.msra.mxu0 0.0
    %7577 = vmatpush.msra.mxu0 0.0
    %7578 = vmatpush.msra.mxu0 0.0
    %7579 = vmatpush.msra.mxu0 0.0
    %7580 = vmatpush.msra.mxu0 %v7569
    %7581 = vmatpush.msra.mxu0 %v7496
    %7582 = vmatpush.msra.mxu0 %v7494
    %7583 = vmatpush.msra.mxu0 %v7491
    %7584 = vmatpush.msra.mxu0 %v7489
    %7585 = vmatpush.msra.mxu0 %v7486
    %7586 = vmatpush.msra.mxu0 %v7484
    %7587 = vmatmul.f32.gmra.mxu0 %v7530
    %v7588 = vpop.f32.mrf.mxu0
    %v7589 = vadd.f32 0.0, %v7588
    %7590 = vmatmul.f32.gmra.mxu0 %v7533
    %v7591 = vpop.f32.mrf.mxu0
    %v7592 = vadd.f32 0.0, %v7591
    %7593 = vmatmul.f32.gmra.mxu0 %v7536
    %v7594 = vpop.f32.mrf.mxu0
    %v7595 = vadd.f32 0.0, %v7594
    %7596 = vmatmul.f32.gmra.mxu0 %v7539
    %v7597 = vpop.f32.mrf.mxu0
    %v7598 = vadd.f32 0.0, %v7597
    %7599 = vmatmul.f32.gmra.mxu0 %v7542
    %v7600 = vpop.f32.mrf.mxu0
    %v7601 = vadd.f32 0.0, %v7600
    %7602 = vmatmul.f32.gmra.mxu0 %v7545
    %v7603 = vpop.f32.mrf.mxu0
    %v7604 = vadd.f32 0.0, %v7603
    %7605 = vmatmul.f32.gmra.mxu0 %v7548
    %v7606 = vpop.f32.mrf.mxu0
    %v7607 = vadd.f32 0.0, %v7606
    %7608 = vmatmul.f32.gmra.mxu0 %v7551
    %v7609 = vpop.f32.mrf.mxu0
    %v7610 = vadd.f32 0.0, %v7609
    %7611 = vmatmul.f32.gmra.mxu0 %v7554
    %v7612 = vpop.f32.mrf.mxu0
    %v7613 = vadd.f32 0.0, %v7612
    %7614 = vmatmul.f32.gmra.mxu0 %v7557
    %v7615 = vpop.f32.mrf.mxu0
    %v7616 = vadd.f32 0.0, %v7615
    %7617 = vmatmul.f32.gmra.mxu0 %v7560
    %v7618 = vpop.f32.mrf.mxu0
    %v7619 = vadd.f32 0.0, %v7618
    %7620 = vmatmul.f32.gmra.mxu0 %v7563
    %v7621 = vpop.f32.mrf.mxu0
    %v7622 = vadd.f32 0.0, %v7621
    %7623 = vmatmul.f32.gmra.mxu0 %v7566
    %v7624 = vpop.f32.mrf.mxu0
    %v7625 = vadd.f32 0.0, %v7624
    %7626 = vdwg.mxu0
    %v7627 = vadd.f32 %v7396, %v7589
    %v7628 = vadd.f32 %v7397, %v7592
    %v7629 = vadd.f32 %v7398, %v7595
    %v7630 = vadd.f32 %v7399, %v7598
    %v7631 = vadd.f32 %v7400, %v7601
    %v7632 = vadd.f32 %v7401, %v7604
    %v7633 = vadd.f32 %v7402, %v7607
    %v7634 = vadd.f32 %v7403, %v7610
    %v7635 = vadd.f32 %v7404, %v7613
    %v7636 = vadd.f32 %v7405, %v7616
    %v7637 = vadd.f32 %v7406, %v7619
    %v7638 = vadd.f32 %v7407, %v7622
    %v7639 = vadd.f32 %v7408, %v7625
    %s7640 = scalar_lea.vmem %s6, 448
    %v7641 = vld [vmem:[%s7640] sm:$0xf]
    %v7642 = vld [vmem:[%s7640 + $0x4] sm:$0xf]
    %v7643 = vld [vmem:[%s7640 + $0x8] sm:$0xf]
    %v7644 = vld [vmem:[%s7640 + $0xc] sm:$0xf]
    %v7645 = vld [vmem:[%s7640 + $0x10] sm:$0xf]
    %v7646 = vld [vmem:[%s7640 + $0x14] sm:$0xf]
    %v7647 = vld [vmem:[%s7640 + $0x18] sm:$0xf]
    %v7648 = vld [vmem:[%s7640 + $0x1c] sm:$0xf]
    %v7649 = vld [vmem:[%s7640 + $0x20] sm:$0xf]
    %v7650 = vld [vmem:[%s7640 + $0x24] sm:$0xf]
    %v7651 = vld [vmem:[%s7640 + $0x28] sm:$0xf]
    %v7652 = vld [vmem:[%s7640 + $0x2c] sm:$0xf]
    %v7653 = vld [vmem:[%s7640 + $0x30] sm:$0xf]
    %v7654 = vld [vmem:[%s7640 + $0x34] sm:$0xf]
    %v7655 = vld [vmem:[%s7640 + $0x38] sm:$0xf]
    %v7656 = vld [vmem:[%s7640 + $0x3c] sm:$0xf]
    %v7673 = vunpack.c.l.b16 %v7641
    %v7674 = vunpack.c.l.b16 %v7642
    %v7675 = vunpack.c.l.b16 %v7643
    %v7676 = vunpack.c.l.b16 %v7644
    %v7677 = vunpack.c.l.b16 %v7645
    %v7678 = vunpack.c.l.b16 %v7646
    %v7679 = vunpack.c.l.b16 %v7647
    %v7680 = vunpack.c.l.b16 %v7648
    %v7681 = vunpack.c.l.b16 %v7649
    %v7682 = vunpack.c.l.b16 %v7650
    %v7683 = vunpack.c.l.b16 %v7651
    %v7684 = vunpack.c.l.b16 %v7652
    %v7685 = vunpack.c.l.b16 %v7653
    %v7686 = vunpack.c.l.b16 %v7654
    %v7687 = vunpack.c.l.b16 %v7655
    %v7688 = vunpack.c.l.b16 %v7656
    %v7689 = vpack.c.b16 %v7674, %v7673
    %v7690 = vpack.c.b16 %v7676, %v7675
    %v7691 = vpack.c.b16 %v7678, %v7677
    %v7692 = vpack.c.b16 %v7680, %v7679
    %v7693 = vpack.c.b16 %v7682, %v7681
    %v7694 = vpack.c.b16 %v7684, %v7683
    %v7695 = vpack.c.b16 %v7686, %v7685
    %v7696 = vpack.c.b16 %v7688, %v7687
    %7705 = vmatpush.bf16.msra.mxu0 %v7696
    %7706 = vmatpush.bf16.msra.mxu0 %v7695
    %7707 = vmatpush.bf16.msra.mxu0 %v7694
    %7708 = vmatpush.bf16.msra.mxu0 %v7693
    %7709 = vmatpush.bf16.msra.mxu0 %v7692
    %7710 = vmatpush.bf16.msra.mxu0 %v7691
    %7711 = vmatpush.bf16.msra.mxu0 %v7690
    %7712 = vmatpush.bf16.msra.mxu0 %v7689
    %7713 = vmatmul.bf16.gmra.mxu0 %v6047
    %v7714 = vpop.f32.mrf.mxu0
    %v7715 = vadd.f32 0.0, %v7714
    %v7716 = vpop.f32.mrf.mxu0
    %v7717 = vadd.f32 0.0, %v7716
    %7718 = vmatmul.bf16.gmra.mxu0 %v6048
    %v7719 = vpop.f32.mrf.mxu0
    %v7720 = vadd.f32 0.0, %v7719
    %v7721 = vpop.f32.mrf.mxu0
    %v7722 = vadd.f32 0.0, %v7721
    %7723 = vmatmul.bf16.gmra.mxu0 %v6049
    %v7724 = vpop.f32.mrf.mxu0
    %v7725 = vadd.f32 0.0, %v7724
    %v7726 = vpop.f32.mrf.mxu0
    %v7727 = vadd.f32 0.0, %v7726
    %7728 = vmatmul.bf16.gmra.mxu0 %v6050
    %v7729 = vpop.f32.mrf.mxu0
    %v7730 = vadd.f32 0.0, %v7729
    %v7731 = vpop.f32.mrf.mxu0
    %7732 = vdwg.mxu0
    %s7733 = scalar_lea.vmem %s8, 364
    %v7734 = vld [vmem:[%s7733] sm:$0xf]
    %v7735 = vld [vmem:[%s7733 + $0x4] sm:$0xf]
    %v7736 = vld [vmem:[%s7733 + $0x8] sm:$0xf]
    %v7737 = vld [vmem:[%s7733 + $0xc] sm:$0xf]
    %v7738 = vld [vmem:[%s7733 + $0x10] sm:$0xf]
    %v7739 = vld [vmem:[%s7733 + $0x14] sm:$0xf]
    %v7740 = vld [vmem:[%s7733 + $0x18] sm:$0xf]
    %v7741 = vld [vmem:[%s7733 + $0x1c] sm:$0xf]
    %v7742 = vld [vmem:[%s7733 + $0x20] sm:$0xf]
    %v7743 = vld [vmem:[%s7733 + $0x24] sm:$0xf]
    %v7744 = vld [vmem:[%s7733 + $0x28] sm:$0xf]
    %v7745 = vld [vmem:[%s7733 + $0x2c] sm:$0xf]
    %v7746 = vld [vmem:[%s7733 + $0x30] sm:$0x1]
    %v7747 = vunpack.c.l.bf16 %v7734
    %v7748 = vunpack.c.l.bf16 %v7735
    %v7749 = vunpack.c.l.bf16 %v7736
    %v7750 = vunpack.c.l.bf16 %v7737
    %v7751 = vunpack.c.l.bf16 %v7738
    %v7752 = vunpack.c.l.bf16 %v7739
    %v7753 = vunpack.c.l.bf16 %v7740
    %v7754 = vunpack.c.l.bf16 %v7741
    %v7755 = vunpack.c.l.bf16 %v7742
    %v7756 = vunpack.c.l.bf16 %v7743
    %v7757 = vunpack.c.l.bf16 %v7744
    %v7758 = vunpack.c.l.bf16 %v7745
    %v7759 = vunpack.c.l.bf16 %v7746
    %v7761 = vsel %vm4020, %v7747, 0
    %v7764 = vsel %vm4020, %v7748, 0
    %v7767 = vsel %vm4020, %v7749, 0
    %v7770 = vsel %vm4020, %v7750, 0
    %v7773 = vsel %vm4020, %v7751, 0
    %v7776 = vsel %vm4020, %v7752, 0
    %v7779 = vsel %vm4020, %v7753, 0
    %v7782 = vsel %vm4020, %v7754, 0
    %v7785 = vsel %vm4020, %v7755, 0
    %v7788 = vsel %vm4020, %v7756, 0
    %v7791 = vsel %vm4020, %v7757, 0
    %v7794 = vsel %vm4020, %v7758, 0
    %v7797 = vsel %vm4020, %v7759, 0
    %v7800 = vsel %vm4042, %v7730, 0
    %7802 = vmatpush.msra.mxu0 0.0
    %7803 = vmatpush.msra.mxu0 0.0
    %7804 = vmatpush.msra.mxu0 0.0
    %7805 = vmatpush.msra.mxu0 0.0
    %7806 = vmatpush.msra.mxu0 0.0
    %7807 = vmatpush.msra.mxu0 0.0
    %7808 = vmatpush.msra.mxu0 0.0
    %7809 = vmatpush.msra.mxu0 0.0
    %7810 = vmatpush.msra.mxu0 0.0
    %7811 = vmatpush.msra.mxu0 %v7800
    %7812 = vmatpush.msra.mxu0 %v7727
    %7813 = vmatpush.msra.mxu0 %v7725
    %7814 = vmatpush.msra.mxu0 %v7722
    %7815 = vmatpush.msra.mxu0 %v7720
    %7816 = vmatpush.msra.mxu0 %v7717
    %7817 = vmatpush.msra.mxu0 %v7715
    %7818 = vmatmul.f32.gmra.mxu0 %v7761
    %v7819 = vpop.f32.mrf.mxu0
    %v7820 = vadd.f32 0.0, %v7819
    %7821 = vmatmul.f32.gmra.mxu0 %v7764
    %v7822 = vpop.f32.mrf.mxu0
    %v7823 = vadd.f32 0.0, %v7822
    %7824 = vmatmul.f32.gmra.mxu0 %v7767
    %v7825 = vpop.f32.mrf.mxu0
    %v7826 = vadd.f32 0.0, %v7825
    %7827 = vmatmul.f32.gmra.mxu0 %v7770
    %v7828 = vpop.f32.mrf.mxu0
    %v7829 = vadd.f32 0.0, %v7828
    %7830 = vmatmul.f32.gmra.mxu0 %v7773
    %v7831 = vpop.f32.mrf.mxu0
    %v7832 = vadd.f32 0.0, %v7831
    %7833 = vmatmul.f32.gmra.mxu0 %v7776
    %v7834 = vpop.f32.mrf.mxu0
    %v7835 = vadd.f32 0.0, %v7834
    %7836 = vmatmul.f32.gmra.mxu0 %v7779
    %v7837 = vpop.f32.mrf.mxu0
    %v7838 = vadd.f32 0.0, %v7837
    %7839 = vmatmul.f32.gmra.mxu0 %v7782
    %v7840 = vpop.f32.mrf.mxu0
    %v7841 = vadd.f32 0.0, %v7840
    %7842 = vmatmul.f32.gmra.mxu0 %v7785
    %v7843 = vpop.f32.mrf.mxu0
    %v7844 = vadd.f32 0.0, %v7843
    %7845 = vmatmul.f32.gmra.mxu0 %v7788
    %v7846 = vpop.f32.mrf.mxu0
    %v7847 = vadd.f32 0.0, %v7846
    %7848 = vmatmul.f32.gmra.mxu0 %v7791
    %v7849 = vpop.f32.mrf.mxu0
    %v7850 = vadd.f32 0.0, %v7849
    %7851 = vmatmul.f32.gmra.mxu0 %v7794
    %v7852 = vpop.f32.mrf.mxu0
    %v7853 = vadd.f32 0.0, %v7852
    %7854 = vmatmul.f32.gmra.mxu0 %v7797
    %v7855 = vpop.f32.mrf.mxu0
    %v7856 = vadd.f32 0.0, %v7855
    %7857 = vdwg.mxu0
    %v7858 = vadd.f32 %v7627, %v7820
    %v7859 = vadd.f32 %v7628, %v7823
    %v7860 = vadd.f32 %v7629, %v7826
    %v7861 = vadd.f32 %v7630, %v7829
    %v7862 = vadd.f32 %v7631, %v7832
    %v7863 = vadd.f32 %v7632, %v7835
    %v7864 = vadd.f32 %v7633, %v7838
    %v7865 = vadd.f32 %v7634, %v7841
    %v7866 = vadd.f32 %v7635, %v7844
    %v7867 = vadd.f32 %v7636, %v7847
    %v7868 = vadd.f32 %v7637, %v7850
    %v7869 = vadd.f32 %v7638, %v7853
    %v7870 = vadd.f32 %v7639, %v7856
    %s7871 = scalar_lea.vmem %s6, 512
    %v7872 = vld [vmem:[%s7871] sm:$0xf]
    %v7873 = vld [vmem:[%s7871 + $0x4] sm:$0xf]
    %v7874 = vld [vmem:[%s7871 + $0x8] sm:$0xf]
    %v7875 = vld [vmem:[%s7871 + $0xc] sm:$0xf]
    %v7876 = vld [vmem:[%s7871 + $0x10] sm:$0xf]
    %v7877 = vld [vmem:[%s7871 + $0x14] sm:$0xf]
    %v7878 = vld [vmem:[%s7871 + $0x18] sm:$0xf]
    %v7879 = vld [vmem:[%s7871 + $0x1c] sm:$0xf]
    %v7880 = vld [vmem:[%s7871 + $0x20] sm:$0xf]
    %v7881 = vld [vmem:[%s7871 + $0x24] sm:$0xf]
    %v7882 = vld [vmem:[%s7871 + $0x28] sm:$0xf]
    %v7883 = vld [vmem:[%s7871 + $0x2c] sm:$0xf]
    %v7884 = vld [vmem:[%s7871 + $0x30] sm:$0xf]
    %v7885 = vld [vmem:[%s7871 + $0x34] sm:$0xf]
    %v7886 = vld [vmem:[%s7871 + $0x38] sm:$0xf]
    %v7887 = vld [vmem:[%s7871 + $0x3c] sm:$0xf]
    %v7904 = vunpack.c.l.b16 %v7872
    %v7905 = vunpack.c.l.b16 %v7873
    %v7906 = vunpack.c.l.b16 %v7874
    %v7907 = vunpack.c.l.b16 %v7875
    %v7908 = vunpack.c.l.b16 %v7876
    %v7909 = vunpack.c.l.b16 %v7877
    %v7910 = vunpack.c.l.b16 %v7878
    %v7911 = vunpack.c.l.b16 %v7879
    %v7912 = vunpack.c.l.b16 %v7880
    %v7913 = vunpack.c.l.b16 %v7881
    %v7914 = vunpack.c.l.b16 %v7882
    %v7915 = vunpack.c.l.b16 %v7883
    %v7916 = vunpack.c.l.b16 %v7884
    %v7917 = vunpack.c.l.b16 %v7885
    %v7918 = vunpack.c.l.b16 %v7886
    %v7919 = vunpack.c.l.b16 %v7887
    %v7920 = vpack.c.b16 %v7905, %v7904
    %v7921 = vpack.c.b16 %v7907, %v7906
    %v7922 = vpack.c.b16 %v7909, %v7908
    %v7923 = vpack.c.b16 %v7911, %v7910
    %v7924 = vpack.c.b16 %v7913, %v7912
    %v7925 = vpack.c.b16 %v7915, %v7914
    %v7926 = vpack.c.b16 %v7917, %v7916
    %v7927 = vpack.c.b16 %v7919, %v7918
    %7936 = vmatpush.bf16.msra.mxu0 %v7927
    %7937 = vmatpush.bf16.msra.mxu0 %v7926
    %7938 = vmatpush.bf16.msra.mxu0 %v7925
    %7939 = vmatpush.bf16.msra.mxu0 %v7924
    %7940 = vmatpush.bf16.msra.mxu0 %v7923
    %7941 = vmatpush.bf16.msra.mxu0 %v7922
    %7942 = vmatpush.bf16.msra.mxu0 %v7921
    %7943 = vmatpush.bf16.msra.mxu0 %v7920
    %7944 = vmatmul.bf16.gmra.mxu0 %v6047
    %v7945 = vpop.f32.mrf.mxu0
    %v7946 = vadd.f32 0.0, %v7945
    %v7947 = vpop.f32.mrf.mxu0
    %v7948 = vadd.f32 0.0, %v7947
    %7949 = vmatmul.bf16.gmra.mxu0 %v6048
    %v7950 = vpop.f32.mrf.mxu0
    %v7951 = vadd.f32 0.0, %v7950
    %v7952 = vpop.f32.mrf.mxu0
    %v7953 = vadd.f32 0.0, %v7952
    %7954 = vmatmul.bf16.gmra.mxu0 %v6049
    %v7955 = vpop.f32.mrf.mxu0
    %v7956 = vadd.f32 0.0, %v7955
    %v7957 = vpop.f32.mrf.mxu0
    %v7958 = vadd.f32 0.0, %v7957
    %7959 = vmatmul.bf16.gmra.mxu0 %v6050
    %v7960 = vpop.f32.mrf.mxu0
    %v7961 = vadd.f32 0.0, %v7960
    %v7962 = vpop.f32.mrf.mxu0
    %7963 = vdwg.mxu0
    %s7964 = scalar_lea.vmem %s8, 416
    %v7965 = vld [vmem:[%s7964] sm:$0xf]
    %v7966 = vld [vmem:[%s7964 + $0x4] sm:$0xf]
    %v7967 = vld [vmem:[%s7964 + $0x8] sm:$0xf]
    %v7968 = vld [vmem:[%s7964 + $0xc] sm:$0xf]
    %v7969 = vld [vmem:[%s7964 + $0x10] sm:$0xf]
    %v7970 = vld [vmem:[%s7964 + $0x14] sm:$0xf]
    %v7971 = vld [vmem:[%s7964 + $0x18] sm:$0xf]
    %v7972 = vld [vmem:[%s7964 + $0x1c] sm:$0xf]
    %v7973 = vld [vmem:[%s7964 + $0x20] sm:$0xf]
    %v7974 = vld [vmem:[%s7964 + $0x24] sm:$0xf]
    %v7975 = vld [vmem:[%s7964 + $0x28] sm:$0xf]
    %v7976 = vld [vmem:[%s7964 + $0x2c] sm:$0xf]
    %v7977 = vld [vmem:[%s7964 + $0x30] sm:$0x1]
    %v7978 = vunpack.c.l.bf16 %v7965
    %v7979 = vunpack.c.l.bf16 %v7966
    %v7980 = vunpack.c.l.bf16 %v7967
    %v7981 = vunpack.c.l.bf16 %v7968
    %v7982 = vunpack.c.l.bf16 %v7969
    %v7983 = vunpack.c.l.bf16 %v7970
    %v7984 = vunpack.c.l.bf16 %v7971
    %v7985 = vunpack.c.l.bf16 %v7972
    %v7986 = vunpack.c.l.bf16 %v7973
    %v7987 = vunpack.c.l.bf16 %v7974
    %v7988 = vunpack.c.l.bf16 %v7975
    %v7989 = vunpack.c.l.bf16 %v7976
    %v7990 = vunpack.c.l.bf16 %v7977
    %v7992 = vsel %vm4020, %v7978, 0
    %v7995 = vsel %vm4020, %v7979, 0
    %v7998 = vsel %vm4020, %v7980, 0
    %v8001 = vsel %vm4020, %v7981, 0
    %v8004 = vsel %vm4020, %v7982, 0
    %v8007 = vsel %vm4020, %v7983, 0
    %v8010 = vsel %vm4020, %v7984, 0
    %v8013 = vsel %vm4020, %v7985, 0
    %v8016 = vsel %vm4020, %v7986, 0
    %v8019 = vsel %vm4020, %v7987, 0
    %v8022 = vsel %vm4020, %v7988, 0
    %v8025 = vsel %vm4020, %v7989, 0
    %v8028 = vsel %vm4020, %v7990, 0
    %v8031 = vsel %vm4042, %v7961, 0
    %8033 = vmatpush.msra.mxu0 0.0
    %8034 = vmatpush.msra.mxu0 0.0
    %8035 = vmatpush.msra.mxu0 0.0
    %8036 = vmatpush.msra.mxu0 0.0
    %8037 = vmatpush.msra.mxu0 0.0
    %8038 = vmatpush.msra.mxu0 0.0
    %8039 = vmatpush.msra.mxu0 0.0
    %8040 = vmatpush.msra.mxu0 0.0
    %8041 = vmatpush.msra.mxu0 0.0
    %8042 = vmatpush.msra.mxu0 %v8031
    %8043 = vmatpush.msra.mxu0 %v7958
    %8044 = vmatpush.msra.mxu0 %v7956
    %8045 = vmatpush.msra.mxu0 %v7953
    %8046 = vmatpush.msra.mxu0 %v7951
    %8047 = vmatpush.msra.mxu0 %v7948
    %8048 = vmatpush.msra.mxu0 %v7946
    %8049 = vmatmul.f32.gmra.mxu0 %v7992
    %v8050 = vpop.f32.mrf.mxu0
    %v8051 = vadd.f32 0.0, %v8050
    %8052 = vmatmul.f32.gmra.mxu0 %v7995
    %v8053 = vpop.f32.mrf.mxu0
    %v8054 = vadd.f32 0.0, %v8053
    %8055 = vmatmul.f32.gmra.mxu0 %v7998
    %v8056 = vpop.f32.mrf.mxu0
    %v8057 = vadd.f32 0.0, %v8056
    %8058 = vmatmul.f32.gmra.mxu0 %v8001
    %v8059 = vpop.f32.mrf.mxu0
    %v8060 = vadd.f32 0.0, %v8059
    %8061 = vmatmul.f32.gmra.mxu0 %v8004
    %v8062 = vpop.f32.mrf.mxu0
    %v8063 = vadd.f32 0.0, %v8062
    %8064 = vmatmul.f32.gmra.mxu0 %v8007
    %v8065 = vpop.f32.mrf.mxu0
    %v8066 = vadd.f32 0.0, %v8065
    %8067 = vmatmul.f32.gmra.mxu0 %v8010
    %v8068 = vpop.f32.mrf.mxu0
    %v8069 = vadd.f32 0.0, %v8068
    %8070 = vmatmul.f32.gmra.mxu0 %v8013
    %v8071 = vpop.f32.mrf.mxu0
    %v8072 = vadd.f32 0.0, %v8071
    %8073 = vmatmul.f32.gmra.mxu0 %v8016
    %v8074 = vpop.f32.mrf.mxu0
    %v8075 = vadd.f32 0.0, %v8074
    %8076 = vmatmul.f32.gmra.mxu0 %v8019
    %v8077 = vpop.f32.mrf.mxu0
    %v8078 = vadd.f32 0.0, %v8077
    %8079 = vmatmul.f32.gmra.mxu0 %v8022
    %v8080 = vpop.f32.mrf.mxu0
    %v8081 = vadd.f32 0.0, %v8080
    %8082 = vmatmul.f32.gmra.mxu0 %v8025
    %v8083 = vpop.f32.mrf.mxu0
    %v8084 = vadd.f32 0.0, %v8083
    %8085 = vmatmul.f32.gmra.mxu0 %v8028
    %v8086 = vpop.f32.mrf.mxu0
    %v8087 = vadd.f32 0.0, %v8086
    %8088 = vdwg.mxu0
    %v8089 = vadd.f32 %v7858, %v8051
    %v8090 = vadd.f32 %v7859, %v8054
    %v8091 = vadd.f32 %v7860, %v8057
    %v8092 = vadd.f32 %v7861, %v8060
    %v8093 = vadd.f32 %v7862, %v8063
    %v8094 = vadd.f32 %v7863, %v8066
    %v8095 = vadd.f32 %v7864, %v8069
    %v8096 = vadd.f32 %v7865, %v8072
    %v8097 = vadd.f32 %v7866, %v8075
    %v8098 = vadd.f32 %v7867, %v8078
    %v8099 = vadd.f32 %v7868, %v8081
    %v8100 = vadd.f32 %v7869, %v8084
    %v8101 = vadd.f32 %v7870, %v8087
    %v8102 = vld [vmem:[#allocation13] sm:$0x1]
    %v8104 = vperm.slane %v8102, 0
    %v8106 = vadd.f32 %v8089, %v8104
    %v8107 = vadd.f32 %v8090, %v8104
    %v8108 = vadd.f32 %v8091, %v8104
    %v8109 = vadd.f32 %v8092, %v8104
    %v8110 = vadd.f32 %v8093, %v8104
    %v8111 = vadd.f32 %v8094, %v8104
    %v8112 = vadd.f32 %v8095, %v8104
    %v8113 = vadd.f32 %v8096, %v8104
    %v8114 = vadd.f32 %v8097, %v8104
    %v8115 = vadd.f32 %v8098, %v8104
    %v8116 = vadd.f32 %v8099, %v8104
    %v8117 = vadd.f32 %v8100, %v8104
    %v8118 = vadd.f32 %v8101, %v8104
    %v8119 = vmax.f32 %v8106, 0.0
    %v8120 = vmax.f32 %v8107, 0.0
    %v8121 = vmax.f32 %v8108, 0.0
    %v8122 = vmax.f32 %v8109, 0.0
    %v8123 = vmax.f32 %v8110, 0.0
    %v8124 = vmax.f32 %v8111, 0.0
    %v8125 = vmax.f32 %v8112, 0.0
    %v8126 = vmax.f32 %v8113, 0.0
    %v8127 = vmax.f32 %v8114, 0.0
    %v8128 = vmax.f32 %v8115, 0.0
    %v8129 = vmax.f32 %v8116, 0.0
    %v8130 = vmax.f32 %v8117, 0.0
    %v8131 = vmax.f32 %v8118, 0.0
    %v8132 = vpack.c.bf16 %v8120, %v8119
    %v8133 = vpack.c.bf16 %v8122, %v8121
    %v8134 = vpack.c.bf16 %v8124, %v8123
    %v8135 = vpack.c.bf16 %v8126, %v8125
    %v8136 = vpack.c.bf16 %v8128, %v8127
    %v8137 = vpack.c.bf16 %v8130, %v8129
    %v8138 = vpack.c.bf16 %v8131, %v8131
    %v8139 = vld [vmem:[%s9] sm:$0xf]
    %v8140 = vld [vmem:[%s9 + $0x4] sm:$0xf]
    %v8141 = vld [vmem:[%s9 + $0x8] sm:$0xf]
    %v8142 = vld [vmem:[%s9 + $0xc] sm:$0xf]
    %v8143 = vld [vmem:[%s9 + $0x10] sm:$0xf]
    %v8144 = vld [vmem:[%s9 + $0x14] sm:$0xf]
    %v8145 = vld [vmem:[%s9 + $0x18] sm:$0xf]
    %v8146 = vld [vmem:[%s9 + $0x1c] sm:$0xf]
    %v8155 = vunpack.c.l.b16 %v8139
    %v8156 = vunpack.c.l.b16 %v8140
    %v8157 = vunpack.c.l.b16 %v8141
    %v8158 = vunpack.c.l.b16 %v8142
    %v8159 = vunpack.c.l.b16 %v8143
    %v8160 = vunpack.c.l.b16 %v8144
    %v8161 = vunpack.c.l.b16 %v8145
    %v8162 = vunpack.c.l.b16 %v8146
    %v8163 = vpack.c.b16 %v8156, %v8155
    %v8164 = vpack.c.b16 %v8158, %v8157
    %v8165 = vpack.c.b16 %v8160, %v8159
    %v8166 = vpack.c.b16 %v8162, %v8161
    %vm8171 = vcmask 523264
    %v8173 = vsel %vm8171, %v8132, 0
    %v8176 = vsel %vm8171, %v8133, 0
    %v8179 = vsel %vm8171, %v8134, 0
    %v8182 = vsel %vm8171, %v8135, 0
    %v8185 = vsel %vm8171, %v8136, 0
    %v8188 = vsel %vm8171, %v8137, 0
    %v8191 = vsel %vm8171, %v8138, 0
    %8193 = vmatpush.bf16.msra.mxu0 0
    %8194 = vmatpush.bf16.msra.mxu0 0
    %8195 = vmatpush.bf16.msra.mxu0 0
    %8196 = vmatpush.bf16.msra.mxu0 0
    %8197 = vmatpush.bf16.msra.mxu0 %v8166
    %8198 = vmatpush.bf16.msra.mxu0 %v8165
    %8199 = vmatpush.bf16.msra.mxu0 %v8164
    %8200 = vmatpush.bf16.msra.mxu0 %v8163
    %8201 = vmatmul.bf16.gmra.mxu0 %v8173
    %v8202 = vpop.f32.mrf.mxu0
    %v8203 = vadd.f32 0.0, %v8202
    %v8204 = vpop.f32.mrf.mxu0
    %v8205 = vadd.f32 0.0, %v8204
    %8206 = vmatmul.bf16.gmra.mxu0 %v8176
    %v8207 = vpop.f32.mrf.mxu0
    %v8208 = vadd.f32 0.0, %v8207
    %v8209 = vpop.f32.mrf.mxu0
    %v8210 = vadd.f32 0.0, %v8209
    %8211 = vmatmul.bf16.gmra.mxu0 %v8179
    %v8212 = vpop.f32.mrf.mxu0
    %v8213 = vadd.f32 0.0, %v8212
    %v8214 = vpop.f32.mrf.mxu0
    %v8215 = vadd.f32 0.0, %v8214
    %8216 = vmatmul.bf16.gmra.mxu0 %v8182
    %v8217 = vpop.f32.mrf.mxu0
    %v8218 = vadd.f32 0.0, %v8217
    %v8219 = vpop.f32.mrf.mxu0
    %v8220 = vadd.f32 0.0, %v8219
    %8221 = vmatmul.bf16.gmra.mxu0 %v8185
    %v8222 = vpop.f32.mrf.mxu0
    %v8223 = vadd.f32 0.0, %v8222
    %v8224 = vpop.f32.mrf.mxu0
    %v8225 = vadd.f32 0.0, %v8224
    %8226 = vmatmul.bf16.gmra.mxu0 %v8188
    %v8227 = vpop.f32.mrf.mxu0
    %v8228 = vadd.f32 0.0, %v8227
    %v8229 = vpop.f32.mrf.mxu0
    %v8230 = vadd.f32 0.0, %v8229
    %8231 = vmatmul.bf16.gmra.mxu0 %v8191
    %v8232 = vpop.f32.mrf.mxu0
    %v8233 = vadd.f32 0.0, %v8232
    %v8234 = vpop.f32.mrf.mxu0
    %8235 = vdwg.mxu0
    %v8236 = vld [vmem:[#allocation14] sm:$0xff]
    %v8237 = vld [vmem:[#allocation14 + $0x8] sm:$0xff]
    %s8238 = scalar_lea.vmem [#allocation14], 16
    %v8239 = vld [vmem:[%s8238] sm:$0xff]
    %v8240 = vld [vmem:[%s8238 + $0x8] sm:$0xff]
    %v8242 = vrot.slane %v8203, 2
    %v8245 = vunpack.c.l.b16 %v8239
    %v8246 = vunpack.c.h.b16 %v8239
    %v8247 = vunpack.c.l.b16 %v8240
    %v8248 = vunpack.c.h.b16 %v8240
    %v8249 = vpack.c.b16 %v8247, %v8245
    %v8250 = vpack.c.b16 %v8248, %v8246
    %vm8253 = vcmask 130048
    %v8254 = vsel %vm8253, %v8242, 0
    %8256 = vmatpush.bf16.msra.mxu0 0
    %8257 = vmatpush.bf16.msra.mxu0 0
    %8258 = vmatpush.bf16.msra.mxu0 0
    %8259 = vmatpush.bf16.msra.mxu0 0
    %8260 = vmatpush.bf16.msra.mxu0 0
    %8261 = vmatpush.bf16.msra.mxu0 0
    %8262 = vmatpush.bf16.msra.mxu0 0
    %8263 = vmatpush.bf16.msra.mxu0 %v8249
    %8264 = vmatmul.f32.gmra.mxu0 %v8254
    %v8265 = vpop.f32.mrf.mxu0
    %v8266 = vadd.f32 0.0, %v8265
    %8267 = vdwg.mxu0
    %8268 = vmatpush.bf16.msra.mxu0 0
    %8269 = vmatpush.bf16.msra.mxu0 0
    %8270 = vmatpush.bf16.msra.mxu0 0
    %8271 = vmatpush.bf16.msra.mxu0 0
    %8272 = vmatpush.bf16.msra.mxu0 0
    %8273 = vmatpush.bf16.msra.mxu0 0
    %8274 = vmatpush.bf16.msra.mxu0 0
    %8275 = vmatpush.bf16.msra.mxu0 %v8250
    %8276 = vmatmul.f32.gmra.mxu0 %v8254
    %v8277 = vpop.f32.mrf.mxu0
    %v8278 = vadd.f32 0.0, %v8277
    %8279 = vdwg.mxu0
    %v8282 = vunpack.c.l.b16 %v8236
    %v8283 = vunpack.c.h.b16 %v8236
    %v8284 = vunpack.c.l.b16 %v8237
    %v8285 = vunpack.c.h.b16 %v8237
    %v8286 = vpack.c.b16 %v8284, %v8282
    %v8287 = vpack.c.b16 %v8285, %v8283
    %v8290 = vsel %vm8253, %v8203, 0
    %8292 = vmatpush.bf16.msra.mxu0 0
    %8293 = vmatpush.bf16.msra.mxu0 0
    %8294 = vmatpush.bf16.msra.mxu0 0
    %8295 = vmatpush.bf16.msra.mxu0 0
    %8296 = vmatpush.bf16.msra.mxu0 0
    %8297 = vmatpush.bf16.msra.mxu0 0
    %8298 = vmatpush.bf16.msra.mxu0 0
    %8299 = vmatpush.bf16.msra.mxu0 %v8286
    %8300 = vmatmul.f32.gmra.mxu0 %v8290
    %v8301 = vpop.f32.mrf.mxu0
    %v8302 = vadd.f32 %v8266, %v8301
    %8303 = vdwg.mxu0
    %8304 = vmatpush.bf16.msra.mxu0 0
    %8305 = vmatpush.bf16.msra.mxu0 0
    %8306 = vmatpush.bf16.msra.mxu0 0
    %8307 = vmatpush.bf16.msra.mxu0 0
    %8308 = vmatpush.bf16.msra.mxu0 0
    %8309 = vmatpush.bf16.msra.mxu0 0
    %8310 = vmatpush.bf16.msra.mxu0 0
    %8311 = vmatpush.bf16.msra.mxu0 %v8287
    %8312 = vmatmul.f32.gmra.mxu0 %v8290
    %v8313 = vpop.f32.mrf.mxu0
    %v8314 = vadd.f32 %v8278, %v8313
    %8315 = vdwg.mxu0
    %s8316 = scalar_lea.vmem [#allocation14], 32
    %v8317 = vld [vmem:[%s8316] sm:$0xff]
    %v8318 = vld [vmem:[%s8316 + $0x8] sm:$0xff]
    %v8319 = vrot.slane %v8203, 4
    %v8322 = vunpack.c.l.b16 %v8317
    %v8323 = vunpack.c.h.b16 %v8317
    %v8324 = vunpack.c.l.b16 %v8318
    %v8325 = vunpack.c.h.b16 %v8318
    %v8326 = vpack.c.b16 %v8324, %v8322
    %v8327 = vpack.c.b16 %v8325, %v8323
    %v8330 = vsel %vm8253, %v8319, 0
    %8332 = vmatpush.bf16.msra.mxu0 0
    %8333 = vmatpush.bf16.msra.mxu0 0
    %8334 = vmatpush.bf16.msra.mxu0 0
    %8335 = vmatpush.bf16.msra.mxu0 0
    %8336 = vmatpush.bf16.msra.mxu0 0
    %8337 = vmatpush.bf16.msra.mxu0 0
    %8338 = vmatpush.bf16.msra.mxu0 0
    %8339 = vmatpush.bf16.msra.mxu0 %v8326
    %8340 = vmatmul.f32.gmra.mxu0 %v8330
    %v8341 = vpop.f32.mrf.mxu0
    %v8342 = vadd.f32 0.0, %v8341
    %8343 = vdwg.mxu0
    %8344 = vmatpush.bf16.msra.mxu0 0
    %8345 = vmatpush.bf16.msra.mxu0 0
    %8346 = vmatpush.bf16.msra.mxu0 0
    %8347 = vmatpush.bf16.msra.mxu0 0
    %8348 = vmatpush.bf16.msra.mxu0 0
    %8349 = vmatpush.bf16.msra.mxu0 0
    %8350 = vmatpush.bf16.msra.mxu0 0
    %8351 = vmatpush.bf16.msra.mxu0 %v8327
    %8352 = vmatmul.f32.gmra.mxu0 %v8330
    %v8353 = vpop.f32.mrf.mxu0
    %v8354 = vadd.f32 0.0, %v8353
    %8355 = vdwg.mxu0
    %v8356 = vadd.f32 %v8302, %v8342
    %v8357 = vadd.f32 %v8314, %v8354
    %s8358 = scalar_lea.vmem [#allocation14], 48
    %v8359 = vld [vmem:[%s8358] sm:$0xff]
    %v8360 = vld [vmem:[%s8358 + $0x8] sm:$0xff]
    %v8361 = vrot.slane %v8203, 6
    %v8364 = vunpack.c.l.b16 %v8359
    %v8365 = vunpack.c.h.b16 %v8359
    %v8366 = vunpack.c.l.b16 %v8360
    %v8367 = vunpack.c.h.b16 %v8360
    %v8368 = vpack.c.b16 %v8366, %v8364
    %v8369 = vpack.c.b16 %v8367, %v8365
    %v8372 = vsel %vm8253, %v8361, 0
    %8374 = vmatpush.bf16.msra.mxu0 0
    %8375 = vmatpush.bf16.msra.mxu0 0
    %8376 = vmatpush.bf16.msra.mxu0 0
    %8377 = vmatpush.bf16.msra.mxu0 0
    %8378 = vmatpush.bf16.msra.mxu0 0
    %8379 = vmatpush.bf16.msra.mxu0 0
    %8380 = vmatpush.bf16.msra.mxu0 0
    %8381 = vmatpush.bf16.msra.mxu0 %v8368
    %8382 = vmatmul.f32.gmra.mxu0 %v8372
    %v8383 = vpop.f32.mrf.mxu0
    %v8384 = vadd.f32 0.0, %v8383
    %8385 = vdwg.mxu0
    %8386 = vmatpush.bf16.msra.mxu0 0
    %8387 = vmatpush.bf16.msra.mxu0 0
    %8388 = vmatpush.bf16.msra.mxu0 0
    %8389 = vmatpush.bf16.msra.mxu0 0
    %8390 = vmatpush.bf16.msra.mxu0 0
    %8391 = vmatpush.bf16.msra.mxu0 0
    %8392 = vmatpush.bf16.msra.mxu0 0
    %8393 = vmatpush.bf16.msra.mxu0 %v8369
    %8394 = vmatmul.f32.gmra.mxu0 %v8372
    %v8395 = vpop.f32.mrf.mxu0
    %v8396 = vadd.f32 0.0, %v8395
    %8397 = vdwg.mxu0
    %v8398 = vadd.f32 %v8356, %v8384
    %v8399 = vadd.f32 %v8357, %v8396
    %s8400 = scalar_lea.vmem [#allocation14], 64
    %v8401 = vld [vmem:[%s8400] sm:$0xff]
    %v8402 = vld [vmem:[%s8400 + $0x8] sm:$0xff]
    %v8405 = vunpack.c.l.b16 %v8401
    %v8406 = vunpack.c.h.b16 %v8401
    %v8407 = vunpack.c.l.b16 %v8402
    %v8408 = vunpack.c.h.b16 %v8402
    %v8409 = vpack.c.b16 %v8407, %v8405
    %v8410 = vpack.c.b16 %v8408, %v8406
    %v8414 = vsel %vm8253, %v8205, 0
    %8416 = vmatpush.bf16.msra.mxu0 0
    %8417 = vmatpush.bf16.msra.mxu0 0
    %8418 = vmatpush.bf16.msra.mxu0 0
    %8419 = vmatpush.bf16.msra.mxu0 0
    %8420 = vmatpush.bf16.msra.mxu0 0
    %8421 = vmatpush.bf16.msra.mxu0 0
    %8422 = vmatpush.bf16.msra.mxu0 0
    %8423 = vmatpush.bf16.msra.mxu0 %v8409
    %8424 = vmatmul.f32.gmra.mxu0 %v8414
    %v8425 = vpop.f32.mrf.mxu0
    %v8426 = vadd.f32 0.0, %v8425
    %8427 = vdwg.mxu0
    %8428 = vmatpush.bf16.msra.mxu0 0
    %8429 = vmatpush.bf16.msra.mxu0 0
    %8430 = vmatpush.bf16.msra.mxu0 0
    %8431 = vmatpush.bf16.msra.mxu0 0
    %8432 = vmatpush.bf16.msra.mxu0 0
    %8433 = vmatpush.bf16.msra.mxu0 0
    %8434 = vmatpush.bf16.msra.mxu0 0
    %8435 = vmatpush.bf16.msra.mxu0 %v8410
    %8436 = vmatmul.f32.gmra.mxu0 %v8414
    %v8437 = vpop.f32.mrf.mxu0
    %v8438 = vadd.f32 0.0, %v8437
    %8439 = vdwg.mxu0
    %v8440 = vadd.f32 %v8398, %v8426
    %v8441 = vadd.f32 %v8399, %v8438
    %s8442 = scalar_lea.vmem [#allocation14], 80
    %v8443 = vld [vmem:[%s8442] sm:$0xff]
    %v8444 = vld [vmem:[%s8442 + $0x8] sm:$0xff]
    %v8445 = vrot.slane %v8205, 2
    %v8448 = vunpack.c.l.b16 %v8443
    %v8449 = vunpack.c.h.b16 %v8443
    %v8450 = vunpack.c.l.b16 %v8444
    %v8451 = vunpack.c.h.b16 %v8444
    %v8452 = vpack.c.b16 %v8450, %v8448
    %v8453 = vpack.c.b16 %v8451, %v8449
    %v8456 = vsel %vm8253, %v8445, 0
    %8458 = vmatpush.bf16.msra.mxu0 0
    %8459 = vmatpush.bf16.msra.mxu0 0
    %8460 = vmatpush.bf16.msra.mxu0 0
    %8461 = vmatpush.bf16.msra.mxu0 0
    %8462 = vmatpush.bf16.msra.mxu0 0
    %8463 = vmatpush.bf16.msra.mxu0 0
    %8464 = vmatpush.bf16.msra.mxu0 0
    %8465 = vmatpush.bf16.msra.mxu0 %v8452
    %8466 = vmatmul.f32.gmra.mxu0 %v8456
    %v8467 = vpop.f32.mrf.mxu0
    %v8468 = vadd.f32 0.0, %v8467
    %8469 = vdwg.mxu0
    %8470 = vmatpush.bf16.msra.mxu0 0
    %8471 = vmatpush.bf16.msra.mxu0 0
    %8472 = vmatpush.bf16.msra.mxu0 0
    %8473 = vmatpush.bf16.msra.mxu0 0
    %8474 = vmatpush.bf16.msra.mxu0 0
    %8475 = vmatpush.bf16.msra.mxu0 0
    %8476 = vmatpush.bf16.msra.mxu0 0
    %8477 = vmatpush.bf16.msra.mxu0 %v8453
    %8478 = vmatmul.f32.gmra.mxu0 %v8456
    %v8479 = vpop.f32.mrf.mxu0
    %v8480 = vadd.f32 0.0, %v8479
    %8481 = vdwg.mxu0
    %v8482 = vadd.f32 %v8440, %v8468
    %v8483 = vadd.f32 %v8441, %v8480
    %s8484 = scalar_lea.vmem [#allocation14], 96
    %v8485 = vld [vmem:[%s8484] sm:$0xff]
    %v8486 = vld [vmem:[%s8484 + $0x8] sm:$0xff]
    %v8487 = vrot.slane %v8205, 4
    %v8490 = vunpack.c.l.b16 %v8485
    %v8491 = vunpack.c.h.b16 %v8485
    %v8492 = vunpack.c.l.b16 %v8486
    %v8493 = vunpack.c.h.b16 %v8486
    %v8494 = vpack.c.b16 %v8492, %v8490
    %v8495 = vpack.c.b16 %v8493, %v8491
    %v8498 = vsel %vm8253, %v8487, 0
    %8500 = vmatpush.bf16.msra.mxu0 0
    %8501 = vmatpush.bf16.msra.mxu0 0
    %8502 = vmatpush.bf16.msra.mxu0 0
    %8503 = vmatpush.bf16.msra.mxu0 0
    %8504 = vmatpush.bf16.msra.mxu0 0
    %8505 = vmatpush.bf16.msra.mxu0 0
    %8506 = vmatpush.bf16.msra.mxu0 0
    %8507 = vmatpush.bf16.msra.mxu0 %v8494
    %8508 = vmatmul.f32.gmra.mxu0 %v8498
    %v8509 = vpop.f32.mrf.mxu0
    %v8510 = vadd.f32 0.0, %v8509
    %8511 = vdwg.mxu0
    %8512 = vmatpush.bf16.msra.mxu0 0
    %8513 = vmatpush.bf16.msra.mxu0 0
    %8514 = vmatpush.bf16.msra.mxu0 0
    %8515 = vmatpush.bf16.msra.mxu0 0
    %8516 = vmatpush.bf16.msra.mxu0 0
    %8517 = vmatpush.bf16.msra.mxu0 0
    %8518 = vmatpush.bf16.msra.mxu0 0
    %8519 = vmatpush.bf16.msra.mxu0 %v8495
    %8520 = vmatmul.f32.gmra.mxu0 %v8498
    %v8521 = vpop.f32.mrf.mxu0
    %v8522 = vadd.f32 0.0, %v8521
    %8523 = vdwg.mxu0
    %v8524 = vadd.f32 %v8482, %v8510
    %v8525 = vadd.f32 %v8483, %v8522
    %s8526 = scalar_lea.vmem [#allocation14], 112
    %v8527 = vld [vmem:[%s8526] sm:$0xff]
    %v8528 = vld [vmem:[%s8526 + $0x8] sm:$0xff]
    %v8529 = vrot.slane %v8205, 6
    %v8532 = vunpack.c.l.b16 %v8527
    %v8533 = vunpack.c.h.b16 %v8527
    %v8534 = vunpack.c.l.b16 %v8528
    %v8535 = vunpack.c.h.b16 %v8528
    %v8536 = vpack.c.b16 %v8534, %v8532
    %v8537 = vpack.c.b16 %v8535, %v8533
    %v8540 = vsel %vm8253, %v8529, 0
    %8542 = vmatpush.bf16.msra.mxu0 0
    %8543 = vmatpush.bf16.msra.mxu0 0
    %8544 = vmatpush.bf16.msra.mxu0 0
    %8545 = vmatpush.bf16.msra.mxu0 0
    %8546 = vmatpush.bf16.msra.mxu0 0
    %8547 = vmatpush.bf16.msra.mxu0 0
    %8548 = vmatpush.bf16.msra.mxu0 0
    %8549 = vmatpush.bf16.msra.mxu0 %v8536
    %8550 = vmatmul.f32.gmra.mxu0 %v8540
    %v8551 = vpop.f32.mrf.mxu0
    %v8552 = vadd.f32 0.0, %v8551
    %8553 = vdwg.mxu0
    %8554 = vmatpush.bf16.msra.mxu0 0
    %8555 = vmatpush.bf16.msra.mxu0 0
    %8556 = vmatpush.bf16.msra.mxu0 0
    %8557 = vmatpush.bf16.msra.mxu0 0
    %8558 = vmatpush.bf16.msra.mxu0 0
    %8559 = vmatpush.bf16.msra.mxu0 0
    %8560 = vmatpush.bf16.msra.mxu0 0
    %8561 = vmatpush.bf16.msra.mxu0 %v8537
    %8562 = vmatmul.f32.gmra.mxu0 %v8540
    %v8563 = vpop.f32.mrf.mxu0
    %v8564 = vadd.f32 0.0, %v8563
    %8565 = vdwg.mxu0
    %v8566 = vadd.f32 %v8524, %v8552
    %v8567 = vadd.f32 %v8525, %v8564
    %s8568 = scalar_lea.vmem [#allocation14], 128
    %v8569 = vld [vmem:[%s8568] sm:$0xff]
    %v8570 = vld [vmem:[%s8568 + $0x8] sm:$0xff]
    %v8573 = vunpack.c.l.b16 %v8569
    %v8574 = vunpack.c.h.b16 %v8569
    %v8575 = vunpack.c.l.b16 %v8570
    %v8576 = vunpack.c.h.b16 %v8570
    %v8577 = vpack.c.b16 %v8575, %v8573
    %v8578 = vpack.c.b16 %v8576, %v8574
    %v8582 = vsel %vm8253, %v8208, 0
    %8584 = vmatpush.bf16.msra.mxu0 0
    %8585 = vmatpush.bf16.msra.mxu0 0
    %8586 = vmatpush.bf16.msra.mxu0 0
    %8587 = vmatpush.bf16.msra.mxu0 0
    %8588 = vmatpush.bf16.msra.mxu0 0
    %8589 = vmatpush.bf16.msra.mxu0 0
    %8590 = vmatpush.bf16.msra.mxu0 0
    %8591 = vmatpush.bf16.msra.mxu0 %v8577
    %8592 = vmatmul.f32.gmra.mxu0 %v8582
    %v8593 = vpop.f32.mrf.mxu0
    %v8594 = vadd.f32 0.0, %v8593
    %8595 = vdwg.mxu0
    %8596 = vmatpush.bf16.msra.mxu0 0
    %8597 = vmatpush.bf16.msra.mxu0 0
    %8598 = vmatpush.bf16.msra.mxu0 0
    %8599 = vmatpush.bf16.msra.mxu0 0
    %8600 = vmatpush.bf16.msra.mxu0 0
    %8601 = vmatpush.bf16.msra.mxu0 0
    %8602 = vmatpush.bf16.msra.mxu0 0
    %8603 = vmatpush.bf16.msra.mxu0 %v8578
    %8604 = vmatmul.f32.gmra.mxu0 %v8582
    %v8605 = vpop.f32.mrf.mxu0
    %v8606 = vadd.f32 0.0, %v8605
    %8607 = vdwg.mxu0
    %v8608 = vadd.f32 %v8566, %v8594
    %v8609 = vadd.f32 %v8567, %v8606
    %s8610 = scalar_lea.vmem [#allocation14], 144
    %v8611 = vld [vmem:[%s8610] sm:$0xff]
    %v8612 = vld [vmem:[%s8610 + $0x8] sm:$0xff]
    %v8613 = vrot.slane %v8208, 2
    %v8616 = vunpack.c.l.b16 %v8611
    %v8617 = vunpack.c.h.b16 %v8611
    %v8618 = vunpack.c.l.b16 %v8612
    %v8619 = vunpack.c.h.b16 %v8612
    %v8620 = vpack.c.b16 %v8618, %v8616
    %v8621 = vpack.c.b16 %v8619, %v8617
    %v8624 = vsel %vm8253, %v8613, 0
    %8626 = vmatpush.bf16.msra.mxu0 0
    %8627 = vmatpush.bf16.msra.mxu0 0
    %8628 = vmatpush.bf16.msra.mxu0 0
    %8629 = vmatpush.bf16.msra.mxu0 0
    %8630 = vmatpush.bf16.msra.mxu0 0
    %8631 = vmatpush.bf16.msra.mxu0 0
    %8632 = vmatpush.bf16.msra.mxu0 0
    %8633 = vmatpush.bf16.msra.mxu0 %v8620
    %8634 = vmatmul.f32.gmra.mxu0 %v8624
    %v8635 = vpop.f32.mrf.mxu0
    %v8636 = vadd.f32 0.0, %v8635
    %8637 = vdwg.mxu0
    %8638 = vmatpush.bf16.msra.mxu0 0
    %8639 = vmatpush.bf16.msra.mxu0 0
    %8640 = vmatpush.bf16.msra.mxu0 0
    %8641 = vmatpush.bf16.msra.mxu0 0
    %8642 = vmatpush.bf16.msra.mxu0 0
    %8643 = vmatpush.bf16.msra.mxu0 0
    %8644 = vmatpush.bf16.msra.mxu0 0
    %8645 = vmatpush.bf16.msra.mxu0 %v8621
    %8646 = vmatmul.f32.gmra.mxu0 %v8624
    %v8647 = vpop.f32.mrf.mxu0
    %v8648 = vadd.f32 0.0, %v8647
    %8649 = vdwg.mxu0
    %v8650 = vadd.f32 %v8608, %v8636
    %v8651 = vadd.f32 %v8609, %v8648
    %s8652 = scalar_lea.vmem [#allocation14], 160
    %v8653 = vld [vmem:[%s8652] sm:$0xff]
    %v8654 = vld [vmem:[%s8652 + $0x8] sm:$0xff]
    %v8655 = vrot.slane %v8208, 4
    %v8658 = vunpack.c.l.b16 %v8653
    %v8659 = vunpack.c.h.b16 %v8653
    %v8660 = vunpack.c.l.b16 %v8654
    %v8661 = vunpack.c.h.b16 %v8654
    %v8662 = vpack.c.b16 %v8660, %v8658
    %v8663 = vpack.c.b16 %v8661, %v8659
    %v8666 = vsel %vm8253, %v8655, 0
    %8668 = vmatpush.bf16.msra.mxu0 0
    %8669 = vmatpush.bf16.msra.mxu0 0
    %8670 = vmatpush.bf16.msra.mxu0 0
    %8671 = vmatpush.bf16.msra.mxu0 0
    %8672 = vmatpush.bf16.msra.mxu0 0
    %8673 = vmatpush.bf16.msra.mxu0 0
    %8674 = vmatpush.bf16.msra.mxu0 0
    %8675 = vmatpush.bf16.msra.mxu0 %v8662
    %8676 = vmatmul.f32.gmra.mxu0 %v8666
    %v8677 = vpop.f32.mrf.mxu0
    %v8678 = vadd.f32 0.0, %v8677
    %8679 = vdwg.mxu0
    %8680 = vmatpush.bf16.msra.mxu0 0
    %8681 = vmatpush.bf16.msra.mxu0 0
    %8682 = vmatpush.bf16.msra.mxu0 0
    %8683 = vmatpush.bf16.msra.mxu0 0
    %8684 = vmatpush.bf16.msra.mxu0 0
    %8685 = vmatpush.bf16.msra.mxu0 0
    %8686 = vmatpush.bf16.msra.mxu0 0
    %8687 = vmatpush.bf16.msra.mxu0 %v8663
    %8688 = vmatmul.f32.gmra.mxu0 %v8666
    %v8689 = vpop.f32.mrf.mxu0
    %v8690 = vadd.f32 0.0, %v8689
    %8691 = vdwg.mxu0
    %v8692 = vadd.f32 %v8650, %v8678
    %v8693 = vadd.f32 %v8651, %v8690
    %s8694 = scalar_lea.vmem [#allocation14], 176
    %v8695 = vld [vmem:[%s8694] sm:$0xff]
    %v8696 = vld [vmem:[%s8694 + $0x8] sm:$0xff]
    %v8697 = vrot.slane %v8208, 6
    %v8700 = vunpack.c.l.b16 %v8695
    %v8701 = vunpack.c.h.b16 %v8695
    %v8702 = vunpack.c.l.b16 %v8696
    %v8703 = vunpack.c.h.b16 %v8696
    %v8704 = vpack.c.b16 %v8702, %v8700
    %v8705 = vpack.c.b16 %v8703, %v8701
    %v8708 = vsel %vm8253, %v8697, 0
    %8710 = vmatpush.bf16.msra.mxu0 0
    %8711 = vmatpush.bf16.msra.mxu0 0
    %8712 = vmatpush.bf16.msra.mxu0 0
    %8713 = vmatpush.bf16.msra.mxu0 0
    %8714 = vmatpush.bf16.msra.mxu0 0
    %8715 = vmatpush.bf16.msra.mxu0 0
    %8716 = vmatpush.bf16.msra.mxu0 0
    %8717 = vmatpush.bf16.msra.mxu0 %v8704
    %8718 = vmatmul.f32.gmra.mxu0 %v8708
    %v8719 = vpop.f32.mrf.mxu0
    %v8720 = vadd.f32 0.0, %v8719
    %8721 = vdwg.mxu0
    %8722 = vmatpush.bf16.msra.mxu0 0
    %8723 = vmatpush.bf16.msra.mxu0 0
    %8724 = vmatpush.bf16.msra.mxu0 0
    %8725 = vmatpush.bf16.msra.mxu0 0
    %8726 = vmatpush.bf16.msra.mxu0 0
    %8727 = vmatpush.bf16.msra.mxu0 0
    %8728 = vmatpush.bf16.msra.mxu0 0
    %8729 = vmatpush.bf16.msra.mxu0 %v8705
    %8730 = vmatmul.f32.gmra.mxu0 %v8708
    %v8731 = vpop.f32.mrf.mxu0
    %v8732 = vadd.f32 0.0, %v8731
    %8733 = vdwg.mxu0
    %v8734 = vadd.f32 %v8692, %v8720
    %v8735 = vadd.f32 %v8693, %v8732
    %s8736 = scalar_lea.vmem [#allocation14], 192
    %v8737 = vld [vmem:[%s8736] sm:$0xff]
    %v8738 = vld [vmem:[%s8736 + $0x8] sm:$0xff]
    %v8741 = vunpack.c.l.b16 %v8737
    %v8742 = vunpack.c.h.b16 %v8737
    %v8743 = vunpack.c.l.b16 %v8738
    %v8744 = vunpack.c.h.b16 %v8738
    %v8745 = vpack.c.b16 %v8743, %v8741
    %v8746 = vpack.c.b16 %v8744, %v8742
    %v8750 = vsel %vm8253, %v8210, 0
    %8752 = vmatpush.bf16.msra.mxu0 0
    %8753 = vmatpush.bf16.msra.mxu0 0
    %8754 = vmatpush.bf16.msra.mxu0 0
    %8755 = vmatpush.bf16.msra.mxu0 0
    %8756 = vmatpush.bf16.msra.mxu0 0
    %8757 = vmatpush.bf16.msra.mxu0 0
    %8758 = vmatpush.bf16.msra.mxu0 0
    %8759 = vmatpush.bf16.msra.mxu0 %v8745
    %8760 = vmatmul.f32.gmra.mxu0 %v8750
    %v8761 = vpop.f32.mrf.mxu0
    %v8762 = vadd.f32 0.0, %v8761
    %8763 = vdwg.mxu0
    %8764 = vmatpush.bf16.msra.mxu0 0
    %8765 = vmatpush.bf16.msra.mxu0 0
    %8766 = vmatpush.bf16.msra.mxu0 0
    %8767 = vmatpush.bf16.msra.mxu0 0
    %8768 = vmatpush.bf16.msra.mxu0 0
    %8769 = vmatpush.bf16.msra.mxu0 0
    %8770 = vmatpush.bf16.msra.mxu0 0
    %8771 = vmatpush.bf16.msra.mxu0 %v8746
    %8772 = vmatmul.f32.gmra.mxu0 %v8750
    %v8773 = vpop.f32.mrf.mxu0
    %v8774 = vadd.f32 0.0, %v8773
    %8775 = vdwg.mxu0
    %v8776 = vadd.f32 %v8734, %v8762
    %v8777 = vadd.f32 %v8735, %v8774
    %s8778 = scalar_lea.vmem [#allocation14], 208
    %v8779 = vld [vmem:[%s8778] sm:$0xff]
    %v8780 = vld [vmem:[%s8778 + $0x8] sm:$0xff]
    %v8781 = vrot.slane %v8210, 2
    %v8784 = vunpack.c.l.b16 %v8779
    %v8785 = vunpack.c.h.b16 %v8779
    %v8786 = vunpack.c.l.b16 %v8780
    %v8787 = vunpack.c.h.b16 %v8780
    %v8788 = vpack.c.b16 %v8786, %v8784
    %v8789 = vpack.c.b16 %v8787, %v8785
    %v8792 = vsel %vm8253, %v8781, 0
    %8794 = vmatpush.bf16.msra.mxu0 0
    %8795 = vmatpush.bf16.msra.mxu0 0
    %8796 = vmatpush.bf16.msra.mxu0 0
    %8797 = vmatpush.bf16.msra.mxu0 0
    %8798 = vmatpush.bf16.msra.mxu0 0
    %8799 = vmatpush.bf16.msra.mxu0 0
    %8800 = vmatpush.bf16.msra.mxu0 0
    %8801 = vmatpush.bf16.msra.mxu0 %v8788
    %8802 = vmatmul.f32.gmra.mxu0 %v8792
    %v8803 = vpop.f32.mrf.mxu0
    %v8804 = vadd.f32 0.0, %v8803
    %8805 = vdwg.mxu0
    %8806 = vmatpush.bf16.msra.mxu0 0
    %8807 = vmatpush.bf16.msra.mxu0 0
    %8808 = vmatpush.bf16.msra.mxu0 0
    %8809 = vmatpush.bf16.msra.mxu0 0
    %8810 = vmatpush.bf16.msra.mxu0 0
    %8811 = vmatpush.bf16.msra.mxu0 0
    %8812 = vmatpush.bf16.msra.mxu0 0
    %8813 = vmatpush.bf16.msra.mxu0 %v8789
    %8814 = vmatmul.f32.gmra.mxu0 %v8792
    %v8815 = vpop.f32.mrf.mxu0
    %v8816 = vadd.f32 0.0, %v8815
    %8817 = vdwg.mxu0
    %v8818 = vadd.f32 %v8776, %v8804
    %v8819 = vadd.f32 %v8777, %v8816
    %s8820 = scalar_lea.vmem [#allocation14], 224
    %v8821 = vld [vmem:[%s8820] sm:$0xff]
    %v8822 = vld [vmem:[%s8820 + $0x8] sm:$0xff]
    %v8823 = vrot.slane %v8210, 4
    %v8826 = vunpack.c.l.b16 %v8821
    %v8827 = vunpack.c.h.b16 %v8821
    %v8828 = vunpack.c.l.b16 %v8822
    %v8829 = vunpack.c.h.b16 %v8822
    %v8830 = vpack.c.b16 %v8828, %v8826
    %v8831 = vpack.c.b16 %v8829, %v8827
    %v8834 = vsel %vm8253, %v8823, 0
    %8836 = vmatpush.bf16.msra.mxu0 0
    %8837 = vmatpush.bf16.msra.mxu0 0
    %8838 = vmatpush.bf16.msra.mxu0 0
    %8839 = vmatpush.bf16.msra.mxu0 0
    %8840 = vmatpush.bf16.msra.mxu0 0
    %8841 = vmatpush.bf16.msra.mxu0 0
    %8842 = vmatpush.bf16.msra.mxu0 0
    %8843 = vmatpush.bf16.msra.mxu0 %v8830
    %8844 = vmatmul.f32.gmra.mxu0 %v8834
    %v8845 = vpop.f32.mrf.mxu0
    %v8846 = vadd.f32 0.0, %v8845
    %8847 = vdwg.mxu0
    %8848 = vmatpush.bf16.msra.mxu0 0
    %8849 = vmatpush.bf16.msra.mxu0 0
    %8850 = vmatpush.bf16.msra.mxu0 0
    %8851 = vmatpush.bf16.msra.mxu0 0
    %8852 = vmatpush.bf16.msra.mxu0 0
    %8853 = vmatpush.bf16.msra.mxu0 0
    %8854 = vmatpush.bf16.msra.mxu0 0
    %8855 = vmatpush.bf16.msra.mxu0 %v8831
    %8856 = vmatmul.f32.gmra.mxu0 %v8834
    %v8857 = vpop.f32.mrf.mxu0
    %v8858 = vadd.f32 0.0, %v8857
    %8859 = vdwg.mxu0
    %v8860 = vadd.f32 %v8818, %v8846
    %v8861 = vadd.f32 %v8819, %v8858
    %s8862 = scalar_lea.vmem [#allocation14], 240
    %v8863 = vld [vmem:[%s8862] sm:$0xff]
    %v8864 = vld [vmem:[%s8862 + $0x8] sm:$0xff]
    %v8865 = vrot.slane %v8210, 6
    %v8868 = vunpack.c.l.b16 %v8863
    %v8869 = vunpack.c.h.b16 %v8863
    %v8870 = vunpack.c.l.b16 %v8864
    %v8871 = vunpack.c.h.b16 %v8864
    %v8872 = vpack.c.b16 %v8870, %v8868
    %v8873 = vpack.c.b16 %v8871, %v8869
    %v8876 = vsel %vm8253, %v8865, 0
    %8878 = vmatpush.bf16.msra.mxu0 0
    %8879 = vmatpush.bf16.msra.mxu0 0
    %8880 = vmatpush.bf16.msra.mxu0 0
    %8881 = vmatpush.bf16.msra.mxu0 0
    %8882 = vmatpush.bf16.msra.mxu0 0
    %8883 = vmatpush.bf16.msra.mxu0 0
    %8884 = vmatpush.bf16.msra.mxu0 0
    %8885 = vmatpush.bf16.msra.mxu0 %v8872
    %8886 = vmatmul.f32.gmra.mxu0 %v8876
    %v8887 = vpop.f32.mrf.mxu0
    %v8888 = vadd.f32 0.0, %v8887
    %8889 = vdwg.mxu0
    %8890 = vmatpush.bf16.msra.mxu0 0
    %8891 = vmatpush.bf16.msra.mxu0 0
    %8892 = vmatpush.bf16.msra.mxu0 0
    %8893 = vmatpush.bf16.msra.mxu0 0
    %8894 = vmatpush.bf16.msra.mxu0 0
    %8895 = vmatpush.bf16.msra.mxu0 0
    %8896 = vmatpush.bf16.msra.mxu0 0
    %8897 = vmatpush.bf16.msra.mxu0 %v8873
    %8898 = vmatmul.f32.gmra.mxu0 %v8876
    %v8899 = vpop.f32.mrf.mxu0
    %v8900 = vadd.f32 0.0, %v8899
    %8901 = vdwg.mxu0
    %v8902 = vadd.f32 %v8860, %v8888
    %v8903 = vadd.f32 %v8861, %v8900
    %s8904 = scalar_lea.vmem [#allocation14], 256
    %v8905 = vld [vmem:[%s8904] sm:$0xff]
    %v8906 = vld [vmem:[%s8904 + $0x8] sm:$0xff]
    %v8909 = vunpack.c.l.b16 %v8905
    %v8910 = vunpack.c.h.b16 %v8905
    %v8911 = vunpack.c.l.b16 %v8906
    %v8912 = vunpack.c.h.b16 %v8906
    %v8913 = vpack.c.b16 %v8911, %v8909
    %v8914 = vpack.c.b16 %v8912, %v8910
    %v8918 = vsel %vm8253, %v8213, 0
    %8920 = vmatpush.bf16.msra.mxu0 0
    %8921 = vmatpush.bf16.msra.mxu0 0
    %8922 = vmatpush.bf16.msra.mxu0 0
    %8923 = vmatpush.bf16.msra.mxu0 0
    %8924 = vmatpush.bf16.msra.mxu0 0
    %8925 = vmatpush.bf16.msra.mxu0 0
    %8926 = vmatpush.bf16.msra.mxu0 0
    %8927 = vmatpush.bf16.msra.mxu0 %v8913
    %8928 = vmatmul.f32.gmra.mxu0 %v8918
    %v8929 = vpop.f32.mrf.mxu0
    %v8930 = vadd.f32 0.0, %v8929
    %8931 = vdwg.mxu0
    %8932 = vmatpush.bf16.msra.mxu0 0
    %8933 = vmatpush.bf16.msra.mxu0 0
    %8934 = vmatpush.bf16.msra.mxu0 0
    %8935 = vmatpush.bf16.msra.mxu0 0
    %8936 = vmatpush.bf16.msra.mxu0 0
    %8937 = vmatpush.bf16.msra.mxu0 0
    %8938 = vmatpush.bf16.msra.mxu0 0
    %8939 = vmatpush.bf16.msra.mxu0 %v8914
    %8940 = vmatmul.f32.gmra.mxu0 %v8918
    %v8941 = vpop.f32.mrf.mxu0
    %v8942 = vadd.f32 0.0, %v8941
    %8943 = vdwg.mxu0
    %v8944 = vadd.f32 %v8902, %v8930
    %v8945 = vadd.f32 %v8903, %v8942
    %s8946 = scalar_lea.vmem [#allocation14], 272
    %v8947 = vld [vmem:[%s8946] sm:$0xff]
    %v8948 = vld [vmem:[%s8946 + $0x8] sm:$0xff]
    %v8949 = vrot.slane %v8213, 2
    %v8952 = vunpack.c.l.b16 %v8947
    %v8953 = vunpack.c.h.b16 %v8947
    %v8954 = vunpack.c.l.b16 %v8948
    %v8955 = vunpack.c.h.b16 %v8948
    %v8956 = vpack.c.b16 %v8954, %v8952
    %v8957 = vpack.c.b16 %v8955, %v8953
    %v8960 = vsel %vm8253, %v8949, 0
    %8962 = vmatpush.bf16.msra.mxu0 0
    %8963 = vmatpush.bf16.msra.mxu0 0
    %8964 = vmatpush.bf16.msra.mxu0 0
    %8965 = vmatpush.bf16.msra.mxu0 0
    %8966 = vmatpush.bf16.msra.mxu0 0
    %8967 = vmatpush.bf16.msra.mxu0 0
    %8968 = vmatpush.bf16.msra.mxu0 0
    %8969 = vmatpush.bf16.msra.mxu0 %v8956
    %8970 = vmatmul.f32.gmra.mxu0 %v8960
    %v8971 = vpop.f32.mrf.mxu0
    %v8972 = vadd.f32 0.0, %v8971
    %8973 = vdwg.mxu0
    %8974 = vmatpush.bf16.msra.mxu0 0
    %8975 = vmatpush.bf16.msra.mxu0 0
    %8976 = vmatpush.bf16.msra.mxu0 0
    %8977 = vmatpush.bf16.msra.mxu0 0
    %8978 = vmatpush.bf16.msra.mxu0 0
    %8979 = vmatpush.bf16.msra.mxu0 0
    %8980 = vmatpush.bf16.msra.mxu0 0
    %8981 = vmatpush.bf16.msra.mxu0 %v8957
    %8982 = vmatmul.f32.gmra.mxu0 %v8960
    %v8983 = vpop.f32.mrf.mxu0
    %v8984 = vadd.f32 0.0, %v8983
    %8985 = vdwg.mxu0
    %v8986 = vadd.f32 %v8944, %v8972
    %v8987 = vadd.f32 %v8945, %v8984
    %s8988 = scalar_lea.vmem [#allocation14], 288
    %v8989 = vld [vmem:[%s8988] sm:$0xff]
    %v8990 = vld [vmem:[%s8988 + $0x8] sm:$0xff]
    %v8991 = vrot.slane %v8213, 4
    %v8994 = vunpack.c.l.b16 %v8989
    %v8995 = vunpack.c.h.b16 %v8989
    %v8996 = vunpack.c.l.b16 %v8990
    %v8997 = vunpack.c.h.b16 %v8990
    %v8998 = vpack.c.b16 %v8996, %v8994
    %v8999 = vpack.c.b16 %v8997, %v8995
    %v9002 = vsel %vm8253, %v8991, 0
    %9004 = vmatpush.bf16.msra.mxu0 0
    %9005 = vmatpush.bf16.msra.mxu0 0
    %9006 = vmatpush.bf16.msra.mxu0 0
    %9007 = vmatpush.bf16.msra.mxu0 0
    %9008 = vmatpush.bf16.msra.mxu0 0
    %9009 = vmatpush.bf16.msra.mxu0 0
    %9010 = vmatpush.bf16.msra.mxu0 0
    %9011 = vmatpush.bf16.msra.mxu0 %v8998
    %9012 = vmatmul.f32.gmra.mxu0 %v9002
    %v9013 = vpop.f32.mrf.mxu0
    %v9014 = vadd.f32 0.0, %v9013
    %9015 = vdwg.mxu0
    %9016 = vmatpush.bf16.msra.mxu0 0
    %9017 = vmatpush.bf16.msra.mxu0 0
    %9018 = vmatpush.bf16.msra.mxu0 0
    %9019 = vmatpush.bf16.msra.mxu0 0
    %9020 = vmatpush.bf16.msra.mxu0 0
    %9021 = vmatpush.bf16.msra.mxu0 0
    %9022 = vmatpush.bf16.msra.mxu0 0
    %9023 = vmatpush.bf16.msra.mxu0 %v8999
    %9024 = vmatmul.f32.gmra.mxu0 %v9002
    %v9025 = vpop.f32.mrf.mxu0
    %v9026 = vadd.f32 0.0, %v9025
    %9027 = vdwg.mxu0
    %v9028 = vadd.f32 %v8986, %v9014
    %v9029 = vadd.f32 %v8987, %v9026
    %s9030 = scalar_lea.vmem [#allocation14], 304
    %v9031 = vld [vmem:[%s9030] sm:$0xff]
    %v9032 = vld [vmem:[%s9030 + $0x8] sm:$0xff]
    %v9033 = vrot.slane %v8213, 6
    %v9036 = vunpack.c.l.b16 %v9031
    %v9037 = vunpack.c.h.b16 %v9031
    %v9038 = vunpack.c.l.b16 %v9032
    %v9039 = vunpack.c.h.b16 %v9032
    %v9040 = vpack.c.b16 %v9038, %v9036
    %v9041 = vpack.c.b16 %v9039, %v9037
    %v9044 = vsel %vm8253, %v9033, 0
    %9046 = vmatpush.bf16.msra.mxu0 0
    %9047 = vmatpush.bf16.msra.mxu0 0
    %9048 = vmatpush.bf16.msra.mxu0 0
    %9049 = vmatpush.bf16.msra.mxu0 0
    %9050 = vmatpush.bf16.msra.mxu0 0
    %9051 = vmatpush.bf16.msra.mxu0 0
    %9052 = vmatpush.bf16.msra.mxu0 0
    %9053 = vmatpush.bf16.msra.mxu0 %v9040
    %9054 = vmatmul.f32.gmra.mxu0 %v9044
    %v9055 = vpop.f32.mrf.mxu0
    %v9056 = vadd.f32 0.0, %v9055
    %9057 = vdwg.mxu0
    %9058 = vmatpush.bf16.msra.mxu0 0
    %9059 = vmatpush.bf16.msra.mxu0 0
    %9060 = vmatpush.bf16.msra.mxu0 0
    %9061 = vmatpush.bf16.msra.mxu0 0
    %9062 = vmatpush.bf16.msra.mxu0 0
    %9063 = vmatpush.bf16.msra.mxu0 0
    %9064 = vmatpush.bf16.msra.mxu0 0
    %9065 = vmatpush.bf16.msra.mxu0 %v9041
    %9066 = vmatmul.f32.gmra.mxu0 %v9044
    %v9067 = vpop.f32.mrf.mxu0
    %v9068 = vadd.f32 0.0, %v9067
    %9069 = vdwg.mxu0
    %v9070 = vadd.f32 %v9028, %v9056
    %v9071 = vadd.f32 %v9029, %v9068
    %s9072 = scalar_lea.vmem [#allocation14], 320
    %v9073 = vld [vmem:[%s9072] sm:$0xff]
    %v9074 = vld [vmem:[%s9072 + $0x8] sm:$0xff]
    %v9077 = vunpack.c.l.b16 %v9073
    %v9078 = vunpack.c.h.b16 %v9073
    %v9079 = vunpack.c.l.b16 %v9074
    %v9080 = vunpack.c.h.b16 %v9074
    %v9081 = vpack.c.b16 %v9079, %v9077
    %v9082 = vpack.c.b16 %v9080, %v9078
    %v9086 = vsel %vm8253, %v8215, 0
    %9088 = vmatpush.bf16.msra.mxu0 0
    %9089 = vmatpush.bf16.msra.mxu0 0
    %9090 = vmatpush.bf16.msra.mxu0 0
    %9091 = vmatpush.bf16.msra.mxu0 0
    %9092 = vmatpush.bf16.msra.mxu0 0
    %9093 = vmatpush.bf16.msra.mxu0 0
    %9094 = vmatpush.bf16.msra.mxu0 0
    %9095 = vmatpush.bf16.msra.mxu0 %v9081
    %9096 = vmatmul.f32.gmra.mxu0 %v9086
    %v9097 = vpop.f32.mrf.mxu0
    %v9098 = vadd.f32 0.0, %v9097
    %9099 = vdwg.mxu0
    %9100 = vmatpush.bf16.msra.mxu0 0
    %9101 = vmatpush.bf16.msra.mxu0 0
    %9102 = vmatpush.bf16.msra.mxu0 0
    %9103 = vmatpush.bf16.msra.mxu0 0
    %9104 = vmatpush.bf16.msra.mxu0 0
    %9105 = vmatpush.bf16.msra.mxu0 0
    %9106 = vmatpush.bf16.msra.mxu0 0
    %9107 = vmatpush.bf16.msra.mxu0 %v9082
    %9108 = vmatmul.f32.gmra.mxu0 %v9086
    %v9109 = vpop.f32.mrf.mxu0
    %v9110 = vadd.f32 0.0, %v9109
    %9111 = vdwg.mxu0
    %v9112 = vadd.f32 %v9070, %v9098
    %v9113 = vadd.f32 %v9071, %v9110
    %s9114 = scalar_lea.vmem [#allocation14], 336
    %v9115 = vld [vmem:[%s9114] sm:$0xff]
    %v9116 = vld [vmem:[%s9114 + $0x8] sm:$0xff]
    %v9117 = vrot.slane %v8215, 2
    %v9120 = vunpack.c.l.b16 %v9115
    %v9121 = vunpack.c.h.b16 %v9115
    %v9122 = vunpack.c.l.b16 %v9116
    %v9123 = vunpack.c.h.b16 %v9116
    %v9124 = vpack.c.b16 %v9122, %v9120
    %v9125 = vpack.c.b16 %v9123, %v9121
    %v9128 = vsel %vm8253, %v9117, 0
    %9130 = vmatpush.bf16.msra.mxu0 0
    %9131 = vmatpush.bf16.msra.mxu0 0
    %9132 = vmatpush.bf16.msra.mxu0 0
    %9133 = vmatpush.bf16.msra.mxu0 0
    %9134 = vmatpush.bf16.msra.mxu0 0
    %9135 = vmatpush.bf16.msra.mxu0 0
    %9136 = vmatpush.bf16.msra.mxu0 0
    %9137 = vmatpush.bf16.msra.mxu0 %v9124
    %9138 = vmatmul.f32.gmra.mxu0 %v9128
    %v9139 = vpop.f32.mrf.mxu0
    %v9140 = vadd.f32 0.0, %v9139
    %9141 = vdwg.mxu0
    %9142 = vmatpush.bf16.msra.mxu0 0
    %9143 = vmatpush.bf16.msra.mxu0 0
    %9144 = vmatpush.bf16.msra.mxu0 0
    %9145 = vmatpush.bf16.msra.mxu0 0
    %9146 = vmatpush.bf16.msra.mxu0 0
    %9147 = vmatpush.bf16.msra.mxu0 0
    %9148 = vmatpush.bf16.msra.mxu0 0
    %9149 = vmatpush.bf16.msra.mxu0 %v9125
    %9150 = vmatmul.f32.gmra.mxu0 %v9128
    %v9151 = vpop.f32.mrf.mxu0
    %v9152 = vadd.f32 0.0, %v9151
    %9153 = vdwg.mxu0
    %v9154 = vadd.f32 %v9112, %v9140
    %v9155 = vadd.f32 %v9113, %v9152
    %s9156 = scalar_lea.vmem [#allocation14], 352
    %v9157 = vld [vmem:[%s9156] sm:$0xff]
    %v9158 = vld [vmem:[%s9156 + $0x8] sm:$0xff]
    %v9159 = vrot.slane %v8215, 4
    %v9162 = vunpack.c.l.b16 %v9157
    %v9163 = vunpack.c.h.b16 %v9157
    %v9164 = vunpack.c.l.b16 %v9158
    %v9165 = vunpack.c.h.b16 %v9158
    %v9166 = vpack.c.b16 %v9164, %v9162
    %v9167 = vpack.c.b16 %v9165, %v9163
    %v9170 = vsel %vm8253, %v9159, 0
    %9172 = vmatpush.bf16.msra.mxu0 0
    %9173 = vmatpush.bf16.msra.mxu0 0
    %9174 = vmatpush.bf16.msra.mxu0 0
    %9175 = vmatpush.bf16.msra.mxu0 0
    %9176 = vmatpush.bf16.msra.mxu0 0
    %9177 = vmatpush.bf16.msra.mxu0 0
    %9178 = vmatpush.bf16.msra.mxu0 0
    %9179 = vmatpush.bf16.msra.mxu0 %v9166
    %9180 = vmatmul.f32.gmra.mxu0 %v9170
    %v9181 = vpop.f32.mrf.mxu0
    %v9182 = vadd.f32 0.0, %v9181
    %9183 = vdwg.mxu0
    %9184 = vmatpush.bf16.msra.mxu0 0
    %9185 = vmatpush.bf16.msra.mxu0 0
    %9186 = vmatpush.bf16.msra.mxu0 0
    %9187 = vmatpush.bf16.msra.mxu0 0
    %9188 = vmatpush.bf16.msra.mxu0 0
    %9189 = vmatpush.bf16.msra.mxu0 0
    %9190 = vmatpush.bf16.msra.mxu0 0
    %9191 = vmatpush.bf16.msra.mxu0 %v9167
    %9192 = vmatmul.f32.gmra.mxu0 %v9170
    %v9193 = vpop.f32.mrf.mxu0
    %v9194 = vadd.f32 0.0, %v9193
    %9195 = vdwg.mxu0
    %v9196 = vadd.f32 %v9154, %v9182
    %v9197 = vadd.f32 %v9155, %v9194
    %s9198 = scalar_lea.vmem [#allocation14], 368
    %v9199 = vld [vmem:[%s9198] sm:$0xff]
    %v9200 = vld [vmem:[%s9198 + $0x8] sm:$0xff]
    %v9201 = vrot.slane %v8215, 6
    %v9204 = vunpack.c.l.b16 %v9199
    %v9205 = vunpack.c.h.b16 %v9199
    %v9206 = vunpack.c.l.b16 %v9200
    %v9207 = vunpack.c.h.b16 %v9200
    %v9208 = vpack.c.b16 %v9206, %v9204
    %v9209 = vpack.c.b16 %v9207, %v9205
    %v9212 = vsel %vm8253, %v9201, 0
    %9214 = vmatpush.bf16.msra.mxu0 0
    %9215 = vmatpush.bf16.msra.mxu0 0
    %9216 = vmatpush.bf16.msra.mxu0 0
    %9217 = vmatpush.bf16.msra.mxu0 0
    %9218 = vmatpush.bf16.msra.mxu0 0
    %9219 = vmatpush.bf16.msra.mxu0 0
    %9220 = vmatpush.bf16.msra.mxu0 0
    %9221 = vmatpush.bf16.msra.mxu0 %v9208
    %9222 = vmatmul.f32.gmra.mxu0 %v9212
    %v9223 = vpop.f32.mrf.mxu0
    %v9224 = vadd.f32 0.0, %v9223
    %9225 = vdwg.mxu0
    %9226 = vmatpush.bf16.msra.mxu0 0
    %9227 = vmatpush.bf16.msra.mxu0 0
    %9228 = vmatpush.bf16.msra.mxu0 0
    %9229 = vmatpush.bf16.msra.mxu0 0
    %9230 = vmatpush.bf16.msra.mxu0 0
    %9231 = vmatpush.bf16.msra.mxu0 0
    %9232 = vmatpush.bf16.msra.mxu0 0
    %9233 = vmatpush.bf16.msra.mxu0 %v9209
    %9234 = vmatmul.f32.gmra.mxu0 %v9212
    %v9235 = vpop.f32.mrf.mxu0
    %v9236 = vadd.f32 0.0, %v9235
    %9237 = vdwg.mxu0
    %v9238 = vadd.f32 %v9196, %v9224
    %v9239 = vadd.f32 %v9197, %v9236
    %s9240 = scalar_lea.vmem [#allocation14], 384
    %v9241 = vld [vmem:[%s9240] sm:$0xff]
    %v9242 = vld [vmem:[%s9240 + $0x8] sm:$0xff]
    %v9245 = vunpack.c.l.b16 %v9241
    %v9246 = vunpack.c.h.b16 %v9241
    %v9247 = vunpack.c.l.b16 %v9242
    %v9248 = vunpack.c.h.b16 %v9242
    %v9249 = vpack.c.b16 %v9247, %v9245
    %v9250 = vpack.c.b16 %v9248, %v9246
    %v9254 = vsel %vm8253, %v8218, 0
    %9256 = vmatpush.bf16.msra.mxu0 0
    %9257 = vmatpush.bf16.msra.mxu0 0
    %9258 = vmatpush.bf16.msra.mxu0 0
    %9259 = vmatpush.bf16.msra.mxu0 0
    %9260 = vmatpush.bf16.msra.mxu0 0
    %9261 = vmatpush.bf16.msra.mxu0 0
    %9262 = vmatpush.bf16.msra.mxu0 0
    %9263 = vmatpush.bf16.msra.mxu0 %v9249
    %9264 = vmatmul.f32.gmra.mxu0 %v9254
    %v9265 = vpop.f32.mrf.mxu0
    %v9266 = vadd.f32 0.0, %v9265
    %9267 = vdwg.mxu0
    %9268 = vmatpush.bf16.msra.mxu0 0
    %9269 = vmatpush.bf16.msra.mxu0 0
    %9270 = vmatpush.bf16.msra.mxu0 0
    %9271 = vmatpush.bf16.msra.mxu0 0
    %9272 = vmatpush.bf16.msra.mxu0 0
    %9273 = vmatpush.bf16.msra.mxu0 0
    %9274 = vmatpush.bf16.msra.mxu0 0
    %9275 = vmatpush.bf16.msra.mxu0 %v9250
    %9276 = vmatmul.f32.gmra.mxu0 %v9254
    %v9277 = vpop.f32.mrf.mxu0
    %v9278 = vadd.f32 0.0, %v9277
    %9279 = vdwg.mxu0
    %v9280 = vadd.f32 %v9238, %v9266
    %v9281 = vadd.f32 %v9239, %v9278
    %s9282 = scalar_lea.vmem [#allocation14], 400
    %v9283 = vld [vmem:[%s9282] sm:$0xff]
    %v9284 = vld [vmem:[%s9282 + $0x8] sm:$0xff]
    %v9285 = vrot.slane %v8218, 2
    %v9288 = vunpack.c.l.b16 %v9283
    %v9289 = vunpack.c.h.b16 %v9283
    %v9290 = vunpack.c.l.b16 %v9284
    %v9291 = vunpack.c.h.b16 %v9284
    %v9292 = vpack.c.b16 %v9290, %v9288
    %v9293 = vpack.c.b16 %v9291, %v9289
    %v9296 = vsel %vm8253, %v9285, 0
    %9298 = vmatpush.bf16.msra.mxu0 0
    %9299 = vmatpush.bf16.msra.mxu0 0
    %9300 = vmatpush.bf16.msra.mxu0 0
    %9301 = vmatpush.bf16.msra.mxu0 0
    %9302 = vmatpush.bf16.msra.mxu0 0
    %9303 = vmatpush.bf16.msra.mxu0 0
    %9304 = vmatpush.bf16.msra.mxu0 0
    %9305 = vmatpush.bf16.msra.mxu0 %v9292
    %9306 = vmatmul.f32.gmra.mxu0 %v9296
    %v9307 = vpop.f32.mrf.mxu0
    %v9308 = vadd.f32 0.0, %v9307
    %9309 = vdwg.mxu0
    %9310 = vmatpush.bf16.msra.mxu0 0
    %9311 = vmatpush.bf16.msra.mxu0 0
    %9312 = vmatpush.bf16.msra.mxu0 0
    %9313 = vmatpush.bf16.msra.mxu0 0
    %9314 = vmatpush.bf16.msra.mxu0 0
    %9315 = vmatpush.bf16.msra.mxu0 0
    %9316 = vmatpush.bf16.msra.mxu0 0
    %9317 = vmatpush.bf16.msra.mxu0 %v9293
    %9318 = vmatmul.f32.gmra.mxu0 %v9296
    %v9319 = vpop.f32.mrf.mxu0
    %v9320 = vadd.f32 0.0, %v9319
    %9321 = vdwg.mxu0
    %v9322 = vadd.f32 %v9280, %v9308
    %v9323 = vadd.f32 %v9281, %v9320
    %s9324 = scalar_lea.vmem [#allocation14], 416
    %v9325 = vld [vmem:[%s9324] sm:$0xff]
    %v9326 = vld [vmem:[%s9324 + $0x8] sm:$0xff]
    %v9327 = vrot.slane %v8218, 4
    %v9330 = vunpack.c.l.b16 %v9325
    %v9331 = vunpack.c.h.b16 %v9325
    %v9332 = vunpack.c.l.b16 %v9326
    %v9333 = vunpack.c.h.b16 %v9326
    %v9334 = vpack.c.b16 %v9332, %v9330
    %v9335 = vpack.c.b16 %v9333, %v9331
    %v9338 = vsel %vm8253, %v9327, 0
    %9340 = vmatpush.bf16.msra.mxu0 0
    %9341 = vmatpush.bf16.msra.mxu0 0
    %9342 = vmatpush.bf16.msra.mxu0 0
    %9343 = vmatpush.bf16.msra.mxu0 0
    %9344 = vmatpush.bf16.msra.mxu0 0
    %9345 = vmatpush.bf16.msra.mxu0 0
    %9346 = vmatpush.bf16.msra.mxu0 0
    %9347 = vmatpush.bf16.msra.mxu0 %v9334
    %9348 = vmatmul.f32.gmra.mxu0 %v9338
    %v9349 = vpop.f32.mrf.mxu0
    %v9350 = vadd.f32 0.0, %v9349
    %9351 = vdwg.mxu0
    %9352 = vmatpush.bf16.msra.mxu0 0
    %9353 = vmatpush.bf16.msra.mxu0 0
    %9354 = vmatpush.bf16.msra.mxu0 0
    %9355 = vmatpush.bf16.msra.mxu0 0
    %9356 = vmatpush.bf16.msra.mxu0 0
    %9357 = vmatpush.bf16.msra.mxu0 0
    %9358 = vmatpush.bf16.msra.mxu0 0
    %9359 = vmatpush.bf16.msra.mxu0 %v9335
    %9360 = vmatmul.f32.gmra.mxu0 %v9338
    %v9361 = vpop.f32.mrf.mxu0
    %v9362 = vadd.f32 0.0, %v9361
    %9363 = vdwg.mxu0
    %v9364 = vadd.f32 %v9322, %v9350
    %v9365 = vadd.f32 %v9323, %v9362
    %s9366 = scalar_lea.vmem [#allocation14], 432
    %v9367 = vld [vmem:[%s9366] sm:$0xff]
    %v9368 = vld [vmem:[%s9366 + $0x8] sm:$0xff]
    %v9369 = vrot.slane %v8218, 6
    %v9372 = vunpack.c.l.b16 %v9367
    %v9373 = vunpack.c.h.b16 %v9367
    %v9374 = vunpack.c.l.b16 %v9368
    %v9375 = vunpack.c.h.b16 %v9368
    %v9376 = vpack.c.b16 %v9374, %v9372
    %v9377 = vpack.c.b16 %v9375, %v9373
    %v9380 = vsel %vm8253, %v9369, 0
    %9382 = vmatpush.bf16.msra.mxu0 0
    %9383 = vmatpush.bf16.msra.mxu0 0
    %9384 = vmatpush.bf16.msra.mxu0 0
    %9385 = vmatpush.bf16.msra.mxu0 0
    %9386 = vmatpush.bf16.msra.mxu0 0
    %9387 = vmatpush.bf16.msra.mxu0 0
    %9388 = vmatpush.bf16.msra.mxu0 0
    %9389 = vmatpush.bf16.msra.mxu0 %v9376
    %9390 = vmatmul.f32.gmra.mxu0 %v9380
    %v9391 = vpop.f32.mrf.mxu0
    %v9392 = vadd.f32 0.0, %v9391
    %9393 = vdwg.mxu0
    %9394 = vmatpush.bf16.msra.mxu0 0
    %9395 = vmatpush.bf16.msra.mxu0 0
    %9396 = vmatpush.bf16.msra.mxu0 0
    %9397 = vmatpush.bf16.msra.mxu0 0
    %9398 = vmatpush.bf16.msra.mxu0 0
    %9399 = vmatpush.bf16.msra.mxu0 0
    %9400 = vmatpush.bf16.msra.mxu0 0
    %9401 = vmatpush.bf16.msra.mxu0 %v9377
    %9402 = vmatmul.f32.gmra.mxu0 %v9380
    %v9403 = vpop.f32.mrf.mxu0
    %v9404 = vadd.f32 0.0, %v9403
    %9405 = vdwg.mxu0
    %v9406 = vadd.f32 %v9364, %v9392
    %v9407 = vadd.f32 %v9365, %v9404
    %s9408 = scalar_lea.vmem [#allocation14], 448
    %v9409 = vld [vmem:[%s9408] sm:$0xff]
    %v9410 = vld [vmem:[%s9408 + $0x8] sm:$0xff]
    %v9413 = vunpack.c.l.b16 %v9409
    %v9414 = vunpack.c.h.b16 %v9409
    %v9415 = vunpack.c.l.b16 %v9410
    %v9416 = vunpack.c.h.b16 %v9410
    %v9417 = vpack.c.b16 %v9415, %v9413
    %v9418 = vpack.c.b16 %v9416, %v9414
    %v9422 = vsel %vm8253, %v8220, 0
    %9424 = vmatpush.bf16.msra.mxu0 0
    %9425 = vmatpush.bf16.msra.mxu0 0
    %9426 = vmatpush.bf16.msra.mxu0 0
    %9427 = vmatpush.bf16.msra.mxu0 0
    %9428 = vmatpush.bf16.msra.mxu0 0
    %9429 = vmatpush.bf16.msra.mxu0 0
    %9430 = vmatpush.bf16.msra.mxu0 0
    %9431 = vmatpush.bf16.msra.mxu0 %v9417
    %9432 = vmatmul.f32.gmra.mxu0 %v9422
    %v9433 = vpop.f32.mrf.mxu0
    %v9434 = vadd.f32 0.0, %v9433
    %9435 = vdwg.mxu0
    %9436 = vmatpush.bf16.msra.mxu0 0
    %9437 = vmatpush.bf16.msra.mxu0 0
    %9438 = vmatpush.bf16.msra.mxu0 0
    %9439 = vmatpush.bf16.msra.mxu0 0
    %9440 = vmatpush.bf16.msra.mxu0 0
    %9441 = vmatpush.bf16.msra.mxu0 0
    %9442 = vmatpush.bf16.msra.mxu0 0
    %9443 = vmatpush.bf16.msra.mxu0 %v9418
    %9444 = vmatmul.f32.gmra.mxu0 %v9422
    %v9445 = vpop.f32.mrf.mxu0
    %v9446 = vadd.f32 0.0, %v9445
    %9447 = vdwg.mxu0
    %v9448 = vadd.f32 %v9406, %v9434
    %v9449 = vadd.f32 %v9407, %v9446
    %s9450 = scalar_lea.vmem [#allocation14], 464
    %v9451 = vld [vmem:[%s9450] sm:$0xff]
    %v9452 = vld [vmem:[%s9450 + $0x8] sm:$0xff]
    %v9453 = vrot.slane %v8220, 2
    %v9456 = vunpack.c.l.b16 %v9451
    %v9457 = vunpack.c.h.b16 %v9451
    %v9458 = vunpack.c.l.b16 %v9452
    %v9459 = vunpack.c.h.b16 %v9452
    %v9460 = vpack.c.b16 %v9458, %v9456
    %v9461 = vpack.c.b16 %v9459, %v9457
    %v9464 = vsel %vm8253, %v9453, 0
    %9466 = vmatpush.bf16.msra.mxu0 0
    %9467 = vmatpush.bf16.msra.mxu0 0
    %9468 = vmatpush.bf16.msra.mxu0 0
    %9469 = vmatpush.bf16.msra.mxu0 0
    %9470 = vmatpush.bf16.msra.mxu0 0
    %9471 = vmatpush.bf16.msra.mxu0 0
    %9472 = vmatpush.bf16.msra.mxu0 0
    %9473 = vmatpush.bf16.msra.mxu0 %v9460
    %9474 = vmatmul.f32.gmra.mxu0 %v9464
    %v9475 = vpop.f32.mrf.mxu0
    %v9476 = vadd.f32 0.0, %v9475
    %9477 = vdwg.mxu0
    %9478 = vmatpush.bf16.msra.mxu0 0
    %9479 = vmatpush.bf16.msra.mxu0 0
    %9480 = vmatpush.bf16.msra.mxu0 0
    %9481 = vmatpush.bf16.msra.mxu0 0
    %9482 = vmatpush.bf16.msra.mxu0 0
    %9483 = vmatpush.bf16.msra.mxu0 0
    %9484 = vmatpush.bf16.msra.mxu0 0
    %9485 = vmatpush.bf16.msra.mxu0 %v9461
    %9486 = vmatmul.f32.gmra.mxu0 %v9464
    %v9487 = vpop.f32.mrf.mxu0
    %v9488 = vadd.f32 0.0, %v9487
    %9489 = vdwg.mxu0
    %v9490 = vadd.f32 %v9448, %v9476
    %v9491 = vadd.f32 %v9449, %v9488
    %s9492 = scalar_lea.vmem [#allocation14], 480
    %v9493 = vld [vmem:[%s9492] sm:$0xff]
    %v9494 = vld [vmem:[%s9492 + $0x8] sm:$0xff]
    %v9495 = vrot.slane %v8220, 4
    %v9498 = vunpack.c.l.b16 %v9493
    %v9499 = vunpack.c.h.b16 %v9493
    %v9500 = vunpack.c.l.b16 %v9494
    %v9501 = vunpack.c.h.b16 %v9494
    %v9502 = vpack.c.b16 %v9500, %v9498
    %v9503 = vpack.c.b16 %v9501, %v9499
    %v9506 = vsel %vm8253, %v9495, 0
    %9508 = vmatpush.bf16.msra.mxu0 0
    %9509 = vmatpush.bf16.msra.mxu0 0
    %9510 = vmatpush.bf16.msra.mxu0 0
    %9511 = vmatpush.bf16.msra.mxu0 0
    %9512 = vmatpush.bf16.msra.mxu0 0
    %9513 = vmatpush.bf16.msra.mxu0 0
    %9514 = vmatpush.bf16.msra.mxu0 0
    %9515 = vmatpush.bf16.msra.mxu0 %v9502
    %9516 = vmatmul.f32.gmra.mxu0 %v9506
    %v9517 = vpop.f32.mrf.mxu0
    %v9518 = vadd.f32 0.0, %v9517
    %9519 = vdwg.mxu0
    %9520 = vmatpush.bf16.msra.mxu0 0
    %9521 = vmatpush.bf16.msra.mxu0 0
    %9522 = vmatpush.bf16.msra.mxu0 0
    %9523 = vmatpush.bf16.msra.mxu0 0
    %9524 = vmatpush.bf16.msra.mxu0 0
    %9525 = vmatpush.bf16.msra.mxu0 0
    %9526 = vmatpush.bf16.msra.mxu0 0
    %9527 = vmatpush.bf16.msra.mxu0 %v9503
    %9528 = vmatmul.f32.gmra.mxu0 %v9506
    %v9529 = vpop.f32.mrf.mxu0
    %v9530 = vadd.f32 0.0, %v9529
    %9531 = vdwg.mxu0
    %v9532 = vadd.f32 %v9490, %v9518
    %v9533 = vadd.f32 %v9491, %v9530
    %s9534 = scalar_lea.vmem [#allocation14], 496
    %v9535 = vld [vmem:[%s9534] sm:$0xff]
    %v9536 = vld [vmem:[%s9534 + $0x8] sm:$0xff]
    %v9537 = vrot.slane %v8220, 6
    %v9540 = vunpack.c.l.b16 %v9535
    %v9541 = vunpack.c.h.b16 %v9535
    %v9542 = vunpack.c.l.b16 %v9536
    %v9543 = vunpack.c.h.b16 %v9536
    %v9544 = vpack.c.b16 %v9542, %v9540
    %v9545 = vpack.c.b16 %v9543, %v9541
    %v9548 = vsel %vm8253, %v9537, 0
    %9550 = vmatpush.bf16.msra.mxu0 0
    %9551 = vmatpush.bf16.msra.mxu0 0
    %9552 = vmatpush.bf16.msra.mxu0 0
    %9553 = vmatpush.bf16.msra.mxu0 0
    %9554 = vmatpush.bf16.msra.mxu0 0
    %9555 = vmatpush.bf16.msra.mxu0 0
    %9556 = vmatpush.bf16.msra.mxu0 0
    %9557 = vmatpush.bf16.msra.mxu0 %v9544
    %9558 = vmatmul.f32.gmra.mxu0 %v9548
    %v9559 = vpop.f32.mrf.mxu0
    %v9560 = vadd.f32 0.0, %v9559
    %9561 = vdwg.mxu0
    %9562 = vmatpush.bf16.msra.mxu0 0
    %9563 = vmatpush.bf16.msra.mxu0 0
    %9564 = vmatpush.bf16.msra.mxu0 0
    %9565 = vmatpush.bf16.msra.mxu0 0
    %9566 = vmatpush.bf16.msra.mxu0 0
    %9567 = vmatpush.bf16.msra.mxu0 0
    %9568 = vmatpush.bf16.msra.mxu0 0
    %9569 = vmatpush.bf16.msra.mxu0 %v9545
    %9570 = vmatmul.f32.gmra.mxu0 %v9548
    %v9571 = vpop.f32.mrf.mxu0
    %v9572 = vadd.f32 0.0, %v9571
    %9573 = vdwg.mxu0
    %v9574 = vadd.f32 %v9532, %v9560
    %v9575 = vadd.f32 %v9533, %v9572
    %s9576 = scalar_lea.vmem [#allocation14], 512
    %v9577 = vld [vmem:[%s9576] sm:$0xff]
    %v9578 = vld [vmem:[%s9576 + $0x8] sm:$0xff]
    %v9581 = vunpack.c.l.b16 %v9577
    %v9582 = vunpack.c.h.b16 %v9577
    %v9583 = vunpack.c.l.b16 %v9578
    %v9584 = vunpack.c.h.b16 %v9578
    %v9585 = vpack.c.b16 %v9583, %v9581
    %v9586 = vpack.c.b16 %v9584, %v9582
    %v9590 = vsel %vm8253, %v8223, 0
    %9592 = vmatpush.bf16.msra.mxu0 0
    %9593 = vmatpush.bf16.msra.mxu0 0
    %9594 = vmatpush.bf16.msra.mxu0 0
    %9595 = vmatpush.bf16.msra.mxu0 0
    %9596 = vmatpush.bf16.msra.mxu0 0
    %9597 = vmatpush.bf16.msra.mxu0 0
    %9598 = vmatpush.bf16.msra.mxu0 0
    %9599 = vmatpush.bf16.msra.mxu0 %v9585
    %9600 = vmatmul.f32.gmra.mxu0 %v9590
    %v9601 = vpop.f32.mrf.mxu0
    %v9602 = vadd.f32 0.0, %v9601
    %9603 = vdwg.mxu0
    %9604 = vmatpush.bf16.msra.mxu0 0
    %9605 = vmatpush.bf16.msra.mxu0 0
    %9606 = vmatpush.bf16.msra.mxu0 0
    %9607 = vmatpush.bf16.msra.mxu0 0
    %9608 = vmatpush.bf16.msra.mxu0 0
    %9609 = vmatpush.bf16.msra.mxu0 0
    %9610 = vmatpush.bf16.msra.mxu0 0
    %9611 = vmatpush.bf16.msra.mxu0 %v9586
    %9612 = vmatmul.f32.gmra.mxu0 %v9590
    %v9613 = vpop.f32.mrf.mxu0
    %v9614 = vadd.f32 0.0, %v9613
    %9615 = vdwg.mxu0
    %v9616 = vadd.f32 %v9574, %v9602
    %v9617 = vadd.f32 %v9575, %v9614
    %s9618 = scalar_lea.vmem [#allocation14], 528
    %v9619 = vld [vmem:[%s9618] sm:$0xff]
    %v9620 = vld [vmem:[%s9618 + $0x8] sm:$0xff]
    %v9621 = vrot.slane %v8223, 2
    %v9624 = vunpack.c.l.b16 %v9619
    %v9625 = vunpack.c.h.b16 %v9619
    %v9626 = vunpack.c.l.b16 %v9620
    %v9627 = vunpack.c.h.b16 %v9620
    %v9628 = vpack.c.b16 %v9626, %v9624
    %v9629 = vpack.c.b16 %v9627, %v9625
    %v9632 = vsel %vm8253, %v9621, 0
    %9634 = vmatpush.bf16.msra.mxu0 0
    %9635 = vmatpush.bf16.msra.mxu0 0
    %9636 = vmatpush.bf16.msra.mxu0 0
    %9637 = vmatpush.bf16.msra.mxu0 0
    %9638 = vmatpush.bf16.msra.mxu0 0
    %9639 = vmatpush.bf16.msra.mxu0 0
    %9640 = vmatpush.bf16.msra.mxu0 0
    %9641 = vmatpush.bf16.msra.mxu0 %v9628
    %9642 = vmatmul.f32.gmra.mxu0 %v9632
    %v9643 = vpop.f32.mrf.mxu0
    %v9644 = vadd.f32 0.0, %v9643
    %9645 = vdwg.mxu0
    %9646 = vmatpush.bf16.msra.mxu0 0
    %9647 = vmatpush.bf16.msra.mxu0 0
    %9648 = vmatpush.bf16.msra.mxu0 0
    %9649 = vmatpush.bf16.msra.mxu0 0
    %9650 = vmatpush.bf16.msra.mxu0 0
    %9651 = vmatpush.bf16.msra.mxu0 0
    %9652 = vmatpush.bf16.msra.mxu0 0
    %9653 = vmatpush.bf16.msra.mxu0 %v9629
    %9654 = vmatmul.f32.gmra.mxu0 %v9632
    %v9655 = vpop.f32.mrf.mxu0
    %v9656 = vadd.f32 0.0, %v9655
    %9657 = vdwg.mxu0
    %v9658 = vadd.f32 %v9616, %v9644
    %v9659 = vadd.f32 %v9617, %v9656
    %s9660 = scalar_lea.vmem [#allocation14], 544
    %v9661 = vld [vmem:[%s9660] sm:$0xff]
    %v9662 = vld [vmem:[%s9660 + $0x8] sm:$0xff]
    %v9663 = vrot.slane %v8223, 4
    %v9666 = vunpack.c.l.b16 %v9661
    %v9667 = vunpack.c.h.b16 %v9661
    %v9668 = vunpack.c.l.b16 %v9662
    %v9669 = vunpack.c.h.b16 %v9662
    %v9670 = vpack.c.b16 %v9668, %v9666
    %v9671 = vpack.c.b16 %v9669, %v9667
    %v9674 = vsel %vm8253, %v9663, 0
    %9676 = vmatpush.bf16.msra.mxu0 0
    %9677 = vmatpush.bf16.msra.mxu0 0
    %9678 = vmatpush.bf16.msra.mxu0 0
    %9679 = vmatpush.bf16.msra.mxu0 0
    %9680 = vmatpush.bf16.msra.mxu0 0
    %9681 = vmatpush.bf16.msra.mxu0 0
    %9682 = vmatpush.bf16.msra.mxu0 0
    %9683 = vmatpush.bf16.msra.mxu0 %v9670
    %9684 = vmatmul.f32.gmra.mxu0 %v9674
    %v9685 = vpop.f32.mrf.mxu0
    %v9686 = vadd.f32 0.0, %v9685
    %9687 = vdwg.mxu0
    %9688 = vmatpush.bf16.msra.mxu0 0
    %9689 = vmatpush.bf16.msra.mxu0 0
    %9690 = vmatpush.bf16.msra.mxu0 0
    %9691 = vmatpush.bf16.msra.mxu0 0
    %9692 = vmatpush.bf16.msra.mxu0 0
    %9693 = vmatpush.bf16.msra.mxu0 0
    %9694 = vmatpush.bf16.msra.mxu0 0
    %9695 = vmatpush.bf16.msra.mxu0 %v9671
    %9696 = vmatmul.f32.gmra.mxu0 %v9674
    %v9697 = vpop.f32.mrf.mxu0
    %v9698 = vadd.f32 0.0, %v9697
    %9699 = vdwg.mxu0
    %v9700 = vadd.f32 %v9658, %v9686
    %v9701 = vadd.f32 %v9659, %v9698
    %s9702 = scalar_lea.vmem [#allocation14], 560
    %v9703 = vld [vmem:[%s9702] sm:$0xff]
    %v9704 = vld [vmem:[%s9702 + $0x8] sm:$0xff]
    %v9705 = vrot.slane %v8223, 6
    %v9708 = vunpack.c.l.b16 %v9703
    %v9709 = vunpack.c.h.b16 %v9703
    %v9710 = vunpack.c.l.b16 %v9704
    %v9711 = vunpack.c.h.b16 %v9704
    %v9712 = vpack.c.b16 %v9710, %v9708
    %v9713 = vpack.c.b16 %v9711, %v9709
    %v9716 = vsel %vm8253, %v9705, 0
    %9718 = vmatpush.bf16.msra.mxu0 0
    %9719 = vmatpush.bf16.msra.mxu0 0
    %9720 = vmatpush.bf16.msra.mxu0 0
    %9721 = vmatpush.bf16.msra.mxu0 0
    %9722 = vmatpush.bf16.msra.mxu0 0
    %9723 = vmatpush.bf16.msra.mxu0 0
    %9724 = vmatpush.bf16.msra.mxu0 0
    %9725 = vmatpush.bf16.msra.mxu0 %v9712
    %9726 = vmatmul.f32.gmra.mxu0 %v9716
    %v9727 = vpop.f32.mrf.mxu0
    %v9728 = vadd.f32 0.0, %v9727
    %9729 = vdwg.mxu0
    %9730 = vmatpush.bf16.msra.mxu0 0
    %9731 = vmatpush.bf16.msra.mxu0 0
    %9732 = vmatpush.bf16.msra.mxu0 0
    %9733 = vmatpush.bf16.msra.mxu0 0
    %9734 = vmatpush.bf16.msra.mxu0 0
    %9735 = vmatpush.bf16.msra.mxu0 0
    %9736 = vmatpush.bf16.msra.mxu0 0
    %9737 = vmatpush.bf16.msra.mxu0 %v9713
    %9738 = vmatmul.f32.gmra.mxu0 %v9716
    %v9739 = vpop.f32.mrf.mxu0
    %v9740 = vadd.f32 0.0, %v9739
    %9741 = vdwg.mxu0
    %v9742 = vadd.f32 %v9700, %v9728
    %v9743 = vadd.f32 %v9701, %v9740
    %s9744 = scalar_lea.vmem [#allocation14], 576
    %v9745 = vld [vmem:[%s9744] sm:$0xff]
    %v9746 = vld [vmem:[%s9744 + $0x8] sm:$0xff]
    %v9749 = vunpack.c.l.b16 %v9745
    %v9750 = vunpack.c.h.b16 %v9745
    %v9751 = vunpack.c.l.b16 %v9746
    %v9752 = vunpack.c.h.b16 %v9746
    %v9753 = vpack.c.b16 %v9751, %v9749
    %v9754 = vpack.c.b16 %v9752, %v9750
    %v9758 = vsel %vm8253, %v8225, 0
    %9760 = vmatpush.bf16.msra.mxu0 0
    %9761 = vmatpush.bf16.msra.mxu0 0
    %9762 = vmatpush.bf16.msra.mxu0 0
    %9763 = vmatpush.bf16.msra.mxu0 0
    %9764 = vmatpush.bf16.msra.mxu0 0
    %9765 = vmatpush.bf16.msra.mxu0 0
    %9766 = vmatpush.bf16.msra.mxu0 0
    %9767 = vmatpush.bf16.msra.mxu0 %v9753
    %9768 = vmatmul.f32.gmra.mxu0 %v9758
    %v9769 = vpop.f32.mrf.mxu0
    %v9770 = vadd.f32 0.0, %v9769
    %9771 = vdwg.mxu0
    %9772 = vmatpush.bf16.msra.mxu0 0
    %9773 = vmatpush.bf16.msra.mxu0 0
    %9774 = vmatpush.bf16.msra.mxu0 0
    %9775 = vmatpush.bf16.msra.mxu0 0
    %9776 = vmatpush.bf16.msra.mxu0 0
    %9777 = vmatpush.bf16.msra.mxu0 0
    %9778 = vmatpush.bf16.msra.mxu0 0
    %9779 = vmatpush.bf16.msra.mxu0 %v9754
    %9780 = vmatmul.f32.gmra.mxu0 %v9758
    %v9781 = vpop.f32.mrf.mxu0
    %v9782 = vadd.f32 0.0, %v9781
    %9783 = vdwg.mxu0
    %v9784 = vadd.f32 %v9742, %v9770
    %v9785 = vadd.f32 %v9743, %v9782
    %s9786 = scalar_lea.vmem [#allocation14], 592
    %v9787 = vld [vmem:[%s9786] sm:$0xff]
    %v9788 = vld [vmem:[%s9786 + $0x8] sm:$0xff]
    %v9789 = vrot.slane %v8225, 2
    %v9792 = vunpack.c.l.b16 %v9787
    %v9793 = vunpack.c.h.b16 %v9787
    %v9794 = vunpack.c.l.b16 %v9788
    %v9795 = vunpack.c.h.b16 %v9788
    %v9796 = vpack.c.b16 %v9794, %v9792
    %v9797 = vpack.c.b16 %v9795, %v9793
    %v9800 = vsel %vm8253, %v9789, 0
    %9802 = vmatpush.bf16.msra.mxu0 0
    %9803 = vmatpush.bf16.msra.mxu0 0
    %9804 = vmatpush.bf16.msra.mxu0 0
    %9805 = vmatpush.bf16.msra.mxu0 0
    %9806 = vmatpush.bf16.msra.mxu0 0
    %9807 = vmatpush.bf16.msra.mxu0 0
    %9808 = vmatpush.bf16.msra.mxu0 0
    %9809 = vmatpush.bf16.msra.mxu0 %v9796
    %9810 = vmatmul.f32.gmra.mxu0 %v9800
    %v9811 = vpop.f32.mrf.mxu0
    %v9812 = vadd.f32 0.0, %v9811
    %9813 = vdwg.mxu0
    %9814 = vmatpush.bf16.msra.mxu0 0
    %9815 = vmatpush.bf16.msra.mxu0 0
    %9816 = vmatpush.bf16.msra.mxu0 0
    %9817 = vmatpush.bf16.msra.mxu0 0
    %9818 = vmatpush.bf16.msra.mxu0 0
    %9819 = vmatpush.bf16.msra.mxu0 0
    %9820 = vmatpush.bf16.msra.mxu0 0
    %9821 = vmatpush.bf16.msra.mxu0 %v9797
    %9822 = vmatmul.f32.gmra.mxu0 %v9800
    %v9823 = vpop.f32.mrf.mxu0
    %v9824 = vadd.f32 0.0, %v9823
    %9825 = vdwg.mxu0
    %v9826 = vadd.f32 %v9784, %v9812
    %v9827 = vadd.f32 %v9785, %v9824
    %s9828 = scalar_lea.vmem [#allocation14], 608
    %v9829 = vld [vmem:[%s9828] sm:$0xff]
    %v9830 = vld [vmem:[%s9828 + $0x8] sm:$0xff]
    %v9831 = vrot.slane %v8225, 4
    %v9834 = vunpack.c.l.b16 %v9829
    %v9835 = vunpack.c.h.b16 %v9829
    %v9836 = vunpack.c.l.b16 %v9830
    %v9837 = vunpack.c.h.b16 %v9830
    %v9838 = vpack.c.b16 %v9836, %v9834
    %v9839 = vpack.c.b16 %v9837, %v9835
    %v9842 = vsel %vm8253, %v9831, 0
    %9844 = vmatpush.bf16.msra.mxu0 0
    %9845 = vmatpush.bf16.msra.mxu0 0
    %9846 = vmatpush.bf16.msra.mxu0 0
    %9847 = vmatpush.bf16.msra.mxu0 0
    %9848 = vmatpush.bf16.msra.mxu0 0
    %9849 = vmatpush.bf16.msra.mxu0 0
    %9850 = vmatpush.bf16.msra.mxu0 0
    %9851 = vmatpush.bf16.msra.mxu0 %v9838
    %9852 = vmatmul.f32.gmra.mxu0 %v9842
    %v9853 = vpop.f32.mrf.mxu0
    %v9854 = vadd.f32 0.0, %v9853
    %9855 = vdwg.mxu0
    %9856 = vmatpush.bf16.msra.mxu0 0
    %9857 = vmatpush.bf16.msra.mxu0 0
    %9858 = vmatpush.bf16.msra.mxu0 0
    %9859 = vmatpush.bf16.msra.mxu0 0
    %9860 = vmatpush.bf16.msra.mxu0 0
    %9861 = vmatpush.bf16.msra.mxu0 0
    %9862 = vmatpush.bf16.msra.mxu0 0
    %9863 = vmatpush.bf16.msra.mxu0 %v9839
    %9864 = vmatmul.f32.gmra.mxu0 %v9842
    %v9865 = vpop.f32.mrf.mxu0
    %v9866 = vadd.f32 0.0, %v9865
    %9867 = vdwg.mxu0
    %v9868 = vadd.f32 %v9826, %v9854
    %v9869 = vadd.f32 %v9827, %v9866
    %s9870 = scalar_lea.vmem [#allocation14], 624
    %v9871 = vld [vmem:[%s9870] sm:$0xff]
    %v9872 = vld [vmem:[%s9870 + $0x8] sm:$0xff]
    %v9873 = vrot.slane %v8225, 6
    %v9876 = vunpack.c.l.b16 %v9871
    %v9877 = vunpack.c.h.b16 %v9871
    %v9878 = vunpack.c.l.b16 %v9872
    %v9879 = vunpack.c.h.b16 %v9872
    %v9880 = vpack.c.b16 %v9878, %v9876
    %v9881 = vpack.c.b16 %v9879, %v9877
    %v9884 = vsel %vm8253, %v9873, 0
    %9886 = vmatpush.bf16.msra.mxu0 0
    %9887 = vmatpush.bf16.msra.mxu0 0
    %9888 = vmatpush.bf16.msra.mxu0 0
    %9889 = vmatpush.bf16.msra.mxu0 0
    %9890 = vmatpush.bf16.msra.mxu0 0
    %9891 = vmatpush.bf16.msra.mxu0 0
    %9892 = vmatpush.bf16.msra.mxu0 0
    %9893 = vmatpush.bf16.msra.mxu0 %v9880
    %9894 = vmatmul.f32.gmra.mxu0 %v9884
    %v9895 = vpop.f32.mrf.mxu0
    %v9896 = vadd.f32 0.0, %v9895
    %9897 = vdwg.mxu0
    %9898 = vmatpush.bf16.msra.mxu0 0
    %9899 = vmatpush.bf16.msra.mxu0 0
    %9900 = vmatpush.bf16.msra.mxu0 0
    %9901 = vmatpush.bf16.msra.mxu0 0
    %9902 = vmatpush.bf16.msra.mxu0 0
    %9903 = vmatpush.bf16.msra.mxu0 0
    %9904 = vmatpush.bf16.msra.mxu0 0
    %9905 = vmatpush.bf16.msra.mxu0 %v9881
    %9906 = vmatmul.f32.gmra.mxu0 %v9884
    %v9907 = vpop.f32.mrf.mxu0
    %v9908 = vadd.f32 0.0, %v9907
    %9909 = vdwg.mxu0
    %v9910 = vadd.f32 %v9868, %v9896
    %v9911 = vadd.f32 %v9869, %v9908
    %s9912 = scalar_lea.vmem [#allocation14], 640
    %v9913 = vld [vmem:[%s9912] sm:$0xff]
    %v9914 = vld [vmem:[%s9912 + $0x8] sm:$0xff]
    %v9917 = vunpack.c.l.b16 %v9913
    %v9918 = vunpack.c.h.b16 %v9913
    %v9919 = vunpack.c.l.b16 %v9914
    %v9920 = vunpack.c.h.b16 %v9914
    %v9921 = vpack.c.b16 %v9919, %v9917
    %v9922 = vpack.c.b16 %v9920, %v9918
    %v9926 = vsel %vm8253, %v8228, 0
    %9928 = vmatpush.bf16.msra.mxu0 0
    %9929 = vmatpush.bf16.msra.mxu0 0
    %9930 = vmatpush.bf16.msra.mxu0 0
    %9931 = vmatpush.bf16.msra.mxu0 0
    %9932 = vmatpush.bf16.msra.mxu0 0
    %9933 = vmatpush.bf16.msra.mxu0 0
    %9934 = vmatpush.bf16.msra.mxu0 0
    %9935 = vmatpush.bf16.msra.mxu0 %v9921
    %9936 = vmatmul.f32.gmra.mxu0 %v9926
    %v9937 = vpop.f32.mrf.mxu0
    %v9938 = vadd.f32 0.0, %v9937
    %9939 = vdwg.mxu0
    %9940 = vmatpush.bf16.msra.mxu0 0
    %9941 = vmatpush.bf16.msra.mxu0 0
    %9942 = vmatpush.bf16.msra.mxu0 0
    %9943 = vmatpush.bf16.msra.mxu0 0
    %9944 = vmatpush.bf16.msra.mxu0 0
    %9945 = vmatpush.bf16.msra.mxu0 0
    %9946 = vmatpush.bf16.msra.mxu0 0
    %9947 = vmatpush.bf16.msra.mxu0 %v9922
    %9948 = vmatmul.f32.gmra.mxu0 %v9926
    %v9949 = vpop.f32.mrf.mxu0
    %v9950 = vadd.f32 0.0, %v9949
    %9951 = vdwg.mxu0
    %v9952 = vadd.f32 %v9910, %v9938
    %v9953 = vadd.f32 %v9911, %v9950
    %s9954 = scalar_lea.vmem [#allocation14], 656
    %v9955 = vld [vmem:[%s9954] sm:$0xff]
    %v9956 = vld [vmem:[%s9954 + $0x8] sm:$0xff]
    %v9957 = vrot.slane %v8228, 2
    %v9960 = vunpack.c.l.b16 %v9955
    %v9961 = vunpack.c.h.b16 %v9955
    %v9962 = vunpack.c.l.b16 %v9956
    %v9963 = vunpack.c.h.b16 %v9956
    %v9964 = vpack.c.b16 %v9962, %v9960
    %v9965 = vpack.c.b16 %v9963, %v9961
    %v9968 = vsel %vm8253, %v9957, 0
    %9970 = vmatpush.bf16.msra.mxu0 0
    %9971 = vmatpush.bf16.msra.mxu0 0
    %9972 = vmatpush.bf16.msra.mxu0 0
    %9973 = vmatpush.bf16.msra.mxu0 0
    %9974 = vmatpush.bf16.msra.mxu0 0
    %9975 = vmatpush.bf16.msra.mxu0 0
    %9976 = vmatpush.bf16.msra.mxu0 0
    %9977 = vmatpush.bf16.msra.mxu0 %v9964
    %9978 = vmatmul.f32.gmra.mxu0 %v9968
    %v9979 = vpop.f32.mrf.mxu0
    %v9980 = vadd.f32 0.0, %v9979
    %9981 = vdwg.mxu0
    %9982 = vmatpush.bf16.msra.mxu0 0
    %9983 = vmatpush.bf16.msra.mxu0 0
    %9984 = vmatpush.bf16.msra.mxu0 0
    %9985 = vmatpush.bf16.msra.mxu0 0
    %9986 = vmatpush.bf16.msra.mxu0 0
    %9987 = vmatpush.bf16.msra.mxu0 0
    %9988 = vmatpush.bf16.msra.mxu0 0
    %9989 = vmatpush.bf16.msra.mxu0 %v9965
    %9990 = vmatmul.f32.gmra.mxu0 %v9968
    %v9991 = vpop.f32.mrf.mxu0
    %v9992 = vadd.f32 0.0, %v9991
    %9993 = vdwg.mxu0
    %v9994 = vadd.f32 %v9952, %v9980
    %v9995 = vadd.f32 %v9953, %v9992
    %s9996 = scalar_lea.vmem [#allocation14], 672
    %v9997 = vld [vmem:[%s9996] sm:$0xff]
    %v9998 = vld [vmem:[%s9996 + $0x8] sm:$0xff]
    %v9999 = vrot.slane %v8228, 4
    %v10002 = vunpack.c.l.b16 %v9997
    %v10003 = vunpack.c.h.b16 %v9997
    %v10004 = vunpack.c.l.b16 %v9998
    %v10005 = vunpack.c.h.b16 %v9998
    %v10006 = vpack.c.b16 %v10004, %v10002
    %v10007 = vpack.c.b16 %v10005, %v10003
    %v10010 = vsel %vm8253, %v9999, 0
    %10012 = vmatpush.bf16.msra.mxu0 0
    %10013 = vmatpush.bf16.msra.mxu0 0
    %10014 = vmatpush.bf16.msra.mxu0 0
    %10015 = vmatpush.bf16.msra.mxu0 0
    %10016 = vmatpush.bf16.msra.mxu0 0
    %10017 = vmatpush.bf16.msra.mxu0 0
    %10018 = vmatpush.bf16.msra.mxu0 0
    %10019 = vmatpush.bf16.msra.mxu0 %v10006
    %10020 = vmatmul.f32.gmra.mxu0 %v10010
    %v10021 = vpop.f32.mrf.mxu0
    %v10022 = vadd.f32 0.0, %v10021
    %10023 = vdwg.mxu0
    %10024 = vmatpush.bf16.msra.mxu0 0
    %10025 = vmatpush.bf16.msra.mxu0 0
    %10026 = vmatpush.bf16.msra.mxu0 0
    %10027 = vmatpush.bf16.msra.mxu0 0
    %10028 = vmatpush.bf16.msra.mxu0 0
    %10029 = vmatpush.bf16.msra.mxu0 0
    %10030 = vmatpush.bf16.msra.mxu0 0
    %10031 = vmatpush.bf16.msra.mxu0 %v10007
    %10032 = vmatmul.f32.gmra.mxu0 %v10010
    %v10033 = vpop.f32.mrf.mxu0
    %v10034 = vadd.f32 0.0, %v10033
    %10035 = vdwg.mxu0
    %v10036 = vadd.f32 %v9994, %v10022
    %v10037 = vadd.f32 %v9995, %v10034
    %s10038 = scalar_lea.vmem [#allocation14], 688
    %v10039 = vld [vmem:[%s10038] sm:$0xff]
    %v10040 = vld [vmem:[%s10038 + $0x8] sm:$0xff]
    %v10041 = vrot.slane %v8228, 6
    %v10044 = vunpack.c.l.b16 %v10039
    %v10045 = vunpack.c.h.b16 %v10039
    %v10046 = vunpack.c.l.b16 %v10040
    %v10047 = vunpack.c.h.b16 %v10040
    %v10048 = vpack.c.b16 %v10046, %v10044
    %v10049 = vpack.c.b16 %v10047, %v10045
    %v10052 = vsel %vm8253, %v10041, 0
    %10054 = vmatpush.bf16.msra.mxu0 0
    %10055 = vmatpush.bf16.msra.mxu0 0
    %10056 = vmatpush.bf16.msra.mxu0 0
    %10057 = vmatpush.bf16.msra.mxu0 0
    %10058 = vmatpush.bf16.msra.mxu0 0
    %10059 = vmatpush.bf16.msra.mxu0 0
    %10060 = vmatpush.bf16.msra.mxu0 0
    %10061 = vmatpush.bf16.msra.mxu0 %v10048
    %10062 = vmatmul.f32.gmra.mxu0 %v10052
    %v10063 = vpop.f32.mrf.mxu0
    %v10064 = vadd.f32 0.0, %v10063
    %10065 = vdwg.mxu0
    %10066 = vmatpush.bf16.msra.mxu0 0
    %10067 = vmatpush.bf16.msra.mxu0 0
    %10068 = vmatpush.bf16.msra.mxu0 0
    %10069 = vmatpush.bf16.msra.mxu0 0
    %10070 = vmatpush.bf16.msra.mxu0 0
    %10071 = vmatpush.bf16.msra.mxu0 0
    %10072 = vmatpush.bf16.msra.mxu0 0
    %10073 = vmatpush.bf16.msra.mxu0 %v10049
    %10074 = vmatmul.f32.gmra.mxu0 %v10052
    %v10075 = vpop.f32.mrf.mxu0
    %v10076 = vadd.f32 0.0, %v10075
    %10077 = vdwg.mxu0
    %v10078 = vadd.f32 %v10036, %v10064
    %v10079 = vadd.f32 %v10037, %v10076
    %s10080 = scalar_lea.vmem [#allocation14], 704
    %v10081 = vld [vmem:[%s10080] sm:$0xff]
    %v10082 = vld [vmem:[%s10080 + $0x8] sm:$0xff]
    %v10085 = vunpack.c.l.b16 %v10081
    %v10086 = vunpack.c.h.b16 %v10081
    %v10087 = vunpack.c.l.b16 %v10082
    %v10088 = vunpack.c.h.b16 %v10082
    %v10089 = vpack.c.b16 %v10087, %v10085
    %v10090 = vpack.c.b16 %v10088, %v10086
    %v10094 = vsel %vm8253, %v8230, 0
    %10096 = vmatpush.bf16.msra.mxu0 0
    %10097 = vmatpush.bf16.msra.mxu0 0
    %10098 = vmatpush.bf16.msra.mxu0 0
    %10099 = vmatpush.bf16.msra.mxu0 0
    %10100 = vmatpush.bf16.msra.mxu0 0
    %10101 = vmatpush.bf16.msra.mxu0 0
    %10102 = vmatpush.bf16.msra.mxu0 0
    %10103 = vmatpush.bf16.msra.mxu0 %v10089
    %10104 = vmatmul.f32.gmra.mxu0 %v10094
    %v10105 = vpop.f32.mrf.mxu0
    %v10106 = vadd.f32 0.0, %v10105
    %10107 = vdwg.mxu0
    %10108 = vmatpush.bf16.msra.mxu0 0
    %10109 = vmatpush.bf16.msra.mxu0 0
    %10110 = vmatpush.bf16.msra.mxu0 0
    %10111 = vmatpush.bf16.msra.mxu0 0
    %10112 = vmatpush.bf16.msra.mxu0 0
    %10113 = vmatpush.bf16.msra.mxu0 0
    %10114 = vmatpush.bf16.msra.mxu0 0
    %10115 = vmatpush.bf16.msra.mxu0 %v10090
    %10116 = vmatmul.f32.gmra.mxu0 %v10094
    %v10117 = vpop.f32.mrf.mxu0
    %v10118 = vadd.f32 0.0, %v10117
    %10119 = vdwg.mxu0
    %v10120 = vadd.f32 %v10078, %v10106
    %v10121 = vadd.f32 %v10079, %v10118
    %s10122 = scalar_lea.vmem [#allocation14], 720
    %v10123 = vld [vmem:[%s10122] sm:$0xff]
    %v10124 = vld [vmem:[%s10122 + $0x8] sm:$0xff]
    %v10125 = vrot.slane %v8230, 2
    %v10128 = vunpack.c.l.b16 %v10123
    %v10129 = vunpack.c.h.b16 %v10123
    %v10130 = vunpack.c.l.b16 %v10124
    %v10131 = vunpack.c.h.b16 %v10124
    %v10132 = vpack.c.b16 %v10130, %v10128
    %v10133 = vpack.c.b16 %v10131, %v10129
    %v10136 = vsel %vm8253, %v10125, 0
    %10138 = vmatpush.bf16.msra.mxu0 0
    %10139 = vmatpush.bf16.msra.mxu0 0
    %10140 = vmatpush.bf16.msra.mxu0 0
    %10141 = vmatpush.bf16.msra.mxu0 0
    %10142 = vmatpush.bf16.msra.mxu0 0
    %10143 = vmatpush.bf16.msra.mxu0 0
    %10144 = vmatpush.bf16.msra.mxu0 0
    %10145 = vmatpush.bf16.msra.mxu0 %v10132
    %10146 = vmatmul.f32.gmra.mxu0 %v10136
    %v10147 = vpop.f32.mrf.mxu0
    %v10148 = vadd.f32 0.0, %v10147
    %10149 = vdwg.mxu0
    %10150 = vmatpush.bf16.msra.mxu0 0
    %10151 = vmatpush.bf16.msra.mxu0 0
    %10152 = vmatpush.bf16.msra.mxu0 0
    %10153 = vmatpush.bf16.msra.mxu0 0
    %10154 = vmatpush.bf16.msra.mxu0 0
    %10155 = vmatpush.bf16.msra.mxu0 0
    %10156 = vmatpush.bf16.msra.mxu0 0
    %10157 = vmatpush.bf16.msra.mxu0 %v10133
    %10158 = vmatmul.f32.gmra.mxu0 %v10136
    %v10159 = vpop.f32.mrf.mxu0
    %v10160 = vadd.f32 0.0, %v10159
    %10161 = vdwg.mxu0
    %v10162 = vadd.f32 %v10120, %v10148
    %v10163 = vadd.f32 %v10121, %v10160
    %s10164 = scalar_lea.vmem [#allocation14], 736
    %v10165 = vld [vmem:[%s10164] sm:$0xff]
    %v10166 = vld [vmem:[%s10164 + $0x8] sm:$0xff]
    %v10167 = vrot.slane %v8230, 4
    %v10170 = vunpack.c.l.b16 %v10165
    %v10171 = vunpack.c.h.b16 %v10165
    %v10172 = vunpack.c.l.b16 %v10166
    %v10173 = vunpack.c.h.b16 %v10166
    %v10174 = vpack.c.b16 %v10172, %v10170
    %v10175 = vpack.c.b16 %v10173, %v10171
    %v10178 = vsel %vm8253, %v10167, 0
    %10180 = vmatpush.bf16.msra.mxu0 0
    %10181 = vmatpush.bf16.msra.mxu0 0
    %10182 = vmatpush.bf16.msra.mxu0 0
    %10183 = vmatpush.bf16.msra.mxu0 0
    %10184 = vmatpush.bf16.msra.mxu0 0
    %10185 = vmatpush.bf16.msra.mxu0 0
    %10186 = vmatpush.bf16.msra.mxu0 0
    %10187 = vmatpush.bf16.msra.mxu0 %v10174
    %10188 = vmatmul.f32.gmra.mxu0 %v10178
    %v10189 = vpop.f32.mrf.mxu0
    %v10190 = vadd.f32 0.0, %v10189
    %10191 = vdwg.mxu0
    %10192 = vmatpush.bf16.msra.mxu0 0
    %10193 = vmatpush.bf16.msra.mxu0 0
    %10194 = vmatpush.bf16.msra.mxu0 0
    %10195 = vmatpush.bf16.msra.mxu0 0
    %10196 = vmatpush.bf16.msra.mxu0 0
    %10197 = vmatpush.bf16.msra.mxu0 0
    %10198 = vmatpush.bf16.msra.mxu0 0
    %10199 = vmatpush.bf16.msra.mxu0 %v10175
    %10200 = vmatmul.f32.gmra.mxu0 %v10178
    %v10201 = vpop.f32.mrf.mxu0
    %v10202 = vadd.f32 0.0, %v10201
    %10203 = vdwg.mxu0
    %v10204 = vadd.f32 %v10162, %v10190
    %v10205 = vadd.f32 %v10163, %v10202
    %s10206 = scalar_lea.vmem [#allocation14], 752
    %v10207 = vld [vmem:[%s10206] sm:$0xff]
    %v10208 = vld [vmem:[%s10206 + $0x8] sm:$0xff]
    %v10209 = vrot.slane %v8230, 6
    %v10212 = vunpack.c.l.b16 %v10207
    %v10213 = vunpack.c.h.b16 %v10207
    %v10214 = vunpack.c.l.b16 %v10208
    %v10215 = vunpack.c.h.b16 %v10208
    %v10216 = vpack.c.b16 %v10214, %v10212
    %v10217 = vpack.c.b16 %v10215, %v10213
    %v10220 = vsel %vm8253, %v10209, 0
    %10222 = vmatpush.bf16.msra.mxu0 0
    %10223 = vmatpush.bf16.msra.mxu0 0
    %10224 = vmatpush.bf16.msra.mxu0 0
    %10225 = vmatpush.bf16.msra.mxu0 0
    %10226 = vmatpush.bf16.msra.mxu0 0
    %10227 = vmatpush.bf16.msra.mxu0 0
    %10228 = vmatpush.bf16.msra.mxu0 0
    %10229 = vmatpush.bf16.msra.mxu0 %v10216
    %10230 = vmatmul.f32.gmra.mxu0 %v10220
    %v10231 = vpop.f32.mrf.mxu0
    %v10232 = vadd.f32 0.0, %v10231
    %10233 = vdwg.mxu0
    %10234 = vmatpush.bf16.msra.mxu0 0
    %10235 = vmatpush.bf16.msra.mxu0 0
    %10236 = vmatpush.bf16.msra.mxu0 0
    %10237 = vmatpush.bf16.msra.mxu0 0
    %10238 = vmatpush.bf16.msra.mxu0 0
    %10239 = vmatpush.bf16.msra.mxu0 0
    %10240 = vmatpush.bf16.msra.mxu0 0
    %10241 = vmatpush.bf16.msra.mxu0 %v10217
    %10242 = vmatmul.f32.gmra.mxu0 %v10220
    %v10243 = vpop.f32.mrf.mxu0
    %v10244 = vadd.f32 0.0, %v10243
    %10245 = vdwg.mxu0
    %v10246 = vadd.f32 %v10204, %v10232
    %v10247 = vadd.f32 %v10205, %v10244
    %s10248 = scalar_lea.vmem [#allocation14], 768
    %v10249 = vld [vmem:[%s10248] sm:$0xff]
    %v10250 = vld [vmem:[%s10248 + $0x8] sm:$0xff]
    %v10253 = vunpack.c.l.b16 %v10249
    %v10254 = vunpack.c.h.b16 %v10249
    %v10255 = vunpack.c.l.b16 %v10250
    %v10256 = vunpack.c.h.b16 %v10250
    %v10257 = vpack.c.b16 %v10255, %v10253
    %v10258 = vpack.c.b16 %v10256, %v10254
    %v10262 = vsel %vm8253, %v8233, 0
    %10264 = vmatpush.bf16.msra.mxu0 0
    %10265 = vmatpush.bf16.msra.mxu0 0
    %10266 = vmatpush.bf16.msra.mxu0 0
    %10267 = vmatpush.bf16.msra.mxu0 0
    %10268 = vmatpush.bf16.msra.mxu0 0
    %10269 = vmatpush.bf16.msra.mxu0 0
    %10270 = vmatpush.bf16.msra.mxu0 0
    %10271 = vmatpush.bf16.msra.mxu0 %v10257
    %10272 = vmatmul.f32.gmra.mxu0 %v10262
    %v10273 = vpop.f32.mrf.mxu0
    %v10274 = vadd.f32 0.0, %v10273
    %10275 = vdwg.mxu0
    %10276 = vmatpush.bf16.msra.mxu0 0
    %10277 = vmatpush.bf16.msra.mxu0 0
    %10278 = vmatpush.bf16.msra.mxu0 0
    %10279 = vmatpush.bf16.msra.mxu0 0
    %10280 = vmatpush.bf16.msra.mxu0 0
    %10281 = vmatpush.bf16.msra.mxu0 0
    %10282 = vmatpush.bf16.msra.mxu0 0
    %10283 = vmatpush.bf16.msra.mxu0 %v10258
    %10284 = vmatmul.f32.gmra.mxu0 %v10262
    %v10285 = vpop.f32.mrf.mxu0
    %v10286 = vadd.f32 0.0, %v10285
    %10287 = vdwg.mxu0
    %v10288 = vadd.f32 %v10246, %v10274
    %v10289 = vadd.f32 %v10247, %v10286
    %v10290 = vld [vmem:[#allocation16] sm:$0x3]
    %v10292 = vperm.slane %v10290, 0
    %v10293 = vperm.slane %v10290, 1
    %v10296 = vadd.f32 %v10288, %v10292
    %v10297 = vadd.f32 %v10289, %v10293
    %v10300 = vrot.slane %v10297, 6
    %v10301 = vsel %vm4042, %v10296, %v10300
    %10303 = vst [vmem:[%s12] sm:$0xf] %v10301
    // Predicated region
    $region86: #{conv_generator_forward.1} parent=1 // pred_check
      _
    $region87: #{conv_generator_forward.1} parent=1 // pred_check_branch
      %10305 = sbr.rel (0) target = $region89
    $region88: #{conv_generator_forward.1} parent=1 // pred_region
      _
    $region89: #{conv_generator_forward.1} parent=1 // pred_fallthru
      _
    // Predicated region
    $region90: #{conv_generator_forward.1} parent=1 // pred_check
      _
    $region91: #{conv_generator_forward.1} parent=1 // pred_check_branch
      %10307 = sbr.rel (0) target = $region93
    $region92: #{conv_generator_forward.1} parent=1 // pred_region
      _
    $region93: #{conv_generator_forward.1} parent=1 // pred_fallthru
      _
    %10308 = vsyncpa [#allocation4], 1
    %10309 = vsyncpa [#allocation6], 1
    %10310 = vsyncpa [#allocation9], 1
    %10311 = vsyncpa [#allocation12], 1
    %10312 = vsyncpa [#allocation15], 1

</llo_original>
